<compile_context>
chip_gen: v5e
topology: v5e:2x2
jax: 0.10.0
libtpu: 0.0.40
codegen_flags: <defaults>
</compile_context>

<pallas_src>
import functools
import re

import jax
import jax.numpy as jnp
from jax.experimental import pallas as pl
from jax.experimental.pallas import tpu as pltpu

_NEG_BIG = -1e30  # bias for padded (fake) class columns -> exp underflows to 0


# --------------------------------------------------------------------------- #
# Device / tiling heuristics
# --------------------------------------------------------------------------- #
def _tpu_generation():
    """Best-effort TPU generation (5 = v5e/v5p, 6 = v6e, 7 = v7x, 0 = unknown)."""
    try:
        kind = jax.devices()[0].device_kind.lower()
    except Exception:
        return 0
    m = re.search(r"(\d+)", kind)
    return int(m.group(1)) if m else 0


def _vmem_plan(gen):
    """(tile-footprint budget, vmem_limit_bytes, per-step row cap) per chip gen."""
    if gen >= 7:          # v7x: 64 MiB physical VMEM, 2 TensorCores
        return 40 << 20, 48 << 20, 2048
    if gen == 6:          # v6e: 128 MiB physical
        return 56 << 20, 64 << 20, 4096
    # v5e / unknown: conservative (default scoped VMEM is small)
    return 20 << 20, 28 << 20, 1024


def _pick_batch_tile(B, HWp, C_, c1, c2p, budget, row_cap, force_two_steps):
    """Images per grid step, sized so the full per-step VMEM footprint fits."""
    def footprint(bt):
        rows = bt * HWp
        act = 2 * rows * C_ * 4            # f32 conv/SiLU activation + one temp
        xin = 2 * rows * c1 * 2            # double-buffered bf16 x blocks
        wgt = 2 * (c1 * C_ + C_ * c2p) * 2  # weights (counted double-buffered: safe)
        bia = 2 * (C_ + c2p) * 4
        out = 2 * bt * c2p * 4             # double-buffered f32 output blocks
        return act + xin + wgt + bia + out

    bt = max(1, min(B, max(1, row_cap // max(HWp, 1))))
    while bt > 1 and footprint(bt) > budget:
        bt -= 1
    if force_two_steps and B >= 2:          # only on v7x (2 TensorCores)
        bt = min(bt, pl.cdiv(B, 2))
    return bt


# --------------------------------------------------------------------------- #
# Kernel
# --------------------------------------------------------------------------- #
def _silu(h, *, bf16_eup):
    """SiLU via tanh: sigmoid(x) = 0.5*(1+tanh(x/2)) -> one EUP push (no exp+recip)."""
    half = h * 0.5
    if bf16_eup:
        t = jnp.tanh(half.astype(jnp.bfloat16)).astype(jnp.float32)
    else:
        t = jnp.tanh(half)
    return half + half * t                 # == h * sigmoid(h)


def _classify_kernel(x_ref, w1_ref, b1_ref, w2_ref, b2_ref, out_ref, *,
                     bt, hwp, inv_hw, n_pad, bf16_eup):
    """Fused 1x1-conv(+BN) + SiLU + global-avg-pool + linear + softmax.

    x_ref:  (bt*hwp, c1)  bf16 channels-last rows of bt images (hwp % 8 == 0)
    w1_ref: (c1, C_)      bf16 BN-folded conv weight
    b1_ref: (1, C_)       f32  BN-folded conv bias
    w2_ref: (C_, c2p)     bf16 linear weight (transposed, class-padded to 128k)
    b2_ref: (1, c2p)      f32  linear bias (padded classes get -1e30)
    out_ref:(1, bt, c2p)  f32  softmax probabilities
    """
    # 1x1 conv (+ folded BN): one fat MXU matmul, f32 accumulation.
    h = jnp.dot(x_ref[...], w1_ref[...],
                preferred_element_type=jnp.float32) + b1_ref[...]   # (bt*hwp, C_)
    h = _silu(h, bf16_eup=bf16_eup)

    # Global average pool per image.  hwp % 8 == 0 -> reshape is layout-free.
    sums = jnp.sum(h.reshape(bt, hwp, -1), axis=1)                  # (bt, C_)
    if n_pad:
        # Zero-padded spatial rows contribute exactly silu(b1) each -> subtract.
        sums = sums - n_pad * _silu(b1_ref[...], bf16_eup=bf16_eup)
    pooled = sums * inv_hw                                          # (bt, C_)

    # Linear head (bf16 MXU inputs, f32 accumulation + bias).
    logits = jnp.dot(pooled.astype(jnp.bfloat16), w2_ref[...],
                     preferred_element_type=jnp.float32) + b2_ref[...]  # (bt, c2p)

    # Softmax over classes (padded columns contribute exp(-1e30) == 0).
    m = jnp.max(logits, axis=-1, keepdims=True)
    e = jnp.exp(logits - m)
    d = jnp.sum(e, axis=-1, keepdims=True)
    r = pl.reciprocal(d, approx=True)
    r = r * (2.0 - d * r)                   # one Newton step -> ~f32 accuracy
    out_ref[0] = (e * r).astype(out_ref.dtype)


# --------------------------------------------------------------------------- #
# Wrapper
# --------------------------------------------------------------------------- #
def classify_forward(x, conv_w, bn_gamma, bn_beta, bn_mean, bn_var,
                     lin_w, lin_b, *, bn_eps=1e-3):
    """Pallas implementation of Classify.forward (eval mode -> softmax output).

    x:       (B, c1, H, W) NCHW float32, or a list of such (concatenated on C)
    conv_w:  (C_, c1, 1, 1)  1x1 conv weight (bias=False, as in ultralytics Conv)
    bn_*:    (C_,)           BatchNorm2d params / running stats
    lin_w:   (c2, C_)        Linear weight
    lin_b:   (c2,)           Linear bias
    returns: (B, c2) float32 softmax probabilities
    """
    if isinstance(x, (list, tuple)):
        x = jnp.concatenate(x, axis=1)

    B, c1, H, W = x.shape
    C_ = conv_w.shape[0]
    c2 = lin_w.shape[0]
    HW = H * W
    HWp = pl.cdiv(HW, 8) * 8        # pad spatial rows -> layout-free in-kernel reshape
    n_pad = HWp - HW

    gen = _tpu_generation()
    bf16_eup = gen >= 6             # bf16 EUP/VPU only on v6e / v7x
    tile_budget, vmem_limit, row_cap = _vmem_plan(gen)

    # --- fold eval-mode BatchNorm into the 1x1 conv (exact, f32 math) -------
    scale = bn_gamma / jnp.sqrt(bn_var + bn_eps)                     # (C_,)
    w1 = (conv_w[:, :, 0, 0] * scale[:, None]).T.astype(jnp.bfloat16)  # (c1, C_)
    b1 = (bn_beta - bn_mean * scale)[None, :].astype(jnp.float32)       # (1, C_)

    # --- pad classes to a lane-dense multiple of 128 --------------------------
    c2p = pl.cdiv(c2, 128) * 128
    w2 = (jnp.zeros((C_, c2p), jnp.float32).at[:, :c2].set(lin_w.T)
          .astype(jnp.bfloat16))                                     # (C_, c2p)
    b2 = jnp.full((1, c2p), _NEG_BIG, jnp.float32).at[:, :c2].set(lin_b)

    # NCHW -> channels-last, casting to bf16 *before* the layout copy so the
    # transpose moves half the bytes.
    # TODO(synk): in a fused deployment the producer should emit channels-last
    # activations (or fuse cast+transpose upstream) so this extra HBM pass
    # over x disappears entirely.
    x_cl = jnp.transpose(x.astype(jnp.bfloat16), (0, 2, 3, 1)).reshape(B, HW, c1)
    if n_pad:
        x_cl = jnp.pad(x_cl, ((0, 0), (0, n_pad), (0, 0)))  # zero rows, corrected in-kernel

    # --- batch tiling ----------------------------------------------------------
    Bt = _pick_batch_tile(B, HWp, C_, c1, c2p, tile_budget, row_cap,
                          force_two_steps=(gen >= 7))
    nb = pl.cdiv(B, Bt)
    Bp = nb * Bt
    if Bp != B:  # pad batch with zero images (results sliced off below)
        x_cl = jnp.pad(x_cl, ((0, Bp - B), (0, 0), (0, 0)))
    x2d = x_cl.reshape(Bp * HWp, c1)      # free reshape: image rows are contiguous

    kernel = functools.partial(_classify_kernel, bt=Bt, hwp=HWp,
                               inv_hw=1.0 / HW, n_pad=n_pad, bf16_eup=bf16_eup)

    def _run(single_buffer_weights):
        if single_buffer_weights:
            # Grid-invariant operands: constant index_map -> DMA'd once; request
            # single buffering to reclaim VMEM for a larger batch tile.
            def const(shape):
                return pl.BlockSpec(shape, lambda b: (0,) * len(shape),
                                    pipeline_mode=pl.Buffered(1))
        else:
            def const(shape):
                return pl.BlockSpec(shape, lambda b: (0,) * len(shape))

        in_specs = [
            pl.BlockSpec((Bt * HWp, c1), lambda b: (b, 0)),
            const((c1, C_)),
            const((1, C_)),
            const((C_, c2p)),
            const((1, c2p)),
        ]
        out_specs = pl.BlockSpec((1, Bt, c2p), lambda b: (b, 0, 0))

        return pl.pallas_call(
            kernel,
            out_shape=jax.ShapeDtypeStruct((nb, Bt, c2p), jnp.float32),
            grid_spec=pltpu.PrefetchScalarGridSpec(
                num_scalar_prefetch=0,
                grid=(nb,),
                in_specs=in_specs,
                out_specs=out_specs),
            compiler_params=pltpu.CompilerParams(
                dimension_semantics=("parallel",),
                vmem_limit_bytes=vmem_limit),
        )(x2d, w1, b1, w2, b2)

    try:
        out = _run(True)          # single-buffered invariant weights (VMEM saver)
    except Exception:
        out = _run(False)         # fall back to default double-buffering

    # (nb, Bt, c2p) -> (Bp, c2p) -> strip batch/class padding.
    return out.reshape(Bp, c2p)[:B, :c2]


# --------------------------------------------------------------------------- #
# Pure-JAX reference & demo
# --------------------------------------------------------------------------- #
def _reference(x, conv_w, bn_gamma, bn_beta, bn_mean, bn_var, lin_w, lin_b,
               bn_eps=1e-3):
    """Pure-JAX f32 reference of the same forward, for validation."""
    B, c1, H, W = x.shape
    scale = bn_gamma / jnp.sqrt(bn_var + bn_eps)
    w1 = (conv_w[:, :, 0, 0] * scale[:, None]).T
    b1 = bn_beta - bn_mean * scale
    xc = jnp.transpose(x, (0, 2, 3, 1)).reshape(B, H * W, c1)
    h = xc @ w1 + b1
    h = h * jax.nn.sigmoid(h)
    pooled = jnp.mean(h, axis=1)
    logits = pooled @ lin_w.T + lin_b
    return jax.nn.softmax(logits, axis=1)


if __name__ == "__main__":
    # Small deterministic configuration consistent with the module.
    B, c1, H, W = 2, 4, 16, 16
    C_ = 1280            # hidden width fixed by the module (c_ = 1280)
    c2 = 10              # number of classes

    key = jax.random.PRNGKey(0)
    ks = jax.random.split(key, 8)
    x = jax.random.normal(ks[0], (B, c1, H, W), dtype=jnp.float32)
    conv_w = 0.1 * jax.random.normal(ks[1], (C_, c1, 1, 1), dtype=jnp.float32)
    bn_gamma = 1.0 + 0.05 * jax.random.normal(ks[2], (C_,), dtype=jnp.float32)
    bn_beta = 0.05 * jax.random.normal(ks[3], (C_,), dtype=jnp.float32)
    bn_mean = 0.05 * jax.random.normal(ks[4], (C_,), dtype=jnp.float32)
    bn_var = jnp.abs(1.0 + 0.05 * jax.random.normal(ks[5], (C_,), dtype=jnp.float32))
    lin_w = 0.02 * jax.random.normal(ks[6], (c2, C_), dtype=jnp.float32)
    lin_b = 0.02 * jax.random.normal(ks[7], (c2,), dtype=jnp.float32)

    out = classify_forward(x, conv_w, bn_gamma, bn_beta, bn_mean, bn_var,
                           lin_w, lin_b)
    out = jax.block_until_ready(out)

    ref = _reference(x, conv_w, bn_gamma, bn_beta, bn_mean, bn_var, lin_w, lin_b)
    assert out.shape == (B, c2)
    assert jnp.allclose(jnp.sum(out, axis=1), 1.0, atol=1e-4)
    # bf16 matmul operands / tanh-form SiLU -> small drift vs f32 reference.
    assert jnp.allclose(out, ref, atol=2e-2, rtol=2e-2)

    print("KERNEL_OK")
</pallas_src>

<mosaic_0001>
module attributes {stable_mosaic.version = 11 : i64} {
  func.func @_classify_kernel(%arg0: i32, %arg1: memref<512x4xbf16, #tpu.memory_space<vmem>>, %arg2: memref<4x1280xbf16, #tpu.memory_space<vmem>>, %arg3: memref<1x1280xf32, #tpu.memory_space<vmem>>, %arg4: memref<1280x128xbf16, #tpu.memory_space<vmem>>, %arg5: memref<1x128xf32, #tpu.memory_space<vmem>>, %arg6: memref<1x2x128xf32, #tpu.memory_space<vmem>>) attributes {dimension_semantics = [#tpu.dimension_semantics<parallel>], iteration_bounds = array<i64: 1>, scalar_prefetch = 0 : i64, scratch_operands = 0 : i64, tpu.core_type = #tpu.core_type<tc>, window_params = [{transform_indices = @transform_0, window_bounds = array<i64: 512, 4>}, {pipeline_mode = #tpu.pipeline_mode<synchronous>, transform_indices = @transform_1, window_bounds = array<i64: 4, 1280>}, {pipeline_mode = #tpu.pipeline_mode<synchronous>, transform_indices = @transform_2, window_bounds = array<i64: 1, 1280>}, {pipeline_mode = #tpu.pipeline_mode<synchronous>, transform_indices = @transform_3, window_bounds = array<i64: 1280, 128>}, {pipeline_mode = #tpu.pipeline_mode<synchronous>, transform_indices = @transform_4, window_bounds = array<i64: 1, 128>}, {transform_indices = @transform_5, window_bounds = array<i64: 1, 2, 128>}]} {
    %c0 = arith.constant 0 : index
    %c0_0 = arith.constant 0 : index
    %0 = vector.load %arg1[%c0, %c0_0] : memref<512x4xbf16, #tpu.memory_space<vmem>>, vector<512x4xbf16>
    %c0_1 = arith.constant 0 : index
    %c0_2 = arith.constant 0 : index
    %1 = vector.load %arg2[%c0_1, %c0_2] : memref<4x1280xbf16, #tpu.memory_space<vmem>>, vector<4x1280xbf16>
    %cst = arith.constant dense<0.000000e+00> : vector<512x1280xf32>
    %2 = tpu.matmul %0, %1, %cst {dimension_numbers = #tpu.dot_dimension_numbers<[1], [0], [0], [1], [0, 0, 1, 1], [], []>} : vector<512x4xbf16>, vector<4x1280xbf16>, vector<512x1280xf32> -> vector<512x1280xf32>
    %c0_3 = arith.constant 0 : index
    %c0_4 = arith.constant 0 : index
    %3 = vector.load %arg3[%c0_3, %c0_4] : memref<1x1280xf32, #tpu.memory_space<vmem>>, vector<1x1280xf32>
    %4 = vector.broadcast %3 : vector<1x1280xf32> to vector<512x1280xf32>
    %5 = arith.addf %2, %4 : vector<512x1280xf32>
    %cst_5 = arith.constant 5.000000e-01 : f32
    %6 = vector.broadcast %cst_5 : f32 to vector<512x1280xf32>
    %7 = arith.mulf %5, %6 : vector<512x1280xf32>
    %8 = math.tanh %7 : vector<512x1280xf32>
    %9 = arith.mulf %7, %8 : vector<512x1280xf32>
    %10 = arith.addf %7, %9 : vector<512x1280xf32>
    %11 = vector.shape_cast %10 : vector<512x1280xf32> to vector<2x256x1280xf32>
    %cst_6 = arith.constant dense<0.000000e+00> : vector<2x1280xf32>
    %12 = vector.multi_reduction <add>, %11, %cst_6 [1] : vector<2x256x1280xf32> to vector<2x1280xf32>
    %cst_7 = arith.constant 3.906250e-03 : f32
    %13 = vector.broadcast %cst_7 : f32 to vector<2x1280xf32>
    %14 = arith.mulf %12, %13 : vector<2x1280xf32>
    %15 = arith.truncf %14 : vector<2x1280xf32> to vector<2x1280xbf16>
    %c0_8 = arith.constant 0 : index
    %c0_9 = arith.constant 0 : index
    %16 = vector.load %arg4[%c0_8, %c0_9] : memref<1280x128xbf16, #tpu.memory_space<vmem>>, vector<1280x128xbf16>
    %cst_10 = arith.constant dense<0.000000e+00> : vector<2x128xf32>
    %17 = tpu.matmul %15, %16, %cst_10 {dimension_numbers = #tpu.dot_dimension_numbers<[1], [0], [0], [1], [0, 0, 1, 1], [], []>} : vector<2x1280xbf16>, vector<1280x128xbf16>, vector<2x128xf32> -> vector<2x128xf32>
    %c0_11 = arith.constant 0 : index
    %c0_12 = arith.constant 0 : index
    %18 = vector.load %arg5[%c0_11, %c0_12] : memref<1x128xf32, #tpu.memory_space<vmem>>, vector<1x128xf32>
    %19 = vector.broadcast %18 : vector<1x128xf32> to vector<2x128xf32>
    %20 = arith.addf %17, %19 : vector<2x128xf32>
    %cst_13 = arith.constant dense<0xFF800000> : vector<2xf32>
    %21 = vector.multi_reduction <maximumf>, %20, %cst_13 [1] : vector<2x128xf32> to vector<2xf32>
    %22 = vector.shape_cast %21 : vector<2xf32> to vector<2x1xf32>
    %23 = vector.broadcast %22 : vector<2x1xf32> to vector<2x128xf32>
    %24 = arith.subf %20, %23 : vector<2x128xf32>
    %25 = math.exp %24 : vector<2x128xf32>
    %cst_14 = arith.constant dense<0.000000e+00> : vector<2xf32>
    %26 = vector.multi_reduction <add>, %25, %cst_14 [1] : vector<2x128xf32> to vector<2xf32>
    %27 = vector.shape_cast %26 : vector<2xf32> to vector<2x1xf32>
    %28 = tpu.reciprocal %27 {approx = true} : vector<2x1xf32> -> vector<2x1xf32>
    %29 = arith.mulf %27, %28 : vector<2x1xf32>
    %cst_15 = arith.constant 2.000000e+00 : f32
    %30 = vector.broadcast %cst_15 : f32 to vector<2x1xf32>
    %31 = arith.subf %30, %29 : vector<2x1xf32>
    %32 = arith.mulf %28, %31 : vector<2x1xf32>
    %33 = vector.broadcast %32 : vector<2x1xf32> to vector<2x128xf32>
    %34 = arith.mulf %25, %33 : vector<2x128xf32>
    %c0_16 = arith.constant 0 : index
    %c0_17 = arith.constant 0 : index
    %c0_18 = arith.constant 0 : index
    %35 = vector.load %arg6[%c0_16, %c0_17, %c0_18] : memref<1x2x128xf32, #tpu.memory_space<vmem>>, vector<1x2x128xf32>
    %36 = vector.shape_cast %35 : vector<1x2x128xf32> to vector<2x128xf32>
    %37 = vector.shape_cast %34 : vector<2x128xf32> to vector<1x2x128xf32>
    tpu.vector_store %arg6[%c0_16, %c0_17, %c0_18], %37 {strides = array<i32>} : memref<1x2x128xf32, #tpu.memory_space<vmem>>, vector<1x2x128xf32>,
    return
  }
  func.func @transform_0(%arg0: i32) -> (i32, i32) {
    %c0_i32 = arith.constant 0 : i32
    %c0_i32_0 = arith.constant 0 : i32
    return %arg0, %c0_i32 : i32, i32
  }
  func.func @transform_1(%arg0: i32) -> (i32, i32) {
    %c0_i32 = arith.constant 0 : i32
    %c0_i32_0 = arith.constant 0 : i32
    %c0_i32_1 = arith.constant 0 : i32
    return %c0_i32, %c0_i32_0 : i32, i32
  }
  func.func @transform_2(%arg0: i32) -> (i32, i32) {
    %c0_i32 = arith.constant 0 : i32
    %c0_i32_0 = arith.constant 0 : i32
    %c0_i32_1 = arith.constant 0 : i32
    return %c0_i32, %c0_i32_0 : i32, i32
  }
  func.func @transform_3(%arg0: i32) -> (i32, i32) {
    %c0_i32 = arith.constant 0 : i32
    %c0_i32_0 = arith.constant 0 : i32
    %c0_i32_1 = arith.constant 0 : i32
    return %c0_i32, %c0_i32_0 : i32, i32
  }
  func.func @transform_4(%arg0: i32) -> (i32, i32) {
    %c0_i32 = arith.constant 0 : i32
    %c0_i32_0 = arith.constant 0 : i32
    %c0_i32_1 = arith.constant 0 : i32
    return %c0_i32, %c0_i32_0 : i32, i32
  }
  func.func @transform_5(%arg0: i32) -> (i32, i32, i32) {
    %c0_i32 = arith.constant 0 : i32
    %c0_i32_0 = arith.constant 0 : i32
    %c0_i32_1 = arith.constant 0 : i32
    return %arg0, %c0_i32, %c0_i32_0 : i32, i32, i32
  }
}

module attributes {stable_mosaic.version = 11 : i64} {
  func.func @_classify_kernel(%arg0: i32, %arg1: memref<512x4xbf16, #tpu.memory_space<vmem>>, %arg2: memref<4x1280xbf16, #tpu.memory_space<vmem>>, %arg3: memref<1x1280xf32, #tpu.memory_space<vmem>>, %arg4: memref<1280x128xbf16, #tpu.memory_space<vmem>>, %arg5: memref<1x128xf32, #tpu.memory_space<vmem>>, %arg6: memref<1x2x128xf32, #tpu.memory_space<vmem>>) attributes {dimension_semantics = [#tpu.dimension_semantics<parallel>], iteration_bounds = array<i64: 1>, scalar_prefetch = 0 : i64, scratch_operands = 0 : i64, tpu.core_type = #tpu.core_type<tc>, window_params = [{transform_indices = @transform_0, window_bounds = array<i64: 512, 4>}, {pipeline_mode = #tpu.pipeline_mode<synchronous>, transform_indices = @transform_1, window_bounds = array<i64: 4, 1280>}, {pipeline_mode = #tpu.pipeline_mode<synchronous>, transform_indices = @transform_2, window_bounds = array<i64: 1, 1280>}, {pipeline_mode = #tpu.pipeline_mode<synchronous>, transform_indices = @transform_3, window_bounds = array<i64: 1280, 128>}, {pipeline_mode = #tpu.pipeline_mode<synchronous>, transform_indices = @transform_4, window_bounds = array<i64: 1, 128>}, {transform_indices = @transform_5, window_bounds = array<i64: 1, 2, 128>}]} {
    %c0 = arith.constant 0 : index
    %c0_0 = arith.constant 0 : index
    %0 = vector.load %arg1[%c0, %c0_0] : memref<512x4xbf16, #tpu.memory_space<vmem>>, vector<512x4xbf16>
    %c0_1 = arith.constant 0 : index
    %c0_2 = arith.constant 0 : index
    %1 = vector.load %arg2[%c0_1, %c0_2] : memref<4x1280xbf16, #tpu.memory_space<vmem>>, vector<4x1280xbf16>
    %cst = arith.constant dense<0.000000e+00> : vector<512x1280xf32>
    %2 = tpu.matmul %0, %1, %cst {dimension_numbers = #tpu.dot_dimension_numbers<[1], [0], [0], [1], [0, 0, 1, 1], [], []>} : vector<512x4xbf16>, vector<4x1280xbf16>, vector<512x1280xf32> -> vector<512x1280xf32>
    %c0_3 = arith.constant 0 : index
    %c0_4 = arith.constant 0 : index
    %3 = vector.load %arg3[%c0_3, %c0_4] : memref<1x1280xf32, #tpu.memory_space<vmem>>, vector<1x1280xf32>
    %4 = vector.broadcast %3 : vector<1x1280xf32> to vector<512x1280xf32>
    %5 = arith.addf %2, %4 : vector<512x1280xf32>
    %cst_5 = arith.constant 5.000000e-01 : f32
    %6 = vector.broadcast %cst_5 : f32 to vector<512x1280xf32>
    %7 = arith.mulf %5, %6 : vector<512x1280xf32>
    %8 = math.tanh %7 : vector<512x1280xf32>
    %9 = arith.mulf %7, %8 : vector<512x1280xf32>
    %10 = arith.addf %7, %9 : vector<512x1280xf32>
    %11 = vector.shape_cast %10 : vector<512x1280xf32> to vector<2x256x1280xf32>
    %cst_6 = arith.constant dense<0.000000e+00> : vector<2x1280xf32>
    %12 = vector.multi_reduction <add>, %11, %cst_6 [1] : vector<2x256x1280xf32> to vector<2x1280xf32>
    %cst_7 = arith.constant 3.906250e-03 : f32
    %13 = vector.broadcast %cst_7 : f32 to vector<2x1280xf32>
    %14 = arith.mulf %12, %13 : vector<2x1280xf32>
    %15 = arith.truncf %14 : vector<2x1280xf32> to vector<2x1280xbf16>
    %c0_8 = arith.constant 0 : index
    %c0_9 = arith.constant 0 : index
    %16 = vector.load %arg4[%c0_8, %c0_9] : memref<1280x128xbf16, #tpu.memory_space<vmem>>, vector<1280x128xbf16>
    %cst_10 = arith.constant dense<0.000000e+00> : vector<2x128xf32>
    %17 = tpu.matmul %15, %16, %cst_10 {dimension_numbers = #tpu.dot_dimension_numbers<[1], [0], [0], [1], [0, 0, 1, 1], [], []>} : vector<2x1280xbf16>, vector<1280x128xbf16>, vector<2x128xf32> -> vector<2x128xf32>
    %c0_11 = arith.constant 0 : index
    %c0_12 = arith.constant 0 : index
    %18 = vector.load %arg5[%c0_11, %c0_12] : memref<1x128xf32, #tpu.memory_space<vmem>>, vector<1x128xf32>
    %19 = vector.broadcast %18 : vector<1x128xf32> to vector<2x128xf32>
    %20 = arith.addf %17, %19 : vector<2x128xf32>
    %cst_13 = arith.constant dense<0xFF800000> : vector<2xf32>
    %21 = vector.multi_reduction <maximumf>, %20, %cst_13 [1] : vector<2x128xf32> to vector<2xf32>
    %22 = vector.shape_cast %21 : vector<2xf32> to vector<2x1xf32>
    %23 = vector.broadcast %22 : vector<2x1xf32> to vector<2x128xf32>
    %24 = arith.subf %20, %23 : vector<2x128xf32>
    %25 = math.exp %24 : vector<2x128xf32>
    %cst_14 = arith.constant dense<0.000000e+00> : vector<2xf32>
    %26 = vector.multi_reduction <add>, %25, %cst_14 [1] : vector<2x128xf32> to vector<2xf32>
    %27 = vector.shape_cast %26 : vector<2xf32> to vector<2x1xf32>
    %28 = tpu.reciprocal %27 {approx = true} : vector<2x1xf32> -> vector<2x1xf32>
    %29 = arith.mulf %27, %28 : vector<2x1xf32>
    %cst_15 = arith.constant 2.000000e+00 : f32
    %30 = vector.broadcast %cst_15 : f32 to vector<2x1xf32>
    %31 = arith.subf %30, %29 : vector<2x1xf32>
    %32 = arith.mulf %28, %31 : vector<2x1xf32>
    %33 = vector.broadcast %32 : vector<2x1xf32> to vector<2x128xf32>
    %34 = arith.mulf %25, %33 : vector<2x128xf32>
    %c0_16 = arith.constant 0 : index
    %c0_17 = arith.constant 0 : index
    %c0_18 = arith.constant 0 : index
    %35 = vector.load %arg6[%c0_16, %c0_17, %c0_18] : memref<1x2x128xf32, #tpu.memory_space<vmem>>, vector<1x2x128xf32>
    %36 = vector.shape_cast %35 : vector<1x2x128xf32> to vector<2x128xf32>
    %37 = vector.shape_cast %34 : vector<2x128xf32> to vector<1x2x128xf32>
    tpu.vector_store %arg6[%c0_16, %c0_17, %c0_18], %37 {strides = array<i32>} : memref<1x2x128xf32, #tpu.memory_space<vmem>>, vector<1x2x128xf32>,
    return
  }
  func.func @transform_0(%arg0: i32) -> (i32, i32) {
    %c0_i32 = arith.constant 0 : i32
    %c0_i32_0 = arith.constant 0 : i32
    return %arg0, %c0_i32 : i32, i32
  }
  func.func @transform_1(%arg0: i32) -> (i32, i32) {
    %c0_i32 = arith.constant 0 : i32
    %c0_i32_0 = arith.constant 0 : i32
    %c0_i32_1 = arith.constant 0 : i32
    return %c0_i32, %c0_i32_0 : i32, i32
  }
  func.func @transform_2(%arg0: i32) -> (i32, i32) {
    %c0_i32 = arith.constant 0 : i32
    %c0_i32_0 = arith.constant 0 : i32
    %c0_i32_1 = arith.constant 0 : i32
    return %c0_i32, %c0_i32_0 : i32, i32
  }
  func.func @transform_3(%arg0: i32) -> (i32, i32) {
    %c0_i32 = arith.constant 0 : i32
    %c0_i32_0 = arith.constant 0 : i32
    %c0_i32_1 = arith.constant 0 : i32
    return %c0_i32, %c0_i32_0 : i32, i32
  }
  func.func @transform_4(%arg0: i32) -> (i32, i32) {
    %c0_i32 = arith.constant 0 : i32
    %c0_i32_0 = arith.constant 0 : i32
    %c0_i32_1 = arith.constant 0 : i32
    return %c0_i32, %c0_i32_0 : i32, i32
  }
  func.func @transform_5(%arg0: i32) -> (i32, i32, i32) {
    %c0_i32 = arith.constant 0 : i32
    %c0_i32_0 = arith.constant 0 : i32
    %c0_i32_1 = arith.constant 0 : i32
    return %arg0, %c0_i32, %c0_i32_0 : i32, i32, i32
  }
}

</mosaic_0001>

<llo_original>
// kernel: tpu_custom_call.1
$region0: #{tpu_custom_call.1}
  #allocation0 [shape = 'u32[]', space=smem, size = 0x4, offset = 0x4, fixed_abs, tag = 'smem constant byte address 0x4 - core index']
  #allocation1 [shape = 'u32[72,128]{1,0:T(1,128)}', space=vmem, size = 0x9000, scoped, tag = 'internal scratch']
  %s0 = inlined_call_operand.vmem [shape: bf16[512,4], index: 0, kind: input, shape index: {}]
  %s1 = inlined_call_operand.vmem [shape: bf16[4,1280], index: 1, kind: input, shape index: {}]
  %s2 = inlined_call_operand.vmem [shape: f32[1,1280], index: 2, kind: input, shape index: {}]
  %s3 = inlined_call_operand.hbm [shape: bf16[1280,128], index: 3, kind: input, shape index: {}]
  %s4 = inlined_call_operand.vmem [shape: f32[1,128], index: 4, kind: input, shape index: {}]
  %s5 = inlined_call_operand.hbm [shape: f32[1,2,128], index: 5, kind: output, shape index: {}]
  %s6 = sld [smem:[#allocation0]]
  $region34: #{tpu_custom_call.1} parent=0
    _
  %s8 = ssub.s32 1, %s6
  %s9 = scalar_select 0, %s8, %s6
  $region1: #{tpu_custom_call.1} parent=0
    #allocation2 [shape = 'u8[327680]{0}', space=vmem, size = 0x50000, scoped, tag = 'input window, operand 3, single buffered']
    #allocation3 [shape = 's32[1]{0}', space=sflag, size = 0x4, scoped, tag = 'scoped memory for tpu_custom_call.1']
    #allocation4 [shape = 's32[1]{0}', space=sflag, size = 0x4, scoped, tag = 'scoped memory for tpu_custom_call.1']
    #allocation5 [shape = 'u8[1024]{0}', space=vmem, size = 0x400, scoped, tag = 'output window, operand 0, single buffered']
    %10 = vsyncpa [#allocation3], 0
    %11 = vsyncpa [#allocation4], 0
    // Predicated region
    $region2: #{tpu_custom_call.1} parent=1 // pred_check
      _
    $region3: #{tpu_custom_call.1} parent=1 // pred_check_branch
      %13 = sbr.rel (0) target = $region5
    $region4: #{tpu_custom_call.1} parent=1 // pred_region
      _
    $region5: #{tpu_custom_call.1} parent=1 // pred_fallthru
      _
    // Predicated region
    $region6: #{tpu_custom_call.1} parent=1 // pred_check
      _
    $region7: #{tpu_custom_call.1} parent=1 // pred_check_branch
      %15 = sbr.rel (0) target = $region9
    $region8: #{tpu_custom_call.1} parent=1 // pred_region
      _
    $region9: #{tpu_custom_call.1} parent=1 // pred_fallthru
      _
    // Predicated region
    $region10: #{tpu_custom_call.1} parent=1 // pred_check
      _
    $region11: #{tpu_custom_call.1} parent=1 // pred_check_branch
      %17 = sbr.rel (0) target = $region13
    $region12: #{tpu_custom_call.1} parent=1 // pred_region
      _
    $region13: #{tpu_custom_call.1} parent=1 // pred_fallthru
      _
    // Predicated region
    $region14: #{tpu_custom_call.1} parent=1 // pred_check
      _
    $region15: #{tpu_custom_call.1} parent=1 // pred_check_branch
      %19 = sbr.rel (0) target = $region17
    $region16: #{tpu_custom_call.1} parent=1 // pred_region
      %21 = vsyncadd [#allocation3], 0
      %s22 = sshll.u32 %s3, 4
      %s23 = int_to_ptr.hbm [resolvable:$true] %s22
      %s24 = sshll.u32 [#allocation2], 4
      %s25 = int_to_ptr.vmem [resolvable:$true] %s24
      %30 = dma.hbm_to_vmem [thread:$0]  %s23, 10240, %s25, [#allocation3], 64, 64, 4
    $region17: #{tpu_custom_call.1} parent=1 // pred_fallthru
      _
    // Predicated region
    $region18: #{tpu_custom_call.1} parent=1 // pred_check
      _
    $region19: #{tpu_custom_call.1} parent=1 // pred_check_branch
      %32 = sbr.rel (0) target = $region21
    $region20: #{tpu_custom_call.1} parent=1 // pred_region
      _
    $region21: #{tpu_custom_call.1} parent=1 // pred_fallthru
      _
    // Predicated region
    $region22: #{tpu_custom_call.1} parent=1 // pred_check
      _
    $region23: #{tpu_custom_call.1} parent=1 // pred_check_branch
      %34 = sbr.rel (0) target = $region25
    $region24: #{tpu_custom_call.1} parent=1 // pred_region
      %36 = dma.done [#allocation3], 10240
    $region25: #{tpu_custom_call.1} parent=1 // pred_fallthru
      _
    %v38 = vld [vmem:[%s0] sm:$0xf]
    %v39 = vld [vmem:[%s0 + $0x4] sm:$0xf]
    %v40 = vld [vmem:[%s0 + $0x8] sm:$0xf]
    %v41 = vld [vmem:[%s0 + $0xc] sm:$0xf]
    %v42 = vld [vmem:[%s0 + $0x10] sm:$0xf]
    %v43 = vld [vmem:[%s0 + $0x14] sm:$0xf]
    %v44 = vld [vmem:[%s0 + $0x18] sm:$0xf]
    %v45 = vld [vmem:[%s0 + $0x1c] sm:$0xf]
    %v46 = vld [vmem:[%s0 + $0x20] sm:$0xf]
    %v47 = vld [vmem:[%s0 + $0x24] sm:$0xf]
    %v48 = vld [vmem:[%s0 + $0x28] sm:$0xf]
    %v49 = vld [vmem:[%s0 + $0x2c] sm:$0xf]
    %v50 = vld [vmem:[%s0 + $0x30] sm:$0xf]
    %v51 = vld [vmem:[%s0 + $0x34] sm:$0xf]
    %v52 = vld [vmem:[%s0 + $0x38] sm:$0xf]
    %v53 = vld [vmem:[%s0 + $0x3c] sm:$0xf]
    %v54 = vld [vmem:[%s0 + $0x40] sm:$0xf]
    %v55 = vld [vmem:[%s0 + $0x44] sm:$0xf]
    %v56 = vld [vmem:[%s0 + $0x48] sm:$0xf]
    %v57 = vld [vmem:[%s0 + $0x4c] sm:$0xf]
    %v58 = vld [vmem:[%s0 + $0x50] sm:$0xf]
    %v59 = vld [vmem:[%s0 + $0x54] sm:$0xf]
    %v60 = vld [vmem:[%s0 + $0x58] sm:$0xf]
    %v61 = vld [vmem:[%s0 + $0x5c] sm:$0xf]
    %v62 = vld [vmem:[%s0 + $0x60] sm:$0xf]
    %v63 = vld [vmem:[%s0 + $0x64] sm:$0xf]
    %v64 = vld [vmem:[%s0 + $0x68] sm:$0xf]
    %v65 = vld [vmem:[%s0 + $0x6c] sm:$0xf]
    %v66 = vld [vmem:[%s0 + $0x70] sm:$0xf]
    %v67 = vld [vmem:[%s0 + $0x74] sm:$0xf]
    %v68 = vld [vmem:[%s0 + $0x78] sm:$0xf]
    %v69 = vld [vmem:[%s0 + $0x7c] sm:$0xf]
    %v70 = vld [vmem:[%s0 + $0x80] sm:$0xf]
    %v71 = vld [vmem:[%s0 + $0x84] sm:$0xf]
    %v72 = vld [vmem:[%s0 + $0x88] sm:$0xf]
    %v73 = vld [vmem:[%s0 + $0x8c] sm:$0xf]
    %v74 = vld [vmem:[%s0 + $0x90] sm:$0xf]
    %v75 = vld [vmem:[%s0 + $0x94] sm:$0xf]
    %v76 = vld [vmem:[%s0 + $0x98] sm:$0xf]
    %v77 = vld [vmem:[%s0 + $0x9c] sm:$0xf]
    %v78 = vld [vmem:[%s0 + $0xa0] sm:$0xf]
    %v79 = vld [vmem:[%s0 + $0xa4] sm:$0xf]
    %v80 = vld [vmem:[%s0 + $0xa8] sm:$0xf]
    %v81 = vld [vmem:[%s0 + $0xac] sm:$0xf]
    %v82 = vld [vmem:[%s0 + $0xb0] sm:$0xf]
    %v83 = vld [vmem:[%s0 + $0xb4] sm:$0xf]
    %v84 = vld [vmem:[%s0 + $0xb8] sm:$0xf]
    %v85 = vld [vmem:[%s0 + $0xbc] sm:$0xf]
    %v86 = vld [vmem:[%s0 + $0xc0] sm:$0xf]
    %v87 = vld [vmem:[%s0 + $0xc4] sm:$0xf]
    %v88 = vld [vmem:[%s0 + $0xc8] sm:$0xf]
    %v89 = vld [vmem:[%s0 + $0xcc] sm:$0xf]
    %v90 = vld [vmem:[%s0 + $0xd0] sm:$0xf]
    %v91 = vld [vmem:[%s0 + $0xd4] sm:$0xf]
    %v92 = vld [vmem:[%s0 + $0xd8] sm:$0xf]
    %v93 = vld [vmem:[%s0 + $0xdc] sm:$0xf]
    %v94 = vld [vmem:[%s0 + $0xe0] sm:$0xf]
    %v95 = vld [vmem:[%s0 + $0xe4] sm:$0xf]
    %v96 = vld [vmem:[%s0 + $0xe8] sm:$0xf]
    %v97 = vld [vmem:[%s0 + $0xec] sm:$0xf]
    %v98 = vld [vmem:[%s0 + $0xf0] sm:$0xf]
    %v99 = vld [vmem:[%s0 + $0xf4] sm:$0xf]
    %v100 = vld [vmem:[%s0 + $0xf8] sm:$0xf]
    %v101 = vld [vmem:[%s0 + $0xfc] sm:$0xf]
    %v102 = vld [vmem:[%s1] sm:$0xff]
    %v103 = vld [vmem:[%s1 + $0x8] sm:$0xff]
    %v104 = vld [vmem:[%s1 + $0x10] sm:$0xf]
    %v105 = vld [vmem:[%s2] sm:$0xff]
    %v106 = vld [vmem:[%s2 + $0x8] sm:$0x3]
    %v109 = vperm.slane %v105, 0
    %v110 = vperm.slane %v105, 1
    %v111 = vperm.slane %v105, 2
    %v112 = vperm.slane %v105, 3
    %v113 = vperm.slane %v105, 4
    %v114 = vperm.slane %v105, 5
    %v115 = vperm.slane %v105, 6
    %v116 = vperm.slane %v105, 7
    %v117 = vperm.slane %v106, 0
    %v118 = vperm.slane %v106, 1
    %v193 = vunpack.c.l.b16 %v38
    %v194 = vunpack.c.l.b16 %v39
    %v195 = vunpack.c.l.b16 %v40
    %v196 = vunpack.c.l.b16 %v41
    %v197 = vunpack.c.l.b16 %v42
    %v198 = vunpack.c.l.b16 %v43
    %v199 = vunpack.c.l.b16 %v44
    %v200 = vunpack.c.l.b16 %v45
    %v201 = vunpack.c.l.b16 %v46
    %v202 = vunpack.c.l.b16 %v47
    %v203 = vunpack.c.l.b16 %v48
    %v204 = vunpack.c.l.b16 %v49
    %v205 = vunpack.c.l.b16 %v50
    %v206 = vunpack.c.l.b16 %v51
    %v207 = vunpack.c.l.b16 %v52
    %v208 = vunpack.c.l.b16 %v53
    %v209 = vunpack.c.l.b16 %v54
    %v210 = vunpack.c.l.b16 %v55
    %v211 = vunpack.c.l.b16 %v56
    %v212 = vunpack.c.l.b16 %v57
    %v213 = vunpack.c.l.b16 %v58
    %v214 = vunpack.c.l.b16 %v59
    %v215 = vunpack.c.l.b16 %v60
    %v216 = vunpack.c.l.b16 %v61
    %v217 = vunpack.c.l.b16 %v62
    %v218 = vunpack.c.l.b16 %v63
    %v219 = vunpack.c.l.b16 %v64
    %v220 = vunpack.c.l.b16 %v65
    %v221 = vunpack.c.l.b16 %v66
    %v222 = vunpack.c.l.b16 %v67
    %v223 = vunpack.c.l.b16 %v68
    %v224 = vunpack.c.l.b16 %v69
    %v225 = vunpack.c.l.b16 %v70
    %v226 = vunpack.c.l.b16 %v71
    %v227 = vunpack.c.l.b16 %v72
    %v228 = vunpack.c.l.b16 %v73
    %v229 = vunpack.c.l.b16 %v74
    %v230 = vunpack.c.l.b16 %v75
    %v231 = vunpack.c.l.b16 %v76
    %v232 = vunpack.c.l.b16 %v77
    %v233 = vunpack.c.l.b16 %v78
    %v234 = vunpack.c.l.b16 %v79
    %v235 = vunpack.c.l.b16 %v80
    %v236 = vunpack.c.l.b16 %v81
    %v237 = vunpack.c.l.b16 %v82
    %v238 = vunpack.c.l.b16 %v83
    %v239 = vunpack.c.l.b16 %v84
    %v240 = vunpack.c.l.b16 %v85
    %v241 = vunpack.c.l.b16 %v86
    %v242 = vunpack.c.l.b16 %v87
    %v243 = vunpack.c.l.b16 %v88
    %v244 = vunpack.c.l.b16 %v89
    %v245 = vunpack.c.l.b16 %v90
    %v246 = vunpack.c.l.b16 %v91
    %v247 = vunpack.c.l.b16 %v92
    %v248 = vunpack.c.l.b16 %v93
    %v249 = vunpack.c.l.b16 %v94
    %v250 = vunpack.c.l.b16 %v95
    %v251 = vunpack.c.l.b16 %v96
    %v252 = vunpack.c.l.b16 %v97
    %v253 = vunpack.c.l.b16 %v98
    %v254 = vunpack.c.l.b16 %v99
    %v255 = vunpack.c.l.b16 %v100
    %v256 = vunpack.c.l.b16 %v101
    %v257 = vpack.c.b16 %v194, %v193
    %v258 = vpack.c.b16 %v196, %v195
    %v259 = vpack.c.b16 %v198, %v197
    %v260 = vpack.c.b16 %v200, %v199
    %v261 = vpack.c.b16 %v202, %v201
    %v262 = vpack.c.b16 %v204, %v203
    %v263 = vpack.c.b16 %v206, %v205
    %v264 = vpack.c.b16 %v208, %v207
    %v265 = vpack.c.b16 %v210, %v209
    %v266 = vpack.c.b16 %v212, %v211
    %v267 = vpack.c.b16 %v214, %v213
    %v268 = vpack.c.b16 %v216, %v215
    %v269 = vpack.c.b16 %v218, %v217
    %v270 = vpack.c.b16 %v220, %v219
    %v271 = vpack.c.b16 %v222, %v221
    %v272 = vpack.c.b16 %v224, %v223
    %v273 = vpack.c.b16 %v226, %v225
    %v274 = vpack.c.b16 %v228, %v227
    %v275 = vpack.c.b16 %v230, %v229
    %v276 = vpack.c.b16 %v232, %v231
    %v277 = vpack.c.b16 %v234, %v233
    %v278 = vpack.c.b16 %v236, %v235
    %v279 = vpack.c.b16 %v238, %v237
    %v280 = vpack.c.b16 %v240, %v239
    %v281 = vpack.c.b16 %v242, %v241
    %v282 = vpack.c.b16 %v244, %v243
    %v283 = vpack.c.b16 %v246, %v245
    %v284 = vpack.c.b16 %v248, %v247
    %v285 = vpack.c.b16 %v250, %v249
    %v286 = vpack.c.b16 %v252, %v251
    %v287 = vpack.c.b16 %v254, %v253
    %v288 = vpack.c.b16 %v256, %v255
    %290 = vst [vmem:[#allocation1] ss:$4 sm:$0xff] %v102
    %s292 = scalar_lea.vmem [#allocation1], 32
    %293 = vst [vmem:[%s292] ss:$4 sm:$0xff] %v103
    %v294 = vld.sshfl [vmem:[#allocation1] sm:$0xff pattern:$0x73625140]
    %v295 = vld.sshfl [vmem:[#allocation1 + $0x8] sm:$0xff pattern:$0x73625140]
    %v296 = vld.sshfl [vmem:[#allocation1 + $0x10] sm:$0xff pattern:$0x73625140]
    %v297 = vld.sshfl [vmem:[#allocation1 + $0x18] sm:$0xff pattern:$0x73625140]
    %v298 = vld.sshfl [vmem:[#allocation1 + $0x20] sm:$0xff pattern:$0x73625140]
    %v299 = vld.sshfl [vmem:[#allocation1 + $0x28] sm:$0xff pattern:$0x73625140]
    %v300 = vld.sshfl [vmem:[#allocation1 + $0x30] sm:$0xff pattern:$0x73625140]
    %v301 = vld.sshfl [vmem:[#allocation1 + $0x38] sm:$0xff pattern:$0x73625140]
    %303 = vst [vmem:[#allocation1] ss:$4 sm:$0xff] %v104
    %v304 = vld.sshfl [vmem:[#allocation1] sm:$0xff pattern:$0x73625140]
    %v305 = vld.sshfl [vmem:[#allocation1 + $0x8] sm:$0xff pattern:$0x73625140]
    %vm306 = vcmask 31744
    %v308 = vsel %vm306, %v257, 0
    %v311 = vsel %vm306, %v258, 0
    %v314 = vsel %vm306, %v259, 0
    %v317 = vsel %vm306, %v260, 0
    %v320 = vsel %vm306, %v261, 0
    %v323 = vsel %vm306, %v262, 0
    %v326 = vsel %vm306, %v263, 0
    %v329 = vsel %vm306, %v264, 0
    %v332 = vsel %vm306, %v265, 0
    %v335 = vsel %vm306, %v266, 0
    %v338 = vsel %vm306, %v267, 0
    %v341 = vsel %vm306, %v268, 0
    %v344 = vsel %vm306, %v269, 0
    %v347 = vsel %vm306, %v270, 0
    %v350 = vsel %vm306, %v271, 0
    %v353 = vsel %vm306, %v272, 0
    %v356 = vsel %vm306, %v273, 0
    %v359 = vsel %vm306, %v274, 0
    %v362 = vsel %vm306, %v275, 0
    %v365 = vsel %vm306, %v276, 0
    %v368 = vsel %vm306, %v277, 0
    %v371 = vsel %vm306, %v278, 0
    %v374 = vsel %vm306, %v279, 0
    %v377 = vsel %vm306, %v280, 0
    %v380 = vsel %vm306, %v281, 0
    %v383 = vsel %vm306, %v282, 0
    %v386 = vsel %vm306, %v283, 0
    %v389 = vsel %vm306, %v284, 0
    %v392 = vsel %vm306, %v285, 0
    %v395 = vsel %vm306, %v286, 0
    %v398 = vsel %vm306, %v287, 0
    %v401 = vsel %vm306, %v288, 0
    %vm403 = vcmask 1041408
    %v404 = vsel %vm403, %v294, 0
    %v406 = vsel %vm403, %v295, 0
    %v408 = vsel %vm403, %v296, 0
    %v410 = vsel %vm403, %v297, 0
    %v412 = vsel %vm403, %v298, 0
    %v414 = vsel %vm403, %v299, 0
    %v416 = vsel %vm403, %v300, 0
    %v418 = vsel %vm403, %v301, 0
    %v420 = vsel %vm403, %v304, 0
    %v422 = vsel %vm403, %v305, 0
    %424 = vmatpush.bf16.msra.mxu0 0
    %425 = vmatpush.bf16.msra.mxu0 0
    %426 = vmatpush.bf16.msra.mxu0 0
    %427 = vmatpush.bf16.msra.mxu0 0
    %428 = vmatpush.bf16.msra.mxu0 0
    %429 = vmatpush.bf16.msra.mxu0 0
    %430 = vmatpush.bf16.msra.mxu0 0
    %431 = vmatpush.bf16.msra.mxu0 %v404
    %432 = vmatmul.bf16.gmra.mxu0 %v308
    %v433 = vpop.f32.mrf.mxu0
    %v434 = vadd.f32 %v109, %v433
    %v435 = vpop.f32.mrf.mxu0
    %v436 = vadd.f32 %v109, %v435
    %437 = vmatmul.bf16.gmra.mxu0 %v311
    %v438 = vpop.f32.mrf.mxu0
    %v439 = vadd.f32 %v109, %v438
    %v440 = vpop.f32.mrf.mxu0
    %v441 = vadd.f32 %v109, %v440
    %442 = vmatmul.bf16.gmra.mxu0 %v314
    %v443 = vpop.f32.mrf.mxu0
    %v444 = vadd.f32 %v109, %v443
    %v445 = vpop.f32.mrf.mxu0
    %v446 = vadd.f32 %v109, %v445
    %447 = vmatmul.bf16.gmra.mxu0 %v317
    %v448 = vpop.f32.mrf.mxu0
    %v449 = vadd.f32 %v109, %v448
    %v450 = vpop.f32.mrf.mxu0
    %v451 = vadd.f32 %v109, %v450
    %452 = vmatmul.bf16.gmra.mxu0 %v320
    %v453 = vpop.f32.mrf.mxu0
    %v454 = vadd.f32 %v109, %v453
    %v455 = vpop.f32.mrf.mxu0
    %v456 = vadd.f32 %v109, %v455
    %457 = vmatmul.bf16.gmra.mxu0 %v323
    %v458 = vpop.f32.mrf.mxu0
    %v459 = vadd.f32 %v109, %v458
    %v460 = vpop.f32.mrf.mxu0
    %v461 = vadd.f32 %v109, %v460
    %462 = vmatmul.bf16.gmra.mxu0 %v326
    %v463 = vpop.f32.mrf.mxu0
    %v464 = vadd.f32 %v109, %v463
    %v465 = vpop.f32.mrf.mxu0
    %v466 = vadd.f32 %v109, %v465
    %467 = vmatmul.bf16.gmra.mxu0 %v329
    %v468 = vpop.f32.mrf.mxu0
    %v469 = vadd.f32 %v109, %v468
    %v470 = vpop.f32.mrf.mxu0
    %v471 = vadd.f32 %v109, %v470
    %472 = vmatmul.bf16.gmra.mxu0 %v332
    %v473 = vpop.f32.mrf.mxu0
    %v474 = vadd.f32 %v109, %v473
    %v475 = vpop.f32.mrf.mxu0
    %v476 = vadd.f32 %v109, %v475
    %477 = vmatmul.bf16.gmra.mxu0 %v335
    %v478 = vpop.f32.mrf.mxu0
    %v479 = vadd.f32 %v109, %v478
    %v480 = vpop.f32.mrf.mxu0
    %v481 = vadd.f32 %v109, %v480
    %482 = vmatmul.bf16.gmra.mxu0 %v338
    %v483 = vpop.f32.mrf.mxu0
    %v484 = vadd.f32 %v109, %v483
    %v485 = vpop.f32.mrf.mxu0
    %v486 = vadd.f32 %v109, %v485
    %487 = vmatmul.bf16.gmra.mxu0 %v341
    %v488 = vpop.f32.mrf.mxu0
    %v489 = vadd.f32 %v109, %v488
    %v490 = vpop.f32.mrf.mxu0
    %v491 = vadd.f32 %v109, %v490
    %492 = vmatmul.bf16.gmra.mxu0 %v344
    %v493 = vpop.f32.mrf.mxu0
    %v494 = vadd.f32 %v109, %v493
    %v495 = vpop.f32.mrf.mxu0
    %v496 = vadd.f32 %v109, %v495
    %497 = vmatmul.bf16.gmra.mxu0 %v347
    %v498 = vpop.f32.mrf.mxu0
    %v499 = vadd.f32 %v109, %v498
    %v500 = vpop.f32.mrf.mxu0
    %v501 = vadd.f32 %v109, %v500
    %502 = vmatmul.bf16.gmra.mxu0 %v350
    %v503 = vpop.f32.mrf.mxu0
    %v504 = vadd.f32 %v109, %v503
    %v505 = vpop.f32.mrf.mxu0
    %v506 = vadd.f32 %v109, %v505
    %507 = vmatmul.bf16.gmra.mxu0 %v353
    %v508 = vpop.f32.mrf.mxu0
    %v509 = vadd.f32 %v109, %v508
    %v510 = vpop.f32.mrf.mxu0
    %v511 = vadd.f32 %v109, %v510
    %512 = vmatmul.bf16.gmra.mxu0 %v356
    %v513 = vpop.f32.mrf.mxu0
    %v514 = vadd.f32 %v109, %v513
    %v515 = vpop.f32.mrf.mxu0
    %v516 = vadd.f32 %v109, %v515
    %517 = vmatmul.bf16.gmra.mxu0 %v359
    %v518 = vpop.f32.mrf.mxu0
    %v519 = vadd.f32 %v109, %v518
    %v520 = vpop.f32.mrf.mxu0
    %v521 = vadd.f32 %v109, %v520
    %522 = vmatmul.bf16.gmra.mxu0 %v362
    %v523 = vpop.f32.mrf.mxu0
    %v524 = vadd.f32 %v109, %v523
    %v525 = vpop.f32.mrf.mxu0
    %v526 = vadd.f32 %v109, %v525
    %527 = vmatmul.bf16.gmra.mxu0 %v365
    %v528 = vpop.f32.mrf.mxu0
    %v529 = vadd.f32 %v109, %v528
    %v530 = vpop.f32.mrf.mxu0
    %v531 = vadd.f32 %v109, %v530
    %532 = vmatmul.bf16.gmra.mxu0 %v368
    %v533 = vpop.f32.mrf.mxu0
    %v534 = vadd.f32 %v109, %v533
    %v535 = vpop.f32.mrf.mxu0
    %v536 = vadd.f32 %v109, %v535
    %537 = vmatmul.bf16.gmra.mxu0 %v371
    %v538 = vpop.f32.mrf.mxu0
    %v539 = vadd.f32 %v109, %v538
    %v540 = vpop.f32.mrf.mxu0
    %v541 = vadd.f32 %v109, %v540
    %542 = vmatmul.bf16.gmra.mxu0 %v374
    %v543 = vpop.f32.mrf.mxu0
    %v544 = vadd.f32 %v109, %v543
    %v545 = vpop.f32.mrf.mxu0
    %v546 = vadd.f32 %v109, %v545
    %547 = vmatmul.bf16.gmra.mxu0 %v377
    %v548 = vpop.f32.mrf.mxu0
    %v549 = vadd.f32 %v109, %v548
    %v550 = vpop.f32.mrf.mxu0
    %v551 = vadd.f32 %v109, %v550
    %552 = vmatmul.bf16.gmra.mxu0 %v380
    %v553 = vpop.f32.mrf.mxu0
    %v554 = vadd.f32 %v109, %v553
    %v555 = vpop.f32.mrf.mxu0
    %v556 = vadd.f32 %v109, %v555
    %557 = vmatmul.bf16.gmra.mxu0 %v383
    %v558 = vpop.f32.mrf.mxu0
    %v559 = vadd.f32 %v109, %v558
    %v560 = vpop.f32.mrf.mxu0
    %v561 = vadd.f32 %v109, %v560
    %562 = vmatmul.bf16.gmra.mxu0 %v386
    %v563 = vpop.f32.mrf.mxu0
    %v564 = vadd.f32 %v109, %v563
    %v565 = vpop.f32.mrf.mxu0
    %v566 = vadd.f32 %v109, %v565
    %567 = vmatmul.bf16.gmra.mxu0 %v389
    %v568 = vpop.f32.mrf.mxu0
    %v569 = vadd.f32 %v109, %v568
    %v570 = vpop.f32.mrf.mxu0
    %v571 = vadd.f32 %v109, %v570
    %572 = vmatmul.bf16.gmra.mxu0 %v392
    %v573 = vpop.f32.mrf.mxu0
    %v574 = vadd.f32 %v109, %v573
    %v575 = vpop.f32.mrf.mxu0
    %v576 = vadd.f32 %v109, %v575
    %577 = vmatmul.bf16.gmra.mxu0 %v395
    %v578 = vpop.f32.mrf.mxu0
    %v579 = vadd.f32 %v109, %v578
    %v580 = vpop.f32.mrf.mxu0
    %v581 = vadd.f32 %v109, %v580
    %582 = vmatmul.bf16.gmra.mxu0 %v398
    %v583 = vpop.f32.mrf.mxu0
    %v584 = vadd.f32 %v109, %v583
    %v585 = vpop.f32.mrf.mxu0
    %v586 = vadd.f32 %v109, %v585
    %587 = vmatmul.bf16.gmra.mxu0 %v401
    %v588 = vpop.f32.mrf.mxu0
    %v589 = vadd.f32 %v109, %v588
    %v590 = vpop.f32.mrf.mxu0
    %v591 = vadd.f32 %v109, %v590
    %592 = vdwg.mxu0
    %593 = vmatpush.bf16.msra.mxu0 0
    %594 = vmatpush.bf16.msra.mxu0 0
    %595 = vmatpush.bf16.msra.mxu0 0
    %596 = vmatpush.bf16.msra.mxu0 0
    %597 = vmatpush.bf16.msra.mxu0 0
    %598 = vmatpush.bf16.msra.mxu0 0
    %599 = vmatpush.bf16.msra.mxu0 0
    %600 = vmatpush.bf16.msra.mxu0 %v406
    %601 = vmatmul.bf16.gmra.mxu0 %v308
    %v602 = vpop.f32.mrf.mxu0
    %v603 = vadd.f32 %v110, %v602
    %v604 = vpop.f32.mrf.mxu0
    %v605 = vadd.f32 %v110, %v604
    %606 = vmatmul.bf16.gmra.mxu0 %v311
    %v607 = vpop.f32.mrf.mxu0
    %v608 = vadd.f32 %v110, %v607
    %v609 = vpop.f32.mrf.mxu0
    %v610 = vadd.f32 %v110, %v609
    %611 = vmatmul.bf16.gmra.mxu0 %v314
    %v612 = vpop.f32.mrf.mxu0
    %v613 = vadd.f32 %v110, %v612
    %v614 = vpop.f32.mrf.mxu0
    %v615 = vadd.f32 %v110, %v614
    %616 = vmatmul.bf16.gmra.mxu0 %v317
    %v617 = vpop.f32.mrf.mxu0
    %v618 = vadd.f32 %v110, %v617
    %v619 = vpop.f32.mrf.mxu0
    %v620 = vadd.f32 %v110, %v619
    %621 = vmatmul.bf16.gmra.mxu0 %v320
    %v622 = vpop.f32.mrf.mxu0
    %v623 = vadd.f32 %v110, %v622
    %v624 = vpop.f32.mrf.mxu0
    %v625 = vadd.f32 %v110, %v624
    %626 = vmatmul.bf16.gmra.mxu0 %v323
    %v627 = vpop.f32.mrf.mxu0
    %v628 = vadd.f32 %v110, %v627
    %v629 = vpop.f32.mrf.mxu0
    %v630 = vadd.f32 %v110, %v629
    %631 = vmatmul.bf16.gmra.mxu0 %v326
    %v632 = vpop.f32.mrf.mxu0
    %v633 = vadd.f32 %v110, %v632
    %v634 = vpop.f32.mrf.mxu0
    %v635 = vadd.f32 %v110, %v634
    %636 = vmatmul.bf16.gmra.mxu0 %v329
    %v637 = vpop.f32.mrf.mxu0
    %v638 = vadd.f32 %v110, %v637
    %v639 = vpop.f32.mrf.mxu0
    %v640 = vadd.f32 %v110, %v639
    %641 = vmatmul.bf16.gmra.mxu0 %v332
    %v642 = vpop.f32.mrf.mxu0
    %v643 = vadd.f32 %v110, %v642
    %v644 = vpop.f32.mrf.mxu0
    %v645 = vadd.f32 %v110, %v644
    %646 = vmatmul.bf16.gmra.mxu0 %v335
    %v647 = vpop.f32.mrf.mxu0
    %v648 = vadd.f32 %v110, %v647
    %v649 = vpop.f32.mrf.mxu0
    %v650 = vadd.f32 %v110, %v649
    %651 = vmatmul.bf16.gmra.mxu0 %v338
    %v652 = vpop.f32.mrf.mxu0
    %v653 = vadd.f32 %v110, %v652
    %v654 = vpop.f32.mrf.mxu0
    %v655 = vadd.f32 %v110, %v654
    %656 = vmatmul.bf16.gmra.mxu0 %v341
    %v657 = vpop.f32.mrf.mxu0
    %v658 = vadd.f32 %v110, %v657
    %v659 = vpop.f32.mrf.mxu0
    %v660 = vadd.f32 %v110, %v659
    %661 = vmatmul.bf16.gmra.mxu0 %v344
    %v662 = vpop.f32.mrf.mxu0
    %v663 = vadd.f32 %v110, %v662
    %v664 = vpop.f32.mrf.mxu0
    %v665 = vadd.f32 %v110, %v664
    %666 = vmatmul.bf16.gmra.mxu0 %v347
    %v667 = vpop.f32.mrf.mxu0
    %v668 = vadd.f32 %v110, %v667
    %v669 = vpop.f32.mrf.mxu0
    %v670 = vadd.f32 %v110, %v669
    %671 = vmatmul.bf16.gmra.mxu0 %v350
    %v672 = vpop.f32.mrf.mxu0
    %v673 = vadd.f32 %v110, %v672
    %v674 = vpop.f32.mrf.mxu0
    %v675 = vadd.f32 %v110, %v674
    %676 = vmatmul.bf16.gmra.mxu0 %v353
    %v677 = vpop.f32.mrf.mxu0
    %v678 = vadd.f32 %v110, %v677
    %v679 = vpop.f32.mrf.mxu0
    %v680 = vadd.f32 %v110, %v679
    %681 = vmatmul.bf16.gmra.mxu0 %v356
    %v682 = vpop.f32.mrf.mxu0
    %v683 = vadd.f32 %v110, %v682
    %v684 = vpop.f32.mrf.mxu0
    %v685 = vadd.f32 %v110, %v684
    %686 = vmatmul.bf16.gmra.mxu0 %v359
    %v687 = vpop.f32.mrf.mxu0
    %v688 = vadd.f32 %v110, %v687
    %v689 = vpop.f32.mrf.mxu0
    %v690 = vadd.f32 %v110, %v689
    %691 = vmatmul.bf16.gmra.mxu0 %v362
    %v692 = vpop.f32.mrf.mxu0
    %v693 = vadd.f32 %v110, %v692
    %v694 = vpop.f32.mrf.mxu0
    %v695 = vadd.f32 %v110, %v694
    %696 = vmatmul.bf16.gmra.mxu0 %v365
    %v697 = vpop.f32.mrf.mxu0
    %v698 = vadd.f32 %v110, %v697
    %v699 = vpop.f32.mrf.mxu0
    %v700 = vadd.f32 %v110, %v699
    %701 = vmatmul.bf16.gmra.mxu0 %v368
    %v702 = vpop.f32.mrf.mxu0
    %v703 = vadd.f32 %v110, %v702
    %v704 = vpop.f32.mrf.mxu0
    %v705 = vadd.f32 %v110, %v704
    %706 = vmatmul.bf16.gmra.mxu0 %v371
    %v707 = vpop.f32.mrf.mxu0
    %v708 = vadd.f32 %v110, %v707
    %v709 = vpop.f32.mrf.mxu0
    %v710 = vadd.f32 %v110, %v709
    %711 = vmatmul.bf16.gmra.mxu0 %v374
    %v712 = vpop.f32.mrf.mxu0
    %v713 = vadd.f32 %v110, %v712
    %v714 = vpop.f32.mrf.mxu0
    %v715 = vadd.f32 %v110, %v714
    %716 = vmatmul.bf16.gmra.mxu0 %v377
    %v717 = vpop.f32.mrf.mxu0
    %v718 = vadd.f32 %v110, %v717
    %v719 = vpop.f32.mrf.mxu0
    %v720 = vadd.f32 %v110, %v719
    %721 = vmatmul.bf16.gmra.mxu0 %v380
    %v722 = vpop.f32.mrf.mxu0
    %v723 = vadd.f32 %v110, %v722
    %v724 = vpop.f32.mrf.mxu0
    %v725 = vadd.f32 %v110, %v724
    %726 = vmatmul.bf16.gmra.mxu0 %v383
    %v727 = vpop.f32.mrf.mxu0
    %v728 = vadd.f32 %v110, %v727
    %v729 = vpop.f32.mrf.mxu0
    %v730 = vadd.f32 %v110, %v729
    %731 = vmatmul.bf16.gmra.mxu0 %v386
    %v732 = vpop.f32.mrf.mxu0
    %v733 = vadd.f32 %v110, %v732
    %v734 = vpop.f32.mrf.mxu0
    %v735 = vadd.f32 %v110, %v734
    %736 = vmatmul.bf16.gmra.mxu0 %v389
    %v737 = vpop.f32.mrf.mxu0
    %v738 = vadd.f32 %v110, %v737
    %v739 = vpop.f32.mrf.mxu0
    %v740 = vadd.f32 %v110, %v739
    %741 = vmatmul.bf16.gmra.mxu0 %v392
    %v742 = vpop.f32.mrf.mxu0
    %v743 = vadd.f32 %v110, %v742
    %v744 = vpop.f32.mrf.mxu0
    %v745 = vadd.f32 %v110, %v744
    %746 = vmatmul.bf16.gmra.mxu0 %v395
    %v747 = vpop.f32.mrf.mxu0
    %v748 = vadd.f32 %v110, %v747
    %v749 = vpop.f32.mrf.mxu0
    %v750 = vadd.f32 %v110, %v749
    %751 = vmatmul.bf16.gmra.mxu0 %v398
    %v752 = vpop.f32.mrf.mxu0
    %v753 = vadd.f32 %v110, %v752
    %v754 = vpop.f32.mrf.mxu0
    %v755 = vadd.f32 %v110, %v754
    %756 = vmatmul.bf16.gmra.mxu0 %v401
    %v757 = vpop.f32.mrf.mxu0
    %v758 = vadd.f32 %v110, %v757
    %v759 = vpop.f32.mrf.mxu0
    %v760 = vadd.f32 %v110, %v759
    %761 = vdwg.mxu0
    %762 = vmatpush.bf16.msra.mxu0 0
    %763 = vmatpush.bf16.msra.mxu0 0
    %764 = vmatpush.bf16.msra.mxu0 0
    %765 = vmatpush.bf16.msra.mxu0 0
    %766 = vmatpush.bf16.msra.mxu0 0
    %767 = vmatpush.bf16.msra.mxu0 0
    %768 = vmatpush.bf16.msra.mxu0 0
    %769 = vmatpush.bf16.msra.mxu0 %v408
    %770 = vmatmul.bf16.gmra.mxu0 %v308
    %v771 = vpop.f32.mrf.mxu0
    %v772 = vadd.f32 %v111, %v771
    %v773 = vpop.f32.mrf.mxu0
    %v774 = vadd.f32 %v111, %v773
    %775 = vmatmul.bf16.gmra.mxu0 %v311
    %v776 = vpop.f32.mrf.mxu0
    %v777 = vadd.f32 %v111, %v776
    %v778 = vpop.f32.mrf.mxu0
    %v779 = vadd.f32 %v111, %v778
    %780 = vmatmul.bf16.gmra.mxu0 %v314
    %v781 = vpop.f32.mrf.mxu0
    %v782 = vadd.f32 %v111, %v781
    %v783 = vpop.f32.mrf.mxu0
    %v784 = vadd.f32 %v111, %v783
    %785 = vmatmul.bf16.gmra.mxu0 %v317
    %v786 = vpop.f32.mrf.mxu0
    %v787 = vadd.f32 %v111, %v786
    %v788 = vpop.f32.mrf.mxu0
    %v789 = vadd.f32 %v111, %v788
    %790 = vmatmul.bf16.gmra.mxu0 %v320
    %v791 = vpop.f32.mrf.mxu0
    %v792 = vadd.f32 %v111, %v791
    %v793 = vpop.f32.mrf.mxu0
    %v794 = vadd.f32 %v111, %v793
    %795 = vmatmul.bf16.gmra.mxu0 %v323
    %v796 = vpop.f32.mrf.mxu0
    %v797 = vadd.f32 %v111, %v796
    %v798 = vpop.f32.mrf.mxu0
    %v799 = vadd.f32 %v111, %v798
    %800 = vmatmul.bf16.gmra.mxu0 %v326
    %v801 = vpop.f32.mrf.mxu0
    %v802 = vadd.f32 %v111, %v801
    %v803 = vpop.f32.mrf.mxu0
    %v804 = vadd.f32 %v111, %v803
    %805 = vmatmul.bf16.gmra.mxu0 %v329
    %v806 = vpop.f32.mrf.mxu0
    %v807 = vadd.f32 %v111, %v806
    %v808 = vpop.f32.mrf.mxu0
    %v809 = vadd.f32 %v111, %v808
    %810 = vmatmul.bf16.gmra.mxu0 %v332
    %v811 = vpop.f32.mrf.mxu0
    %v812 = vadd.f32 %v111, %v811
    %v813 = vpop.f32.mrf.mxu0
    %v814 = vadd.f32 %v111, %v813
    %815 = vmatmul.bf16.gmra.mxu0 %v335
    %v816 = vpop.f32.mrf.mxu0
    %v817 = vadd.f32 %v111, %v816
    %v818 = vpop.f32.mrf.mxu0
    %v819 = vadd.f32 %v111, %v818
    %820 = vmatmul.bf16.gmra.mxu0 %v338
    %v821 = vpop.f32.mrf.mxu0
    %v822 = vadd.f32 %v111, %v821
    %v823 = vpop.f32.mrf.mxu0
    %v824 = vadd.f32 %v111, %v823
    %825 = vmatmul.bf16.gmra.mxu0 %v341
    %v826 = vpop.f32.mrf.mxu0
    %v827 = vadd.f32 %v111, %v826
    %v828 = vpop.f32.mrf.mxu0
    %v829 = vadd.f32 %v111, %v828
    %830 = vmatmul.bf16.gmra.mxu0 %v344
    %v831 = vpop.f32.mrf.mxu0
    %v832 = vadd.f32 %v111, %v831
    %v833 = vpop.f32.mrf.mxu0
    %v834 = vadd.f32 %v111, %v833
    %835 = vmatmul.bf16.gmra.mxu0 %v347
    %v836 = vpop.f32.mrf.mxu0
    %v837 = vadd.f32 %v111, %v836
    %v838 = vpop.f32.mrf.mxu0
    %v839 = vadd.f32 %v111, %v838
    %840 = vmatmul.bf16.gmra.mxu0 %v350
    %v841 = vpop.f32.mrf.mxu0
    %v842 = vadd.f32 %v111, %v841
    %v843 = vpop.f32.mrf.mxu0
    %v844 = vadd.f32 %v111, %v843
    %845 = vmatmul.bf16.gmra.mxu0 %v353
    %v846 = vpop.f32.mrf.mxu0
    %v847 = vadd.f32 %v111, %v846
    %v848 = vpop.f32.mrf.mxu0
    %v849 = vadd.f32 %v111, %v848
    %850 = vmatmul.bf16.gmra.mxu0 %v356
    %v851 = vpop.f32.mrf.mxu0
    %v852 = vadd.f32 %v111, %v851
    %v853 = vpop.f32.mrf.mxu0
    %v854 = vadd.f32 %v111, %v853
    %855 = vmatmul.bf16.gmra.mxu0 %v359
    %v856 = vpop.f32.mrf.mxu0
    %v857 = vadd.f32 %v111, %v856
    %v858 = vpop.f32.mrf.mxu0
    %v859 = vadd.f32 %v111, %v858
    %860 = vmatmul.bf16.gmra.mxu0 %v362
    %v861 = vpop.f32.mrf.mxu0
    %v862 = vadd.f32 %v111, %v861
    %v863 = vpop.f32.mrf.mxu0
    %v864 = vadd.f32 %v111, %v863
    %865 = vmatmul.bf16.gmra.mxu0 %v365
    %v866 = vpop.f32.mrf.mxu0
    %v867 = vadd.f32 %v111, %v866
    %v868 = vpop.f32.mrf.mxu0
    %v869 = vadd.f32 %v111, %v868
    %870 = vmatmul.bf16.gmra.mxu0 %v368
    %v871 = vpop.f32.mrf.mxu0
    %v872 = vadd.f32 %v111, %v871
    %v873 = vpop.f32.mrf.mxu0
    %v874 = vadd.f32 %v111, %v873
    %875 = vmatmul.bf16.gmra.mxu0 %v371
    %v876 = vpop.f32.mrf.mxu0
    %v877 = vadd.f32 %v111, %v876
    %v878 = vpop.f32.mrf.mxu0
    %v879 = vadd.f32 %v111, %v878
    %880 = vmatmul.bf16.gmra.mxu0 %v374
    %v881 = vpop.f32.mrf.mxu0
    %v882 = vadd.f32 %v111, %v881
    %v883 = vpop.f32.mrf.mxu0
    %v884 = vadd.f32 %v111, %v883
    %885 = vmatmul.bf16.gmra.mxu0 %v377
    %v886 = vpop.f32.mrf.mxu0
    %v887 = vadd.f32 %v111, %v886
    %v888 = vpop.f32.mrf.mxu0
    %v889 = vadd.f32 %v111, %v888
    %890 = vmatmul.bf16.gmra.mxu0 %v380
    %v891 = vpop.f32.mrf.mxu0
    %v892 = vadd.f32 %v111, %v891
    %v893 = vpop.f32.mrf.mxu0
    %v894 = vadd.f32 %v111, %v893
    %895 = vmatmul.bf16.gmra.mxu0 %v383
    %v896 = vpop.f32.mrf.mxu0
    %v897 = vadd.f32 %v111, %v896
    %v898 = vpop.f32.mrf.mxu0
    %v899 = vadd.f32 %v111, %v898
    %900 = vmatmul.bf16.gmra.mxu0 %v386
    %v901 = vpop.f32.mrf.mxu0
    %v902 = vadd.f32 %v111, %v901
    %v903 = vpop.f32.mrf.mxu0
    %v904 = vadd.f32 %v111, %v903
    %905 = vmatmul.bf16.gmra.mxu0 %v389
    %v906 = vpop.f32.mrf.mxu0
    %v907 = vadd.f32 %v111, %v906
    %v908 = vpop.f32.mrf.mxu0
    %v909 = vadd.f32 %v111, %v908
    %910 = vmatmul.bf16.gmra.mxu0 %v392
    %v911 = vpop.f32.mrf.mxu0
    %v912 = vadd.f32 %v111, %v911
    %v913 = vpop.f32.mrf.mxu0
    %v914 = vadd.f32 %v111, %v913
    %915 = vmatmul.bf16.gmra.mxu0 %v395
    %v916 = vpop.f32.mrf.mxu0
    %v917 = vadd.f32 %v111, %v916
    %v918 = vpop.f32.mrf.mxu0
    %v919 = vadd.f32 %v111, %v918
    %920 = vmatmul.bf16.gmra.mxu0 %v398
    %v921 = vpop.f32.mrf.mxu0
    %v922 = vadd.f32 %v111, %v921
    %v923 = vpop.f32.mrf.mxu0
    %v924 = vadd.f32 %v111, %v923
    %925 = vmatmul.bf16.gmra.mxu0 %v401
    %v926 = vpop.f32.mrf.mxu0
    %v927 = vadd.f32 %v111, %v926
    %v928 = vpop.f32.mrf.mxu0
    %v929 = vadd.f32 %v111, %v928
    %930 = vdwg.mxu0
    %931 = vmatpush.bf16.msra.mxu0 0
    %932 = vmatpush.bf16.msra.mxu0 0
    %933 = vmatpush.bf16.msra.mxu0 0
    %934 = vmatpush.bf16.msra.mxu0 0
    %935 = vmatpush.bf16.msra.mxu0 0
    %936 = vmatpush.bf16.msra.mxu0 0
    %937 = vmatpush.bf16.msra.mxu0 0
    %938 = vmatpush.bf16.msra.mxu0 %v410
    %939 = vmatmul.bf16.gmra.mxu0 %v308
    %v940 = vpop.f32.mrf.mxu0
    %v941 = vadd.f32 %v112, %v940
    %v942 = vpop.f32.mrf.mxu0
    %v943 = vadd.f32 %v112, %v942
    %944 = vmatmul.bf16.gmra.mxu0 %v311
    %v945 = vpop.f32.mrf.mxu0
    %v946 = vadd.f32 %v112, %v945
    %v947 = vpop.f32.mrf.mxu0
    %v948 = vadd.f32 %v112, %v947
    %949 = vmatmul.bf16.gmra.mxu0 %v314
    %v950 = vpop.f32.mrf.mxu0
    %v951 = vadd.f32 %v112, %v950
    %v952 = vpop.f32.mrf.mxu0
    %v953 = vadd.f32 %v112, %v952
    %954 = vmatmul.bf16.gmra.mxu0 %v317
    %v955 = vpop.f32.mrf.mxu0
    %v956 = vadd.f32 %v112, %v955
    %v957 = vpop.f32.mrf.mxu0
    %v958 = vadd.f32 %v112, %v957
    %959 = vmatmul.bf16.gmra.mxu0 %v320
    %v960 = vpop.f32.mrf.mxu0
    %v961 = vadd.f32 %v112, %v960
    %v962 = vpop.f32.mrf.mxu0
    %v963 = vadd.f32 %v112, %v962
    %964 = vmatmul.bf16.gmra.mxu0 %v323
    %v965 = vpop.f32.mrf.mxu0
    %v966 = vadd.f32 %v112, %v965
    %v967 = vpop.f32.mrf.mxu0
    %v968 = vadd.f32 %v112, %v967
    %969 = vmatmul.bf16.gmra.mxu0 %v326
    %v970 = vpop.f32.mrf.mxu0
    %v971 = vadd.f32 %v112, %v970
    %v972 = vpop.f32.mrf.mxu0
    %v973 = vadd.f32 %v112, %v972
    %974 = vmatmul.bf16.gmra.mxu0 %v329
    %v975 = vpop.f32.mrf.mxu0
    %v976 = vadd.f32 %v112, %v975
    %v977 = vpop.f32.mrf.mxu0
    %v978 = vadd.f32 %v112, %v977
    %979 = vmatmul.bf16.gmra.mxu0 %v332
    %v980 = vpop.f32.mrf.mxu0
    %v981 = vadd.f32 %v112, %v980
    %v982 = vpop.f32.mrf.mxu0
    %v983 = vadd.f32 %v112, %v982
    %984 = vmatmul.bf16.gmra.mxu0 %v335
    %v985 = vpop.f32.mrf.mxu0
    %v986 = vadd.f32 %v112, %v985
    %v987 = vpop.f32.mrf.mxu0
    %v988 = vadd.f32 %v112, %v987
    %989 = vmatmul.bf16.gmra.mxu0 %v338
    %v990 = vpop.f32.mrf.mxu0
    %v991 = vadd.f32 %v112, %v990
    %v992 = vpop.f32.mrf.mxu0
    %v993 = vadd.f32 %v112, %v992
    %994 = vmatmul.bf16.gmra.mxu0 %v341
    %v995 = vpop.f32.mrf.mxu0
    %v996 = vadd.f32 %v112, %v995
    %v997 = vpop.f32.mrf.mxu0
    %v998 = vadd.f32 %v112, %v997
    %999 = vmatmul.bf16.gmra.mxu0 %v344
    %v1000 = vpop.f32.mrf.mxu0
    %v1001 = vadd.f32 %v112, %v1000
    %v1002 = vpop.f32.mrf.mxu0
    %v1003 = vadd.f32 %v112, %v1002
    %1004 = vmatmul.bf16.gmra.mxu0 %v347
    %v1005 = vpop.f32.mrf.mxu0
    %v1006 = vadd.f32 %v112, %v1005
    %v1007 = vpop.f32.mrf.mxu0
    %v1008 = vadd.f32 %v112, %v1007
    %1009 = vmatmul.bf16.gmra.mxu0 %v350
    %v1010 = vpop.f32.mrf.mxu0
    %v1011 = vadd.f32 %v112, %v1010
    %v1012 = vpop.f32.mrf.mxu0
    %v1013 = vadd.f32 %v112, %v1012
    %1014 = vmatmul.bf16.gmra.mxu0 %v353
    %v1015 = vpop.f32.mrf.mxu0
    %v1016 = vadd.f32 %v112, %v1015
    %v1017 = vpop.f32.mrf.mxu0
    %v1018 = vadd.f32 %v112, %v1017
    %1019 = vmatmul.bf16.gmra.mxu0 %v356
    %v1020 = vpop.f32.mrf.mxu0
    %v1021 = vadd.f32 %v112, %v1020
    %v1022 = vpop.f32.mrf.mxu0
    %v1023 = vadd.f32 %v112, %v1022
    %1024 = vmatmul.bf16.gmra.mxu0 %v359
    %v1025 = vpop.f32.mrf.mxu0
    %v1026 = vadd.f32 %v112, %v1025
    %v1027 = vpop.f32.mrf.mxu0
    %v1028 = vadd.f32 %v112, %v1027
    %1029 = vmatmul.bf16.gmra.mxu0 %v362
    %v1030 = vpop.f32.mrf.mxu0
    %v1031 = vadd.f32 %v112, %v1030
    %v1032 = vpop.f32.mrf.mxu0
    %v1033 = vadd.f32 %v112, %v1032
    %1034 = vmatmul.bf16.gmra.mxu0 %v365
    %v1035 = vpop.f32.mrf.mxu0
    %v1036 = vadd.f32 %v112, %v1035
    %v1037 = vpop.f32.mrf.mxu0
    %v1038 = vadd.f32 %v112, %v1037
    %1039 = vmatmul.bf16.gmra.mxu0 %v368
    %v1040 = vpop.f32.mrf.mxu0
    %v1041 = vadd.f32 %v112, %v1040
    %v1042 = vpop.f32.mrf.mxu0
    %v1043 = vadd.f32 %v112, %v1042
    %1044 = vmatmul.bf16.gmra.mxu0 %v371
    %v1045 = vpop.f32.mrf.mxu0
    %v1046 = vadd.f32 %v112, %v1045
    %v1047 = vpop.f32.mrf.mxu0
    %v1048 = vadd.f32 %v112, %v1047
    %1049 = vmatmul.bf16.gmra.mxu0 %v374
    %v1050 = vpop.f32.mrf.mxu0
    %v1051 = vadd.f32 %v112, %v1050
    %v1052 = vpop.f32.mrf.mxu0
    %v1053 = vadd.f32 %v112, %v1052
    %1054 = vmatmul.bf16.gmra.mxu0 %v377
    %v1055 = vpop.f32.mrf.mxu0
    %v1056 = vadd.f32 %v112, %v1055
    %v1057 = vpop.f32.mrf.mxu0
    %v1058 = vadd.f32 %v112, %v1057
    %1059 = vmatmul.bf16.gmra.mxu0 %v380
    %v1060 = vpop.f32.mrf.mxu0
    %v1061 = vadd.f32 %v112, %v1060
    %v1062 = vpop.f32.mrf.mxu0
    %v1063 = vadd.f32 %v112, %v1062
    %1064 = vmatmul.bf16.gmra.mxu0 %v383
    %v1065 = vpop.f32.mrf.mxu0
    %v1066 = vadd.f32 %v112, %v1065
    %v1067 = vpop.f32.mrf.mxu0
    %v1068 = vadd.f32 %v112, %v1067
    %1069 = vmatmul.bf16.gmra.mxu0 %v386
    %v1070 = vpop.f32.mrf.mxu0
    %v1071 = vadd.f32 %v112, %v1070
    %v1072 = vpop.f32.mrf.mxu0
    %v1073 = vadd.f32 %v112, %v1072
    %1074 = vmatmul.bf16.gmra.mxu0 %v389
    %v1075 = vpop.f32.mrf.mxu0
    %v1076 = vadd.f32 %v112, %v1075
    %v1077 = vpop.f32.mrf.mxu0
    %v1078 = vadd.f32 %v112, %v1077
    %1079 = vmatmul.bf16.gmra.mxu0 %v392
    %v1080 = vpop.f32.mrf.mxu0
    %v1081 = vadd.f32 %v112, %v1080
    %v1082 = vpop.f32.mrf.mxu0
    %v1083 = vadd.f32 %v112, %v1082
    %1084 = vmatmul.bf16.gmra.mxu0 %v395
    %v1085 = vpop.f32.mrf.mxu0
    %v1086 = vadd.f32 %v112, %v1085
    %v1087 = vpop.f32.mrf.mxu0
    %v1088 = vadd.f32 %v112, %v1087
    %1089 = vmatmul.bf16.gmra.mxu0 %v398
    %v1090 = vpop.f32.mrf.mxu0
    %v1091 = vadd.f32 %v112, %v1090
    %v1092 = vpop.f32.mrf.mxu0
    %v1093 = vadd.f32 %v112, %v1092
    %1094 = vmatmul.bf16.gmra.mxu0 %v401
    %v1095 = vpop.f32.mrf.mxu0
    %v1096 = vadd.f32 %v112, %v1095
    %v1097 = vpop.f32.mrf.mxu0
    %v1098 = vadd.f32 %v112, %v1097
    %1099 = vdwg.mxu0
    %1100 = vmatpush.bf16.msra.mxu0 0
    %1101 = vmatpush.bf16.msra.mxu0 0
    %1102 = vmatpush.bf16.msra.mxu0 0
    %1103 = vmatpush.bf16.msra.mxu0 0
    %1104 = vmatpush.bf16.msra.mxu0 0
    %1105 = vmatpush.bf16.msra.mxu0 0
    %1106 = vmatpush.bf16.msra.mxu0 0
    %1107 = vmatpush.bf16.msra.mxu0 %v412
    %1108 = vmatmul.bf16.gmra.mxu0 %v308
    %v1109 = vpop.f32.mrf.mxu0
    %v1110 = vadd.f32 %v113, %v1109
    %v1111 = vpop.f32.mrf.mxu0
    %v1112 = vadd.f32 %v113, %v1111
    %1113 = vmatmul.bf16.gmra.mxu0 %v311
    %v1114 = vpop.f32.mrf.mxu0
    %v1115 = vadd.f32 %v113, %v1114
    %v1116 = vpop.f32.mrf.mxu0
    %v1117 = vadd.f32 %v113, %v1116
    %1118 = vmatmul.bf16.gmra.mxu0 %v314
    %v1119 = vpop.f32.mrf.mxu0
    %v1120 = vadd.f32 %v113, %v1119
    %v1121 = vpop.f32.mrf.mxu0
    %v1122 = vadd.f32 %v113, %v1121
    %1123 = vmatmul.bf16.gmra.mxu0 %v317
    %v1124 = vpop.f32.mrf.mxu0
    %v1125 = vadd.f32 %v113, %v1124
    %v1126 = vpop.f32.mrf.mxu0
    %v1127 = vadd.f32 %v113, %v1126
    %1128 = vmatmul.bf16.gmra.mxu0 %v320
    %v1129 = vpop.f32.mrf.mxu0
    %v1130 = vadd.f32 %v113, %v1129
    %v1131 = vpop.f32.mrf.mxu0
    %v1132 = vadd.f32 %v113, %v1131
    %1133 = vmatmul.bf16.gmra.mxu0 %v323
    %v1134 = vpop.f32.mrf.mxu0
    %v1135 = vadd.f32 %v113, %v1134
    %v1136 = vpop.f32.mrf.mxu0
    %v1137 = vadd.f32 %v113, %v1136
    %1138 = vmatmul.bf16.gmra.mxu0 %v326
    %v1139 = vpop.f32.mrf.mxu0
    %v1140 = vadd.f32 %v113, %v1139
    %v1141 = vpop.f32.mrf.mxu0
    %v1142 = vadd.f32 %v113, %v1141
    %1143 = vmatmul.bf16.gmra.mxu0 %v329
    %v1144 = vpop.f32.mrf.mxu0
    %v1145 = vadd.f32 %v113, %v1144
    %v1146 = vpop.f32.mrf.mxu0
    %v1147 = vadd.f32 %v113, %v1146
    %1148 = vmatmul.bf16.gmra.mxu0 %v332
    %v1149 = vpop.f32.mrf.mxu0
    %v1150 = vadd.f32 %v113, %v1149
    %v1151 = vpop.f32.mrf.mxu0
    %v1152 = vadd.f32 %v113, %v1151
    %1153 = vmatmul.bf16.gmra.mxu0 %v335
    %v1154 = vpop.f32.mrf.mxu0
    %v1155 = vadd.f32 %v113, %v1154
    %v1156 = vpop.f32.mrf.mxu0
    %v1157 = vadd.f32 %v113, %v1156
    %1158 = vmatmul.bf16.gmra.mxu0 %v338
    %v1159 = vpop.f32.mrf.mxu0
    %v1160 = vadd.f32 %v113, %v1159
    %v1161 = vpop.f32.mrf.mxu0
    %v1162 = vadd.f32 %v113, %v1161
    %1163 = vmatmul.bf16.gmra.mxu0 %v341
    %v1164 = vpop.f32.mrf.mxu0
    %v1165 = vadd.f32 %v113, %v1164
    %v1166 = vpop.f32.mrf.mxu0
    %v1167 = vadd.f32 %v113, %v1166
    %1168 = vmatmul.bf16.gmra.mxu0 %v344
    %v1169 = vpop.f32.mrf.mxu0
    %v1170 = vadd.f32 %v113, %v1169
    %v1171 = vpop.f32.mrf.mxu0
    %v1172 = vadd.f32 %v113, %v1171
    %1173 = vmatmul.bf16.gmra.mxu0 %v347
    %v1174 = vpop.f32.mrf.mxu0
    %v1175 = vadd.f32 %v113, %v1174
    %v1176 = vpop.f32.mrf.mxu0
    %v1177 = vadd.f32 %v113, %v1176
    %1178 = vmatmul.bf16.gmra.mxu0 %v350
    %v1179 = vpop.f32.mrf.mxu0
    %v1180 = vadd.f32 %v113, %v1179
    %v1181 = vpop.f32.mrf.mxu0
    %v1182 = vadd.f32 %v113, %v1181
    %1183 = vmatmul.bf16.gmra.mxu0 %v353
    %v1184 = vpop.f32.mrf.mxu0
    %v1185 = vadd.f32 %v113, %v1184
    %v1186 = vpop.f32.mrf.mxu0
    %v1187 = vadd.f32 %v113, %v1186
    %1188 = vmatmul.bf16.gmra.mxu0 %v356
    %v1189 = vpop.f32.mrf.mxu0
    %v1190 = vadd.f32 %v113, %v1189
    %v1191 = vpop.f32.mrf.mxu0
    %v1192 = vadd.f32 %v113, %v1191
    %1193 = vmatmul.bf16.gmra.mxu0 %v359
    %v1194 = vpop.f32.mrf.mxu0
    %v1195 = vadd.f32 %v113, %v1194
    %v1196 = vpop.f32.mrf.mxu0
    %v1197 = vadd.f32 %v113, %v1196
    %1198 = vmatmul.bf16.gmra.mxu0 %v362
    %v1199 = vpop.f32.mrf.mxu0
    %v1200 = vadd.f32 %v113, %v1199
    %v1201 = vpop.f32.mrf.mxu0
    %v1202 = vadd.f32 %v113, %v1201
    %1203 = vmatmul.bf16.gmra.mxu0 %v365
    %v1204 = vpop.f32.mrf.mxu0
    %v1205 = vadd.f32 %v113, %v1204
    %v1206 = vpop.f32.mrf.mxu0
    %v1207 = vadd.f32 %v113, %v1206
    %1208 = vmatmul.bf16.gmra.mxu0 %v368
    %v1209 = vpop.f32.mrf.mxu0
    %v1210 = vadd.f32 %v113, %v1209
    %v1211 = vpop.f32.mrf.mxu0
    %v1212 = vadd.f32 %v113, %v1211
    %1213 = vmatmul.bf16.gmra.mxu0 %v371
    %v1214 = vpop.f32.mrf.mxu0
    %v1215 = vadd.f32 %v113, %v1214
    %v1216 = vpop.f32.mrf.mxu0
    %v1217 = vadd.f32 %v113, %v1216
    %1218 = vmatmul.bf16.gmra.mxu0 %v374
    %v1219 = vpop.f32.mrf.mxu0
    %v1220 = vadd.f32 %v113, %v1219
    %v1221 = vpop.f32.mrf.mxu0
    %v1222 = vadd.f32 %v113, %v1221
    %1223 = vmatmul.bf16.gmra.mxu0 %v377
    %v1224 = vpop.f32.mrf.mxu0
    %v1225 = vadd.f32 %v113, %v1224
    %v1226 = vpop.f32.mrf.mxu0
    %v1227 = vadd.f32 %v113, %v1226
    %1228 = vmatmul.bf16.gmra.mxu0 %v380
    %v1229 = vpop.f32.mrf.mxu0
    %v1230 = vadd.f32 %v113, %v1229
    %v1231 = vpop.f32.mrf.mxu0
    %v1232 = vadd.f32 %v113, %v1231
    %1233 = vmatmul.bf16.gmra.mxu0 %v383
    %v1234 = vpop.f32.mrf.mxu0
    %v1235 = vadd.f32 %v113, %v1234
    %v1236 = vpop.f32.mrf.mxu0
    %v1237 = vadd.f32 %v113, %v1236
    %1238 = vmatmul.bf16.gmra.mxu0 %v386
    %v1239 = vpop.f32.mrf.mxu0
    %v1240 = vadd.f32 %v113, %v1239
    %v1241 = vpop.f32.mrf.mxu0
    %v1242 = vadd.f32 %v113, %v1241
    %1243 = vmatmul.bf16.gmra.mxu0 %v389
    %v1244 = vpop.f32.mrf.mxu0
    %v1245 = vadd.f32 %v113, %v1244
    %v1246 = vpop.f32.mrf.mxu0
    %v1247 = vadd.f32 %v113, %v1246
    %1248 = vmatmul.bf16.gmra.mxu0 %v392
    %v1249 = vpop.f32.mrf.mxu0
    %v1250 = vadd.f32 %v113, %v1249
    %v1251 = vpop.f32.mrf.mxu0
    %v1252 = vadd.f32 %v113, %v1251
    %1253 = vmatmul.bf16.gmra.mxu0 %v395
    %v1254 = vpop.f32.mrf.mxu0
    %v1255 = vadd.f32 %v113, %v1254
    %v1256 = vpop.f32.mrf.mxu0
    %v1257 = vadd.f32 %v113, %v1256
    %1258 = vmatmul.bf16.gmra.mxu0 %v398
    %v1259 = vpop.f32.mrf.mxu0
    %v1260 = vadd.f32 %v113, %v1259
    %v1261 = vpop.f32.mrf.mxu0
    %v1262 = vadd.f32 %v113, %v1261
    %1263 = vmatmul.bf16.gmra.mxu0 %v401
    %v1264 = vpop.f32.mrf.mxu0
    %v1265 = vadd.f32 %v113, %v1264
    %v1266 = vpop.f32.mrf.mxu0
    %v1267 = vadd.f32 %v113, %v1266
    %1268 = vdwg.mxu0
    %1269 = vmatpush.bf16.msra.mxu0 0
    %1270 = vmatpush.bf16.msra.mxu0 0
    %1271 = vmatpush.bf16.msra.mxu0 0
    %1272 = vmatpush.bf16.msra.mxu0 0
    %1273 = vmatpush.bf16.msra.mxu0 0
    %1274 = vmatpush.bf16.msra.mxu0 0
    %1275 = vmatpush.bf16.msra.mxu0 0
    %1276 = vmatpush.bf16.msra.mxu0 %v414
    %1277 = vmatmul.bf16.gmra.mxu0 %v308
    %v1278 = vpop.f32.mrf.mxu0
    %v1279 = vadd.f32 %v114, %v1278
    %v1280 = vpop.f32.mrf.mxu0
    %v1281 = vadd.f32 %v114, %v1280
    %1282 = vmatmul.bf16.gmra.mxu0 %v311
    %v1283 = vpop.f32.mrf.mxu0
    %v1284 = vadd.f32 %v114, %v1283
    %v1285 = vpop.f32.mrf.mxu0
    %v1286 = vadd.f32 %v114, %v1285
    %1287 = vmatmul.bf16.gmra.mxu0 %v314
    %v1288 = vpop.f32.mrf.mxu0
    %v1289 = vadd.f32 %v114, %v1288
    %v1290 = vpop.f32.mrf.mxu0
    %v1291 = vadd.f32 %v114, %v1290
    %1292 = vmatmul.bf16.gmra.mxu0 %v317
    %v1293 = vpop.f32.mrf.mxu0
    %v1294 = vadd.f32 %v114, %v1293
    %v1295 = vpop.f32.mrf.mxu0
    %v1296 = vadd.f32 %v114, %v1295
    %1297 = vmatmul.bf16.gmra.mxu0 %v320
    %v1298 = vpop.f32.mrf.mxu0
    %v1299 = vadd.f32 %v114, %v1298
    %v1300 = vpop.f32.mrf.mxu0
    %v1301 = vadd.f32 %v114, %v1300
    %1302 = vmatmul.bf16.gmra.mxu0 %v323
    %v1303 = vpop.f32.mrf.mxu0
    %v1304 = vadd.f32 %v114, %v1303
    %v1305 = vpop.f32.mrf.mxu0
    %v1306 = vadd.f32 %v114, %v1305
    %1307 = vmatmul.bf16.gmra.mxu0 %v326
    %v1308 = vpop.f32.mrf.mxu0
    %v1309 = vadd.f32 %v114, %v1308
    %v1310 = vpop.f32.mrf.mxu0
    %v1311 = vadd.f32 %v114, %v1310
    %1312 = vmatmul.bf16.gmra.mxu0 %v329
    %v1313 = vpop.f32.mrf.mxu0
    %v1314 = vadd.f32 %v114, %v1313
    %v1315 = vpop.f32.mrf.mxu0
    %v1316 = vadd.f32 %v114, %v1315
    %1317 = vmatmul.bf16.gmra.mxu0 %v332
    %v1318 = vpop.f32.mrf.mxu0
    %v1319 = vadd.f32 %v114, %v1318
    %v1320 = vpop.f32.mrf.mxu0
    %v1321 = vadd.f32 %v114, %v1320
    %1322 = vmatmul.bf16.gmra.mxu0 %v335
    %v1323 = vpop.f32.mrf.mxu0
    %v1324 = vadd.f32 %v114, %v1323
    %v1325 = vpop.f32.mrf.mxu0
    %v1326 = vadd.f32 %v114, %v1325
    %1327 = vmatmul.bf16.gmra.mxu0 %v338
    %v1328 = vpop.f32.mrf.mxu0
    %v1329 = vadd.f32 %v114, %v1328
    %v1330 = vpop.f32.mrf.mxu0
    %v1331 = vadd.f32 %v114, %v1330
    %1332 = vmatmul.bf16.gmra.mxu0 %v341
    %v1333 = vpop.f32.mrf.mxu0
    %v1334 = vadd.f32 %v114, %v1333
    %v1335 = vpop.f32.mrf.mxu0
    %v1336 = vadd.f32 %v114, %v1335
    %1337 = vmatmul.bf16.gmra.mxu0 %v344
    %v1338 = vpop.f32.mrf.mxu0
    %v1339 = vadd.f32 %v114, %v1338
    %v1340 = vpop.f32.mrf.mxu0
    %v1341 = vadd.f32 %v114, %v1340
    %1342 = vmatmul.bf16.gmra.mxu0 %v347
    %v1343 = vpop.f32.mrf.mxu0
    %v1344 = vadd.f32 %v114, %v1343
    %v1345 = vpop.f32.mrf.mxu0
    %v1346 = vadd.f32 %v114, %v1345
    %1347 = vmatmul.bf16.gmra.mxu0 %v350
    %v1348 = vpop.f32.mrf.mxu0
    %v1349 = vadd.f32 %v114, %v1348
    %v1350 = vpop.f32.mrf.mxu0
    %v1351 = vadd.f32 %v114, %v1350
    %1352 = vmatmul.bf16.gmra.mxu0 %v353
    %v1353 = vpop.f32.mrf.mxu0
    %v1354 = vadd.f32 %v114, %v1353
    %v1355 = vpop.f32.mrf.mxu0
    %v1356 = vadd.f32 %v114, %v1355
    %1357 = vmatmul.bf16.gmra.mxu0 %v356
    %v1358 = vpop.f32.mrf.mxu0
    %v1359 = vadd.f32 %v114, %v1358
    %v1360 = vpop.f32.mrf.mxu0
    %v1361 = vadd.f32 %v114, %v1360
    %1362 = vmatmul.bf16.gmra.mxu0 %v359
    %v1363 = vpop.f32.mrf.mxu0
    %v1364 = vadd.f32 %v114, %v1363
    %v1365 = vpop.f32.mrf.mxu0
    %v1366 = vadd.f32 %v114, %v1365
    %1367 = vmatmul.bf16.gmra.mxu0 %v362
    %v1368 = vpop.f32.mrf.mxu0
    %v1369 = vadd.f32 %v114, %v1368
    %v1370 = vpop.f32.mrf.mxu0
    %v1371 = vadd.f32 %v114, %v1370
    %1372 = vmatmul.bf16.gmra.mxu0 %v365
    %v1373 = vpop.f32.mrf.mxu0
    %v1374 = vadd.f32 %v114, %v1373
    %v1375 = vpop.f32.mrf.mxu0
    %v1376 = vadd.f32 %v114, %v1375
    %1377 = vmatmul.bf16.gmra.mxu0 %v368
    %v1378 = vpop.f32.mrf.mxu0
    %v1379 = vadd.f32 %v114, %v1378
    %v1380 = vpop.f32.mrf.mxu0
    %v1381 = vadd.f32 %v114, %v1380
    %1382 = vmatmul.bf16.gmra.mxu0 %v371
    %v1383 = vpop.f32.mrf.mxu0
    %v1384 = vadd.f32 %v114, %v1383
    %v1385 = vpop.f32.mrf.mxu0
    %v1386 = vadd.f32 %v114, %v1385
    %1387 = vmatmul.bf16.gmra.mxu0 %v374
    %v1388 = vpop.f32.mrf.mxu0
    %v1389 = vadd.f32 %v114, %v1388
    %v1390 = vpop.f32.mrf.mxu0
    %v1391 = vadd.f32 %v114, %v1390
    %1392 = vmatmul.bf16.gmra.mxu0 %v377
    %v1393 = vpop.f32.mrf.mxu0
    %v1394 = vadd.f32 %v114, %v1393
    %v1395 = vpop.f32.mrf.mxu0
    %v1396 = vadd.f32 %v114, %v1395
    %1397 = vmatmul.bf16.gmra.mxu0 %v380
    %v1398 = vpop.f32.mrf.mxu0
    %v1399 = vadd.f32 %v114, %v1398
    %v1400 = vpop.f32.mrf.mxu0
    %v1401 = vadd.f32 %v114, %v1400
    %1402 = vmatmul.bf16.gmra.mxu0 %v383
    %v1403 = vpop.f32.mrf.mxu0
    %v1404 = vadd.f32 %v114, %v1403
    %v1405 = vpop.f32.mrf.mxu0
    %v1406 = vadd.f32 %v114, %v1405
    %1407 = vmatmul.bf16.gmra.mxu0 %v386
    %v1408 = vpop.f32.mrf.mxu0
    %v1409 = vadd.f32 %v114, %v1408
    %v1410 = vpop.f32.mrf.mxu0
    %v1411 = vadd.f32 %v114, %v1410
    %1412 = vmatmul.bf16.gmra.mxu0 %v389
    %v1413 = vpop.f32.mrf.mxu0
    %v1414 = vadd.f32 %v114, %v1413
    %v1415 = vpop.f32.mrf.mxu0
    %v1416 = vadd.f32 %v114, %v1415
    %1417 = vmatmul.bf16.gmra.mxu0 %v392
    %v1418 = vpop.f32.mrf.mxu0
    %v1419 = vadd.f32 %v114, %v1418
    %v1420 = vpop.f32.mrf.mxu0
    %v1421 = vadd.f32 %v114, %v1420
    %1422 = vmatmul.bf16.gmra.mxu0 %v395
    %v1423 = vpop.f32.mrf.mxu0
    %v1424 = vadd.f32 %v114, %v1423
    %v1425 = vpop.f32.mrf.mxu0
    %v1426 = vadd.f32 %v114, %v1425
    %1427 = vmatmul.bf16.gmra.mxu0 %v398
    %v1428 = vpop.f32.mrf.mxu0
    %v1429 = vadd.f32 %v114, %v1428
    %v1430 = vpop.f32.mrf.mxu0
    %v1431 = vadd.f32 %v114, %v1430
    %1432 = vmatmul.bf16.gmra.mxu0 %v401
    %v1433 = vpop.f32.mrf.mxu0
    %v1434 = vadd.f32 %v114, %v1433
    %v1435 = vpop.f32.mrf.mxu0
    %v1436 = vadd.f32 %v114, %v1435
    %1437 = vdwg.mxu0
    %1438 = vmatpush.bf16.msra.mxu0 0
    %1439 = vmatpush.bf16.msra.mxu0 0
    %1440 = vmatpush.bf16.msra.mxu0 0
    %1441 = vmatpush.bf16.msra.mxu0 0
    %1442 = vmatpush.bf16.msra.mxu0 0
    %1443 = vmatpush.bf16.msra.mxu0 0
    %1444 = vmatpush.bf16.msra.mxu0 0
    %1445 = vmatpush.bf16.msra.mxu0 %v416
    %1446 = vmatmul.bf16.gmra.mxu0 %v308
    %v1447 = vpop.f32.mrf.mxu0
    %v1448 = vadd.f32 %v115, %v1447
    %v1449 = vpop.f32.mrf.mxu0
    %v1450 = vadd.f32 %v115, %v1449
    %1451 = vmatmul.bf16.gmra.mxu0 %v311
    %v1452 = vpop.f32.mrf.mxu0
    %v1453 = vadd.f32 %v115, %v1452
    %v1454 = vpop.f32.mrf.mxu0
    %v1455 = vadd.f32 %v115, %v1454
    %1456 = vmatmul.bf16.gmra.mxu0 %v314
    %v1457 = vpop.f32.mrf.mxu0
    %v1458 = vadd.f32 %v115, %v1457
    %v1459 = vpop.f32.mrf.mxu0
    %v1460 = vadd.f32 %v115, %v1459
    %1461 = vmatmul.bf16.gmra.mxu0 %v317
    %v1462 = vpop.f32.mrf.mxu0
    %v1463 = vadd.f32 %v115, %v1462
    %v1464 = vpop.f32.mrf.mxu0
    %v1465 = vadd.f32 %v115, %v1464
    %1466 = vmatmul.bf16.gmra.mxu0 %v320
    %v1467 = vpop.f32.mrf.mxu0
    %v1468 = vadd.f32 %v115, %v1467
    %v1469 = vpop.f32.mrf.mxu0
    %v1470 = vadd.f32 %v115, %v1469
    %1471 = vmatmul.bf16.gmra.mxu0 %v323
    %v1472 = vpop.f32.mrf.mxu0
    %v1473 = vadd.f32 %v115, %v1472
    %v1474 = vpop.f32.mrf.mxu0
    %v1475 = vadd.f32 %v115, %v1474
    %1476 = vmatmul.bf16.gmra.mxu0 %v326
    %v1477 = vpop.f32.mrf.mxu0
    %v1478 = vadd.f32 %v115, %v1477
    %v1479 = vpop.f32.mrf.mxu0
    %v1480 = vadd.f32 %v115, %v1479
    %1481 = vmatmul.bf16.gmra.mxu0 %v329
    %v1482 = vpop.f32.mrf.mxu0
    %v1483 = vadd.f32 %v115, %v1482
    %v1484 = vpop.f32.mrf.mxu0
    %v1485 = vadd.f32 %v115, %v1484
    %1486 = vmatmul.bf16.gmra.mxu0 %v332
    %v1487 = vpop.f32.mrf.mxu0
    %v1488 = vadd.f32 %v115, %v1487
    %v1489 = vpop.f32.mrf.mxu0
    %v1490 = vadd.f32 %v115, %v1489
    %1491 = vmatmul.bf16.gmra.mxu0 %v335
    %v1492 = vpop.f32.mrf.mxu0
    %v1493 = vadd.f32 %v115, %v1492
    %v1494 = vpop.f32.mrf.mxu0
    %v1495 = vadd.f32 %v115, %v1494
    %1496 = vmatmul.bf16.gmra.mxu0 %v338
    %v1497 = vpop.f32.mrf.mxu0
    %v1498 = vadd.f32 %v115, %v1497
    %v1499 = vpop.f32.mrf.mxu0
    %v1500 = vadd.f32 %v115, %v1499
    %1501 = vmatmul.bf16.gmra.mxu0 %v341
    %v1502 = vpop.f32.mrf.mxu0
    %v1503 = vadd.f32 %v115, %v1502
    %v1504 = vpop.f32.mrf.mxu0
    %v1505 = vadd.f32 %v115, %v1504
    %1506 = vmatmul.bf16.gmra.mxu0 %v344
    %v1507 = vpop.f32.mrf.mxu0
    %v1508 = vadd.f32 %v115, %v1507
    %v1509 = vpop.f32.mrf.mxu0
    %v1510 = vadd.f32 %v115, %v1509
    %1511 = vmatmul.bf16.gmra.mxu0 %v347
    %v1512 = vpop.f32.mrf.mxu0
    %v1513 = vadd.f32 %v115, %v1512
    %v1514 = vpop.f32.mrf.mxu0
    %v1515 = vadd.f32 %v115, %v1514
    %1516 = vmatmul.bf16.gmra.mxu0 %v350
    %v1517 = vpop.f32.mrf.mxu0
    %v1518 = vadd.f32 %v115, %v1517
    %v1519 = vpop.f32.mrf.mxu0
    %v1520 = vadd.f32 %v115, %v1519
    %1521 = vmatmul.bf16.gmra.mxu0 %v353
    %v1522 = vpop.f32.mrf.mxu0
    %v1523 = vadd.f32 %v115, %v1522
    %v1524 = vpop.f32.mrf.mxu0
    %v1525 = vadd.f32 %v115, %v1524
    %1526 = vmatmul.bf16.gmra.mxu0 %v356
    %v1527 = vpop.f32.mrf.mxu0
    %v1528 = vadd.f32 %v115, %v1527
    %v1529 = vpop.f32.mrf.mxu0
    %v1530 = vadd.f32 %v115, %v1529
    %1531 = vmatmul.bf16.gmra.mxu0 %v359
    %v1532 = vpop.f32.mrf.mxu0
    %v1533 = vadd.f32 %v115, %v1532
    %v1534 = vpop.f32.mrf.mxu0
    %v1535 = vadd.f32 %v115, %v1534
    %1536 = vmatmul.bf16.gmra.mxu0 %v362
    %v1537 = vpop.f32.mrf.mxu0
    %v1538 = vadd.f32 %v115, %v1537
    %v1539 = vpop.f32.mrf.mxu0
    %v1540 = vadd.f32 %v115, %v1539
    %1541 = vmatmul.bf16.gmra.mxu0 %v365
    %v1542 = vpop.f32.mrf.mxu0
    %v1543 = vadd.f32 %v115, %v1542
    %v1544 = vpop.f32.mrf.mxu0
    %v1545 = vadd.f32 %v115, %v1544
    %1546 = vmatmul.bf16.gmra.mxu0 %v368
    %v1547 = vpop.f32.mrf.mxu0
    %v1548 = vadd.f32 %v115, %v1547
    %v1549 = vpop.f32.mrf.mxu0
    %v1550 = vadd.f32 %v115, %v1549
    %1551 = vmatmul.bf16.gmra.mxu0 %v371
    %v1552 = vpop.f32.mrf.mxu0
    %v1553 = vadd.f32 %v115, %v1552
    %v1554 = vpop.f32.mrf.mxu0
    %v1555 = vadd.f32 %v115, %v1554
    %1556 = vmatmul.bf16.gmra.mxu0 %v374
    %v1557 = vpop.f32.mrf.mxu0
    %v1558 = vadd.f32 %v115, %v1557
    %v1559 = vpop.f32.mrf.mxu0
    %v1560 = vadd.f32 %v115, %v1559
    %1561 = vmatmul.bf16.gmra.mxu0 %v377
    %v1562 = vpop.f32.mrf.mxu0
    %v1563 = vadd.f32 %v115, %v1562
    %v1564 = vpop.f32.mrf.mxu0
    %v1565 = vadd.f32 %v115, %v1564
    %1566 = vmatmul.bf16.gmra.mxu0 %v380
    %v1567 = vpop.f32.mrf.mxu0
    %v1568 = vadd.f32 %v115, %v1567
    %v1569 = vpop.f32.mrf.mxu0
    %v1570 = vadd.f32 %v115, %v1569
    %1571 = vmatmul.bf16.gmra.mxu0 %v383
    %v1572 = vpop.f32.mrf.mxu0
    %v1573 = vadd.f32 %v115, %v1572
    %v1574 = vpop.f32.mrf.mxu0
    %v1575 = vadd.f32 %v115, %v1574
    %1576 = vmatmul.bf16.gmra.mxu0 %v386
    %v1577 = vpop.f32.mrf.mxu0
    %v1578 = vadd.f32 %v115, %v1577
    %v1579 = vpop.f32.mrf.mxu0
    %v1580 = vadd.f32 %v115, %v1579
    %1581 = vmatmul.bf16.gmra.mxu0 %v389
    %v1582 = vpop.f32.mrf.mxu0
    %v1583 = vadd.f32 %v115, %v1582
    %v1584 = vpop.f32.mrf.mxu0
    %v1585 = vadd.f32 %v115, %v1584
    %1586 = vmatmul.bf16.gmra.mxu0 %v392
    %v1587 = vpop.f32.mrf.mxu0
    %v1588 = vadd.f32 %v115, %v1587
    %v1589 = vpop.f32.mrf.mxu0
    %v1590 = vadd.f32 %v115, %v1589
    %1591 = vmatmul.bf16.gmra.mxu0 %v395
    %v1592 = vpop.f32.mrf.mxu0
    %v1593 = vadd.f32 %v115, %v1592
    %v1594 = vpop.f32.mrf.mxu0
    %v1595 = vadd.f32 %v115, %v1594
    %1596 = vmatmul.bf16.gmra.mxu0 %v398
    %v1597 = vpop.f32.mrf.mxu0
    %v1598 = vadd.f32 %v115, %v1597
    %v1599 = vpop.f32.mrf.mxu0
    %v1600 = vadd.f32 %v115, %v1599
    %1601 = vmatmul.bf16.gmra.mxu0 %v401
    %v1602 = vpop.f32.mrf.mxu0
    %v1603 = vadd.f32 %v115, %v1602
    %v1604 = vpop.f32.mrf.mxu0
    %v1605 = vadd.f32 %v115, %v1604
    %1606 = vdwg.mxu0
    %1607 = vmatpush.bf16.msra.mxu0 0
    %1608 = vmatpush.bf16.msra.mxu0 0
    %1609 = vmatpush.bf16.msra.mxu0 0
    %1610 = vmatpush.bf16.msra.mxu0 0
    %1611 = vmatpush.bf16.msra.mxu0 0
    %1612 = vmatpush.bf16.msra.mxu0 0
    %1613 = vmatpush.bf16.msra.mxu0 0
    %1614 = vmatpush.bf16.msra.mxu0 %v418
    %1615 = vmatmul.bf16.gmra.mxu0 %v308
    %v1616 = vpop.f32.mrf.mxu0
    %v1617 = vadd.f32 %v116, %v1616
    %v1618 = vpop.f32.mrf.mxu0
    %v1619 = vadd.f32 %v116, %v1618
    %1620 = vmatmul.bf16.gmra.mxu0 %v311
    %v1621 = vpop.f32.mrf.mxu0
    %v1622 = vadd.f32 %v116, %v1621
    %v1623 = vpop.f32.mrf.mxu0
    %v1624 = vadd.f32 %v116, %v1623
    %1625 = vmatmul.bf16.gmra.mxu0 %v314
    %v1626 = vpop.f32.mrf.mxu0
    %v1627 = vadd.f32 %v116, %v1626
    %v1628 = vpop.f32.mrf.mxu0
    %v1629 = vadd.f32 %v116, %v1628
    %1630 = vmatmul.bf16.gmra.mxu0 %v317
    %v1631 = vpop.f32.mrf.mxu0
    %v1632 = vadd.f32 %v116, %v1631
    %v1633 = vpop.f32.mrf.mxu0
    %v1634 = vadd.f32 %v116, %v1633
    %1635 = vmatmul.bf16.gmra.mxu0 %v320
    %v1636 = vpop.f32.mrf.mxu0
    %v1637 = vadd.f32 %v116, %v1636
    %v1638 = vpop.f32.mrf.mxu0
    %v1639 = vadd.f32 %v116, %v1638
    %1640 = vmatmul.bf16.gmra.mxu0 %v323
    %v1641 = vpop.f32.mrf.mxu0
    %v1642 = vadd.f32 %v116, %v1641
    %v1643 = vpop.f32.mrf.mxu0
    %v1644 = vadd.f32 %v116, %v1643
    %1645 = vmatmul.bf16.gmra.mxu0 %v326
    %v1646 = vpop.f32.mrf.mxu0
    %v1647 = vadd.f32 %v116, %v1646
    %v1648 = vpop.f32.mrf.mxu0
    %v1649 = vadd.f32 %v116, %v1648
    %1650 = vmatmul.bf16.gmra.mxu0 %v329
    %v1651 = vpop.f32.mrf.mxu0
    %v1652 = vadd.f32 %v116, %v1651
    %v1653 = vpop.f32.mrf.mxu0
    %v1654 = vadd.f32 %v116, %v1653
    %1655 = vmatmul.bf16.gmra.mxu0 %v332
    %v1656 = vpop.f32.mrf.mxu0
    %v1657 = vadd.f32 %v116, %v1656
    %v1658 = vpop.f32.mrf.mxu0
    %v1659 = vadd.f32 %v116, %v1658
    %1660 = vmatmul.bf16.gmra.mxu0 %v335
    %v1661 = vpop.f32.mrf.mxu0
    %v1662 = vadd.f32 %v116, %v1661
    %v1663 = vpop.f32.mrf.mxu0
    %v1664 = vadd.f32 %v116, %v1663
    %1665 = vmatmul.bf16.gmra.mxu0 %v338
    %v1666 = vpop.f32.mrf.mxu0
    %v1667 = vadd.f32 %v116, %v1666
    %v1668 = vpop.f32.mrf.mxu0
    %v1669 = vadd.f32 %v116, %v1668
    %1670 = vmatmul.bf16.gmra.mxu0 %v341
    %v1671 = vpop.f32.mrf.mxu0
    %v1672 = vadd.f32 %v116, %v1671
    %v1673 = vpop.f32.mrf.mxu0
    %v1674 = vadd.f32 %v116, %v1673
    %1675 = vmatmul.bf16.gmra.mxu0 %v344
    %v1676 = vpop.f32.mrf.mxu0
    %v1677 = vadd.f32 %v116, %v1676
    %v1678 = vpop.f32.mrf.mxu0
    %v1679 = vadd.f32 %v116, %v1678
    %1680 = vmatmul.bf16.gmra.mxu0 %v347
    %v1681 = vpop.f32.mrf.mxu0
    %v1682 = vadd.f32 %v116, %v1681
    %v1683 = vpop.f32.mrf.mxu0
    %v1684 = vadd.f32 %v116, %v1683
    %1685 = vmatmul.bf16.gmra.mxu0 %v350
    %v1686 = vpop.f32.mrf.mxu0
    %v1687 = vadd.f32 %v116, %v1686
    %v1688 = vpop.f32.mrf.mxu0
    %v1689 = vadd.f32 %v116, %v1688
    %1690 = vmatmul.bf16.gmra.mxu0 %v353
    %v1691 = vpop.f32.mrf.mxu0
    %v1692 = vadd.f32 %v116, %v1691
    %v1693 = vpop.f32.mrf.mxu0
    %v1694 = vadd.f32 %v116, %v1693
    %1695 = vmatmul.bf16.gmra.mxu0 %v356
    %v1696 = vpop.f32.mrf.mxu0
    %v1697 = vadd.f32 %v116, %v1696
    %v1698 = vpop.f32.mrf.mxu0
    %v1699 = vadd.f32 %v116, %v1698
    %1700 = vmatmul.bf16.gmra.mxu0 %v359
    %v1701 = vpop.f32.mrf.mxu0
    %v1702 = vadd.f32 %v116, %v1701
    %v1703 = vpop.f32.mrf.mxu0
    %v1704 = vadd.f32 %v116, %v1703
    %1705 = vmatmul.bf16.gmra.mxu0 %v362
    %v1706 = vpop.f32.mrf.mxu0
    %v1707 = vadd.f32 %v116, %v1706
    %v1708 = vpop.f32.mrf.mxu0
    %v1709 = vadd.f32 %v116, %v1708
    %1710 = vmatmul.bf16.gmra.mxu0 %v365
    %v1711 = vpop.f32.mrf.mxu0
    %v1712 = vadd.f32 %v116, %v1711
    %v1713 = vpop.f32.mrf.mxu0
    %v1714 = vadd.f32 %v116, %v1713
    %1715 = vmatmul.bf16.gmra.mxu0 %v368
    %v1716 = vpop.f32.mrf.mxu0
    %v1717 = vadd.f32 %v116, %v1716
    %v1718 = vpop.f32.mrf.mxu0
    %v1719 = vadd.f32 %v116, %v1718
    %1720 = vmatmul.bf16.gmra.mxu0 %v371
    %v1721 = vpop.f32.mrf.mxu0
    %v1722 = vadd.f32 %v116, %v1721
    %v1723 = vpop.f32.mrf.mxu0
    %v1724 = vadd.f32 %v116, %v1723
    %1725 = vmatmul.bf16.gmra.mxu0 %v374
    %v1726 = vpop.f32.mrf.mxu0
    %v1727 = vadd.f32 %v116, %v1726
    %v1728 = vpop.f32.mrf.mxu0
    %v1729 = vadd.f32 %v116, %v1728
    %1730 = vmatmul.bf16.gmra.mxu0 %v377
    %v1731 = vpop.f32.mrf.mxu0
    %v1732 = vadd.f32 %v116, %v1731
    %v1733 = vpop.f32.mrf.mxu0
    %v1734 = vadd.f32 %v116, %v1733
    %1735 = vmatmul.bf16.gmra.mxu0 %v380
    %v1736 = vpop.f32.mrf.mxu0
    %v1737 = vadd.f32 %v116, %v1736
    %v1738 = vpop.f32.mrf.mxu0
    %v1739 = vadd.f32 %v116, %v1738
    %1740 = vmatmul.bf16.gmra.mxu0 %v383
    %v1741 = vpop.f32.mrf.mxu0
    %v1742 = vadd.f32 %v116, %v1741
    %v1743 = vpop.f32.mrf.mxu0
    %v1744 = vadd.f32 %v116, %v1743
    %1745 = vmatmul.bf16.gmra.mxu0 %v386
    %v1746 = vpop.f32.mrf.mxu0
    %v1747 = vadd.f32 %v116, %v1746
    %v1748 = vpop.f32.mrf.mxu0
    %v1749 = vadd.f32 %v116, %v1748
    %1750 = vmatmul.bf16.gmra.mxu0 %v389
    %v1751 = vpop.f32.mrf.mxu0
    %v1752 = vadd.f32 %v116, %v1751
    %v1753 = vpop.f32.mrf.mxu0
    %v1754 = vadd.f32 %v116, %v1753
    %1755 = vmatmul.bf16.gmra.mxu0 %v392
    %v1756 = vpop.f32.mrf.mxu0
    %v1757 = vadd.f32 %v116, %v1756
    %v1758 = vpop.f32.mrf.mxu0
    %v1759 = vadd.f32 %v116, %v1758
    %1760 = vmatmul.bf16.gmra.mxu0 %v395
    %v1761 = vpop.f32.mrf.mxu0
    %v1762 = vadd.f32 %v116, %v1761
    %v1763 = vpop.f32.mrf.mxu0
    %v1764 = vadd.f32 %v116, %v1763
    %1765 = vmatmul.bf16.gmra.mxu0 %v398
    %v1766 = vpop.f32.mrf.mxu0
    %v1767 = vadd.f32 %v116, %v1766
    %v1768 = vpop.f32.mrf.mxu0
    %v1769 = vadd.f32 %v116, %v1768
    %1770 = vmatmul.bf16.gmra.mxu0 %v401
    %v1771 = vpop.f32.mrf.mxu0
    %v1772 = vadd.f32 %v116, %v1771
    %v1773 = vpop.f32.mrf.mxu0
    %v1774 = vadd.f32 %v116, %v1773
    %1775 = vdwg.mxu0
    %1776 = vmatpush.bf16.msra.mxu0 0
    %1777 = vmatpush.bf16.msra.mxu0 0
    %1778 = vmatpush.bf16.msra.mxu0 0
    %1779 = vmatpush.bf16.msra.mxu0 0
    %1780 = vmatpush.bf16.msra.mxu0 0
    %1781 = vmatpush.bf16.msra.mxu0 0
    %1782 = vmatpush.bf16.msra.mxu0 0
    %1783 = vmatpush.bf16.msra.mxu0 %v420
    %1784 = vmatmul.bf16.gmra.mxu0 %v308
    %v1785 = vpop.f32.mrf.mxu0
    %v1786 = vadd.f32 %v117, %v1785
    %v1787 = vpop.f32.mrf.mxu0
    %v1788 = vadd.f32 %v117, %v1787
    %1789 = vmatmul.bf16.gmra.mxu0 %v311
    %v1790 = vpop.f32.mrf.mxu0
    %v1791 = vadd.f32 %v117, %v1790
    %v1792 = vpop.f32.mrf.mxu0
    %v1793 = vadd.f32 %v117, %v1792
    %1794 = vmatmul.bf16.gmra.mxu0 %v314
    %v1795 = vpop.f32.mrf.mxu0
    %v1796 = vadd.f32 %v117, %v1795
    %v1797 = vpop.f32.mrf.mxu0
    %v1798 = vadd.f32 %v117, %v1797
    %1799 = vmatmul.bf16.gmra.mxu0 %v317
    %v1800 = vpop.f32.mrf.mxu0
    %v1801 = vadd.f32 %v117, %v1800
    %v1802 = vpop.f32.mrf.mxu0
    %v1803 = vadd.f32 %v117, %v1802
    %1804 = vmatmul.bf16.gmra.mxu0 %v320
    %v1805 = vpop.f32.mrf.mxu0
    %v1806 = vadd.f32 %v117, %v1805
    %v1807 = vpop.f32.mrf.mxu0
    %v1808 = vadd.f32 %v117, %v1807
    %1809 = vmatmul.bf16.gmra.mxu0 %v323
    %v1810 = vpop.f32.mrf.mxu0
    %v1811 = vadd.f32 %v117, %v1810
    %v1812 = vpop.f32.mrf.mxu0
    %v1813 = vadd.f32 %v117, %v1812
    %1814 = vmatmul.bf16.gmra.mxu0 %v326
    %v1815 = vpop.f32.mrf.mxu0
    %v1816 = vadd.f32 %v117, %v1815
    %v1817 = vpop.f32.mrf.mxu0
    %v1818 = vadd.f32 %v117, %v1817
    %1819 = vmatmul.bf16.gmra.mxu0 %v329
    %v1820 = vpop.f32.mrf.mxu0
    %v1821 = vadd.f32 %v117, %v1820
    %v1822 = vpop.f32.mrf.mxu0
    %v1823 = vadd.f32 %v117, %v1822
    %1824 = vmatmul.bf16.gmra.mxu0 %v332
    %v1825 = vpop.f32.mrf.mxu0
    %v1826 = vadd.f32 %v117, %v1825
    %v1827 = vpop.f32.mrf.mxu0
    %v1828 = vadd.f32 %v117, %v1827
    %1829 = vmatmul.bf16.gmra.mxu0 %v335
    %v1830 = vpop.f32.mrf.mxu0
    %v1831 = vadd.f32 %v117, %v1830
    %v1832 = vpop.f32.mrf.mxu0
    %v1833 = vadd.f32 %v117, %v1832
    %1834 = vmatmul.bf16.gmra.mxu0 %v338
    %v1835 = vpop.f32.mrf.mxu0
    %v1836 = vadd.f32 %v117, %v1835
    %v1837 = vpop.f32.mrf.mxu0
    %v1838 = vadd.f32 %v117, %v1837
    %1839 = vmatmul.bf16.gmra.mxu0 %v341
    %v1840 = vpop.f32.mrf.mxu0
    %v1841 = vadd.f32 %v117, %v1840
    %v1842 = vpop.f32.mrf.mxu0
    %v1843 = vadd.f32 %v117, %v1842
    %1844 = vmatmul.bf16.gmra.mxu0 %v344
    %v1845 = vpop.f32.mrf.mxu0
    %v1846 = vadd.f32 %v117, %v1845
    %v1847 = vpop.f32.mrf.mxu0
    %v1848 = vadd.f32 %v117, %v1847
    %1849 = vmatmul.bf16.gmra.mxu0 %v347
    %v1850 = vpop.f32.mrf.mxu0
    %v1851 = vadd.f32 %v117, %v1850
    %v1852 = vpop.f32.mrf.mxu0
    %v1853 = vadd.f32 %v117, %v1852
    %1854 = vmatmul.bf16.gmra.mxu0 %v350
    %v1855 = vpop.f32.mrf.mxu0
    %v1856 = vadd.f32 %v117, %v1855
    %v1857 = vpop.f32.mrf.mxu0
    %v1858 = vadd.f32 %v117, %v1857
    %1859 = vmatmul.bf16.gmra.mxu0 %v353
    %v1860 = vpop.f32.mrf.mxu0
    %v1861 = vadd.f32 %v117, %v1860
    %v1862 = vpop.f32.mrf.mxu0
    %v1863 = vadd.f32 %v117, %v1862
    %1864 = vmatmul.bf16.gmra.mxu0 %v356
    %v1865 = vpop.f32.mrf.mxu0
    %v1866 = vadd.f32 %v117, %v1865
    %v1867 = vpop.f32.mrf.mxu0
    %v1868 = vadd.f32 %v117, %v1867
    %1869 = vmatmul.bf16.gmra.mxu0 %v359
    %v1870 = vpop.f32.mrf.mxu0
    %v1871 = vadd.f32 %v117, %v1870
    %v1872 = vpop.f32.mrf.mxu0
    %v1873 = vadd.f32 %v117, %v1872
    %1874 = vmatmul.bf16.gmra.mxu0 %v362
    %v1875 = vpop.f32.mrf.mxu0
    %v1876 = vadd.f32 %v117, %v1875
    %v1877 = vpop.f32.mrf.mxu0
    %v1878 = vadd.f32 %v117, %v1877
    %1879 = vmatmul.bf16.gmra.mxu0 %v365
    %v1880 = vpop.f32.mrf.mxu0
    %v1881 = vadd.f32 %v117, %v1880
    %v1882 = vpop.f32.mrf.mxu0
    %v1883 = vadd.f32 %v117, %v1882
    %1884 = vmatmul.bf16.gmra.mxu0 %v368
    %v1885 = vpop.f32.mrf.mxu0
    %v1886 = vadd.f32 %v117, %v1885
    %v1887 = vpop.f32.mrf.mxu0
    %v1888 = vadd.f32 %v117, %v1887
    %1889 = vmatmul.bf16.gmra.mxu0 %v371
    %v1890 = vpop.f32.mrf.mxu0
    %v1891 = vadd.f32 %v117, %v1890
    %v1892 = vpop.f32.mrf.mxu0
    %v1893 = vadd.f32 %v117, %v1892
    %1894 = vmatmul.bf16.gmra.mxu0 %v374
    %v1895 = vpop.f32.mrf.mxu0
    %v1896 = vadd.f32 %v117, %v1895
    %v1897 = vpop.f32.mrf.mxu0
    %v1898 = vadd.f32 %v117, %v1897
    %1899 = vmatmul.bf16.gmra.mxu0 %v377
    %v1900 = vpop.f32.mrf.mxu0
    %v1901 = vadd.f32 %v117, %v1900
    %v1902 = vpop.f32.mrf.mxu0
    %v1903 = vadd.f32 %v117, %v1902
    %1904 = vmatmul.bf16.gmra.mxu0 %v380
    %v1905 = vpop.f32.mrf.mxu0
    %v1906 = vadd.f32 %v117, %v1905
    %v1907 = vpop.f32.mrf.mxu0
    %v1908 = vadd.f32 %v117, %v1907
    %1909 = vmatmul.bf16.gmra.mxu0 %v383
    %v1910 = vpop.f32.mrf.mxu0
    %v1911 = vadd.f32 %v117, %v1910
    %v1912 = vpop.f32.mrf.mxu0
    %v1913 = vadd.f32 %v117, %v1912
    %1914 = vmatmul.bf16.gmra.mxu0 %v386
    %v1915 = vpop.f32.mrf.mxu0
    %v1916 = vadd.f32 %v117, %v1915
    %v1917 = vpop.f32.mrf.mxu0
    %v1918 = vadd.f32 %v117, %v1917
    %1919 = vmatmul.bf16.gmra.mxu0 %v389
    %v1920 = vpop.f32.mrf.mxu0
    %v1921 = vadd.f32 %v117, %v1920
    %v1922 = vpop.f32.mrf.mxu0
    %v1923 = vadd.f32 %v117, %v1922
    %1924 = vmatmul.bf16.gmra.mxu0 %v392
    %v1925 = vpop.f32.mrf.mxu0
    %v1926 = vadd.f32 %v117, %v1925
    %v1927 = vpop.f32.mrf.mxu0
    %v1928 = vadd.f32 %v117, %v1927
    %1929 = vmatmul.bf16.gmra.mxu0 %v395
    %v1930 = vpop.f32.mrf.mxu0
    %v1931 = vadd.f32 %v117, %v1930
    %v1932 = vpop.f32.mrf.mxu0
    %v1933 = vadd.f32 %v117, %v1932
    %1934 = vmatmul.bf16.gmra.mxu0 %v398
    %v1935 = vpop.f32.mrf.mxu0
    %v1936 = vadd.f32 %v117, %v1935
    %v1937 = vpop.f32.mrf.mxu0
    %v1938 = vadd.f32 %v117, %v1937
    %1939 = vmatmul.bf16.gmra.mxu0 %v401
    %v1940 = vpop.f32.mrf.mxu0
    %v1941 = vadd.f32 %v117, %v1940
    %v1942 = vpop.f32.mrf.mxu0
    %v1943 = vadd.f32 %v117, %v1942
    %1944 = vdwg.mxu0
    %1945 = vmatpush.bf16.msra.mxu0 0
    %1946 = vmatpush.bf16.msra.mxu0 0
    %1947 = vmatpush.bf16.msra.mxu0 0
    %1948 = vmatpush.bf16.msra.mxu0 0
    %1949 = vmatpush.bf16.msra.mxu0 0
    %1950 = vmatpush.bf16.msra.mxu0 0
    %1951 = vmatpush.bf16.msra.mxu0 0
    %1952 = vmatpush.bf16.msra.mxu0 %v422
    %1953 = vmatmul.bf16.gmra.mxu0 %v308
    %v1954 = vpop.f32.mrf.mxu0
    %v1955 = vadd.f32 %v118, %v1954
    %v1956 = vpop.f32.mrf.mxu0
    %v1957 = vadd.f32 %v118, %v1956
    %1958 = vmatmul.bf16.gmra.mxu0 %v311
    %v1959 = vpop.f32.mrf.mxu0
    %v1960 = vadd.f32 %v118, %v1959
    %v1961 = vpop.f32.mrf.mxu0
    %v1962 = vadd.f32 %v118, %v1961
    %1963 = vmatmul.bf16.gmra.mxu0 %v314
    %v1964 = vpop.f32.mrf.mxu0
    %v1965 = vadd.f32 %v118, %v1964
    %v1966 = vpop.f32.mrf.mxu0
    %v1967 = vadd.f32 %v118, %v1966
    %1968 = vmatmul.bf16.gmra.mxu0 %v317
    %v1969 = vpop.f32.mrf.mxu0
    %v1970 = vadd.f32 %v118, %v1969
    %v1971 = vpop.f32.mrf.mxu0
    %v1972 = vadd.f32 %v118, %v1971
    %1973 = vmatmul.bf16.gmra.mxu0 %v320
    %v1974 = vpop.f32.mrf.mxu0
    %v1975 = vadd.f32 %v118, %v1974
    %v1976 = vpop.f32.mrf.mxu0
    %v1977 = vadd.f32 %v118, %v1976
    %1978 = vmatmul.bf16.gmra.mxu0 %v323
    %v1979 = vpop.f32.mrf.mxu0
    %v1980 = vadd.f32 %v118, %v1979
    %v1981 = vpop.f32.mrf.mxu0
    %v1982 = vadd.f32 %v118, %v1981
    %1983 = vmatmul.bf16.gmra.mxu0 %v326
    %v1984 = vpop.f32.mrf.mxu0
    %v1985 = vadd.f32 %v118, %v1984
    %v1986 = vpop.f32.mrf.mxu0
    %v1987 = vadd.f32 %v118, %v1986
    %1988 = vmatmul.bf16.gmra.mxu0 %v329
    %v1989 = vpop.f32.mrf.mxu0
    %v1990 = vadd.f32 %v118, %v1989
    %v1991 = vpop.f32.mrf.mxu0
    %v1992 = vadd.f32 %v118, %v1991
    %1993 = vmatmul.bf16.gmra.mxu0 %v332
    %v1994 = vpop.f32.mrf.mxu0
    %v1995 = vadd.f32 %v118, %v1994
    %v1996 = vpop.f32.mrf.mxu0
    %v1997 = vadd.f32 %v118, %v1996
    %1998 = vmatmul.bf16.gmra.mxu0 %v335
    %v1999 = vpop.f32.mrf.mxu0
    %v2000 = vadd.f32 %v118, %v1999
    %v2001 = vpop.f32.mrf.mxu0
    %v2002 = vadd.f32 %v118, %v2001
    %2003 = vmatmul.bf16.gmra.mxu0 %v338
    %v2004 = vpop.f32.mrf.mxu0
    %v2005 = vadd.f32 %v118, %v2004
    %v2006 = vpop.f32.mrf.mxu0
    %v2007 = vadd.f32 %v118, %v2006
    %2008 = vmatmul.bf16.gmra.mxu0 %v341
    %v2009 = vpop.f32.mrf.mxu0
    %v2010 = vadd.f32 %v118, %v2009
    %v2011 = vpop.f32.mrf.mxu0
    %v2012 = vadd.f32 %v118, %v2011
    %2013 = vmatmul.bf16.gmra.mxu0 %v344
    %v2014 = vpop.f32.mrf.mxu0
    %v2015 = vadd.f32 %v118, %v2014
    %v2016 = vpop.f32.mrf.mxu0
    %v2017 = vadd.f32 %v118, %v2016
    %2018 = vmatmul.bf16.gmra.mxu0 %v347
    %v2019 = vpop.f32.mrf.mxu0
    %v2020 = vadd.f32 %v118, %v2019
    %v2021 = vpop.f32.mrf.mxu0
    %v2022 = vadd.f32 %v118, %v2021
    %2023 = vmatmul.bf16.gmra.mxu0 %v350
    %v2024 = vpop.f32.mrf.mxu0
    %v2025 = vadd.f32 %v118, %v2024
    %v2026 = vpop.f32.mrf.mxu0
    %v2027 = vadd.f32 %v118, %v2026
    %2028 = vmatmul.bf16.gmra.mxu0 %v353
    %v2029 = vpop.f32.mrf.mxu0
    %v2030 = vadd.f32 %v118, %v2029
    %v2031 = vpop.f32.mrf.mxu0
    %v2032 = vadd.f32 %v118, %v2031
    %2033 = vmatmul.bf16.gmra.mxu0 %v356
    %v2034 = vpop.f32.mrf.mxu0
    %v2035 = vadd.f32 %v118, %v2034
    %v2036 = vpop.f32.mrf.mxu0
    %v2037 = vadd.f32 %v118, %v2036
    %2038 = vmatmul.bf16.gmra.mxu0 %v359
    %v2039 = vpop.f32.mrf.mxu0
    %v2040 = vadd.f32 %v118, %v2039
    %v2041 = vpop.f32.mrf.mxu0
    %v2042 = vadd.f32 %v118, %v2041
    %2043 = vmatmul.bf16.gmra.mxu0 %v362
    %v2044 = vpop.f32.mrf.mxu0
    %v2045 = vadd.f32 %v118, %v2044
    %v2046 = vpop.f32.mrf.mxu0
    %v2047 = vadd.f32 %v118, %v2046
    %2048 = vmatmul.bf16.gmra.mxu0 %v365
    %v2049 = vpop.f32.mrf.mxu0
    %v2050 = vadd.f32 %v118, %v2049
    %v2051 = vpop.f32.mrf.mxu0
    %v2052 = vadd.f32 %v118, %v2051
    %2053 = vmatmul.bf16.gmra.mxu0 %v368
    %v2054 = vpop.f32.mrf.mxu0
    %v2055 = vadd.f32 %v118, %v2054
    %v2056 = vpop.f32.mrf.mxu0
    %v2057 = vadd.f32 %v118, %v2056
    %2058 = vmatmul.bf16.gmra.mxu0 %v371
    %v2059 = vpop.f32.mrf.mxu0
    %v2060 = vadd.f32 %v118, %v2059
    %v2061 = vpop.f32.mrf.mxu0
    %v2062 = vadd.f32 %v118, %v2061
    %2063 = vmatmul.bf16.gmra.mxu0 %v374
    %v2064 = vpop.f32.mrf.mxu0
    %v2065 = vadd.f32 %v118, %v2064
    %v2066 = vpop.f32.mrf.mxu0
    %v2067 = vadd.f32 %v118, %v2066
    %2068 = vmatmul.bf16.gmra.mxu0 %v377
    %v2069 = vpop.f32.mrf.mxu0
    %v2070 = vadd.f32 %v118, %v2069
    %v2071 = vpop.f32.mrf.mxu0
    %v2072 = vadd.f32 %v118, %v2071
    %2073 = vmatmul.bf16.gmra.mxu0 %v380
    %v2074 = vpop.f32.mrf.mxu0
    %v2075 = vadd.f32 %v118, %v2074
    %v2076 = vpop.f32.mrf.mxu0
    %v2077 = vadd.f32 %v118, %v2076
    %2078 = vmatmul.bf16.gmra.mxu0 %v383
    %v2079 = vpop.f32.mrf.mxu0
    %v2080 = vadd.f32 %v118, %v2079
    %v2081 = vpop.f32.mrf.mxu0
    %v2082 = vadd.f32 %v118, %v2081
    %2083 = vmatmul.bf16.gmra.mxu0 %v386
    %v2084 = vpop.f32.mrf.mxu0
    %v2085 = vadd.f32 %v118, %v2084
    %v2086 = vpop.f32.mrf.mxu0
    %v2087 = vadd.f32 %v118, %v2086
    %2088 = vmatmul.bf16.gmra.mxu0 %v389
    %v2089 = vpop.f32.mrf.mxu0
    %v2090 = vadd.f32 %v118, %v2089
    %v2091 = vpop.f32.mrf.mxu0
    %v2092 = vadd.f32 %v118, %v2091
    %2093 = vmatmul.bf16.gmra.mxu0 %v392
    %v2094 = vpop.f32.mrf.mxu0
    %v2095 = vadd.f32 %v118, %v2094
    %v2096 = vpop.f32.mrf.mxu0
    %v2097 = vadd.f32 %v118, %v2096
    %2098 = vmatmul.bf16.gmra.mxu0 %v395
    %v2099 = vpop.f32.mrf.mxu0
    %v2100 = vadd.f32 %v118, %v2099
    %v2101 = vpop.f32.mrf.mxu0
    %v2102 = vadd.f32 %v118, %v2101
    %2103 = vmatmul.bf16.gmra.mxu0 %v398
    %v2104 = vpop.f32.mrf.mxu0
    %v2105 = vadd.f32 %v118, %v2104
    %v2106 = vpop.f32.mrf.mxu0
    %v2107 = vadd.f32 %v118, %v2106
    %2108 = vmatmul.bf16.gmra.mxu0 %v401
    %v2109 = vpop.f32.mrf.mxu0
    %v2110 = vadd.f32 %v118, %v2109
    %v2111 = vpop.f32.mrf.mxu0
    %v2112 = vadd.f32 %v118, %v2111
    %2113 = vdwg.mxu0
    %v2114 = vmul.f32 %v434, 0.5
    %v2115 = vmul.f32 %v603, 0.5
    %v2116 = vmul.f32 %v772, 0.5
    %v2117 = vmul.f32 %v941, 0.5
    %v2118 = vmul.f32 %v1110, 0.5
    %v2119 = vmul.f32 %v1279, 0.5
    %v2120 = vmul.f32 %v1448, 0.5
    %v2121 = vmul.f32 %v1617, 0.5
    %v2122 = vmul.f32 %v1786, 0.5
    %v2123 = vmul.f32 %v1955, 0.5
    %v2124 = vmul.f32 %v436, 0.5
    %v2125 = vmul.f32 %v605, 0.5
    %v2126 = vmul.f32 %v774, 0.5
    %v2127 = vmul.f32 %v943, 0.5
    %v2128 = vmul.f32 %v1112, 0.5
    %v2129 = vmul.f32 %v1281, 0.5
    %v2130 = vmul.f32 %v1450, 0.5
    %v2131 = vmul.f32 %v1619, 0.5
    %v2132 = vmul.f32 %v1788, 0.5
    %v2133 = vmul.f32 %v1957, 0.5
    %v2134 = vmul.f32 %v439, 0.5
    %v2135 = vmul.f32 %v608, 0.5
    %v2136 = vmul.f32 %v777, 0.5
    %v2137 = vmul.f32 %v946, 0.5
    %v2138 = vmul.f32 %v1115, 0.5
    %v2139 = vmul.f32 %v1284, 0.5
    %v2140 = vmul.f32 %v1453, 0.5
    %v2141 = vmul.f32 %v1622, 0.5
    %v2142 = vmul.f32 %v1791, 0.5
    %v2143 = vmul.f32 %v1960, 0.5
    %v2144 = vmul.f32 %v441, 0.5
    %v2145 = vmul.f32 %v610, 0.5
    %v2146 = vmul.f32 %v779, 0.5
    %v2147 = vmul.f32 %v948, 0.5
    %v2148 = vmul.f32 %v1117, 0.5
    %v2149 = vmul.f32 %v1286, 0.5
    %v2150 = vmul.f32 %v1455, 0.5
    %v2151 = vmul.f32 %v1624, 0.5
    %v2152 = vmul.f32 %v1793, 0.5
    %v2153 = vmul.f32 %v1962, 0.5
    %v2154 = vmul.f32 %v444, 0.5
    %v2155 = vmul.f32 %v613, 0.5
    %v2156 = vmul.f32 %v782, 0.5
    %v2157 = vmul.f32 %v951, 0.5
    %v2158 = vmul.f32 %v1120, 0.5
    %v2159 = vmul.f32 %v1289, 0.5
    %v2160 = vmul.f32 %v1458, 0.5
    %v2161 = vmul.f32 %v1627, 0.5
    %v2162 = vmul.f32 %v1796, 0.5
    %v2163 = vmul.f32 %v1965, 0.5
    %v2164 = vmul.f32 %v446, 0.5
    %v2165 = vmul.f32 %v615, 0.5
    %v2166 = vmul.f32 %v784, 0.5
    %v2167 = vmul.f32 %v953, 0.5
    %v2168 = vmul.f32 %v1122, 0.5
    %v2169 = vmul.f32 %v1291, 0.5
    %v2170 = vmul.f32 %v1460, 0.5
    %v2171 = vmul.f32 %v1629, 0.5
    %v2172 = vmul.f32 %v1798, 0.5
    %v2173 = vmul.f32 %v1967, 0.5
    %v2174 = vmul.f32 %v449, 0.5
    %v2175 = vmul.f32 %v618, 0.5
    %v2176 = vmul.f32 %v787, 0.5
    %v2177 = vmul.f32 %v956, 0.5
    %v2178 = vmul.f32 %v1125, 0.5
    %v2179 = vmul.f32 %v1294, 0.5
    %v2180 = vmul.f32 %v1463, 0.5
    %v2181 = vmul.f32 %v1632, 0.5
    %v2182 = vmul.f32 %v1801, 0.5
    %v2183 = vmul.f32 %v1970, 0.5
    %v2184 = vmul.f32 %v451, 0.5
    %v2185 = vmul.f32 %v620, 0.5
    %v2186 = vmul.f32 %v789, 0.5
    %v2187 = vmul.f32 %v958, 0.5
    %v2188 = vmul.f32 %v1127, 0.5
    %v2189 = vmul.f32 %v1296, 0.5
    %v2190 = vmul.f32 %v1465, 0.5
    %v2191 = vmul.f32 %v1634, 0.5
    %v2192 = vmul.f32 %v1803, 0.5
    %v2193 = vmul.f32 %v1972, 0.5
    %v2194 = vmul.f32 %v454, 0.5
    %v2195 = vmul.f32 %v623, 0.5
    %v2196 = vmul.f32 %v792, 0.5
    %v2197 = vmul.f32 %v961, 0.5
    %v2198 = vmul.f32 %v1130, 0.5
    %v2199 = vmul.f32 %v1299, 0.5
    %v2200 = vmul.f32 %v1468, 0.5
    %v2201 = vmul.f32 %v1637, 0.5
    %v2202 = vmul.f32 %v1806, 0.5
    %v2203 = vmul.f32 %v1975, 0.5
    %v2204 = vmul.f32 %v456, 0.5
    %v2205 = vmul.f32 %v625, 0.5
    %v2206 = vmul.f32 %v794, 0.5
    %v2207 = vmul.f32 %v963, 0.5
    %v2208 = vmul.f32 %v1132, 0.5
    %v2209 = vmul.f32 %v1301, 0.5
    %v2210 = vmul.f32 %v1470, 0.5
    %v2211 = vmul.f32 %v1639, 0.5
    %v2212 = vmul.f32 %v1808, 0.5
    %v2213 = vmul.f32 %v1977, 0.5
    %v2214 = vmul.f32 %v459, 0.5
    %v2215 = vmul.f32 %v628, 0.5
    %v2216 = vmul.f32 %v797, 0.5
    %v2217 = vmul.f32 %v966, 0.5
    %v2218 = vmul.f32 %v1135, 0.5
    %v2219 = vmul.f32 %v1304, 0.5
    %v2220 = vmul.f32 %v1473, 0.5
    %v2221 = vmul.f32 %v1642, 0.5
    %v2222 = vmul.f32 %v1811, 0.5
    %v2223 = vmul.f32 %v1980, 0.5
    %v2224 = vmul.f32 %v461, 0.5
    %v2225 = vmul.f32 %v630, 0.5
    %v2226 = vmul.f32 %v799, 0.5
    %v2227 = vmul.f32 %v968, 0.5
    %v2228 = vmul.f32 %v1137, 0.5
    %v2229 = vmul.f32 %v1306, 0.5
    %v2230 = vmul.f32 %v1475, 0.5
    %v2231 = vmul.f32 %v1644, 0.5
    %v2232 = vmul.f32 %v1813, 0.5
    %v2233 = vmul.f32 %v1982, 0.5
    %v2234 = vmul.f32 %v464, 0.5
    %v2235 = vmul.f32 %v633, 0.5
    %v2236 = vmul.f32 %v802, 0.5
    %v2237 = vmul.f32 %v971, 0.5
    %v2238 = vmul.f32 %v1140, 0.5
    %v2239 = vmul.f32 %v1309, 0.5
    %v2240 = vmul.f32 %v1478, 0.5
    %v2241 = vmul.f32 %v1647, 0.5
    %v2242 = vmul.f32 %v1816, 0.5
    %v2243 = vmul.f32 %v1985, 0.5
    %v2244 = vmul.f32 %v466, 0.5
    %v2245 = vmul.f32 %v635, 0.5
    %v2246 = vmul.f32 %v804, 0.5
    %v2247 = vmul.f32 %v973, 0.5
    %v2248 = vmul.f32 %v1142, 0.5
    %v2249 = vmul.f32 %v1311, 0.5
    %v2250 = vmul.f32 %v1480, 0.5
    %v2251 = vmul.f32 %v1649, 0.5
    %v2252 = vmul.f32 %v1818, 0.5
    %v2253 = vmul.f32 %v1987, 0.5
    %v2254 = vmul.f32 %v469, 0.5
    %v2255 = vmul.f32 %v638, 0.5
    %v2256 = vmul.f32 %v807, 0.5
    %v2257 = vmul.f32 %v976, 0.5
    %v2258 = vmul.f32 %v1145, 0.5
    %v2259 = vmul.f32 %v1314, 0.5
    %v2260 = vmul.f32 %v1483, 0.5
    %v2261 = vmul.f32 %v1652, 0.5
    %v2262 = vmul.f32 %v1821, 0.5
    %v2263 = vmul.f32 %v1990, 0.5
    %v2264 = vmul.f32 %v471, 0.5
    %v2265 = vmul.f32 %v640, 0.5
    %v2266 = vmul.f32 %v809, 0.5
    %v2267 = vmul.f32 %v978, 0.5
    %v2268 = vmul.f32 %v1147, 0.5
    %v2269 = vmul.f32 %v1316, 0.5
    %v2270 = vmul.f32 %v1485, 0.5
    %v2271 = vmul.f32 %v1654, 0.5
    %v2272 = vmul.f32 %v1823, 0.5
    %v2273 = vmul.f32 %v1992, 0.5
    %v2274 = vmul.f32 %v474, 0.5
    %v2275 = vmul.f32 %v643, 0.5
    %v2276 = vmul.f32 %v812, 0.5
    %v2277 = vmul.f32 %v981, 0.5
    %v2278 = vmul.f32 %v1150, 0.5
    %v2279 = vmul.f32 %v1319, 0.5
    %v2280 = vmul.f32 %v1488, 0.5
    %v2281 = vmul.f32 %v1657, 0.5
    %v2282 = vmul.f32 %v1826, 0.5
    %v2283 = vmul.f32 %v1995, 0.5
    %v2284 = vmul.f32 %v476, 0.5
    %v2285 = vmul.f32 %v645, 0.5
    %v2286 = vmul.f32 %v814, 0.5
    %v2287 = vmul.f32 %v983, 0.5
    %v2288 = vmul.f32 %v1152, 0.5
    %v2289 = vmul.f32 %v1321, 0.5
    %v2290 = vmul.f32 %v1490, 0.5
    %v2291 = vmul.f32 %v1659, 0.5
    %v2292 = vmul.f32 %v1828, 0.5
    %v2293 = vmul.f32 %v1997, 0.5
    %v2294 = vmul.f32 %v479, 0.5
    %v2295 = vmul.f32 %v648, 0.5
    %v2296 = vmul.f32 %v817, 0.5
    %v2297 = vmul.f32 %v986, 0.5
    %v2298 = vmul.f32 %v1155, 0.5
    %v2299 = vmul.f32 %v1324, 0.5
    %v2300 = vmul.f32 %v1493, 0.5
    %v2301 = vmul.f32 %v1662, 0.5
    %v2302 = vmul.f32 %v1831, 0.5
    %v2303 = vmul.f32 %v2000, 0.5
    %v2304 = vmul.f32 %v481, 0.5
    %v2305 = vmul.f32 %v650, 0.5
    %v2306 = vmul.f32 %v819, 0.5
    %v2307 = vmul.f32 %v988, 0.5
    %v2308 = vmul.f32 %v1157, 0.5
    %v2309 = vmul.f32 %v1326, 0.5
    %v2310 = vmul.f32 %v1495, 0.5
    %v2311 = vmul.f32 %v1664, 0.5
    %v2312 = vmul.f32 %v1833, 0.5
    %v2313 = vmul.f32 %v2002, 0.5
    %v2314 = vmul.f32 %v484, 0.5
    %v2315 = vmul.f32 %v653, 0.5
    %v2316 = vmul.f32 %v822, 0.5
    %v2317 = vmul.f32 %v991, 0.5
    %v2318 = vmul.f32 %v1160, 0.5
    %v2319 = vmul.f32 %v1329, 0.5
    %v2320 = vmul.f32 %v1498, 0.5
    %v2321 = vmul.f32 %v1667, 0.5
    %v2322 = vmul.f32 %v1836, 0.5
    %v2323 = vmul.f32 %v2005, 0.5
    %v2324 = vmul.f32 %v486, 0.5
    %v2325 = vmul.f32 %v655, 0.5
    %v2326 = vmul.f32 %v824, 0.5
    %v2327 = vmul.f32 %v993, 0.5
    %v2328 = vmul.f32 %v1162, 0.5
    %v2329 = vmul.f32 %v1331, 0.5
    %v2330 = vmul.f32 %v1500, 0.5
    %v2331 = vmul.f32 %v1669, 0.5
    %v2332 = vmul.f32 %v1838, 0.5
    %v2333 = vmul.f32 %v2007, 0.5
    %v2334 = vmul.f32 %v489, 0.5
    %v2335 = vmul.f32 %v658, 0.5
    %v2336 = vmul.f32 %v827, 0.5
    %v2337 = vmul.f32 %v996, 0.5
    %v2338 = vmul.f32 %v1165, 0.5
    %v2339 = vmul.f32 %v1334, 0.5
    %v2340 = vmul.f32 %v1503, 0.5
    %v2341 = vmul.f32 %v1672, 0.5
    %v2342 = vmul.f32 %v1841, 0.5
    %v2343 = vmul.f32 %v2010, 0.5
    %v2344 = vmul.f32 %v491, 0.5
    %v2345 = vmul.f32 %v660, 0.5
    %v2346 = vmul.f32 %v829, 0.5
    %v2347 = vmul.f32 %v998, 0.5
    %v2348 = vmul.f32 %v1167, 0.5
    %v2349 = vmul.f32 %v1336, 0.5
    %v2350 = vmul.f32 %v1505, 0.5
    %v2351 = vmul.f32 %v1674, 0.5
    %v2352 = vmul.f32 %v1843, 0.5
    %v2353 = vmul.f32 %v2012, 0.5
    %v2354 = vmul.f32 %v494, 0.5
    %v2355 = vmul.f32 %v663, 0.5
    %v2356 = vmul.f32 %v832, 0.5
    %v2357 = vmul.f32 %v1001, 0.5
    %v2358 = vmul.f32 %v1170, 0.5
    %v2359 = vmul.f32 %v1339, 0.5
    %v2360 = vmul.f32 %v1508, 0.5
    %v2361 = vmul.f32 %v1677, 0.5
    %v2362 = vmul.f32 %v1846, 0.5
    %v2363 = vmul.f32 %v2015, 0.5
    %v2364 = vmul.f32 %v496, 0.5
    %v2365 = vmul.f32 %v665, 0.5
    %v2366 = vmul.f32 %v834, 0.5
    %v2367 = vmul.f32 %v1003, 0.5
    %v2368 = vmul.f32 %v1172, 0.5
    %v2369 = vmul.f32 %v1341, 0.5
    %v2370 = vmul.f32 %v1510, 0.5
    %v2371 = vmul.f32 %v1679, 0.5
    %v2372 = vmul.f32 %v1848, 0.5
    %v2373 = vmul.f32 %v2017, 0.5
    %v2374 = vmul.f32 %v499, 0.5
    %v2375 = vmul.f32 %v668, 0.5
    %v2376 = vmul.f32 %v837, 0.5
    %v2377 = vmul.f32 %v1006, 0.5
    %v2378 = vmul.f32 %v1175, 0.5
    %v2379 = vmul.f32 %v1344, 0.5
    %v2380 = vmul.f32 %v1513, 0.5
    %v2381 = vmul.f32 %v1682, 0.5
    %v2382 = vmul.f32 %v1851, 0.5
    %v2383 = vmul.f32 %v2020, 0.5
    %v2384 = vmul.f32 %v501, 0.5
    %v2385 = vmul.f32 %v670, 0.5
    %v2386 = vmul.f32 %v839, 0.5
    %v2387 = vmul.f32 %v1008, 0.5
    %v2388 = vmul.f32 %v1177, 0.5
    %v2389 = vmul.f32 %v1346, 0.5
    %v2390 = vmul.f32 %v1515, 0.5
    %v2391 = vmul.f32 %v1684, 0.5
    %v2392 = vmul.f32 %v1853, 0.5
    %v2393 = vmul.f32 %v2022, 0.5
    %v2394 = vmul.f32 %v504, 0.5
    %v2395 = vmul.f32 %v673, 0.5
    %v2396 = vmul.f32 %v842, 0.5
    %v2397 = vmul.f32 %v1011, 0.5
    %v2398 = vmul.f32 %v1180, 0.5
    %v2399 = vmul.f32 %v1349, 0.5
    %v2400 = vmul.f32 %v1518, 0.5
    %v2401 = vmul.f32 %v1687, 0.5
    %v2402 = vmul.f32 %v1856, 0.5
    %v2403 = vmul.f32 %v2025, 0.5
    %v2404 = vmul.f32 %v506, 0.5
    %v2405 = vmul.f32 %v675, 0.5
    %v2406 = vmul.f32 %v844, 0.5
    %v2407 = vmul.f32 %v1013, 0.5
    %v2408 = vmul.f32 %v1182, 0.5
    %v2409 = vmul.f32 %v1351, 0.5
    %v2410 = vmul.f32 %v1520, 0.5
    %v2411 = vmul.f32 %v1689, 0.5
    %v2412 = vmul.f32 %v1858, 0.5
    %v2413 = vmul.f32 %v2027, 0.5
    %v2414 = vmul.f32 %v509, 0.5
    %v2415 = vmul.f32 %v678, 0.5
    %v2416 = vmul.f32 %v847, 0.5
    %v2417 = vmul.f32 %v1016, 0.5
    %v2418 = vmul.f32 %v1185, 0.5
    %v2419 = vmul.f32 %v1354, 0.5
    %v2420 = vmul.f32 %v1523, 0.5
    %v2421 = vmul.f32 %v1692, 0.5
    %v2422 = vmul.f32 %v1861, 0.5
    %v2423 = vmul.f32 %v2030, 0.5
    %v2424 = vmul.f32 %v511, 0.5
    %v2425 = vmul.f32 %v680, 0.5
    %v2426 = vmul.f32 %v849, 0.5
    %v2427 = vmul.f32 %v1018, 0.5
    %v2428 = vmul.f32 %v1187, 0.5
    %v2429 = vmul.f32 %v1356, 0.5
    %v2430 = vmul.f32 %v1525, 0.5
    %v2431 = vmul.f32 %v1694, 0.5
    %v2432 = vmul.f32 %v1863, 0.5
    %v2433 = vmul.f32 %v2032, 0.5
    %v2434 = vmul.f32 %v514, 0.5
    %v2435 = vmul.f32 %v683, 0.5
    %v2436 = vmul.f32 %v852, 0.5
    %v2437 = vmul.f32 %v1021, 0.5
    %v2438 = vmul.f32 %v1190, 0.5
    %v2439 = vmul.f32 %v1359, 0.5
    %v2440 = vmul.f32 %v1528, 0.5
    %v2441 = vmul.f32 %v1697, 0.5
    %v2442 = vmul.f32 %v1866, 0.5
    %v2443 = vmul.f32 %v2035, 0.5
    %v2444 = vmul.f32 %v516, 0.5
    %v2445 = vmul.f32 %v685, 0.5
    %v2446 = vmul.f32 %v854, 0.5
    %v2447 = vmul.f32 %v1023, 0.5
    %v2448 = vmul.f32 %v1192, 0.5
    %v2449 = vmul.f32 %v1361, 0.5
    %v2450 = vmul.f32 %v1530, 0.5
    %v2451 = vmul.f32 %v1699, 0.5
    %v2452 = vmul.f32 %v1868, 0.5
    %v2453 = vmul.f32 %v2037, 0.5
    %v2454 = vmul.f32 %v519, 0.5
    %v2455 = vmul.f32 %v688, 0.5
    %v2456 = vmul.f32 %v857, 0.5
    %v2457 = vmul.f32 %v1026, 0.5
    %v2458 = vmul.f32 %v1195, 0.5
    %v2459 = vmul.f32 %v1364, 0.5
    %v2460 = vmul.f32 %v1533, 0.5
    %v2461 = vmul.f32 %v1702, 0.5
    %v2462 = vmul.f32 %v1871, 0.5
    %v2463 = vmul.f32 %v2040, 0.5
    %v2464 = vmul.f32 %v521, 0.5
    %v2465 = vmul.f32 %v690, 0.5
    %v2466 = vmul.f32 %v859, 0.5
    %v2467 = vmul.f32 %v1028, 0.5
    %v2468 = vmul.f32 %v1197, 0.5
    %v2469 = vmul.f32 %v1366, 0.5
    %v2470 = vmul.f32 %v1535, 0.5
    %v2471 = vmul.f32 %v1704, 0.5
    %v2472 = vmul.f32 %v1873, 0.5
    %v2473 = vmul.f32 %v2042, 0.5
    %v2474 = vmul.f32 %v524, 0.5
    %v2475 = vmul.f32 %v693, 0.5
    %v2476 = vmul.f32 %v862, 0.5
    %v2477 = vmul.f32 %v1031, 0.5
    %v2478 = vmul.f32 %v1200, 0.5
    %v2479 = vmul.f32 %v1369, 0.5
    %v2480 = vmul.f32 %v1538, 0.5
    %v2481 = vmul.f32 %v1707, 0.5
    %v2482 = vmul.f32 %v1876, 0.5
    %v2483 = vmul.f32 %v2045, 0.5
    %v2484 = vmul.f32 %v526, 0.5
    %v2485 = vmul.f32 %v695, 0.5
    %v2486 = vmul.f32 %v864, 0.5
    %v2487 = vmul.f32 %v1033, 0.5
    %v2488 = vmul.f32 %v1202, 0.5
    %v2489 = vmul.f32 %v1371, 0.5
    %v2490 = vmul.f32 %v1540, 0.5
    %v2491 = vmul.f32 %v1709, 0.5
    %v2492 = vmul.f32 %v1878, 0.5
    %v2493 = vmul.f32 %v2047, 0.5
    %v2494 = vmul.f32 %v529, 0.5
    %v2495 = vmul.f32 %v698, 0.5
    %v2496 = vmul.f32 %v867, 0.5
    %v2497 = vmul.f32 %v1036, 0.5
    %v2498 = vmul.f32 %v1205, 0.5
    %v2499 = vmul.f32 %v1374, 0.5
    %v2500 = vmul.f32 %v1543, 0.5
    %v2501 = vmul.f32 %v1712, 0.5
    %v2502 = vmul.f32 %v1881, 0.5
    %v2503 = vmul.f32 %v2050, 0.5
    %v2504 = vmul.f32 %v531, 0.5
    %v2505 = vmul.f32 %v700, 0.5
    %v2506 = vmul.f32 %v869, 0.5
    %v2507 = vmul.f32 %v1038, 0.5
    %v2508 = vmul.f32 %v1207, 0.5
    %v2509 = vmul.f32 %v1376, 0.5
    %v2510 = vmul.f32 %v1545, 0.5
    %v2511 = vmul.f32 %v1714, 0.5
    %v2512 = vmul.f32 %v1883, 0.5
    %v2513 = vmul.f32 %v2052, 0.5
    %v2514 = vmul.f32 %v534, 0.5
    %v2515 = vmul.f32 %v703, 0.5
    %v2516 = vmul.f32 %v872, 0.5
    %v2517 = vmul.f32 %v1041, 0.5
    %v2518 = vmul.f32 %v1210, 0.5
    %v2519 = vmul.f32 %v1379, 0.5
    %v2520 = vmul.f32 %v1548, 0.5
    %v2521 = vmul.f32 %v1717, 0.5
    %v2522 = vmul.f32 %v1886, 0.5
    %v2523 = vmul.f32 %v2055, 0.5
    %v2524 = vmul.f32 %v536, 0.5
    %v2525 = vmul.f32 %v705, 0.5
    %v2526 = vmul.f32 %v874, 0.5
    %v2527 = vmul.f32 %v1043, 0.5
    %v2528 = vmul.f32 %v1212, 0.5
    %v2529 = vmul.f32 %v1381, 0.5
    %v2530 = vmul.f32 %v1550, 0.5
    %v2531 = vmul.f32 %v1719, 0.5
    %v2532 = vmul.f32 %v1888, 0.5
    %v2533 = vmul.f32 %v2057, 0.5
    %v2534 = vmul.f32 %v539, 0.5
    %v2535 = vmul.f32 %v708, 0.5
    %v2536 = vmul.f32 %v877, 0.5
    %v2537 = vmul.f32 %v1046, 0.5
    %v2538 = vmul.f32 %v1215, 0.5
    %v2539 = vmul.f32 %v1384, 0.5
    %v2540 = vmul.f32 %v1553, 0.5
    %v2541 = vmul.f32 %v1722, 0.5
    %v2542 = vmul.f32 %v1891, 0.5
    %v2543 = vmul.f32 %v2060, 0.5
    %v2544 = vmul.f32 %v541, 0.5
    %v2545 = vmul.f32 %v710, 0.5
    %v2546 = vmul.f32 %v879, 0.5
    %v2547 = vmul.f32 %v1048, 0.5
    %v2548 = vmul.f32 %v1217, 0.5
    %v2549 = vmul.f32 %v1386, 0.5
    %v2550 = vmul.f32 %v1555, 0.5
    %v2551 = vmul.f32 %v1724, 0.5
    %v2552 = vmul.f32 %v1893, 0.5
    %v2553 = vmul.f32 %v2062, 0.5
    %v2554 = vmul.f32 %v544, 0.5
    %v2555 = vmul.f32 %v713, 0.5
    %v2556 = vmul.f32 %v882, 0.5
    %v2557 = vmul.f32 %v1051, 0.5
    %v2558 = vmul.f32 %v1220, 0.5
    %v2559 = vmul.f32 %v1389, 0.5
    %v2560 = vmul.f32 %v1558, 0.5
    %v2561 = vmul.f32 %v1727, 0.5
    %v2562 = vmul.f32 %v1896, 0.5
    %v2563 = vmul.f32 %v2065, 0.5
    %v2564 = vmul.f32 %v546, 0.5
    %v2565 = vmul.f32 %v715, 0.5
    %v2566 = vmul.f32 %v884, 0.5
    %v2567 = vmul.f32 %v1053, 0.5
    %v2568 = vmul.f32 %v1222, 0.5
    %v2569 = vmul.f32 %v1391, 0.5
    %v2570 = vmul.f32 %v1560, 0.5
    %v2571 = vmul.f32 %v1729, 0.5
    %v2572 = vmul.f32 %v1898, 0.5
    %v2573 = vmul.f32 %v2067, 0.5
    %v2574 = vmul.f32 %v549, 0.5
    %v2575 = vmul.f32 %v718, 0.5
    %v2576 = vmul.f32 %v887, 0.5
    %v2577 = vmul.f32 %v1056, 0.5
    %v2578 = vmul.f32 %v1225, 0.5
    %v2579 = vmul.f32 %v1394, 0.5
    %v2580 = vmul.f32 %v1563, 0.5
    %v2581 = vmul.f32 %v1732, 0.5
    %v2582 = vmul.f32 %v1901, 0.5
    %v2583 = vmul.f32 %v2070, 0.5
    %v2584 = vmul.f32 %v551, 0.5
    %v2585 = vmul.f32 %v720, 0.5
    %v2586 = vmul.f32 %v889, 0.5
    %v2587 = vmul.f32 %v1058, 0.5
    %v2588 = vmul.f32 %v1227, 0.5
    %v2589 = vmul.f32 %v1396, 0.5
    %v2590 = vmul.f32 %v1565, 0.5
    %v2591 = vmul.f32 %v1734, 0.5
    %v2592 = vmul.f32 %v1903, 0.5
    %v2593 = vmul.f32 %v2072, 0.5
    %v2594 = vmul.f32 %v554, 0.5
    %v2595 = vmul.f32 %v723, 0.5
    %v2596 = vmul.f32 %v892, 0.5
    %v2597 = vmul.f32 %v1061, 0.5
    %v2598 = vmul.f32 %v1230, 0.5
    %v2599 = vmul.f32 %v1399, 0.5
    %v2600 = vmul.f32 %v1568, 0.5
    %v2601 = vmul.f32 %v1737, 0.5
    %v2602 = vmul.f32 %v1906, 0.5
    %v2603 = vmul.f32 %v2075, 0.5
    %v2604 = vmul.f32 %v556, 0.5
    %v2605 = vmul.f32 %v725, 0.5
    %v2606 = vmul.f32 %v894, 0.5
    %v2607 = vmul.f32 %v1063, 0.5
    %v2608 = vmul.f32 %v1232, 0.5
    %v2609 = vmul.f32 %v1401, 0.5
    %v2610 = vmul.f32 %v1570, 0.5
    %v2611 = vmul.f32 %v1739, 0.5
    %v2612 = vmul.f32 %v1908, 0.5
    %v2613 = vmul.f32 %v2077, 0.5
    %v2614 = vmul.f32 %v559, 0.5
    %v2615 = vmul.f32 %v728, 0.5
    %v2616 = vmul.f32 %v897, 0.5
    %v2617 = vmul.f32 %v1066, 0.5
    %v2618 = vmul.f32 %v1235, 0.5
    %v2619 = vmul.f32 %v1404, 0.5
    %v2620 = vmul.f32 %v1573, 0.5
    %v2621 = vmul.f32 %v1742, 0.5
    %v2622 = vmul.f32 %v1911, 0.5
    %v2623 = vmul.f32 %v2080, 0.5
    %v2624 = vmul.f32 %v561, 0.5
    %v2625 = vmul.f32 %v730, 0.5
    %v2626 = vmul.f32 %v899, 0.5
    %v2627 = vmul.f32 %v1068, 0.5
    %v2628 = vmul.f32 %v1237, 0.5
    %v2629 = vmul.f32 %v1406, 0.5
    %v2630 = vmul.f32 %v1575, 0.5
    %v2631 = vmul.f32 %v1744, 0.5
    %v2632 = vmul.f32 %v1913, 0.5
    %v2633 = vmul.f32 %v2082, 0.5
    %v2634 = vmul.f32 %v564, 0.5
    %v2635 = vmul.f32 %v733, 0.5
    %v2636 = vmul.f32 %v902, 0.5
    %v2637 = vmul.f32 %v1071, 0.5
    %v2638 = vmul.f32 %v1240, 0.5
    %v2639 = vmul.f32 %v1409, 0.5
    %v2640 = vmul.f32 %v1578, 0.5
    %v2641 = vmul.f32 %v1747, 0.5
    %v2642 = vmul.f32 %v1916, 0.5
    %v2643 = vmul.f32 %v2085, 0.5
    %v2644 = vmul.f32 %v566, 0.5
    %v2645 = vmul.f32 %v735, 0.5
    %v2646 = vmul.f32 %v904, 0.5
    %v2647 = vmul.f32 %v1073, 0.5
    %v2648 = vmul.f32 %v1242, 0.5
    %v2649 = vmul.f32 %v1411, 0.5
    %v2650 = vmul.f32 %v1580, 0.5
    %v2651 = vmul.f32 %v1749, 0.5
    %v2652 = vmul.f32 %v1918, 0.5
    %v2653 = vmul.f32 %v2087, 0.5
    %v2654 = vmul.f32 %v569, 0.5
    %v2655 = vmul.f32 %v738, 0.5
    %v2656 = vmul.f32 %v907, 0.5
    %v2657 = vmul.f32 %v1076, 0.5
    %v2658 = vmul.f32 %v1245, 0.5
    %v2659 = vmul.f32 %v1414, 0.5
    %v2660 = vmul.f32 %v1583, 0.5
    %v2661 = vmul.f32 %v1752, 0.5
    %v2662 = vmul.f32 %v1921, 0.5
    %v2663 = vmul.f32 %v2090, 0.5
    %v2664 = vmul.f32 %v571, 0.5
    %v2665 = vmul.f32 %v740, 0.5
    %v2666 = vmul.f32 %v909, 0.5
    %v2667 = vmul.f32 %v1078, 0.5
    %v2668 = vmul.f32 %v1247, 0.5
    %v2669 = vmul.f32 %v1416, 0.5
    %v2670 = vmul.f32 %v1585, 0.5
    %v2671 = vmul.f32 %v1754, 0.5
    %v2672 = vmul.f32 %v1923, 0.5
    %v2673 = vmul.f32 %v2092, 0.5
    %v2674 = vmul.f32 %v574, 0.5
    %v2675 = vmul.f32 %v743, 0.5
    %v2676 = vmul.f32 %v912, 0.5
    %v2677 = vmul.f32 %v1081, 0.5
    %v2678 = vmul.f32 %v1250, 0.5
    %v2679 = vmul.f32 %v1419, 0.5
    %v2680 = vmul.f32 %v1588, 0.5
    %v2681 = vmul.f32 %v1757, 0.5
    %v2682 = vmul.f32 %v1926, 0.5
    %v2683 = vmul.f32 %v2095, 0.5
    %v2684 = vmul.f32 %v576, 0.5
    %v2685 = vmul.f32 %v745, 0.5
    %v2686 = vmul.f32 %v914, 0.5
    %v2687 = vmul.f32 %v1083, 0.5
    %v2688 = vmul.f32 %v1252, 0.5
    %v2689 = vmul.f32 %v1421, 0.5
    %v2690 = vmul.f32 %v1590, 0.5
    %v2691 = vmul.f32 %v1759, 0.5
    %v2692 = vmul.f32 %v1928, 0.5
    %v2693 = vmul.f32 %v2097, 0.5
    %v2694 = vmul.f32 %v579, 0.5
    %v2695 = vmul.f32 %v748, 0.5
    %v2696 = vmul.f32 %v917, 0.5
    %v2697 = vmul.f32 %v1086, 0.5
    %v2698 = vmul.f32 %v1255, 0.5
    %v2699 = vmul.f32 %v1424, 0.5
    %v2700 = vmul.f32 %v1593, 0.5
    %v2701 = vmul.f32 %v1762, 0.5
    %v2702 = vmul.f32 %v1931, 0.5
    %v2703 = vmul.f32 %v2100, 0.5
    %v2704 = vmul.f32 %v581, 0.5
    %v2705 = vmul.f32 %v750, 0.5
    %v2706 = vmul.f32 %v919, 0.5
    %v2707 = vmul.f32 %v1088, 0.5
    %v2708 = vmul.f32 %v1257, 0.5
    %v2709 = vmul.f32 %v1426, 0.5
    %v2710 = vmul.f32 %v1595, 0.5
    %v2711 = vmul.f32 %v1764, 0.5
    %v2712 = vmul.f32 %v1933, 0.5
    %v2713 = vmul.f32 %v2102, 0.5
    %v2714 = vmul.f32 %v584, 0.5
    %v2715 = vmul.f32 %v753, 0.5
    %v2716 = vmul.f32 %v922, 0.5
    %v2717 = vmul.f32 %v1091, 0.5
    %v2718 = vmul.f32 %v1260, 0.5
    %v2719 = vmul.f32 %v1429, 0.5
    %v2720 = vmul.f32 %v1598, 0.5
    %v2721 = vmul.f32 %v1767, 0.5
    %v2722 = vmul.f32 %v1936, 0.5
    %v2723 = vmul.f32 %v2105, 0.5
    %v2724 = vmul.f32 %v586, 0.5
    %v2725 = vmul.f32 %v755, 0.5
    %v2726 = vmul.f32 %v924, 0.5
    %v2727 = vmul.f32 %v1093, 0.5
    %v2728 = vmul.f32 %v1262, 0.5
    %v2729 = vmul.f32 %v1431, 0.5
    %v2730 = vmul.f32 %v1600, 0.5
    %v2731 = vmul.f32 %v1769, 0.5
    %v2732 = vmul.f32 %v1938, 0.5
    %v2733 = vmul.f32 %v2107, 0.5
    %v2734 = vmul.f32 %v589, 0.5
    %v2735 = vmul.f32 %v758, 0.5
    %v2736 = vmul.f32 %v927, 0.5
    %v2737 = vmul.f32 %v1096, 0.5
    %v2738 = vmul.f32 %v1265, 0.5
    %v2739 = vmul.f32 %v1434, 0.5
    %v2740 = vmul.f32 %v1603, 0.5
    %v2741 = vmul.f32 %v1772, 0.5
    %v2742 = vmul.f32 %v1941, 0.5
    %v2743 = vmul.f32 %v2110, 0.5
    %v2744 = vmul.f32 %v591, 0.5
    %v2745 = vmul.f32 %v760, 0.5
    %v2746 = vmul.f32 %v929, 0.5
    %v2747 = vmul.f32 %v1098, 0.5
    %v2748 = vmul.f32 %v1267, 0.5
    %v2749 = vmul.f32 %v1436, 0.5
    %v2750 = vmul.f32 %v1605, 0.5
    %v2751 = vmul.f32 %v1774, 0.5
    %v2752 = vmul.f32 %v1943, 0.5
    %v2753 = vmul.f32 %v2112, 0.5
    %v2754 = vtanh.pop %v2114
    %v2755 = vtanh.pop %v2115
    %v2756 = vtanh.pop %v2116
    %v2757 = vtanh.pop %v2117
    %v2758 = vtanh.pop %v2118
    %v2759 = vtanh.pop %v2119
    %v2760 = vtanh.pop %v2120
    %v2761 = vtanh.pop %v2121
    %v2762 = vtanh.pop %v2122
    %v2763 = vtanh.pop %v2123
    %v2764 = vtanh.pop %v2124
    %v2765 = vtanh.pop %v2125
    %v2766 = vtanh.pop %v2126
    %v2767 = vtanh.pop %v2127
    %v2768 = vtanh.pop %v2128
    %v2769 = vtanh.pop %v2129
    %v2770 = vtanh.pop %v2130
    %v2771 = vtanh.pop %v2131
    %v2772 = vtanh.pop %v2132
    %v2773 = vtanh.pop %v2133
    %v2774 = vtanh.pop %v2134
    %v2775 = vtanh.pop %v2135
    %v2776 = vtanh.pop %v2136
    %v2777 = vtanh.pop %v2137
    %v2778 = vtanh.pop %v2138
    %v2779 = vtanh.pop %v2139
    %v2780 = vtanh.pop %v2140
    %v2781 = vtanh.pop %v2141
    %v2782 = vtanh.pop %v2142
    %v2783 = vtanh.pop %v2143
    %v2784 = vtanh.pop %v2144
    %v2785 = vtanh.pop %v2145
    %v2786 = vtanh.pop %v2146
    %v2787 = vtanh.pop %v2147
    %v2788 = vtanh.pop %v2148
    %v2789 = vtanh.pop %v2149
    %v2790 = vtanh.pop %v2150
    %v2791 = vtanh.pop %v2151
    %v2792 = vtanh.pop %v2152
    %v2793 = vtanh.pop %v2153
    %v2794 = vtanh.pop %v2154
    %v2795 = vtanh.pop %v2155
    %v2796 = vtanh.pop %v2156
    %v2797 = vtanh.pop %v2157
    %v2798 = vtanh.pop %v2158
    %v2799 = vtanh.pop %v2159
    %v2800 = vtanh.pop %v2160
    %v2801 = vtanh.pop %v2161
    %v2802 = vtanh.pop %v2162
    %v2803 = vtanh.pop %v2163
    %v2804 = vtanh.pop %v2164
    %v2805 = vtanh.pop %v2165
    %v2806 = vtanh.pop %v2166
    %v2807 = vtanh.pop %v2167
    %v2808 = vtanh.pop %v2168
    %v2809 = vtanh.pop %v2169
    %v2810 = vtanh.pop %v2170
    %v2811 = vtanh.pop %v2171
    %v2812 = vtanh.pop %v2172
    %v2813 = vtanh.pop %v2173
    %v2814 = vtanh.pop %v2174
    %v2815 = vtanh.pop %v2175
    %v2816 = vtanh.pop %v2176
    %v2817 = vtanh.pop %v2177
    %v2818 = vtanh.pop %v2178
    %v2819 = vtanh.pop %v2179
    %v2820 = vtanh.pop %v2180
    %v2821 = vtanh.pop %v2181
    %v2822 = vtanh.pop %v2182
    %v2823 = vtanh.pop %v2183
    %v2824 = vtanh.pop %v2184
    %v2825 = vtanh.pop %v2185
    %v2826 = vtanh.pop %v2186
    %v2827 = vtanh.pop %v2187
    %v2828 = vtanh.pop %v2188
    %v2829 = vtanh.pop %v2189
    %v2830 = vtanh.pop %v2190
    %v2831 = vtanh.pop %v2191
    %v2832 = vtanh.pop %v2192
    %v2833 = vtanh.pop %v2193
    %v2834 = vtanh.pop %v2194
    %v2835 = vtanh.pop %v2195
    %v2836 = vtanh.pop %v2196
    %v2837 = vtanh.pop %v2197
    %v2838 = vtanh.pop %v2198
    %v2839 = vtanh.pop %v2199
    %v2840 = vtanh.pop %v2200
    %v2841 = vtanh.pop %v2201
    %v2842 = vtanh.pop %v2202
    %v2843 = vtanh.pop %v2203
    %v2844 = vtanh.pop %v2204
    %v2845 = vtanh.pop %v2205
    %v2846 = vtanh.pop %v2206
    %v2847 = vtanh.pop %v2207
    %v2848 = vtanh.pop %v2208
    %v2849 = vtanh.pop %v2209
    %v2850 = vtanh.pop %v2210
    %v2851 = vtanh.pop %v2211
    %v2852 = vtanh.pop %v2212
    %v2853 = vtanh.pop %v2213
    %v2854 = vtanh.pop %v2214
    %v2855 = vtanh.pop %v2215
    %v2856 = vtanh.pop %v2216
    %v2857 = vtanh.pop %v2217
    %v2858 = vtanh.pop %v2218
    %v2859 = vtanh.pop %v2219
    %v2860 = vtanh.pop %v2220
    %v2861 = vtanh.pop %v2221
    %v2862 = vtanh.pop %v2222
    %v2863 = vtanh.pop %v2223
    %v2864 = vtanh.pop %v2224
    %v2865 = vtanh.pop %v2225
    %v2866 = vtanh.pop %v2226
    %v2867 = vtanh.pop %v2227
    %v2868 = vtanh.pop %v2228
    %v2869 = vtanh.pop %v2229
    %v2870 = vtanh.pop %v2230
    %v2871 = vtanh.pop %v2231
    %v2872 = vtanh.pop %v2232
    %v2873 = vtanh.pop %v2233
    %v2874 = vtanh.pop %v2234
    %v2875 = vtanh.pop %v2235
    %v2876 = vtanh.pop %v2236
    %v2877 = vtanh.pop %v2237
    %v2878 = vtanh.pop %v2238
    %v2879 = vtanh.pop %v2239
    %v2880 = vtanh.pop %v2240
    %v2881 = vtanh.pop %v2241
    %v2882 = vtanh.pop %v2242
    %v2883 = vtanh.pop %v2243
    %v2884 = vtanh.pop %v2244
    %v2885 = vtanh.pop %v2245
    %v2886 = vtanh.pop %v2246
    %v2887 = vtanh.pop %v2247
    %v2888 = vtanh.pop %v2248
    %v2889 = vtanh.pop %v2249
    %v2890 = vtanh.pop %v2250
    %v2891 = vtanh.pop %v2251
    %v2892 = vtanh.pop %v2252
    %v2893 = vtanh.pop %v2253
    %v2894 = vtanh.pop %v2254
    %v2895 = vtanh.pop %v2255
    %v2896 = vtanh.pop %v2256
    %v2897 = vtanh.pop %v2257
    %v2898 = vtanh.pop %v2258
    %v2899 = vtanh.pop %v2259
    %v2900 = vtanh.pop %v2260
    %v2901 = vtanh.pop %v2261
    %v2902 = vtanh.pop %v2262
    %v2903 = vtanh.pop %v2263
    %v2904 = vtanh.pop %v2264
    %v2905 = vtanh.pop %v2265
    %v2906 = vtanh.pop %v2266
    %v2907 = vtanh.pop %v2267
    %v2908 = vtanh.pop %v2268
    %v2909 = vtanh.pop %v2269
    %v2910 = vtanh.pop %v2270
    %v2911 = vtanh.pop %v2271
    %v2912 = vtanh.pop %v2272
    %v2913 = vtanh.pop %v2273
    %v2914 = vtanh.pop %v2274
    %v2915 = vtanh.pop %v2275
    %v2916 = vtanh.pop %v2276
    %v2917 = vtanh.pop %v2277
    %v2918 = vtanh.pop %v2278
    %v2919 = vtanh.pop %v2279
    %v2920 = vtanh.pop %v2280
    %v2921 = vtanh.pop %v2281
    %v2922 = vtanh.pop %v2282
    %v2923 = vtanh.pop %v2283
    %v2924 = vtanh.pop %v2284
    %v2925 = vtanh.pop %v2285
    %v2926 = vtanh.pop %v2286
    %v2927 = vtanh.pop %v2287
    %v2928 = vtanh.pop %v2288
    %v2929 = vtanh.pop %v2289
    %v2930 = vtanh.pop %v2290
    %v2931 = vtanh.pop %v2291
    %v2932 = vtanh.pop %v2292
    %v2933 = vtanh.pop %v2293
    %v2934 = vtanh.pop %v2294
    %v2935 = vtanh.pop %v2295
    %v2936 = vtanh.pop %v2296
    %v2937 = vtanh.pop %v2297
    %v2938 = vtanh.pop %v2298
    %v2939 = vtanh.pop %v2299
    %v2940 = vtanh.pop %v2300
    %v2941 = vtanh.pop %v2301
    %v2942 = vtanh.pop %v2302
    %v2943 = vtanh.pop %v2303
    %v2944 = vtanh.pop %v2304
    %v2945 = vtanh.pop %v2305
    %v2946 = vtanh.pop %v2306
    %v2947 = vtanh.pop %v2307
    %v2948 = vtanh.pop %v2308
    %v2949 = vtanh.pop %v2309
    %v2950 = vtanh.pop %v2310
    %v2951 = vtanh.pop %v2311
    %v2952 = vtanh.pop %v2312
    %v2953 = vtanh.pop %v2313
    %v2954 = vtanh.pop %v2314
    %v2955 = vtanh.pop %v2315
    %v2956 = vtanh.pop %v2316
    %v2957 = vtanh.pop %v2317
    %v2958 = vtanh.pop %v2318
    %v2959 = vtanh.pop %v2319
    %v2960 = vtanh.pop %v2320
    %v2961 = vtanh.pop %v2321
    %v2962 = vtanh.pop %v2322
    %v2963 = vtanh.pop %v2323
    %v2964 = vtanh.pop %v2324
    %v2965 = vtanh.pop %v2325
    %v2966 = vtanh.pop %v2326
    %v2967 = vtanh.pop %v2327
    %v2968 = vtanh.pop %v2328
    %v2969 = vtanh.pop %v2329
    %v2970 = vtanh.pop %v2330
    %v2971 = vtanh.pop %v2331
    %v2972 = vtanh.pop %v2332
    %v2973 = vtanh.pop %v2333
    %v2974 = vtanh.pop %v2334
    %v2975 = vtanh.pop %v2335
    %v2976 = vtanh.pop %v2336
    %v2977 = vtanh.pop %v2337
    %v2978 = vtanh.pop %v2338
    %v2979 = vtanh.pop %v2339
    %v2980 = vtanh.pop %v2340
    %v2981 = vtanh.pop %v2341
    %v2982 = vtanh.pop %v2342
    %v2983 = vtanh.pop %v2343
    %v2984 = vtanh.pop %v2344
    %v2985 = vtanh.pop %v2345
    %v2986 = vtanh.pop %v2346
    %v2987 = vtanh.pop %v2347
    %v2988 = vtanh.pop %v2348
    %v2989 = vtanh.pop %v2349
    %v2990 = vtanh.pop %v2350
    %v2991 = vtanh.pop %v2351
    %v2992 = vtanh.pop %v2352
    %v2993 = vtanh.pop %v2353
    %v2994 = vtanh.pop %v2354
    %v2995 = vtanh.pop %v2355
    %v2996 = vtanh.pop %v2356
    %v2997 = vtanh.pop %v2357
    %v2998 = vtanh.pop %v2358
    %v2999 = vtanh.pop %v2359
    %v3000 = vtanh.pop %v2360
    %v3001 = vtanh.pop %v2361
    %v3002 = vtanh.pop %v2362
    %v3003 = vtanh.pop %v2363
    %v3004 = vtanh.pop %v2364
    %v3005 = vtanh.pop %v2365
    %v3006 = vtanh.pop %v2366
    %v3007 = vtanh.pop %v2367
    %v3008 = vtanh.pop %v2368
    %v3009 = vtanh.pop %v2369
    %v3010 = vtanh.pop %v2370
    %v3011 = vtanh.pop %v2371
    %v3012 = vtanh.pop %v2372
    %v3013 = vtanh.pop %v2373
    %v3014 = vtanh.pop %v2374
    %v3015 = vtanh.pop %v2375
    %v3016 = vtanh.pop %v2376
    %v3017 = vtanh.pop %v2377
    %v3018 = vtanh.pop %v2378
    %v3019 = vtanh.pop %v2379
    %v3020 = vtanh.pop %v2380
    %v3021 = vtanh.pop %v2381
    %v3022 = vtanh.pop %v2382
    %v3023 = vtanh.pop %v2383
    %v3024 = vtanh.pop %v2384
    %v3025 = vtanh.pop %v2385
    %v3026 = vtanh.pop %v2386
    %v3027 = vtanh.pop %v2387
    %v3028 = vtanh.pop %v2388
    %v3029 = vtanh.pop %v2389
    %v3030 = vtanh.pop %v2390
    %v3031 = vtanh.pop %v2391
    %v3032 = vtanh.pop %v2392
    %v3033 = vtanh.pop %v2393
    %v3034 = vtanh.pop %v2394
    %v3035 = vtanh.pop %v2395
    %v3036 = vtanh.pop %v2396
    %v3037 = vtanh.pop %v2397
    %v3038 = vtanh.pop %v2398
    %v3039 = vtanh.pop %v2399
    %v3040 = vtanh.pop %v2400
    %v3041 = vtanh.pop %v2401
    %v3042 = vtanh.pop %v2402
    %v3043 = vtanh.pop %v2403
    %v3044 = vtanh.pop %v2404
    %v3045 = vtanh.pop %v2405
    %v3046 = vtanh.pop %v2406
    %v3047 = vtanh.pop %v2407
    %v3048 = vtanh.pop %v2408
    %v3049 = vtanh.pop %v2409
    %v3050 = vtanh.pop %v2410
    %v3051 = vtanh.pop %v2411
    %v3052 = vtanh.pop %v2412
    %v3053 = vtanh.pop %v2413
    %v3054 = vtanh.pop %v2414
    %v3055 = vtanh.pop %v2415
    %v3056 = vtanh.pop %v2416
    %v3057 = vtanh.pop %v2417
    %v3058 = vtanh.pop %v2418
    %v3059 = vtanh.pop %v2419
    %v3060 = vtanh.pop %v2420
    %v3061 = vtanh.pop %v2421
    %v3062 = vtanh.pop %v2422
    %v3063 = vtanh.pop %v2423
    %v3064 = vtanh.pop %v2424
    %v3065 = vtanh.pop %v2425
    %v3066 = vtanh.pop %v2426
    %v3067 = vtanh.pop %v2427
    %v3068 = vtanh.pop %v2428
    %v3069 = vtanh.pop %v2429
    %v3070 = vtanh.pop %v2430
    %v3071 = vtanh.pop %v2431
    %v3072 = vtanh.pop %v2432
    %v3073 = vtanh.pop %v2433
    %v3074 = vtanh.pop %v2434
    %v3075 = vtanh.pop %v2435
    %v3076 = vtanh.pop %v2436
    %v3077 = vtanh.pop %v2437
    %v3078 = vtanh.pop %v2438
    %v3079 = vtanh.pop %v2439
    %v3080 = vtanh.pop %v2440
    %v3081 = vtanh.pop %v2441
    %v3082 = vtanh.pop %v2442
    %v3083 = vtanh.pop %v2443
    %v3084 = vtanh.pop %v2444
    %v3085 = vtanh.pop %v2445
    %v3086 = vtanh.pop %v2446
    %v3087 = vtanh.pop %v2447
    %v3088 = vtanh.pop %v2448
    %v3089 = vtanh.pop %v2449
    %v3090 = vtanh.pop %v2450
    %v3091 = vtanh.pop %v2451
    %v3092 = vtanh.pop %v2452
    %v3093 = vtanh.pop %v2453
    %v3094 = vtanh.pop %v2454
    %v3095 = vtanh.pop %v2455
    %v3096 = vtanh.pop %v2456
    %v3097 = vtanh.pop %v2457
    %v3098 = vtanh.pop %v2458
    %v3099 = vtanh.pop %v2459
    %v3100 = vtanh.pop %v2460
    %v3101 = vtanh.pop %v2461
    %v3102 = vtanh.pop %v2462
    %v3103 = vtanh.pop %v2463
    %v3104 = vtanh.pop %v2464
    %v3105 = vtanh.pop %v2465
    %v3106 = vtanh.pop %v2466
    %v3107 = vtanh.pop %v2467
    %v3108 = vtanh.pop %v2468
    %v3109 = vtanh.pop %v2469
    %v3110 = vtanh.pop %v2470
    %v3111 = vtanh.pop %v2471
    %v3112 = vtanh.pop %v2472
    %v3113 = vtanh.pop %v2473
    %v3114 = vtanh.pop %v2474
    %v3115 = vtanh.pop %v2475
    %v3116 = vtanh.pop %v2476
    %v3117 = vtanh.pop %v2477
    %v3118 = vtanh.pop %v2478
    %v3119 = vtanh.pop %v2479
    %v3120 = vtanh.pop %v2480
    %v3121 = vtanh.pop %v2481
    %v3122 = vtanh.pop %v2482
    %v3123 = vtanh.pop %v2483
    %v3124 = vtanh.pop %v2484
    %v3125 = vtanh.pop %v2485
    %v3126 = vtanh.pop %v2486
    %v3127 = vtanh.pop %v2487
    %v3128 = vtanh.pop %v2488
    %v3129 = vtanh.pop %v2489
    %v3130 = vtanh.pop %v2490
    %v3131 = vtanh.pop %v2491
    %v3132 = vtanh.pop %v2492
    %v3133 = vtanh.pop %v2493
    %v3134 = vtanh.pop %v2494
    %v3135 = vtanh.pop %v2495
    %v3136 = vtanh.pop %v2496
    %v3137 = vtanh.pop %v2497
    %v3138 = vtanh.pop %v2498
    %v3139 = vtanh.pop %v2499
    %v3140 = vtanh.pop %v2500
    %v3141 = vtanh.pop %v2501
    %v3142 = vtanh.pop %v2502
    %v3143 = vtanh.pop %v2503
    %v3144 = vtanh.pop %v2504
    %v3145 = vtanh.pop %v2505
    %v3146 = vtanh.pop %v2506
    %v3147 = vtanh.pop %v2507
    %v3148 = vtanh.pop %v2508
    %v3149 = vtanh.pop %v2509
    %v3150 = vtanh.pop %v2510
    %v3151 = vtanh.pop %v2511
    %v3152 = vtanh.pop %v2512
    %v3153 = vtanh.pop %v2513
    %v3154 = vtanh.pop %v2514
    %v3155 = vtanh.pop %v2515
    %v3156 = vtanh.pop %v2516
    %v3157 = vtanh.pop %v2517
    %v3158 = vtanh.pop %v2518
    %v3159 = vtanh.pop %v2519
    %v3160 = vtanh.pop %v2520
    %v3161 = vtanh.pop %v2521
    %v3162 = vtanh.pop %v2522
    %v3163 = vtanh.pop %v2523
    %v3164 = vtanh.pop %v2524
    %v3165 = vtanh.pop %v2525
    %v3166 = vtanh.pop %v2526
    %v3167 = vtanh.pop %v2527
    %v3168 = vtanh.pop %v2528
    %v3169 = vtanh.pop %v2529
    %v3170 = vtanh.pop %v2530
    %v3171 = vtanh.pop %v2531
    %v3172 = vtanh.pop %v2532
    %v3173 = vtanh.pop %v2533
    %v3174 = vtanh.pop %v2534
    %v3175 = vtanh.pop %v2535
    %v3176 = vtanh.pop %v2536
    %v3177 = vtanh.pop %v2537
    %v3178 = vtanh.pop %v2538
    %v3179 = vtanh.pop %v2539
    %v3180 = vtanh.pop %v2540
    %v3181 = vtanh.pop %v2541
    %v3182 = vtanh.pop %v2542
    %v3183 = vtanh.pop %v2543
    %v3184 = vtanh.pop %v2544
    %v3185 = vtanh.pop %v2545
    %v3186 = vtanh.pop %v2546
    %v3187 = vtanh.pop %v2547
    %v3188 = vtanh.pop %v2548
    %v3189 = vtanh.pop %v2549
    %v3190 = vtanh.pop %v2550
    %v3191 = vtanh.pop %v2551
    %v3192 = vtanh.pop %v2552
    %v3193 = vtanh.pop %v2553
    %v3194 = vtanh.pop %v2554
    %v3195 = vtanh.pop %v2555
    %v3196 = vtanh.pop %v2556
    %v3197 = vtanh.pop %v2557
    %v3198 = vtanh.pop %v2558
    %v3199 = vtanh.pop %v2559
    %v3200 = vtanh.pop %v2560
    %v3201 = vtanh.pop %v2561
    %v3202 = vtanh.pop %v2562
    %v3203 = vtanh.pop %v2563
    %v3204 = vtanh.pop %v2564
    %v3205 = vtanh.pop %v2565
    %v3206 = vtanh.pop %v2566
    %v3207 = vtanh.pop %v2567
    %v3208 = vtanh.pop %v2568
    %v3209 = vtanh.pop %v2569
    %v3210 = vtanh.pop %v2570
    %v3211 = vtanh.pop %v2571
    %v3212 = vtanh.pop %v2572
    %v3213 = vtanh.pop %v2573
    %v3214 = vtanh.pop %v2574
    %v3215 = vtanh.pop %v2575
    %v3216 = vtanh.pop %v2576
    %v3217 = vtanh.pop %v2577
    %v3218 = vtanh.pop %v2578
    %v3219 = vtanh.pop %v2579
    %v3220 = vtanh.pop %v2580
    %v3221 = vtanh.pop %v2581
    %v3222 = vtanh.pop %v2582
    %v3223 = vtanh.pop %v2583
    %v3224 = vtanh.pop %v2584
    %v3225 = vtanh.pop %v2585
    %v3226 = vtanh.pop %v2586
    %v3227 = vtanh.pop %v2587
    %v3228 = vtanh.pop %v2588
    %v3229 = vtanh.pop %v2589
    %v3230 = vtanh.pop %v2590
    %v3231 = vtanh.pop %v2591
    %v3232 = vtanh.pop %v2592
    %v3233 = vtanh.pop %v2593
    %v3234 = vtanh.pop %v2594
    %v3235 = vtanh.pop %v2595
    %v3236 = vtanh.pop %v2596
    %v3237 = vtanh.pop %v2597
    %v3238 = vtanh.pop %v2598
    %v3239 = vtanh.pop %v2599
    %v3240 = vtanh.pop %v2600
    %v3241 = vtanh.pop %v2601
    %v3242 = vtanh.pop %v2602
    %v3243 = vtanh.pop %v2603
    %v3244 = vtanh.pop %v2604
    %v3245 = vtanh.pop %v2605
    %v3246 = vtanh.pop %v2606
    %v3247 = vtanh.pop %v2607
    %v3248 = vtanh.pop %v2608
    %v3249 = vtanh.pop %v2609
    %v3250 = vtanh.pop %v2610
    %v3251 = vtanh.pop %v2611
    %v3252 = vtanh.pop %v2612
    %v3253 = vtanh.pop %v2613
    %v3254 = vtanh.pop %v2614
    %v3255 = vtanh.pop %v2615
    %v3256 = vtanh.pop %v2616
    %v3257 = vtanh.pop %v2617
    %v3258 = vtanh.pop %v2618
    %v3259 = vtanh.pop %v2619
    %v3260 = vtanh.pop %v2620
    %v3261 = vtanh.pop %v2621
    %v3262 = vtanh.pop %v2622
    %v3263 = vtanh.pop %v2623
    %v3264 = vtanh.pop %v2624
    %v3265 = vtanh.pop %v2625
    %v3266 = vtanh.pop %v2626
    %v3267 = vtanh.pop %v2627
    %v3268 = vtanh.pop %v2628
    %v3269 = vtanh.pop %v2629
    %v3270 = vtanh.pop %v2630
    %v3271 = vtanh.pop %v2631
    %v3272 = vtanh.pop %v2632
    %v3273 = vtanh.pop %v2633
    %v3274 = vtanh.pop %v2634
    %v3275 = vtanh.pop %v2635
    %v3276 = vtanh.pop %v2636
    %v3277 = vtanh.pop %v2637
    %v3278 = vtanh.pop %v2638
    %v3279 = vtanh.pop %v2639
    %v3280 = vtanh.pop %v2640
    %v3281 = vtanh.pop %v2641
    %v3282 = vtanh.pop %v2642
    %v3283 = vtanh.pop %v2643
    %v3284 = vtanh.pop %v2644
    %v3285 = vtanh.pop %v2645
    %v3286 = vtanh.pop %v2646
    %v3287 = vtanh.pop %v2647
    %v3288 = vtanh.pop %v2648
    %v3289 = vtanh.pop %v2649
    %v3290 = vtanh.pop %v2650
    %v3291 = vtanh.pop %v2651
    %v3292 = vtanh.pop %v2652
    %v3293 = vtanh.pop %v2653
    %v3294 = vtanh.pop %v2654
    %v3295 = vtanh.pop %v2655
    %v3296 = vtanh.pop %v2656
    %v3297 = vtanh.pop %v2657
    %v3298 = vtanh.pop %v2658
    %v3299 = vtanh.pop %v2659
    %v3300 = vtanh.pop %v2660
    %v3301 = vtanh.pop %v2661
    %v3302 = vtanh.pop %v2662
    %v3303 = vtanh.pop %v2663
    %v3304 = vtanh.pop %v2664
    %v3305 = vtanh.pop %v2665
    %v3306 = vtanh.pop %v2666
    %v3307 = vtanh.pop %v2667
    %v3308 = vtanh.pop %v2668
    %v3309 = vtanh.pop %v2669
    %v3310 = vtanh.pop %v2670
    %v3311 = vtanh.pop %v2671
    %v3312 = vtanh.pop %v2672
    %v3313 = vtanh.pop %v2673
    %v3314 = vtanh.pop %v2674
    %v3315 = vtanh.pop %v2675
    %v3316 = vtanh.pop %v2676
    %v3317 = vtanh.pop %v2677
    %v3318 = vtanh.pop %v2678
    %v3319 = vtanh.pop %v2679
    %v3320 = vtanh.pop %v2680
    %v3321 = vtanh.pop %v2681
    %v3322 = vtanh.pop %v2682
    %v3323 = vtanh.pop %v2683
    %v3324 = vtanh.pop %v2684
    %v3325 = vtanh.pop %v2685
    %v3326 = vtanh.pop %v2686
    %v3327 = vtanh.pop %v2687
    %v3328 = vtanh.pop %v2688
    %v3329 = vtanh.pop %v2689
    %v3330 = vtanh.pop %v2690
    %v3331 = vtanh.pop %v2691
    %v3332 = vtanh.pop %v2692
    %v3333 = vtanh.pop %v2693
    %v3334 = vtanh.pop %v2694
    %v3335 = vtanh.pop %v2695
    %v3336 = vtanh.pop %v2696
    %v3337 = vtanh.pop %v2697
    %v3338 = vtanh.pop %v2698
    %v3339 = vtanh.pop %v2699
    %v3340 = vtanh.pop %v2700
    %v3341 = vtanh.pop %v2701
    %v3342 = vtanh.pop %v2702
    %v3343 = vtanh.pop %v2703
    %v3344 = vtanh.pop %v2704
    %v3345 = vtanh.pop %v2705
    %v3346 = vtanh.pop %v2706
    %v3347 = vtanh.pop %v2707
    %v3348 = vtanh.pop %v2708
    %v3349 = vtanh.pop %v2709
    %v3350 = vtanh.pop %v2710
    %v3351 = vtanh.pop %v2711
    %v3352 = vtanh.pop %v2712
    %v3353 = vtanh.pop %v2713
    %v3354 = vtanh.pop %v2714
    %v3355 = vtanh.pop %v2715
    %v3356 = vtanh.pop %v2716
    %v3357 = vtanh.pop %v2717
    %v3358 = vtanh.pop %v2718
    %v3359 = vtanh.pop %v2719
    %v3360 = vtanh.pop %v2720
    %v3361 = vtanh.pop %v2721
    %v3362 = vtanh.pop %v2722
    %v3363 = vtanh.pop %v2723
    %v3364 = vtanh.pop %v2724
    %v3365 = vtanh.pop %v2725
    %v3366 = vtanh.pop %v2726
    %v3367 = vtanh.pop %v2727
    %v3368 = vtanh.pop %v2728
    %v3369 = vtanh.pop %v2729
    %v3370 = vtanh.pop %v2730
    %v3371 = vtanh.pop %v2731
    %v3372 = vtanh.pop %v2732
    %v3373 = vtanh.pop %v2733
    %v3374 = vtanh.pop %v2734
    %v3375 = vtanh.pop %v2735
    %v3376 = vtanh.pop %v2736
    %v3377 = vtanh.pop %v2737
    %v3378 = vtanh.pop %v2738
    %v3379 = vtanh.pop %v2739
    %v3380 = vtanh.pop %v2740
    %v3381 = vtanh.pop %v2741
    %v3382 = vtanh.pop %v2742
    %v3383 = vtanh.pop %v2743
    %v3384 = vtanh.pop %v2744
    %v3385 = vtanh.pop %v2745
    %v3386 = vtanh.pop %v2746
    %v3387 = vtanh.pop %v2747
    %v3388 = vtanh.pop %v2748
    %v3389 = vtanh.pop %v2749
    %v3390 = vtanh.pop %v2750
    %v3391 = vtanh.pop %v2751
    %v3392 = vtanh.pop %v2752
    %v3393 = vtanh.pop %v2753
    %v3394 = vmul.f32 %v2114, %v2754
    %v3395 = vmul.f32 %v2115, %v2755
    %v3396 = vmul.f32 %v2116, %v2756
    %v3397 = vmul.f32 %v2117, %v2757
    %v3398 = vmul.f32 %v2118, %v2758
    %v3399 = vmul.f32 %v2119, %v2759
    %v3400 = vmul.f32 %v2120, %v2760
    %v3401 = vmul.f32 %v2121, %v2761
    %v3402 = vmul.f32 %v2122, %v2762
    %v3403 = vmul.f32 %v2123, %v2763
    %v3404 = vmul.f32 %v2124, %v2764
    %v3405 = vmul.f32 %v2125, %v2765
    %v3406 = vmul.f32 %v2126, %v2766
    %v3407 = vmul.f32 %v2127, %v2767
    %v3408 = vmul.f32 %v2128, %v2768
    %v3409 = vmul.f32 %v2129, %v2769
    %v3410 = vmul.f32 %v2130, %v2770
    %v3411 = vmul.f32 %v2131, %v2771
    %v3412 = vmul.f32 %v2132, %v2772
    %v3413 = vmul.f32 %v2133, %v2773
    %v3414 = vmul.f32 %v2134, %v2774
    %v3415 = vmul.f32 %v2135, %v2775
    %v3416 = vmul.f32 %v2136, %v2776
    %v3417 = vmul.f32 %v2137, %v2777
    %v3418 = vmul.f32 %v2138, %v2778
    %v3419 = vmul.f32 %v2139, %v2779
    %v3420 = vmul.f32 %v2140, %v2780
    %v3421 = vmul.f32 %v2141, %v2781
    %v3422 = vmul.f32 %v2142, %v2782
    %v3423 = vmul.f32 %v2143, %v2783
    %v3424 = vmul.f32 %v2144, %v2784
    %v3425 = vmul.f32 %v2145, %v2785
    %v3426 = vmul.f32 %v2146, %v2786
    %v3427 = vmul.f32 %v2147, %v2787
    %v3428 = vmul.f32 %v2148, %v2788
    %v3429 = vmul.f32 %v2149, %v2789
    %v3430 = vmul.f32 %v2150, %v2790
    %v3431 = vmul.f32 %v2151, %v2791
    %v3432 = vmul.f32 %v2152, %v2792
    %v3433 = vmul.f32 %v2153, %v2793
    %v3434 = vmul.f32 %v2154, %v2794
    %v3435 = vmul.f32 %v2155, %v2795
    %v3436 = vmul.f32 %v2156, %v2796
    %v3437 = vmul.f32 %v2157, %v2797
    %v3438 = vmul.f32 %v2158, %v2798
    %v3439 = vmul.f32 %v2159, %v2799
    %v3440 = vmul.f32 %v2160, %v2800
    %v3441 = vmul.f32 %v2161, %v2801
    %v3442 = vmul.f32 %v2162, %v2802
    %v3443 = vmul.f32 %v2163, %v2803
    %v3444 = vmul.f32 %v2164, %v2804
    %v3445 = vmul.f32 %v2165, %v2805
    %v3446 = vmul.f32 %v2166, %v2806
    %v3447 = vmul.f32 %v2167, %v2807
    %v3448 = vmul.f32 %v2168, %v2808
    %v3449 = vmul.f32 %v2169, %v2809
    %v3450 = vmul.f32 %v2170, %v2810
    %v3451 = vmul.f32 %v2171, %v2811
    %v3452 = vmul.f32 %v2172, %v2812
    %v3453 = vmul.f32 %v2173, %v2813
    %v3454 = vmul.f32 %v2174, %v2814
    %v3455 = vmul.f32 %v2175, %v2815
    %v3456 = vmul.f32 %v2176, %v2816
    %v3457 = vmul.f32 %v2177, %v2817
    %v3458 = vmul.f32 %v2178, %v2818
    %v3459 = vmul.f32 %v2179, %v2819
    %v3460 = vmul.f32 %v2180, %v2820
    %v3461 = vmul.f32 %v2181, %v2821
    %v3462 = vmul.f32 %v2182, %v2822
    %v3463 = vmul.f32 %v2183, %v2823
    %v3464 = vmul.f32 %v2184, %v2824
    %v3465 = vmul.f32 %v2185, %v2825
    %v3466 = vmul.f32 %v2186, %v2826
    %v3467 = vmul.f32 %v2187, %v2827
    %v3468 = vmul.f32 %v2188, %v2828
    %v3469 = vmul.f32 %v2189, %v2829
    %v3470 = vmul.f32 %v2190, %v2830
    %v3471 = vmul.f32 %v2191, %v2831
    %v3472 = vmul.f32 %v2192, %v2832
    %v3473 = vmul.f32 %v2193, %v2833
    %v3474 = vmul.f32 %v2194, %v2834
    %v3475 = vmul.f32 %v2195, %v2835
    %v3476 = vmul.f32 %v2196, %v2836
    %v3477 = vmul.f32 %v2197, %v2837
    %v3478 = vmul.f32 %v2198, %v2838
    %v3479 = vmul.f32 %v2199, %v2839
    %v3480 = vmul.f32 %v2200, %v2840
    %v3481 = vmul.f32 %v2201, %v2841
    %v3482 = vmul.f32 %v2202, %v2842
    %v3483 = vmul.f32 %v2203, %v2843
    %v3484 = vmul.f32 %v2204, %v2844
    %v3485 = vmul.f32 %v2205, %v2845
    %v3486 = vmul.f32 %v2206, %v2846
    %v3487 = vmul.f32 %v2207, %v2847
    %v3488 = vmul.f32 %v2208, %v2848
    %v3489 = vmul.f32 %v2209, %v2849
    %v3490 = vmul.f32 %v2210, %v2850
    %v3491 = vmul.f32 %v2211, %v2851
    %v3492 = vmul.f32 %v2212, %v2852
    %v3493 = vmul.f32 %v2213, %v2853
    %v3494 = vmul.f32 %v2214, %v2854
    %v3495 = vmul.f32 %v2215, %v2855
    %v3496 = vmul.f32 %v2216, %v2856
    %v3497 = vmul.f32 %v2217, %v2857
    %v3498 = vmul.f32 %v2218, %v2858
    %v3499 = vmul.f32 %v2219, %v2859
    %v3500 = vmul.f32 %v2220, %v2860
    %v3501 = vmul.f32 %v2221, %v2861
    %v3502 = vmul.f32 %v2222, %v2862
    %v3503 = vmul.f32 %v2223, %v2863
    %v3504 = vmul.f32 %v2224, %v2864
    %v3505 = vmul.f32 %v2225, %v2865
    %v3506 = vmul.f32 %v2226, %v2866
    %v3507 = vmul.f32 %v2227, %v2867
    %v3508 = vmul.f32 %v2228, %v2868
    %v3509 = vmul.f32 %v2229, %v2869
    %v3510 = vmul.f32 %v2230, %v2870
    %v3511 = vmul.f32 %v2231, %v2871
    %v3512 = vmul.f32 %v2232, %v2872
    %v3513 = vmul.f32 %v2233, %v2873
    %v3514 = vmul.f32 %v2234, %v2874
    %v3515 = vmul.f32 %v2235, %v2875
    %v3516 = vmul.f32 %v2236, %v2876
    %v3517 = vmul.f32 %v2237, %v2877
    %v3518 = vmul.f32 %v2238, %v2878
    %v3519 = vmul.f32 %v2239, %v2879
    %v3520 = vmul.f32 %v2240, %v2880
    %v3521 = vmul.f32 %v2241, %v2881
    %v3522 = vmul.f32 %v2242, %v2882
    %v3523 = vmul.f32 %v2243, %v2883
    %v3524 = vmul.f32 %v2244, %v2884
    %v3525 = vmul.f32 %v2245, %v2885
    %v3526 = vmul.f32 %v2246, %v2886
    %v3527 = vmul.f32 %v2247, %v2887
    %v3528 = vmul.f32 %v2248, %v2888
    %v3529 = vmul.f32 %v2249, %v2889
    %v3530 = vmul.f32 %v2250, %v2890
    %v3531 = vmul.f32 %v2251, %v2891
    %v3532 = vmul.f32 %v2252, %v2892
    %v3533 = vmul.f32 %v2253, %v2893
    %v3534 = vmul.f32 %v2254, %v2894
    %v3535 = vmul.f32 %v2255, %v2895
    %v3536 = vmul.f32 %v2256, %v2896
    %v3537 = vmul.f32 %v2257, %v2897
    %v3538 = vmul.f32 %v2258, %v2898
    %v3539 = vmul.f32 %v2259, %v2899
    %v3540 = vmul.f32 %v2260, %v2900
    %v3541 = vmul.f32 %v2261, %v2901
    %v3542 = vmul.f32 %v2262, %v2902
    %v3543 = vmul.f32 %v2263, %v2903
    %v3544 = vmul.f32 %v2264, %v2904
    %v3545 = vmul.f32 %v2265, %v2905
    %v3546 = vmul.f32 %v2266, %v2906
    %v3547 = vmul.f32 %v2267, %v2907
    %v3548 = vmul.f32 %v2268, %v2908
    %v3549 = vmul.f32 %v2269, %v2909
    %v3550 = vmul.f32 %v2270, %v2910
    %v3551 = vmul.f32 %v2271, %v2911
    %v3552 = vmul.f32 %v2272, %v2912
    %v3553 = vmul.f32 %v2273, %v2913
    %v3554 = vmul.f32 %v2274, %v2914
    %v3555 = vmul.f32 %v2275, %v2915
    %v3556 = vmul.f32 %v2276, %v2916
    %v3557 = vmul.f32 %v2277, %v2917
    %v3558 = vmul.f32 %v2278, %v2918
    %v3559 = vmul.f32 %v2279, %v2919
    %v3560 = vmul.f32 %v2280, %v2920
    %v3561 = vmul.f32 %v2281, %v2921
    %v3562 = vmul.f32 %v2282, %v2922
    %v3563 = vmul.f32 %v2283, %v2923
    %v3564 = vmul.f32 %v2284, %v2924
    %v3565 = vmul.f32 %v2285, %v2925
    %v3566 = vmul.f32 %v2286, %v2926
    %v3567 = vmul.f32 %v2287, %v2927
    %v3568 = vmul.f32 %v2288, %v2928
    %v3569 = vmul.f32 %v2289, %v2929
    %v3570 = vmul.f32 %v2290, %v2930
    %v3571 = vmul.f32 %v2291, %v2931
    %v3572 = vmul.f32 %v2292, %v2932
    %v3573 = vmul.f32 %v2293, %v2933
    %v3574 = vmul.f32 %v2294, %v2934
    %v3575 = vmul.f32 %v2295, %v2935
    %v3576 = vmul.f32 %v2296, %v2936
    %v3577 = vmul.f32 %v2297, %v2937
    %v3578 = vmul.f32 %v2298, %v2938
    %v3579 = vmul.f32 %v2299, %v2939
    %v3580 = vmul.f32 %v2300, %v2940
    %v3581 = vmul.f32 %v2301, %v2941
    %v3582 = vmul.f32 %v2302, %v2942
    %v3583 = vmul.f32 %v2303, %v2943
    %v3584 = vmul.f32 %v2304, %v2944
    %v3585 = vmul.f32 %v2305, %v2945
    %v3586 = vmul.f32 %v2306, %v2946
    %v3587 = vmul.f32 %v2307, %v2947
    %v3588 = vmul.f32 %v2308, %v2948
    %v3589 = vmul.f32 %v2309, %v2949
    %v3590 = vmul.f32 %v2310, %v2950
    %v3591 = vmul.f32 %v2311, %v2951
    %v3592 = vmul.f32 %v2312, %v2952
    %v3593 = vmul.f32 %v2313, %v2953
    %v3594 = vmul.f32 %v2314, %v2954
    %v3595 = vmul.f32 %v2315, %v2955
    %v3596 = vmul.f32 %v2316, %v2956
    %v3597 = vmul.f32 %v2317, %v2957
    %v3598 = vmul.f32 %v2318, %v2958
    %v3599 = vmul.f32 %v2319, %v2959
    %v3600 = vmul.f32 %v2320, %v2960
    %v3601 = vmul.f32 %v2321, %v2961
    %v3602 = vmul.f32 %v2322, %v2962
    %v3603 = vmul.f32 %v2323, %v2963
    %v3604 = vmul.f32 %v2324, %v2964
    %v3605 = vmul.f32 %v2325, %v2965
    %v3606 = vmul.f32 %v2326, %v2966
    %v3607 = vmul.f32 %v2327, %v2967
    %v3608 = vmul.f32 %v2328, %v2968
    %v3609 = vmul.f32 %v2329, %v2969
    %v3610 = vmul.f32 %v2330, %v2970
    %v3611 = vmul.f32 %v2331, %v2971
    %v3612 = vmul.f32 %v2332, %v2972
    %v3613 = vmul.f32 %v2333, %v2973
    %v3614 = vmul.f32 %v2334, %v2974
    %v3615 = vmul.f32 %v2335, %v2975
    %v3616 = vmul.f32 %v2336, %v2976
    %v3617 = vmul.f32 %v2337, %v2977
    %v3618 = vmul.f32 %v2338, %v2978
    %v3619 = vmul.f32 %v2339, %v2979
    %v3620 = vmul.f32 %v2340, %v2980
    %v3621 = vmul.f32 %v2341, %v2981
    %v3622 = vmul.f32 %v2342, %v2982
    %v3623 = vmul.f32 %v2343, %v2983
    %v3624 = vmul.f32 %v2344, %v2984
    %v3625 = vmul.f32 %v2345, %v2985
    %v3626 = vmul.f32 %v2346, %v2986
    %v3627 = vmul.f32 %v2347, %v2987
    %v3628 = vmul.f32 %v2348, %v2988
    %v3629 = vmul.f32 %v2349, %v2989
    %v3630 = vmul.f32 %v2350, %v2990
    %v3631 = vmul.f32 %v2351, %v2991
    %v3632 = vmul.f32 %v2352, %v2992
    %v3633 = vmul.f32 %v2353, %v2993
    %v3634 = vmul.f32 %v2354, %v2994
    %v3635 = vmul.f32 %v2355, %v2995
    %v3636 = vmul.f32 %v2356, %v2996
    %v3637 = vmul.f32 %v2357, %v2997
    %v3638 = vmul.f32 %v2358, %v2998
    %v3639 = vmul.f32 %v2359, %v2999
    %v3640 = vmul.f32 %v2360, %v3000
    %v3641 = vmul.f32 %v2361, %v3001
    %v3642 = vmul.f32 %v2362, %v3002
    %v3643 = vmul.f32 %v2363, %v3003
    %v3644 = vmul.f32 %v2364, %v3004
    %v3645 = vmul.f32 %v2365, %v3005
    %v3646 = vmul.f32 %v2366, %v3006
    %v3647 = vmul.f32 %v2367, %v3007
    %v3648 = vmul.f32 %v2368, %v3008
    %v3649 = vmul.f32 %v2369, %v3009
    %v3650 = vmul.f32 %v2370, %v3010
    %v3651 = vmul.f32 %v2371, %v3011
    %v3652 = vmul.f32 %v2372, %v3012
    %v3653 = vmul.f32 %v2373, %v3013
    %v3654 = vmul.f32 %v2374, %v3014
    %v3655 = vmul.f32 %v2375, %v3015
    %v3656 = vmul.f32 %v2376, %v3016
    %v3657 = vmul.f32 %v2377, %v3017
    %v3658 = vmul.f32 %v2378, %v3018
    %v3659 = vmul.f32 %v2379, %v3019
    %v3660 = vmul.f32 %v2380, %v3020
    %v3661 = vmul.f32 %v2381, %v3021
    %v3662 = vmul.f32 %v2382, %v3022
    %v3663 = vmul.f32 %v2383, %v3023
    %v3664 = vmul.f32 %v2384, %v3024
    %v3665 = vmul.f32 %v2385, %v3025
    %v3666 = vmul.f32 %v2386, %v3026
    %v3667 = vmul.f32 %v2387, %v3027
    %v3668 = vmul.f32 %v2388, %v3028
    %v3669 = vmul.f32 %v2389, %v3029
    %v3670 = vmul.f32 %v2390, %v3030
    %v3671 = vmul.f32 %v2391, %v3031
    %v3672 = vmul.f32 %v2392, %v3032
    %v3673 = vmul.f32 %v2393, %v3033
    %v3674 = vmul.f32 %v2394, %v3034
    %v3675 = vmul.f32 %v2395, %v3035
    %v3676 = vmul.f32 %v2396, %v3036
    %v3677 = vmul.f32 %v2397, %v3037
    %v3678 = vmul.f32 %v2398, %v3038
    %v3679 = vmul.f32 %v2399, %v3039
    %v3680 = vmul.f32 %v2400, %v3040
    %v3681 = vmul.f32 %v2401, %v3041
    %v3682 = vmul.f32 %v2402, %v3042
    %v3683 = vmul.f32 %v2403, %v3043
    %v3684 = vmul.f32 %v2404, %v3044
    %v3685 = vmul.f32 %v2405, %v3045
    %v3686 = vmul.f32 %v2406, %v3046
    %v3687 = vmul.f32 %v2407, %v3047
    %v3688 = vmul.f32 %v2408, %v3048
    %v3689 = vmul.f32 %v2409, %v3049
    %v3690 = vmul.f32 %v2410, %v3050
    %v3691 = vmul.f32 %v2411, %v3051
    %v3692 = vmul.f32 %v2412, %v3052
    %v3693 = vmul.f32 %v2413, %v3053
    %v3694 = vmul.f32 %v2414, %v3054
    %v3695 = vmul.f32 %v2415, %v3055
    %v3696 = vmul.f32 %v2416, %v3056
    %v3697 = vmul.f32 %v2417, %v3057
    %v3698 = vmul.f32 %v2418, %v3058
    %v3699 = vmul.f32 %v2419, %v3059
    %v3700 = vmul.f32 %v2420, %v3060
    %v3701 = vmul.f32 %v2421, %v3061
    %v3702 = vmul.f32 %v2422, %v3062
    %v3703 = vmul.f32 %v2423, %v3063
    %v3704 = vmul.f32 %v2424, %v3064
    %v3705 = vmul.f32 %v2425, %v3065
    %v3706 = vmul.f32 %v2426, %v3066
    %v3707 = vmul.f32 %v2427, %v3067
    %v3708 = vmul.f32 %v2428, %v3068
    %v3709 = vmul.f32 %v2429, %v3069
    %v3710 = vmul.f32 %v2430, %v3070
    %v3711 = vmul.f32 %v2431, %v3071
    %v3712 = vmul.f32 %v2432, %v3072
    %v3713 = vmul.f32 %v2433, %v3073
    %v3714 = vmul.f32 %v2434, %v3074
    %v3715 = vmul.f32 %v2435, %v3075
    %v3716 = vmul.f32 %v2436, %v3076
    %v3717 = vmul.f32 %v2437, %v3077
    %v3718 = vmul.f32 %v2438, %v3078
    %v3719 = vmul.f32 %v2439, %v3079
    %v3720 = vmul.f32 %v2440, %v3080
    %v3721 = vmul.f32 %v2441, %v3081
    %v3722 = vmul.f32 %v2442, %v3082
    %v3723 = vmul.f32 %v2443, %v3083
    %v3724 = vmul.f32 %v2444, %v3084
    %v3725 = vmul.f32 %v2445, %v3085
    %v3726 = vmul.f32 %v2446, %v3086
    %v3727 = vmul.f32 %v2447, %v3087
    %v3728 = vmul.f32 %v2448, %v3088
    %v3729 = vmul.f32 %v2449, %v3089
    %v3730 = vmul.f32 %v2450, %v3090
    %v3731 = vmul.f32 %v2451, %v3091
    %v3732 = vmul.f32 %v2452, %v3092
    %v3733 = vmul.f32 %v2453, %v3093
    %v3734 = vmul.f32 %v2454, %v3094
    %v3735 = vmul.f32 %v2455, %v3095
    %v3736 = vmul.f32 %v2456, %v3096
    %v3737 = vmul.f32 %v2457, %v3097
    %v3738 = vmul.f32 %v2458, %v3098
    %v3739 = vmul.f32 %v2459, %v3099
    %v3740 = vmul.f32 %v2460, %v3100
    %v3741 = vmul.f32 %v2461, %v3101
    %v3742 = vmul.f32 %v2462, %v3102
    %v3743 = vmul.f32 %v2463, %v3103
    %v3744 = vmul.f32 %v2464, %v3104
    %v3745 = vmul.f32 %v2465, %v3105
    %v3746 = vmul.f32 %v2466, %v3106
    %v3747 = vmul.f32 %v2467, %v3107
    %v3748 = vmul.f32 %v2468, %v3108
    %v3749 = vmul.f32 %v2469, %v3109
    %v3750 = vmul.f32 %v2470, %v3110
    %v3751 = vmul.f32 %v2471, %v3111
    %v3752 = vmul.f32 %v2472, %v3112
    %v3753 = vmul.f32 %v2473, %v3113
    %v3754 = vmul.f32 %v2474, %v3114
    %v3755 = vmul.f32 %v2475, %v3115
    %v3756 = vmul.f32 %v2476, %v3116
    %v3757 = vmul.f32 %v2477, %v3117
    %v3758 = vmul.f32 %v2478, %v3118
    %v3759 = vmul.f32 %v2479, %v3119
    %v3760 = vmul.f32 %v2480, %v3120
    %v3761 = vmul.f32 %v2481, %v3121
    %v3762 = vmul.f32 %v2482, %v3122
    %v3763 = vmul.f32 %v2483, %v3123
    %v3764 = vmul.f32 %v2484, %v3124
    %v3765 = vmul.f32 %v2485, %v3125
    %v3766 = vmul.f32 %v2486, %v3126
    %v3767 = vmul.f32 %v2487, %v3127
    %v3768 = vmul.f32 %v2488, %v3128
    %v3769 = vmul.f32 %v2489, %v3129
    %v3770 = vmul.f32 %v2490, %v3130
    %v3771 = vmul.f32 %v2491, %v3131
    %v3772 = vmul.f32 %v2492, %v3132
    %v3773 = vmul.f32 %v2493, %v3133
    %v3774 = vmul.f32 %v2494, %v3134
    %v3775 = vmul.f32 %v2495, %v3135
    %v3776 = vmul.f32 %v2496, %v3136
    %v3777 = vmul.f32 %v2497, %v3137
    %v3778 = vmul.f32 %v2498, %v3138
    %v3779 = vmul.f32 %v2499, %v3139
    %v3780 = vmul.f32 %v2500, %v3140
    %v3781 = vmul.f32 %v2501, %v3141
    %v3782 = vmul.f32 %v2502, %v3142
    %v3783 = vmul.f32 %v2503, %v3143
    %v3784 = vmul.f32 %v2504, %v3144
    %v3785 = vmul.f32 %v2505, %v3145
    %v3786 = vmul.f32 %v2506, %v3146
    %v3787 = vmul.f32 %v2507, %v3147
    %v3788 = vmul.f32 %v2508, %v3148
    %v3789 = vmul.f32 %v2509, %v3149
    %v3790 = vmul.f32 %v2510, %v3150
    %v3791 = vmul.f32 %v2511, %v3151
    %v3792 = vmul.f32 %v2512, %v3152
    %v3793 = vmul.f32 %v2513, %v3153
    %v3794 = vmul.f32 %v2514, %v3154
    %v3795 = vmul.f32 %v2515, %v3155
    %v3796 = vmul.f32 %v2516, %v3156
    %v3797 = vmul.f32 %v2517, %v3157
    %v3798 = vmul.f32 %v2518, %v3158
    %v3799 = vmul.f32 %v2519, %v3159
    %v3800 = vmul.f32 %v2520, %v3160
    %v3801 = vmul.f32 %v2521, %v3161
    %v3802 = vmul.f32 %v2522, %v3162
    %v3803 = vmul.f32 %v2523, %v3163
    %v3804 = vmul.f32 %v2524, %v3164
    %v3805 = vmul.f32 %v2525, %v3165
    %v3806 = vmul.f32 %v2526, %v3166
    %v3807 = vmul.f32 %v2527, %v3167
    %v3808 = vmul.f32 %v2528, %v3168
    %v3809 = vmul.f32 %v2529, %v3169
    %v3810 = vmul.f32 %v2530, %v3170
    %v3811 = vmul.f32 %v2531, %v3171
    %v3812 = vmul.f32 %v2532, %v3172
    %v3813 = vmul.f32 %v2533, %v3173
    %v3814 = vmul.f32 %v2534, %v3174
    %v3815 = vmul.f32 %v2535, %v3175
    %v3816 = vmul.f32 %v2536, %v3176
    %v3817 = vmul.f32 %v2537, %v3177
    %v3818 = vmul.f32 %v2538, %v3178
    %v3819 = vmul.f32 %v2539, %v3179
    %v3820 = vmul.f32 %v2540, %v3180
    %v3821 = vmul.f32 %v2541, %v3181
    %v3822 = vmul.f32 %v2542, %v3182
    %v3823 = vmul.f32 %v2543, %v3183
    %v3824 = vmul.f32 %v2544, %v3184
    %v3825 = vmul.f32 %v2545, %v3185
    %v3826 = vmul.f32 %v2546, %v3186
    %v3827 = vmul.f32 %v2547, %v3187
    %v3828 = vmul.f32 %v2548, %v3188
    %v3829 = vmul.f32 %v2549, %v3189
    %v3830 = vmul.f32 %v2550, %v3190
    %v3831 = vmul.f32 %v2551, %v3191
    %v3832 = vmul.f32 %v2552, %v3192
    %v3833 = vmul.f32 %v2553, %v3193
    %v3834 = vmul.f32 %v2554, %v3194
    %v3835 = vmul.f32 %v2555, %v3195
    %v3836 = vmul.f32 %v2556, %v3196
    %v3837 = vmul.f32 %v2557, %v3197
    %v3838 = vmul.f32 %v2558, %v3198
    %v3839 = vmul.f32 %v2559, %v3199
    %v3840 = vmul.f32 %v2560, %v3200
    %v3841 = vmul.f32 %v2561, %v3201
    %v3842 = vmul.f32 %v2562, %v3202
    %v3843 = vmul.f32 %v2563, %v3203
    %v3844 = vmul.f32 %v2564, %v3204
    %v3845 = vmul.f32 %v2565, %v3205
    %v3846 = vmul.f32 %v2566, %v3206
    %v3847 = vmul.f32 %v2567, %v3207
    %v3848 = vmul.f32 %v2568, %v3208
    %v3849 = vmul.f32 %v2569, %v3209
    %v3850 = vmul.f32 %v2570, %v3210
    %v3851 = vmul.f32 %v2571, %v3211
    %v3852 = vmul.f32 %v2572, %v3212
    %v3853 = vmul.f32 %v2573, %v3213
    %v3854 = vmul.f32 %v2574, %v3214
    %v3855 = vmul.f32 %v2575, %v3215
    %v3856 = vmul.f32 %v2576, %v3216
    %v3857 = vmul.f32 %v2577, %v3217
    %v3858 = vmul.f32 %v2578, %v3218
    %v3859 = vmul.f32 %v2579, %v3219
    %v3860 = vmul.f32 %v2580, %v3220
    %v3861 = vmul.f32 %v2581, %v3221
    %v3862 = vmul.f32 %v2582, %v3222
    %v3863 = vmul.f32 %v2583, %v3223
    %v3864 = vmul.f32 %v2584, %v3224
    %v3865 = vmul.f32 %v2585, %v3225
    %v3866 = vmul.f32 %v2586, %v3226
    %v3867 = vmul.f32 %v2587, %v3227
    %v3868 = vmul.f32 %v2588, %v3228
    %v3869 = vmul.f32 %v2589, %v3229
    %v3870 = vmul.f32 %v2590, %v3230
    %v3871 = vmul.f32 %v2591, %v3231
    %v3872 = vmul.f32 %v2592, %v3232
    %v3873 = vmul.f32 %v2593, %v3233
    %v3874 = vmul.f32 %v2594, %v3234
    %v3875 = vmul.f32 %v2595, %v3235
    %v3876 = vmul.f32 %v2596, %v3236
    %v3877 = vmul.f32 %v2597, %v3237
    %v3878 = vmul.f32 %v2598, %v3238
    %v3879 = vmul.f32 %v2599, %v3239
    %v3880 = vmul.f32 %v2600, %v3240
    %v3881 = vmul.f32 %v2601, %v3241
    %v3882 = vmul.f32 %v2602, %v3242
    %v3883 = vmul.f32 %v2603, %v3243
    %v3884 = vmul.f32 %v2604, %v3244
    %v3885 = vmul.f32 %v2605, %v3245
    %v3886 = vmul.f32 %v2606, %v3246
    %v3887 = vmul.f32 %v2607, %v3247
    %v3888 = vmul.f32 %v2608, %v3248
    %v3889 = vmul.f32 %v2609, %v3249
    %v3890 = vmul.f32 %v2610, %v3250
    %v3891 = vmul.f32 %v2611, %v3251
    %v3892 = vmul.f32 %v2612, %v3252
    %v3893 = vmul.f32 %v2613, %v3253
    %v3894 = vmul.f32 %v2614, %v3254
    %v3895 = vmul.f32 %v2615, %v3255
    %v3896 = vmul.f32 %v2616, %v3256
    %v3897 = vmul.f32 %v2617, %v3257
    %v3898 = vmul.f32 %v2618, %v3258
    %v3899 = vmul.f32 %v2619, %v3259
    %v3900 = vmul.f32 %v2620, %v3260
    %v3901 = vmul.f32 %v2621, %v3261
    %v3902 = vmul.f32 %v2622, %v3262
    %v3903 = vmul.f32 %v2623, %v3263
    %v3904 = vmul.f32 %v2624, %v3264
    %v3905 = vmul.f32 %v2625, %v3265
    %v3906 = vmul.f32 %v2626, %v3266
    %v3907 = vmul.f32 %v2627, %v3267
    %v3908 = vmul.f32 %v2628, %v3268
    %v3909 = vmul.f32 %v2629, %v3269
    %v3910 = vmul.f32 %v2630, %v3270
    %v3911 = vmul.f32 %v2631, %v3271
    %v3912 = vmul.f32 %v2632, %v3272
    %v3913 = vmul.f32 %v2633, %v3273
    %v3914 = vmul.f32 %v2634, %v3274
    %v3915 = vmul.f32 %v2635, %v3275
    %v3916 = vmul.f32 %v2636, %v3276
    %v3917 = vmul.f32 %v2637, %v3277
    %v3918 = vmul.f32 %v2638, %v3278
    %v3919 = vmul.f32 %v2639, %v3279
    %v3920 = vmul.f32 %v2640, %v3280
    %v3921 = vmul.f32 %v2641, %v3281
    %v3922 = vmul.f32 %v2642, %v3282
    %v3923 = vmul.f32 %v2643, %v3283
    %v3924 = vmul.f32 %v2644, %v3284
    %v3925 = vmul.f32 %v2645, %v3285
    %v3926 = vmul.f32 %v2646, %v3286
    %v3927 = vmul.f32 %v2647, %v3287
    %v3928 = vmul.f32 %v2648, %v3288
    %v3929 = vmul.f32 %v2649, %v3289
    %v3930 = vmul.f32 %v2650, %v3290
    %v3931 = vmul.f32 %v2651, %v3291
    %v3932 = vmul.f32 %v2652, %v3292
    %v3933 = vmul.f32 %v2653, %v3293
    %v3934 = vmul.f32 %v2654, %v3294
    %v3935 = vmul.f32 %v2655, %v3295
    %v3936 = vmul.f32 %v2656, %v3296
    %v3937 = vmul.f32 %v2657, %v3297
    %v3938 = vmul.f32 %v2658, %v3298
    %v3939 = vmul.f32 %v2659, %v3299
    %v3940 = vmul.f32 %v2660, %v3300
    %v3941 = vmul.f32 %v2661, %v3301
    %v3942 = vmul.f32 %v2662, %v3302
    %v3943 = vmul.f32 %v2663, %v3303
    %v3944 = vmul.f32 %v2664, %v3304
    %v3945 = vmul.f32 %v2665, %v3305
    %v3946 = vmul.f32 %v2666, %v3306
    %v3947 = vmul.f32 %v2667, %v3307
    %v3948 = vmul.f32 %v2668, %v3308
    %v3949 = vmul.f32 %v2669, %v3309
    %v3950 = vmul.f32 %v2670, %v3310
    %v3951 = vmul.f32 %v2671, %v3311
    %v3952 = vmul.f32 %v2672, %v3312
    %v3953 = vmul.f32 %v2673, %v3313
    %v3954 = vmul.f32 %v2674, %v3314
    %v3955 = vmul.f32 %v2675, %v3315
    %v3956 = vmul.f32 %v2676, %v3316
    %v3957 = vmul.f32 %v2677, %v3317
    %v3958 = vmul.f32 %v2678, %v3318
    %v3959 = vmul.f32 %v2679, %v3319
    %v3960 = vmul.f32 %v2680, %v3320
    %v3961 = vmul.f32 %v2681, %v3321
    %v3962 = vmul.f32 %v2682, %v3322
    %v3963 = vmul.f32 %v2683, %v3323
    %v3964 = vmul.f32 %v2684, %v3324
    %v3965 = vmul.f32 %v2685, %v3325
    %v3966 = vmul.f32 %v2686, %v3326
    %v3967 = vmul.f32 %v2687, %v3327
    %v3968 = vmul.f32 %v2688, %v3328
    %v3969 = vmul.f32 %v2689, %v3329
    %v3970 = vmul.f32 %v2690, %v3330
    %v3971 = vmul.f32 %v2691, %v3331
    %v3972 = vmul.f32 %v2692, %v3332
    %v3973 = vmul.f32 %v2693, %v3333
    %v3974 = vmul.f32 %v2694, %v3334
    %v3975 = vmul.f32 %v2695, %v3335
    %v3976 = vmul.f32 %v2696, %v3336
    %v3977 = vmul.f32 %v2697, %v3337
    %v3978 = vmul.f32 %v2698, %v3338
    %v3979 = vmul.f32 %v2699, %v3339
    %v3980 = vmul.f32 %v2700, %v3340
    %v3981 = vmul.f32 %v2701, %v3341
    %v3982 = vmul.f32 %v2702, %v3342
    %v3983 = vmul.f32 %v2703, %v3343
    %v3984 = vmul.f32 %v2704, %v3344
    %v3985 = vmul.f32 %v2705, %v3345
    %v3986 = vmul.f32 %v2706, %v3346
    %v3987 = vmul.f32 %v2707, %v3347
    %v3988 = vmul.f32 %v2708, %v3348
    %v3989 = vmul.f32 %v2709, %v3349
    %v3990 = vmul.f32 %v2710, %v3350
    %v3991 = vmul.f32 %v2711, %v3351
    %v3992 = vmul.f32 %v2712, %v3352
    %v3993 = vmul.f32 %v2713, %v3353
    %v3994 = vmul.f32 %v2714, %v3354
    %v3995 = vmul.f32 %v2715, %v3355
    %v3996 = vmul.f32 %v2716, %v3356
    %v3997 = vmul.f32 %v2717, %v3357
    %v3998 = vmul.f32 %v2718, %v3358
    %v3999 = vmul.f32 %v2719, %v3359
    %v4000 = vmul.f32 %v2720, %v3360
    %v4001 = vmul.f32 %v2721, %v3361
    %v4002 = vmul.f32 %v2722, %v3362
    %v4003 = vmul.f32 %v2723, %v3363
    %v4004 = vmul.f32 %v2724, %v3364
    %v4005 = vmul.f32 %v2725, %v3365
    %v4006 = vmul.f32 %v2726, %v3366
    %v4007 = vmul.f32 %v2727, %v3367
    %v4008 = vmul.f32 %v2728, %v3368
    %v4009 = vmul.f32 %v2729, %v3369
    %v4010 = vmul.f32 %v2730, %v3370
    %v4011 = vmul.f32 %v2731, %v3371
    %v4012 = vmul.f32 %v2732, %v3372
    %v4013 = vmul.f32 %v2733, %v3373
    %v4014 = vmul.f32 %v2734, %v3374
    %v4015 = vmul.f32 %v2735, %v3375
    %v4016 = vmul.f32 %v2736, %v3376
    %v4017 = vmul.f32 %v2737, %v3377
    %v4018 = vmul.f32 %v2738, %v3378
    %v4019 = vmul.f32 %v2739, %v3379
    %v4020 = vmul.f32 %v2740, %v3380
    %v4021 = vmul.f32 %v2741, %v3381
    %v4022 = vmul.f32 %v2742, %v3382
    %v4023 = vmul.f32 %v2743, %v3383
    %v4024 = vmul.f32 %v2744, %v3384
    %v4025 = vmul.f32 %v2745, %v3385
    %v4026 = vmul.f32 %v2746, %v3386
    %v4027 = vmul.f32 %v2747, %v3387
    %v4028 = vmul.f32 %v2748, %v3388
    %v4029 = vmul.f32 %v2749, %v3389
    %v4030 = vmul.f32 %v2750, %v3390
    %v4031 = vmul.f32 %v2751, %v3391
    %v4032 = vmul.f32 %v2752, %v3392
    %v4033 = vmul.f32 %v2753, %v3393
    %v4034 = vadd.f32 %v2114, %v3394
    %v4035 = vadd.f32 %v2115, %v3395
    %v4036 = vadd.f32 %v2116, %v3396
    %v4037 = vadd.f32 %v2117, %v3397
    %v4038 = vadd.f32 %v2118, %v3398
    %v4039 = vadd.f32 %v2119, %v3399
    %v4040 = vadd.f32 %v2120, %v3400
    %v4041 = vadd.f32 %v2121, %v3401
    %v4042 = vadd.f32 %v2122, %v3402
    %v4043 = vadd.f32 %v2123, %v3403
    %v4044 = vadd.f32 %v2124, %v3404
    %v4045 = vadd.f32 %v2125, %v3405
    %v4046 = vadd.f32 %v2126, %v3406
    %v4047 = vadd.f32 %v2127, %v3407
    %v4048 = vadd.f32 %v2128, %v3408
    %v4049 = vadd.f32 %v2129, %v3409
    %v4050 = vadd.f32 %v2130, %v3410
    %v4051 = vadd.f32 %v2131, %v3411
    %v4052 = vadd.f32 %v2132, %v3412
    %v4053 = vadd.f32 %v2133, %v3413
    %v4054 = vadd.f32 %v2134, %v3414
    %v4055 = vadd.f32 %v2135, %v3415
    %v4056 = vadd.f32 %v2136, %v3416
    %v4057 = vadd.f32 %v2137, %v3417
    %v4058 = vadd.f32 %v2138, %v3418
    %v4059 = vadd.f32 %v2139, %v3419
    %v4060 = vadd.f32 %v2140, %v3420
    %v4061 = vadd.f32 %v2141, %v3421
    %v4062 = vadd.f32 %v2142, %v3422
    %v4063 = vadd.f32 %v2143, %v3423
    %v4064 = vadd.f32 %v2144, %v3424
    %v4065 = vadd.f32 %v2145, %v3425
    %v4066 = vadd.f32 %v2146, %v3426
    %v4067 = vadd.f32 %v2147, %v3427
    %v4068 = vadd.f32 %v2148, %v3428
    %v4069 = vadd.f32 %v2149, %v3429
    %v4070 = vadd.f32 %v2150, %v3430
    %v4071 = vadd.f32 %v2151, %v3431
    %v4072 = vadd.f32 %v2152, %v3432
    %v4073 = vadd.f32 %v2153, %v3433
    %v4074 = vadd.f32 %v2154, %v3434
    %v4075 = vadd.f32 %v2155, %v3435
    %v4076 = vadd.f32 %v2156, %v3436
    %v4077 = vadd.f32 %v2157, %v3437
    %v4078 = vadd.f32 %v2158, %v3438
    %v4079 = vadd.f32 %v2159, %v3439
    %v4080 = vadd.f32 %v2160, %v3440
    %v4081 = vadd.f32 %v2161, %v3441
    %v4082 = vadd.f32 %v2162, %v3442
    %v4083 = vadd.f32 %v2163, %v3443
    %v4084 = vadd.f32 %v2164, %v3444
    %v4085 = vadd.f32 %v2165, %v3445
    %v4086 = vadd.f32 %v2166, %v3446
    %v4087 = vadd.f32 %v2167, %v3447
    %v4088 = vadd.f32 %v2168, %v3448
    %v4089 = vadd.f32 %v2169, %v3449
    %v4090 = vadd.f32 %v2170, %v3450
    %v4091 = vadd.f32 %v2171, %v3451
    %v4092 = vadd.f32 %v2172, %v3452
    %v4093 = vadd.f32 %v2173, %v3453
    %v4094 = vadd.f32 %v2174, %v3454
    %v4095 = vadd.f32 %v2175, %v3455
    %v4096 = vadd.f32 %v2176, %v3456
    %v4097 = vadd.f32 %v2177, %v3457
    %v4098 = vadd.f32 %v2178, %v3458
    %v4099 = vadd.f32 %v2179, %v3459
    %v4100 = vadd.f32 %v2180, %v3460
    %v4101 = vadd.f32 %v2181, %v3461
    %v4102 = vadd.f32 %v2182, %v3462
    %v4103 = vadd.f32 %v2183, %v3463
    %v4104 = vadd.f32 %v2184, %v3464
    %v4105 = vadd.f32 %v2185, %v3465
    %v4106 = vadd.f32 %v2186, %v3466
    %v4107 = vadd.f32 %v2187, %v3467
    %v4108 = vadd.f32 %v2188, %v3468
    %v4109 = vadd.f32 %v2189, %v3469
    %v4110 = vadd.f32 %v2190, %v3470
    %v4111 = vadd.f32 %v2191, %v3471
    %v4112 = vadd.f32 %v2192, %v3472
    %v4113 = vadd.f32 %v2193, %v3473
    %v4114 = vadd.f32 %v2194, %v3474
    %v4115 = vadd.f32 %v2195, %v3475
    %v4116 = vadd.f32 %v2196, %v3476
    %v4117 = vadd.f32 %v2197, %v3477
    %v4118 = vadd.f32 %v2198, %v3478
    %v4119 = vadd.f32 %v2199, %v3479
    %v4120 = vadd.f32 %v2200, %v3480
    %v4121 = vadd.f32 %v2201, %v3481
    %v4122 = vadd.f32 %v2202, %v3482
    %v4123 = vadd.f32 %v2203, %v3483
    %v4124 = vadd.f32 %v2204, %v3484
    %v4125 = vadd.f32 %v2205, %v3485
    %v4126 = vadd.f32 %v2206, %v3486
    %v4127 = vadd.f32 %v2207, %v3487
    %v4128 = vadd.f32 %v2208, %v3488
    %v4129 = vadd.f32 %v2209, %v3489
    %v4130 = vadd.f32 %v2210, %v3490
    %v4131 = vadd.f32 %v2211, %v3491
    %v4132 = vadd.f32 %v2212, %v3492
    %v4133 = vadd.f32 %v2213, %v3493
    %v4134 = vadd.f32 %v2214, %v3494
    %v4135 = vadd.f32 %v2215, %v3495
    %v4136 = vadd.f32 %v2216, %v3496
    %v4137 = vadd.f32 %v2217, %v3497
    %v4138 = vadd.f32 %v2218, %v3498
    %v4139 = vadd.f32 %v2219, %v3499
    %v4140 = vadd.f32 %v2220, %v3500
    %v4141 = vadd.f32 %v2221, %v3501
    %v4142 = vadd.f32 %v2222, %v3502
    %v4143 = vadd.f32 %v2223, %v3503
    %v4144 = vadd.f32 %v2224, %v3504
    %v4145 = vadd.f32 %v2225, %v3505
    %v4146 = vadd.f32 %v2226, %v3506
    %v4147 = vadd.f32 %v2227, %v3507
    %v4148 = vadd.f32 %v2228, %v3508
    %v4149 = vadd.f32 %v2229, %v3509
    %v4150 = vadd.f32 %v2230, %v3510
    %v4151 = vadd.f32 %v2231, %v3511
    %v4152 = vadd.f32 %v2232, %v3512
    %v4153 = vadd.f32 %v2233, %v3513
    %v4154 = vadd.f32 %v2234, %v3514
    %v4155 = vadd.f32 %v2235, %v3515
    %v4156 = vadd.f32 %v2236, %v3516
    %v4157 = vadd.f32 %v2237, %v3517
    %v4158 = vadd.f32 %v2238, %v3518
    %v4159 = vadd.f32 %v2239, %v3519
    %v4160 = vadd.f32 %v2240, %v3520
    %v4161 = vadd.f32 %v2241, %v3521
    %v4162 = vadd.f32 %v2242, %v3522
    %v4163 = vadd.f32 %v2243, %v3523
    %v4164 = vadd.f32 %v2244, %v3524
    %v4165 = vadd.f32 %v2245, %v3525
    %v4166 = vadd.f32 %v2246, %v3526
    %v4167 = vadd.f32 %v2247, %v3527
    %v4168 = vadd.f32 %v2248, %v3528
    %v4169 = vadd.f32 %v2249, %v3529
    %v4170 = vadd.f32 %v2250, %v3530
    %v4171 = vadd.f32 %v2251, %v3531
    %v4172 = vadd.f32 %v2252, %v3532
    %v4173 = vadd.f32 %v2253, %v3533
    %v4174 = vadd.f32 %v2254, %v3534
    %v4175 = vadd.f32 %v2255, %v3535
    %v4176 = vadd.f32 %v2256, %v3536
    %v4177 = vadd.f32 %v2257, %v3537
    %v4178 = vadd.f32 %v2258, %v3538
    %v4179 = vadd.f32 %v2259, %v3539
    %v4180 = vadd.f32 %v2260, %v3540
    %v4181 = vadd.f32 %v2261, %v3541
    %v4182 = vadd.f32 %v2262, %v3542
    %v4183 = vadd.f32 %v2263, %v3543
    %v4184 = vadd.f32 %v2264, %v3544
    %v4185 = vadd.f32 %v2265, %v3545
    %v4186 = vadd.f32 %v2266, %v3546
    %v4187 = vadd.f32 %v2267, %v3547
    %v4188 = vadd.f32 %v2268, %v3548
    %v4189 = vadd.f32 %v2269, %v3549
    %v4190 = vadd.f32 %v2270, %v3550
    %v4191 = vadd.f32 %v2271, %v3551
    %v4192 = vadd.f32 %v2272, %v3552
    %v4193 = vadd.f32 %v2273, %v3553
    %v4194 = vadd.f32 %v2274, %v3554
    %v4195 = vadd.f32 %v2275, %v3555
    %v4196 = vadd.f32 %v2276, %v3556
    %v4197 = vadd.f32 %v2277, %v3557
    %v4198 = vadd.f32 %v2278, %v3558
    %v4199 = vadd.f32 %v2279, %v3559
    %v4200 = vadd.f32 %v2280, %v3560
    %v4201 = vadd.f32 %v2281, %v3561
    %v4202 = vadd.f32 %v2282, %v3562
    %v4203 = vadd.f32 %v2283, %v3563
    %v4204 = vadd.f32 %v2284, %v3564
    %v4205 = vadd.f32 %v2285, %v3565
    %v4206 = vadd.f32 %v2286, %v3566
    %v4207 = vadd.f32 %v2287, %v3567
    %v4208 = vadd.f32 %v2288, %v3568
    %v4209 = vadd.f32 %v2289, %v3569
    %v4210 = vadd.f32 %v2290, %v3570
    %v4211 = vadd.f32 %v2291, %v3571
    %v4212 = vadd.f32 %v2292, %v3572
    %v4213 = vadd.f32 %v2293, %v3573
    %v4214 = vadd.f32 %v2294, %v3574
    %v4215 = vadd.f32 %v2295, %v3575
    %v4216 = vadd.f32 %v2296, %v3576
    %v4217 = vadd.f32 %v2297, %v3577
    %v4218 = vadd.f32 %v2298, %v3578
    %v4219 = vadd.f32 %v2299, %v3579
    %v4220 = vadd.f32 %v2300, %v3580
    %v4221 = vadd.f32 %v2301, %v3581
    %v4222 = vadd.f32 %v2302, %v3582
    %v4223 = vadd.f32 %v2303, %v3583
    %v4224 = vadd.f32 %v2304, %v3584
    %v4225 = vadd.f32 %v2305, %v3585
    %v4226 = vadd.f32 %v2306, %v3586
    %v4227 = vadd.f32 %v2307, %v3587
    %v4228 = vadd.f32 %v2308, %v3588
    %v4229 = vadd.f32 %v2309, %v3589
    %v4230 = vadd.f32 %v2310, %v3590
    %v4231 = vadd.f32 %v2311, %v3591
    %v4232 = vadd.f32 %v2312, %v3592
    %v4233 = vadd.f32 %v2313, %v3593
    %v4234 = vadd.f32 %v2314, %v3594
    %v4235 = vadd.f32 %v2315, %v3595
    %v4236 = vadd.f32 %v2316, %v3596
    %v4237 = vadd.f32 %v2317, %v3597
    %v4238 = vadd.f32 %v2318, %v3598
    %v4239 = vadd.f32 %v2319, %v3599
    %v4240 = vadd.f32 %v2320, %v3600
    %v4241 = vadd.f32 %v2321, %v3601
    %v4242 = vadd.f32 %v2322, %v3602
    %v4243 = vadd.f32 %v2323, %v3603
    %v4244 = vadd.f32 %v2324, %v3604
    %v4245 = vadd.f32 %v2325, %v3605
    %v4246 = vadd.f32 %v2326, %v3606
    %v4247 = vadd.f32 %v2327, %v3607
    %v4248 = vadd.f32 %v2328, %v3608
    %v4249 = vadd.f32 %v2329, %v3609
    %v4250 = vadd.f32 %v2330, %v3610
    %v4251 = vadd.f32 %v2331, %v3611
    %v4252 = vadd.f32 %v2332, %v3612
    %v4253 = vadd.f32 %v2333, %v3613
    %v4254 = vadd.f32 %v2334, %v3614
    %v4255 = vadd.f32 %v2335, %v3615
    %v4256 = vadd.f32 %v2336, %v3616
    %v4257 = vadd.f32 %v2337, %v3617
    %v4258 = vadd.f32 %v2338, %v3618
    %v4259 = vadd.f32 %v2339, %v3619
    %v4260 = vadd.f32 %v2340, %v3620
    %v4261 = vadd.f32 %v2341, %v3621
    %v4262 = vadd.f32 %v2342, %v3622
    %v4263 = vadd.f32 %v2343, %v3623
    %v4264 = vadd.f32 %v2344, %v3624
    %v4265 = vadd.f32 %v2345, %v3625
    %v4266 = vadd.f32 %v2346, %v3626
    %v4267 = vadd.f32 %v2347, %v3627
    %v4268 = vadd.f32 %v2348, %v3628
    %v4269 = vadd.f32 %v2349, %v3629
    %v4270 = vadd.f32 %v2350, %v3630
    %v4271 = vadd.f32 %v2351, %v3631
    %v4272 = vadd.f32 %v2352, %v3632
    %v4273 = vadd.f32 %v2353, %v3633
    %v4274 = vadd.f32 %v2354, %v3634
    %v4275 = vadd.f32 %v2355, %v3635
    %v4276 = vadd.f32 %v2356, %v3636
    %v4277 = vadd.f32 %v2357, %v3637
    %v4278 = vadd.f32 %v2358, %v3638
    %v4279 = vadd.f32 %v2359, %v3639
    %v4280 = vadd.f32 %v2360, %v3640
    %v4281 = vadd.f32 %v2361, %v3641
    %v4282 = vadd.f32 %v2362, %v3642
    %v4283 = vadd.f32 %v2363, %v3643
    %v4284 = vadd.f32 %v2364, %v3644
    %v4285 = vadd.f32 %v2365, %v3645
    %v4286 = vadd.f32 %v2366, %v3646
    %v4287 = vadd.f32 %v2367, %v3647
    %v4288 = vadd.f32 %v2368, %v3648
    %v4289 = vadd.f32 %v2369, %v3649
    %v4290 = vadd.f32 %v2370, %v3650
    %v4291 = vadd.f32 %v2371, %v3651
    %v4292 = vadd.f32 %v2372, %v3652
    %v4293 = vadd.f32 %v2373, %v3653
    %v4294 = vadd.f32 %v2374, %v3654
    %v4295 = vadd.f32 %v2375, %v3655
    %v4296 = vadd.f32 %v2376, %v3656
    %v4297 = vadd.f32 %v2377, %v3657
    %v4298 = vadd.f32 %v2378, %v3658
    %v4299 = vadd.f32 %v2379, %v3659
    %v4300 = vadd.f32 %v2380, %v3660
    %v4301 = vadd.f32 %v2381, %v3661
    %v4302 = vadd.f32 %v2382, %v3662
    %v4303 = vadd.f32 %v2383, %v3663
    %v4304 = vadd.f32 %v2384, %v3664
    %v4305 = vadd.f32 %v2385, %v3665
    %v4306 = vadd.f32 %v2386, %v3666
    %v4307 = vadd.f32 %v2387, %v3667
    %v4308 = vadd.f32 %v2388, %v3668
    %v4309 = vadd.f32 %v2389, %v3669
    %v4310 = vadd.f32 %v2390, %v3670
    %v4311 = vadd.f32 %v2391, %v3671
    %v4312 = vadd.f32 %v2392, %v3672
    %v4313 = vadd.f32 %v2393, %v3673
    %v4314 = vadd.f32 %v2394, %v3674
    %v4315 = vadd.f32 %v2395, %v3675
    %v4316 = vadd.f32 %v2396, %v3676
    %v4317 = vadd.f32 %v2397, %v3677
    %v4318 = vadd.f32 %v2398, %v3678
    %v4319 = vadd.f32 %v2399, %v3679
    %v4320 = vadd.f32 %v2400, %v3680
    %v4321 = vadd.f32 %v2401, %v3681
    %v4322 = vadd.f32 %v2402, %v3682
    %v4323 = vadd.f32 %v2403, %v3683
    %v4324 = vadd.f32 %v2404, %v3684
    %v4325 = vadd.f32 %v2405, %v3685
    %v4326 = vadd.f32 %v2406, %v3686
    %v4327 = vadd.f32 %v2407, %v3687
    %v4328 = vadd.f32 %v2408, %v3688
    %v4329 = vadd.f32 %v2409, %v3689
    %v4330 = vadd.f32 %v2410, %v3690
    %v4331 = vadd.f32 %v2411, %v3691
    %v4332 = vadd.f32 %v2412, %v3692
    %v4333 = vadd.f32 %v2413, %v3693
    %v4334 = vadd.f32 %v2414, %v3694
    %v4335 = vadd.f32 %v2415, %v3695
    %v4336 = vadd.f32 %v2416, %v3696
    %v4337 = vadd.f32 %v2417, %v3697
    %v4338 = vadd.f32 %v2418, %v3698
    %v4339 = vadd.f32 %v2419, %v3699
    %v4340 = vadd.f32 %v2420, %v3700
    %v4341 = vadd.f32 %v2421, %v3701
    %v4342 = vadd.f32 %v2422, %v3702
    %v4343 = vadd.f32 %v2423, %v3703
    %v4344 = vadd.f32 %v2424, %v3704
    %v4345 = vadd.f32 %v2425, %v3705
    %v4346 = vadd.f32 %v2426, %v3706
    %v4347 = vadd.f32 %v2427, %v3707
    %v4348 = vadd.f32 %v2428, %v3708
    %v4349 = vadd.f32 %v2429, %v3709
    %v4350 = vadd.f32 %v2430, %v3710
    %v4351 = vadd.f32 %v2431, %v3711
    %v4352 = vadd.f32 %v2432, %v3712
    %v4353 = vadd.f32 %v2433, %v3713
    %v4354 = vadd.f32 %v2434, %v3714
    %v4355 = vadd.f32 %v2435, %v3715
    %v4356 = vadd.f32 %v2436, %v3716
    %v4357 = vadd.f32 %v2437, %v3717
    %v4358 = vadd.f32 %v2438, %v3718
    %v4359 = vadd.f32 %v2439, %v3719
    %v4360 = vadd.f32 %v2440, %v3720
    %v4361 = vadd.f32 %v2441, %v3721
    %v4362 = vadd.f32 %v2442, %v3722
    %v4363 = vadd.f32 %v2443, %v3723
    %v4364 = vadd.f32 %v2444, %v3724
    %v4365 = vadd.f32 %v2445, %v3725
    %v4366 = vadd.f32 %v2446, %v3726
    %v4367 = vadd.f32 %v2447, %v3727
    %v4368 = vadd.f32 %v2448, %v3728
    %v4369 = vadd.f32 %v2449, %v3729
    %v4370 = vadd.f32 %v2450, %v3730
    %v4371 = vadd.f32 %v2451, %v3731
    %v4372 = vadd.f32 %v2452, %v3732
    %v4373 = vadd.f32 %v2453, %v3733
    %v4374 = vadd.f32 %v2454, %v3734
    %v4375 = vadd.f32 %v2455, %v3735
    %v4376 = vadd.f32 %v2456, %v3736
    %v4377 = vadd.f32 %v2457, %v3737
    %v4378 = vadd.f32 %v2458, %v3738
    %v4379 = vadd.f32 %v2459, %v3739
    %v4380 = vadd.f32 %v2460, %v3740
    %v4381 = vadd.f32 %v2461, %v3741
    %v4382 = vadd.f32 %v2462, %v3742
    %v4383 = vadd.f32 %v2463, %v3743
    %v4384 = vadd.f32 %v2464, %v3744
    %v4385 = vadd.f32 %v2465, %v3745
    %v4386 = vadd.f32 %v2466, %v3746
    %v4387 = vadd.f32 %v2467, %v3747
    %v4388 = vadd.f32 %v2468, %v3748
    %v4389 = vadd.f32 %v2469, %v3749
    %v4390 = vadd.f32 %v2470, %v3750
    %v4391 = vadd.f32 %v2471, %v3751
    %v4392 = vadd.f32 %v2472, %v3752
    %v4393 = vadd.f32 %v2473, %v3753
    %v4394 = vadd.f32 %v2474, %v3754
    %v4395 = vadd.f32 %v2475, %v3755
    %v4396 = vadd.f32 %v2476, %v3756
    %v4397 = vadd.f32 %v2477, %v3757
    %v4398 = vadd.f32 %v2478, %v3758
    %v4399 = vadd.f32 %v2479, %v3759
    %v4400 = vadd.f32 %v2480, %v3760
    %v4401 = vadd.f32 %v2481, %v3761
    %v4402 = vadd.f32 %v2482, %v3762
    %v4403 = vadd.f32 %v2483, %v3763
    %v4404 = vadd.f32 %v2484, %v3764
    %v4405 = vadd.f32 %v2485, %v3765
    %v4406 = vadd.f32 %v2486, %v3766
    %v4407 = vadd.f32 %v2487, %v3767
    %v4408 = vadd.f32 %v2488, %v3768
    %v4409 = vadd.f32 %v2489, %v3769
    %v4410 = vadd.f32 %v2490, %v3770
    %v4411 = vadd.f32 %v2491, %v3771
    %v4412 = vadd.f32 %v2492, %v3772
    %v4413 = vadd.f32 %v2493, %v3773
    %v4414 = vadd.f32 %v2494, %v3774
    %v4415 = vadd.f32 %v2495, %v3775
    %v4416 = vadd.f32 %v2496, %v3776
    %v4417 = vadd.f32 %v2497, %v3777
    %v4418 = vadd.f32 %v2498, %v3778
    %v4419 = vadd.f32 %v2499, %v3779
    %v4420 = vadd.f32 %v2500, %v3780
    %v4421 = vadd.f32 %v2501, %v3781
    %v4422 = vadd.f32 %v2502, %v3782
    %v4423 = vadd.f32 %v2503, %v3783
    %v4424 = vadd.f32 %v2504, %v3784
    %v4425 = vadd.f32 %v2505, %v3785
    %v4426 = vadd.f32 %v2506, %v3786
    %v4427 = vadd.f32 %v2507, %v3787
    %v4428 = vadd.f32 %v2508, %v3788
    %v4429 = vadd.f32 %v2509, %v3789
    %v4430 = vadd.f32 %v2510, %v3790
    %v4431 = vadd.f32 %v2511, %v3791
    %v4432 = vadd.f32 %v2512, %v3792
    %v4433 = vadd.f32 %v2513, %v3793
    %v4434 = vadd.f32 %v2514, %v3794
    %v4435 = vadd.f32 %v2515, %v3795
    %v4436 = vadd.f32 %v2516, %v3796
    %v4437 = vadd.f32 %v2517, %v3797
    %v4438 = vadd.f32 %v2518, %v3798
    %v4439 = vadd.f32 %v2519, %v3799
    %v4440 = vadd.f32 %v2520, %v3800
    %v4441 = vadd.f32 %v2521, %v3801
    %v4442 = vadd.f32 %v2522, %v3802
    %v4443 = vadd.f32 %v2523, %v3803
    %v4444 = vadd.f32 %v2524, %v3804
    %v4445 = vadd.f32 %v2525, %v3805
    %v4446 = vadd.f32 %v2526, %v3806
    %v4447 = vadd.f32 %v2527, %v3807
    %v4448 = vadd.f32 %v2528, %v3808
    %v4449 = vadd.f32 %v2529, %v3809
    %v4450 = vadd.f32 %v2530, %v3810
    %v4451 = vadd.f32 %v2531, %v3811
    %v4452 = vadd.f32 %v2532, %v3812
    %v4453 = vadd.f32 %v2533, %v3813
    %v4454 = vadd.f32 %v2534, %v3814
    %v4455 = vadd.f32 %v2535, %v3815
    %v4456 = vadd.f32 %v2536, %v3816
    %v4457 = vadd.f32 %v2537, %v3817
    %v4458 = vadd.f32 %v2538, %v3818
    %v4459 = vadd.f32 %v2539, %v3819
    %v4460 = vadd.f32 %v2540, %v3820
    %v4461 = vadd.f32 %v2541, %v3821
    %v4462 = vadd.f32 %v2542, %v3822
    %v4463 = vadd.f32 %v2543, %v3823
    %v4464 = vadd.f32 %v2544, %v3824
    %v4465 = vadd.f32 %v2545, %v3825
    %v4466 = vadd.f32 %v2546, %v3826
    %v4467 = vadd.f32 %v2547, %v3827
    %v4468 = vadd.f32 %v2548, %v3828
    %v4469 = vadd.f32 %v2549, %v3829
    %v4470 = vadd.f32 %v2550, %v3830
    %v4471 = vadd.f32 %v2551, %v3831
    %v4472 = vadd.f32 %v2552, %v3832
    %v4473 = vadd.f32 %v2553, %v3833
    %v4474 = vadd.f32 %v2554, %v3834
    %v4475 = vadd.f32 %v2555, %v3835
    %v4476 = vadd.f32 %v2556, %v3836
    %v4477 = vadd.f32 %v2557, %v3837
    %v4478 = vadd.f32 %v2558, %v3838
    %v4479 = vadd.f32 %v2559, %v3839
    %v4480 = vadd.f32 %v2560, %v3840
    %v4481 = vadd.f32 %v2561, %v3841
    %v4482 = vadd.f32 %v2562, %v3842
    %v4483 = vadd.f32 %v2563, %v3843
    %v4484 = vadd.f32 %v2564, %v3844
    %v4485 = vadd.f32 %v2565, %v3845
    %v4486 = vadd.f32 %v2566, %v3846
    %v4487 = vadd.f32 %v2567, %v3847
    %v4488 = vadd.f32 %v2568, %v3848
    %v4489 = vadd.f32 %v2569, %v3849
    %v4490 = vadd.f32 %v2570, %v3850
    %v4491 = vadd.f32 %v2571, %v3851
    %v4492 = vadd.f32 %v2572, %v3852
    %v4493 = vadd.f32 %v2573, %v3853
    %v4494 = vadd.f32 %v2574, %v3854
    %v4495 = vadd.f32 %v2575, %v3855
    %v4496 = vadd.f32 %v2576, %v3856
    %v4497 = vadd.f32 %v2577, %v3857
    %v4498 = vadd.f32 %v2578, %v3858
    %v4499 = vadd.f32 %v2579, %v3859
    %v4500 = vadd.f32 %v2580, %v3860
    %v4501 = vadd.f32 %v2581, %v3861
    %v4502 = vadd.f32 %v2582, %v3862
    %v4503 = vadd.f32 %v2583, %v3863
    %v4504 = vadd.f32 %v2584, %v3864
    %v4505 = vadd.f32 %v2585, %v3865
    %v4506 = vadd.f32 %v2586, %v3866
    %v4507 = vadd.f32 %v2587, %v3867
    %v4508 = vadd.f32 %v2588, %v3868
    %v4509 = vadd.f32 %v2589, %v3869
    %v4510 = vadd.f32 %v2590, %v3870
    %v4511 = vadd.f32 %v2591, %v3871
    %v4512 = vadd.f32 %v2592, %v3872
    %v4513 = vadd.f32 %v2593, %v3873
    %v4514 = vadd.f32 %v2594, %v3874
    %v4515 = vadd.f32 %v2595, %v3875
    %v4516 = vadd.f32 %v2596, %v3876
    %v4517 = vadd.f32 %v2597, %v3877
    %v4518 = vadd.f32 %v2598, %v3878
    %v4519 = vadd.f32 %v2599, %v3879
    %v4520 = vadd.f32 %v2600, %v3880
    %v4521 = vadd.f32 %v2601, %v3881
    %v4522 = vadd.f32 %v2602, %v3882
    %v4523 = vadd.f32 %v2603, %v3883
    %v4524 = vadd.f32 %v2604, %v3884
    %v4525 = vadd.f32 %v2605, %v3885
    %v4526 = vadd.f32 %v2606, %v3886
    %v4527 = vadd.f32 %v2607, %v3887
    %v4528 = vadd.f32 %v2608, %v3888
    %v4529 = vadd.f32 %v2609, %v3889
    %v4530 = vadd.f32 %v2610, %v3890
    %v4531 = vadd.f32 %v2611, %v3891
    %v4532 = vadd.f32 %v2612, %v3892
    %v4533 = vadd.f32 %v2613, %v3893
    %v4534 = vadd.f32 %v2614, %v3894
    %v4535 = vadd.f32 %v2615, %v3895
    %v4536 = vadd.f32 %v2616, %v3896
    %v4537 = vadd.f32 %v2617, %v3897
    %v4538 = vadd.f32 %v2618, %v3898
    %v4539 = vadd.f32 %v2619, %v3899
    %v4540 = vadd.f32 %v2620, %v3900
    %v4541 = vadd.f32 %v2621, %v3901
    %v4542 = vadd.f32 %v2622, %v3902
    %v4543 = vadd.f32 %v2623, %v3903
    %v4544 = vadd.f32 %v2624, %v3904
    %v4545 = vadd.f32 %v2625, %v3905
    %v4546 = vadd.f32 %v2626, %v3906
    %v4547 = vadd.f32 %v2627, %v3907
    %v4548 = vadd.f32 %v2628, %v3908
    %v4549 = vadd.f32 %v2629, %v3909
    %v4550 = vadd.f32 %v2630, %v3910
    %v4551 = vadd.f32 %v2631, %v3911
    %v4552 = vadd.f32 %v2632, %v3912
    %v4553 = vadd.f32 %v2633, %v3913
    %v4554 = vadd.f32 %v2634, %v3914
    %v4555 = vadd.f32 %v2635, %v3915
    %v4556 = vadd.f32 %v2636, %v3916
    %v4557 = vadd.f32 %v2637, %v3917
    %v4558 = vadd.f32 %v2638, %v3918
    %v4559 = vadd.f32 %v2639, %v3919
    %v4560 = vadd.f32 %v2640, %v3920
    %v4561 = vadd.f32 %v2641, %v3921
    %v4562 = vadd.f32 %v2642, %v3922
    %v4563 = vadd.f32 %v2643, %v3923
    %v4564 = vadd.f32 %v2644, %v3924
    %v4565 = vadd.f32 %v2645, %v3925
    %v4566 = vadd.f32 %v2646, %v3926
    %v4567 = vadd.f32 %v2647, %v3927
    %v4568 = vadd.f32 %v2648, %v3928
    %v4569 = vadd.f32 %v2649, %v3929
    %v4570 = vadd.f32 %v2650, %v3930
    %v4571 = vadd.f32 %v2651, %v3931
    %v4572 = vadd.f32 %v2652, %v3932
    %v4573 = vadd.f32 %v2653, %v3933
    %v4574 = vadd.f32 %v2654, %v3934
    %v4575 = vadd.f32 %v2655, %v3935
    %v4576 = vadd.f32 %v2656, %v3936
    %v4577 = vadd.f32 %v2657, %v3937
    %v4578 = vadd.f32 %v2658, %v3938
    %v4579 = vadd.f32 %v2659, %v3939
    %v4580 = vadd.f32 %v2660, %v3940
    %v4581 = vadd.f32 %v2661, %v3941
    %v4582 = vadd.f32 %v2662, %v3942
    %v4583 = vadd.f32 %v2663, %v3943
    %v4584 = vadd.f32 %v2664, %v3944
    %v4585 = vadd.f32 %v2665, %v3945
    %v4586 = vadd.f32 %v2666, %v3946
    %v4587 = vadd.f32 %v2667, %v3947
    %v4588 = vadd.f32 %v2668, %v3948
    %v4589 = vadd.f32 %v2669, %v3949
    %v4590 = vadd.f32 %v2670, %v3950
    %v4591 = vadd.f32 %v2671, %v3951
    %v4592 = vadd.f32 %v2672, %v3952
    %v4593 = vadd.f32 %v2673, %v3953
    %v4594 = vadd.f32 %v2674, %v3954
    %v4595 = vadd.f32 %v2675, %v3955
    %v4596 = vadd.f32 %v2676, %v3956
    %v4597 = vadd.f32 %v2677, %v3957
    %v4598 = vadd.f32 %v2678, %v3958
    %v4599 = vadd.f32 %v2679, %v3959
    %v4600 = vadd.f32 %v2680, %v3960
    %v4601 = vadd.f32 %v2681, %v3961
    %v4602 = vadd.f32 %v2682, %v3962
    %v4603 = vadd.f32 %v2683, %v3963
    %v4604 = vadd.f32 %v2684, %v3964
    %v4605 = vadd.f32 %v2685, %v3965
    %v4606 = vadd.f32 %v2686, %v3966
    %v4607 = vadd.f32 %v2687, %v3967
    %v4608 = vadd.f32 %v2688, %v3968
    %v4609 = vadd.f32 %v2689, %v3969
    %v4610 = vadd.f32 %v2690, %v3970
    %v4611 = vadd.f32 %v2691, %v3971
    %v4612 = vadd.f32 %v2692, %v3972
    %v4613 = vadd.f32 %v2693, %v3973
    %v4614 = vadd.f32 %v2694, %v3974
    %v4615 = vadd.f32 %v2695, %v3975
    %v4616 = vadd.f32 %v2696, %v3976
    %v4617 = vadd.f32 %v2697, %v3977
    %v4618 = vadd.f32 %v2698, %v3978
    %v4619 = vadd.f32 %v2699, %v3979
    %v4620 = vadd.f32 %v2700, %v3980
    %v4621 = vadd.f32 %v2701, %v3981
    %v4622 = vadd.f32 %v2702, %v3982
    %v4623 = vadd.f32 %v2703, %v3983
    %v4624 = vadd.f32 %v2704, %v3984
    %v4625 = vadd.f32 %v2705, %v3985
    %v4626 = vadd.f32 %v2706, %v3986
    %v4627 = vadd.f32 %v2707, %v3987
    %v4628 = vadd.f32 %v2708, %v3988
    %v4629 = vadd.f32 %v2709, %v3989
    %v4630 = vadd.f32 %v2710, %v3990
    %v4631 = vadd.f32 %v2711, %v3991
    %v4632 = vadd.f32 %v2712, %v3992
    %v4633 = vadd.f32 %v2713, %v3993
    %v4634 = vadd.f32 %v2714, %v3994
    %v4635 = vadd.f32 %v2715, %v3995
    %v4636 = vadd.f32 %v2716, %v3996
    %v4637 = vadd.f32 %v2717, %v3997
    %v4638 = vadd.f32 %v2718, %v3998
    %v4639 = vadd.f32 %v2719, %v3999
    %v4640 = vadd.f32 %v2720, %v4000
    %v4641 = vadd.f32 %v2721, %v4001
    %v4642 = vadd.f32 %v2722, %v4002
    %v4643 = vadd.f32 %v2723, %v4003
    %v4644 = vadd.f32 %v2724, %v4004
    %v4645 = vadd.f32 %v2725, %v4005
    %v4646 = vadd.f32 %v2726, %v4006
    %v4647 = vadd.f32 %v2727, %v4007
    %v4648 = vadd.f32 %v2728, %v4008
    %v4649 = vadd.f32 %v2729, %v4009
    %v4650 = vadd.f32 %v2730, %v4010
    %v4651 = vadd.f32 %v2731, %v4011
    %v4652 = vadd.f32 %v2732, %v4012
    %v4653 = vadd.f32 %v2733, %v4013
    %v4654 = vadd.f32 %v2734, %v4014
    %v4655 = vadd.f32 %v2735, %v4015
    %v4656 = vadd.f32 %v2736, %v4016
    %v4657 = vadd.f32 %v2737, %v4017
    %v4658 = vadd.f32 %v2738, %v4018
    %v4659 = vadd.f32 %v2739, %v4019
    %v4660 = vadd.f32 %v2740, %v4020
    %v4661 = vadd.f32 %v2741, %v4021
    %v4662 = vadd.f32 %v2742, %v4022
    %v4663 = vadd.f32 %v2743, %v4023
    %v4664 = vadd.f32 %v2744, %v4024
    %v4665 = vadd.f32 %v2745, %v4025
    %v4666 = vadd.f32 %v2746, %v4026
    %v4667 = vadd.f32 %v2747, %v4027
    %v4668 = vadd.f32 %v2748, %v4028
    %v4669 = vadd.f32 %v2749, %v4029
    %v4670 = vadd.f32 %v2750, %v4030
    %v4671 = vadd.f32 %v2751, %v4031
    %v4672 = vadd.f32 %v2752, %v4032
    %v4673 = vadd.f32 %v2753, %v4033
    %v4674 = vadd.f32 %v4034, %v4044
    %v4675 = vadd.f32 %v4674, %v4054
    %v4676 = vadd.f32 %v4675, %v4064
    %v4677 = vadd.f32 %v4676, %v4074
    %v4678 = vadd.f32 %v4677, %v4084
    %v4679 = vadd.f32 %v4678, %v4094
    %v4680 = vadd.f32 %v4679, %v4104
    %v4681 = vadd.f32 %v4680, %v4114
    %v4682 = vadd.f32 %v4681, %v4124
    %v4683 = vadd.f32 %v4682, %v4134
    %v4684 = vadd.f32 %v4683, %v4144
    %v4685 = vadd.f32 %v4684, %v4154
    %v4686 = vadd.f32 %v4685, %v4164
    %v4687 = vadd.f32 %v4686, %v4174
    %v4688 = vadd.f32 %v4687, %v4184
    %v4689 = vadd.f32 %v4688, %v4194
    %v4690 = vadd.f32 %v4689, %v4204
    %v4691 = vadd.f32 %v4690, %v4214
    %v4692 = vadd.f32 %v4691, %v4224
    %v4693 = vadd.f32 %v4692, %v4234
    %v4694 = vadd.f32 %v4693, %v4244
    %v4695 = vadd.f32 %v4694, %v4254
    %v4696 = vadd.f32 %v4695, %v4264
    %v4697 = vadd.f32 %v4696, %v4274
    %v4698 = vadd.f32 %v4697, %v4284
    %v4699 = vadd.f32 %v4698, %v4294
    %v4700 = vadd.f32 %v4699, %v4304
    %v4701 = vadd.f32 %v4700, %v4314
    %v4702 = vadd.f32 %v4701, %v4324
    %v4703 = vadd.f32 %v4702, %v4334
    %v4704 = vadd.f32 %v4703, %v4344
    %v4705 = vrot.slane %v4704, 4
    %v4706 = vadd.f32 %v4704, %v4705
    %v4707 = vrot.slane %v4706, 2
    %v4708 = vadd.f32 %v4706, %v4707
    %v4709 = vrot.slane %v4708, 1
    %v4710 = vadd.f32 %v4708, %v4709
    %v4711 = vadd.f32 %v4035, %v4045
    %v4712 = vadd.f32 %v4711, %v4055
    %v4713 = vadd.f32 %v4712, %v4065
    %v4714 = vadd.f32 %v4713, %v4075
    %v4715 = vadd.f32 %v4714, %v4085
    %v4716 = vadd.f32 %v4715, %v4095
    %v4717 = vadd.f32 %v4716, %v4105
    %v4718 = vadd.f32 %v4717, %v4115
    %v4719 = vadd.f32 %v4718, %v4125
    %v4720 = vadd.f32 %v4719, %v4135
    %v4721 = vadd.f32 %v4720, %v4145
    %v4722 = vadd.f32 %v4721, %v4155
    %v4723 = vadd.f32 %v4722, %v4165
    %v4724 = vadd.f32 %v4723, %v4175
    %v4725 = vadd.f32 %v4724, %v4185
    %v4726 = vadd.f32 %v4725, %v4195
    %v4727 = vadd.f32 %v4726, %v4205
    %v4728 = vadd.f32 %v4727, %v4215
    %v4729 = vadd.f32 %v4728, %v4225
    %v4730 = vadd.f32 %v4729, %v4235
    %v4731 = vadd.f32 %v4730, %v4245
    %v4732 = vadd.f32 %v4731, %v4255
    %v4733 = vadd.f32 %v4732, %v4265
    %v4734 = vadd.f32 %v4733, %v4275
    %v4735 = vadd.f32 %v4734, %v4285
    %v4736 = vadd.f32 %v4735, %v4295
    %v4737 = vadd.f32 %v4736, %v4305
    %v4738 = vadd.f32 %v4737, %v4315
    %v4739 = vadd.f32 %v4738, %v4325
    %v4740 = vadd.f32 %v4739, %v4335
    %v4741 = vadd.f32 %v4740, %v4345
    %v4742 = vrot.slane %v4741, 4
    %v4743 = vadd.f32 %v4741, %v4742
    %v4744 = vrot.slane %v4743, 2
    %v4745 = vadd.f32 %v4743, %v4744
    %v4746 = vrot.slane %v4745, 1
    %v4747 = vadd.f32 %v4745, %v4746
    %v4748 = vadd.f32 %v4036, %v4046
    %v4749 = vadd.f32 %v4748, %v4056
    %v4750 = vadd.f32 %v4749, %v4066
    %v4751 = vadd.f32 %v4750, %v4076
    %v4752 = vadd.f32 %v4751, %v4086
    %v4753 = vadd.f32 %v4752, %v4096
    %v4754 = vadd.f32 %v4753, %v4106
    %v4755 = vadd.f32 %v4754, %v4116
    %v4756 = vadd.f32 %v4755, %v4126
    %v4757 = vadd.f32 %v4756, %v4136
    %v4758 = vadd.f32 %v4757, %v4146
    %v4759 = vadd.f32 %v4758, %v4156
    %v4760 = vadd.f32 %v4759, %v4166
    %v4761 = vadd.f32 %v4760, %v4176
    %v4762 = vadd.f32 %v4761, %v4186
    %v4763 = vadd.f32 %v4762, %v4196
    %v4764 = vadd.f32 %v4763, %v4206
    %v4765 = vadd.f32 %v4764, %v4216
    %v4766 = vadd.f32 %v4765, %v4226
    %v4767 = vadd.f32 %v4766, %v4236
    %v4768 = vadd.f32 %v4767, %v4246
    %v4769 = vadd.f32 %v4768, %v4256
    %v4770 = vadd.f32 %v4769, %v4266
    %v4771 = vadd.f32 %v4770, %v4276
    %v4772 = vadd.f32 %v4771, %v4286
    %v4773 = vadd.f32 %v4772, %v4296
    %v4774 = vadd.f32 %v4773, %v4306
    %v4775 = vadd.f32 %v4774, %v4316
    %v4776 = vadd.f32 %v4775, %v4326
    %v4777 = vadd.f32 %v4776, %v4336
    %v4778 = vadd.f32 %v4777, %v4346
    %v4779 = vrot.slane %v4778, 4
    %v4780 = vadd.f32 %v4778, %v4779
    %v4781 = vrot.slane %v4780, 2
    %v4782 = vadd.f32 %v4780, %v4781
    %v4783 = vrot.slane %v4782, 1
    %v4784 = vadd.f32 %v4782, %v4783
    %v4785 = vadd.f32 %v4037, %v4047
    %v4786 = vadd.f32 %v4785, %v4057
    %v4787 = vadd.f32 %v4786, %v4067
    %v4788 = vadd.f32 %v4787, %v4077
    %v4789 = vadd.f32 %v4788, %v4087
    %v4790 = vadd.f32 %v4789, %v4097
    %v4791 = vadd.f32 %v4790, %v4107
    %v4792 = vadd.f32 %v4791, %v4117
    %v4793 = vadd.f32 %v4792, %v4127
    %v4794 = vadd.f32 %v4793, %v4137
    %v4795 = vadd.f32 %v4794, %v4147
    %v4796 = vadd.f32 %v4795, %v4157
    %v4797 = vadd.f32 %v4796, %v4167
    %v4798 = vadd.f32 %v4797, %v4177
    %v4799 = vadd.f32 %v4798, %v4187
    %v4800 = vadd.f32 %v4799, %v4197
    %v4801 = vadd.f32 %v4800, %v4207
    %v4802 = vadd.f32 %v4801, %v4217
    %v4803 = vadd.f32 %v4802, %v4227
    %v4804 = vadd.f32 %v4803, %v4237
    %v4805 = vadd.f32 %v4804, %v4247
    %v4806 = vadd.f32 %v4805, %v4257
    %v4807 = vadd.f32 %v4806, %v4267
    %v4808 = vadd.f32 %v4807, %v4277
    %v4809 = vadd.f32 %v4808, %v4287
    %v4810 = vadd.f32 %v4809, %v4297
    %v4811 = vadd.f32 %v4810, %v4307
    %v4812 = vadd.f32 %v4811, %v4317
    %v4813 = vadd.f32 %v4812, %v4327
    %v4814 = vadd.f32 %v4813, %v4337
    %v4815 = vadd.f32 %v4814, %v4347
    %v4816 = vrot.slane %v4815, 4
    %v4817 = vadd.f32 %v4815, %v4816
    %v4818 = vrot.slane %v4817, 2
    %v4819 = vadd.f32 %v4817, %v4818
    %v4820 = vrot.slane %v4819, 1
    %v4821 = vadd.f32 %v4819, %v4820
    %v4822 = vadd.f32 %v4038, %v4048
    %v4823 = vadd.f32 %v4822, %v4058
    %v4824 = vadd.f32 %v4823, %v4068
    %v4825 = vadd.f32 %v4824, %v4078
    %v4826 = vadd.f32 %v4825, %v4088
    %v4827 = vadd.f32 %v4826, %v4098
    %v4828 = vadd.f32 %v4827, %v4108
    %v4829 = vadd.f32 %v4828, %v4118
    %v4830 = vadd.f32 %v4829, %v4128
    %v4831 = vadd.f32 %v4830, %v4138
    %v4832 = vadd.f32 %v4831, %v4148
    %v4833 = vadd.f32 %v4832, %v4158
    %v4834 = vadd.f32 %v4833, %v4168
    %v4835 = vadd.f32 %v4834, %v4178
    %v4836 = vadd.f32 %v4835, %v4188
    %v4837 = vadd.f32 %v4836, %v4198
    %v4838 = vadd.f32 %v4837, %v4208
    %v4839 = vadd.f32 %v4838, %v4218
    %v4840 = vadd.f32 %v4839, %v4228
    %v4841 = vadd.f32 %v4840, %v4238
    %v4842 = vadd.f32 %v4841, %v4248
    %v4843 = vadd.f32 %v4842, %v4258
    %v4844 = vadd.f32 %v4843, %v4268
    %v4845 = vadd.f32 %v4844, %v4278
    %v4846 = vadd.f32 %v4845, %v4288
    %v4847 = vadd.f32 %v4846, %v4298
    %v4848 = vadd.f32 %v4847, %v4308
    %v4849 = vadd.f32 %v4848, %v4318
    %v4850 = vadd.f32 %v4849, %v4328
    %v4851 = vadd.f32 %v4850, %v4338
    %v4852 = vadd.f32 %v4851, %v4348
    %v4853 = vrot.slane %v4852, 4
    %v4854 = vadd.f32 %v4852, %v4853
    %v4855 = vrot.slane %v4854, 2
    %v4856 = vadd.f32 %v4854, %v4855
    %v4857 = vrot.slane %v4856, 1
    %v4858 = vadd.f32 %v4856, %v4857
    %v4859 = vadd.f32 %v4039, %v4049
    %v4860 = vadd.f32 %v4859, %v4059
    %v4861 = vadd.f32 %v4860, %v4069
    %v4862 = vadd.f32 %v4861, %v4079
    %v4863 = vadd.f32 %v4862, %v4089
    %v4864 = vadd.f32 %v4863, %v4099
    %v4865 = vadd.f32 %v4864, %v4109
    %v4866 = vadd.f32 %v4865, %v4119
    %v4867 = vadd.f32 %v4866, %v4129
    %v4868 = vadd.f32 %v4867, %v4139
    %v4869 = vadd.f32 %v4868, %v4149
    %v4870 = vadd.f32 %v4869, %v4159
    %v4871 = vadd.f32 %v4870, %v4169
    %v4872 = vadd.f32 %v4871, %v4179
    %v4873 = vadd.f32 %v4872, %v4189
    %v4874 = vadd.f32 %v4873, %v4199
    %v4875 = vadd.f32 %v4874, %v4209
    %v4876 = vadd.f32 %v4875, %v4219
    %v4877 = vadd.f32 %v4876, %v4229
    %v4878 = vadd.f32 %v4877, %v4239
    %v4879 = vadd.f32 %v4878, %v4249
    %v4880 = vadd.f32 %v4879, %v4259
    %v4881 = vadd.f32 %v4880, %v4269
    %v4882 = vadd.f32 %v4881, %v4279
    %v4883 = vadd.f32 %v4882, %v4289
    %v4884 = vadd.f32 %v4883, %v4299
    %v4885 = vadd.f32 %v4884, %v4309
    %v4886 = vadd.f32 %v4885, %v4319
    %v4887 = vadd.f32 %v4886, %v4329
    %v4888 = vadd.f32 %v4887, %v4339
    %v4889 = vadd.f32 %v4888, %v4349
    %v4890 = vrot.slane %v4889, 4
    %v4891 = vadd.f32 %v4889, %v4890
    %v4892 = vrot.slane %v4891, 2
    %v4893 = vadd.f32 %v4891, %v4892
    %v4894 = vrot.slane %v4893, 1
    %v4895 = vadd.f32 %v4893, %v4894
    %v4896 = vadd.f32 %v4040, %v4050
    %v4897 = vadd.f32 %v4896, %v4060
    %v4898 = vadd.f32 %v4897, %v4070
    %v4899 = vadd.f32 %v4898, %v4080
    %v4900 = vadd.f32 %v4899, %v4090
    %v4901 = vadd.f32 %v4900, %v4100
    %v4902 = vadd.f32 %v4901, %v4110
    %v4903 = vadd.f32 %v4902, %v4120
    %v4904 = vadd.f32 %v4903, %v4130
    %v4905 = vadd.f32 %v4904, %v4140
    %v4906 = vadd.f32 %v4905, %v4150
    %v4907 = vadd.f32 %v4906, %v4160
    %v4908 = vadd.f32 %v4907, %v4170
    %v4909 = vadd.f32 %v4908, %v4180
    %v4910 = vadd.f32 %v4909, %v4190
    %v4911 = vadd.f32 %v4910, %v4200
    %v4912 = vadd.f32 %v4911, %v4210
    %v4913 = vadd.f32 %v4912, %v4220
    %v4914 = vadd.f32 %v4913, %v4230
    %v4915 = vadd.f32 %v4914, %v4240
    %v4916 = vadd.f32 %v4915, %v4250
    %v4917 = vadd.f32 %v4916, %v4260
    %v4918 = vadd.f32 %v4917, %v4270
    %v4919 = vadd.f32 %v4918, %v4280
    %v4920 = vadd.f32 %v4919, %v4290
    %v4921 = vadd.f32 %v4920, %v4300
    %v4922 = vadd.f32 %v4921, %v4310
    %v4923 = vadd.f32 %v4922, %v4320
    %v4924 = vadd.f32 %v4923, %v4330
    %v4925 = vadd.f32 %v4924, %v4340
    %v4926 = vadd.f32 %v4925, %v4350
    %v4927 = vrot.slane %v4926, 4
    %v4928 = vadd.f32 %v4926, %v4927
    %v4929 = vrot.slane %v4928, 2
    %v4930 = vadd.f32 %v4928, %v4929
    %v4931 = vrot.slane %v4930, 1
    %v4932 = vadd.f32 %v4930, %v4931
    %v4933 = vadd.f32 %v4041, %v4051
    %v4934 = vadd.f32 %v4933, %v4061
    %v4935 = vadd.f32 %v4934, %v4071
    %v4936 = vadd.f32 %v4935, %v4081
    %v4937 = vadd.f32 %v4936, %v4091
    %v4938 = vadd.f32 %v4937, %v4101
    %v4939 = vadd.f32 %v4938, %v4111
    %v4940 = vadd.f32 %v4939, %v4121
    %v4941 = vadd.f32 %v4940, %v4131
    %v4942 = vadd.f32 %v4941, %v4141
    %v4943 = vadd.f32 %v4942, %v4151
    %v4944 = vadd.f32 %v4943, %v4161
    %v4945 = vadd.f32 %v4944, %v4171
    %v4946 = vadd.f32 %v4945, %v4181
    %v4947 = vadd.f32 %v4946, %v4191
    %v4948 = vadd.f32 %v4947, %v4201
    %v4949 = vadd.f32 %v4948, %v4211
    %v4950 = vadd.f32 %v4949, %v4221
    %v4951 = vadd.f32 %v4950, %v4231
    %v4952 = vadd.f32 %v4951, %v4241
    %v4953 = vadd.f32 %v4952, %v4251
    %v4954 = vadd.f32 %v4953, %v4261
    %v4955 = vadd.f32 %v4954, %v4271
    %v4956 = vadd.f32 %v4955, %v4281
    %v4957 = vadd.f32 %v4956, %v4291
    %v4958 = vadd.f32 %v4957, %v4301
    %v4959 = vadd.f32 %v4958, %v4311
    %v4960 = vadd.f32 %v4959, %v4321
    %v4961 = vadd.f32 %v4960, %v4331
    %v4962 = vadd.f32 %v4961, %v4341
    %v4963 = vadd.f32 %v4962, %v4351
    %v4964 = vrot.slane %v4963, 4
    %v4965 = vadd.f32 %v4963, %v4964
    %v4966 = vrot.slane %v4965, 2
    %v4967 = vadd.f32 %v4965, %v4966
    %v4968 = vrot.slane %v4967, 1
    %v4969 = vadd.f32 %v4967, %v4968
    %v4970 = vadd.f32 %v4042, %v4052
    %v4971 = vadd.f32 %v4970, %v4062
    %v4972 = vadd.f32 %v4971, %v4072
    %v4973 = vadd.f32 %v4972, %v4082
    %v4974 = vadd.f32 %v4973, %v4092
    %v4975 = vadd.f32 %v4974, %v4102
    %v4976 = vadd.f32 %v4975, %v4112
    %v4977 = vadd.f32 %v4976, %v4122
    %v4978 = vadd.f32 %v4977, %v4132
    %v4979 = vadd.f32 %v4978, %v4142
    %v4980 = vadd.f32 %v4979, %v4152
    %v4981 = vadd.f32 %v4980, %v4162
    %v4982 = vadd.f32 %v4981, %v4172
    %v4983 = vadd.f32 %v4982, %v4182
    %v4984 = vadd.f32 %v4983, %v4192
    %v4985 = vadd.f32 %v4984, %v4202
    %v4986 = vadd.f32 %v4985, %v4212
    %v4987 = vadd.f32 %v4986, %v4222
    %v4988 = vadd.f32 %v4987, %v4232
    %v4989 = vadd.f32 %v4988, %v4242
    %v4990 = vadd.f32 %v4989, %v4252
    %v4991 = vadd.f32 %v4990, %v4262
    %v4992 = vadd.f32 %v4991, %v4272
    %v4993 = vadd.f32 %v4992, %v4282
    %v4994 = vadd.f32 %v4993, %v4292
    %v4995 = vadd.f32 %v4994, %v4302
    %v4996 = vadd.f32 %v4995, %v4312
    %v4997 = vadd.f32 %v4996, %v4322
    %v4998 = vadd.f32 %v4997, %v4332
    %v4999 = vadd.f32 %v4998, %v4342
    %v5000 = vadd.f32 %v4999, %v4352
    %v5001 = vrot.slane %v5000, 4
    %v5002 = vadd.f32 %v5000, %v5001
    %v5003 = vrot.slane %v5002, 2
    %v5004 = vadd.f32 %v5002, %v5003
    %v5005 = vrot.slane %v5004, 1
    %v5006 = vadd.f32 %v5004, %v5005
    %v5007 = vadd.f32 %v4043, %v4053
    %v5008 = vadd.f32 %v5007, %v4063
    %v5009 = vadd.f32 %v5008, %v4073
    %v5010 = vadd.f32 %v5009, %v4083
    %v5011 = vadd.f32 %v5010, %v4093
    %v5012 = vadd.f32 %v5011, %v4103
    %v5013 = vadd.f32 %v5012, %v4113
    %v5014 = vadd.f32 %v5013, %v4123
    %v5015 = vadd.f32 %v5014, %v4133
    %v5016 = vadd.f32 %v5015, %v4143
    %v5017 = vadd.f32 %v5016, %v4153
    %v5018 = vadd.f32 %v5017, %v4163
    %v5019 = vadd.f32 %v5018, %v4173
    %v5020 = vadd.f32 %v5019, %v4183
    %v5021 = vadd.f32 %v5020, %v4193
    %v5022 = vadd.f32 %v5021, %v4203
    %v5023 = vadd.f32 %v5022, %v4213
    %v5024 = vadd.f32 %v5023, %v4223
    %v5025 = vadd.f32 %v5024, %v4233
    %v5026 = vadd.f32 %v5025, %v4243
    %v5027 = vadd.f32 %v5026, %v4253
    %v5028 = vadd.f32 %v5027, %v4263
    %v5029 = vadd.f32 %v5028, %v4273
    %v5030 = vadd.f32 %v5029, %v4283
    %v5031 = vadd.f32 %v5030, %v4293
    %v5032 = vadd.f32 %v5031, %v4303
    %v5033 = vadd.f32 %v5032, %v4313
    %v5034 = vadd.f32 %v5033, %v4323
    %v5035 = vadd.f32 %v5034, %v4333
    %v5036 = vadd.f32 %v5035, %v4343
    %v5037 = vadd.f32 %v5036, %v4353
    %v5038 = vrot.slane %v5037, 4
    %v5039 = vadd.f32 %v5037, %v5038
    %v5040 = vrot.slane %v5039, 2
    %v5041 = vadd.f32 %v5039, %v5040
    %v5042 = vrot.slane %v5041, 1
    %v5043 = vadd.f32 %v5041, %v5042
    %v5044 = vadd.f32 %v4354, %v4364
    %v5045 = vadd.f32 %v5044, %v4374
    %v5046 = vadd.f32 %v5045, %v4384
    %v5047 = vadd.f32 %v5046, %v4394
    %v5048 = vadd.f32 %v5047, %v4404
    %v5049 = vadd.f32 %v5048, %v4414
    %v5050 = vadd.f32 %v5049, %v4424
    %v5051 = vadd.f32 %v5050, %v4434
    %v5052 = vadd.f32 %v5051, %v4444
    %v5053 = vadd.f32 %v5052, %v4454
    %v5054 = vadd.f32 %v5053, %v4464
    %v5055 = vadd.f32 %v5054, %v4474
    %v5056 = vadd.f32 %v5055, %v4484
    %v5057 = vadd.f32 %v5056, %v4494
    %v5058 = vadd.f32 %v5057, %v4504
    %v5059 = vadd.f32 %v5058, %v4514
    %v5060 = vadd.f32 %v5059, %v4524
    %v5061 = vadd.f32 %v5060, %v4534
    %v5062 = vadd.f32 %v5061, %v4544
    %v5063 = vadd.f32 %v5062, %v4554
    %v5064 = vadd.f32 %v5063, %v4564
    %v5065 = vadd.f32 %v5064, %v4574
    %v5066 = vadd.f32 %v5065, %v4584
    %v5067 = vadd.f32 %v5066, %v4594
    %v5068 = vadd.f32 %v5067, %v4604
    %v5069 = vadd.f32 %v5068, %v4614
    %v5070 = vadd.f32 %v5069, %v4624
    %v5071 = vadd.f32 %v5070, %v4634
    %v5072 = vadd.f32 %v5071, %v4644
    %v5073 = vadd.f32 %v5072, %v4654
    %v5074 = vadd.f32 %v5073, %v4664
    %v5075 = vrot.slane %v5074, 4
    %v5076 = vadd.f32 %v5074, %v5075
    %v5077 = vrot.slane %v5076, 2
    %v5078 = vadd.f32 %v5076, %v5077
    %v5079 = vrot.slane %v5078, 1
    %v5080 = vadd.f32 %v5078, %v5079
    %v5081 = vadd.f32 %v4355, %v4365
    %v5082 = vadd.f32 %v5081, %v4375
    %v5083 = vadd.f32 %v5082, %v4385
    %v5084 = vadd.f32 %v5083, %v4395
    %v5085 = vadd.f32 %v5084, %v4405
    %v5086 = vadd.f32 %v5085, %v4415
    %v5087 = vadd.f32 %v5086, %v4425
    %v5088 = vadd.f32 %v5087, %v4435
    %v5089 = vadd.f32 %v5088, %v4445
    %v5090 = vadd.f32 %v5089, %v4455
    %v5091 = vadd.f32 %v5090, %v4465
    %v5092 = vadd.f32 %v5091, %v4475
    %v5093 = vadd.f32 %v5092, %v4485
    %v5094 = vadd.f32 %v5093, %v4495
    %v5095 = vadd.f32 %v5094, %v4505
    %v5096 = vadd.f32 %v5095, %v4515
    %v5097 = vadd.f32 %v5096, %v4525
    %v5098 = vadd.f32 %v5097, %v4535
    %v5099 = vadd.f32 %v5098, %v4545
    %v5100 = vadd.f32 %v5099, %v4555
    %v5101 = vadd.f32 %v5100, %v4565
    %v5102 = vadd.f32 %v5101, %v4575
    %v5103 = vadd.f32 %v5102, %v4585
    %v5104 = vadd.f32 %v5103, %v4595
    %v5105 = vadd.f32 %v5104, %v4605
    %v5106 = vadd.f32 %v5105, %v4615
    %v5107 = vadd.f32 %v5106, %v4625
    %v5108 = vadd.f32 %v5107, %v4635
    %v5109 = vadd.f32 %v5108, %v4645
    %v5110 = vadd.f32 %v5109, %v4655
    %v5111 = vadd.f32 %v5110, %v4665
    %v5112 = vrot.slane %v5111, 4
    %v5113 = vadd.f32 %v5111, %v5112
    %v5114 = vrot.slane %v5113, 2
    %v5115 = vadd.f32 %v5113, %v5114
    %v5116 = vrot.slane %v5115, 1
    %v5117 = vadd.f32 %v5115, %v5116
    %v5118 = vadd.f32 %v4356, %v4366
    %v5119 = vadd.f32 %v5118, %v4376
    %v5120 = vadd.f32 %v5119, %v4386
    %v5121 = vadd.f32 %v5120, %v4396
    %v5122 = vadd.f32 %v5121, %v4406
    %v5123 = vadd.f32 %v5122, %v4416
    %v5124 = vadd.f32 %v5123, %v4426
    %v5125 = vadd.f32 %v5124, %v4436
    %v5126 = vadd.f32 %v5125, %v4446
    %v5127 = vadd.f32 %v5126, %v4456
    %v5128 = vadd.f32 %v5127, %v4466
    %v5129 = vadd.f32 %v5128, %v4476
    %v5130 = vadd.f32 %v5129, %v4486
    %v5131 = vadd.f32 %v5130, %v4496
    %v5132 = vadd.f32 %v5131, %v4506
    %v5133 = vadd.f32 %v5132, %v4516
    %v5134 = vadd.f32 %v5133, %v4526
    %v5135 = vadd.f32 %v5134, %v4536
    %v5136 = vadd.f32 %v5135, %v4546
    %v5137 = vadd.f32 %v5136, %v4556
    %v5138 = vadd.f32 %v5137, %v4566
    %v5139 = vadd.f32 %v5138, %v4576
    %v5140 = vadd.f32 %v5139, %v4586
    %v5141 = vadd.f32 %v5140, %v4596
    %v5142 = vadd.f32 %v5141, %v4606
    %v5143 = vadd.f32 %v5142, %v4616
    %v5144 = vadd.f32 %v5143, %v4626
    %v5145 = vadd.f32 %v5144, %v4636
    %v5146 = vadd.f32 %v5145, %v4646
    %v5147 = vadd.f32 %v5146, %v4656
    %v5148 = vadd.f32 %v5147, %v4666
    %v5149 = vrot.slane %v5148, 4
    %v5150 = vadd.f32 %v5148, %v5149
    %v5151 = vrot.slane %v5150, 2
    %v5152 = vadd.f32 %v5150, %v5151
    %v5153 = vrot.slane %v5152, 1
    %v5154 = vadd.f32 %v5152, %v5153
    %v5155 = vadd.f32 %v4357, %v4367
    %v5156 = vadd.f32 %v5155, %v4377
    %v5157 = vadd.f32 %v5156, %v4387
    %v5158 = vadd.f32 %v5157, %v4397
    %v5159 = vadd.f32 %v5158, %v4407
    %v5160 = vadd.f32 %v5159, %v4417
    %v5161 = vadd.f32 %v5160, %v4427
    %v5162 = vadd.f32 %v5161, %v4437
    %v5163 = vadd.f32 %v5162, %v4447
    %v5164 = vadd.f32 %v5163, %v4457
    %v5165 = vadd.f32 %v5164, %v4467
    %v5166 = vadd.f32 %v5165, %v4477
    %v5167 = vadd.f32 %v5166, %v4487
    %v5168 = vadd.f32 %v5167, %v4497
    %v5169 = vadd.f32 %v5168, %v4507
    %v5170 = vadd.f32 %v5169, %v4517
    %v5171 = vadd.f32 %v5170, %v4527
    %v5172 = vadd.f32 %v5171, %v4537
    %v5173 = vadd.f32 %v5172, %v4547
    %v5174 = vadd.f32 %v5173, %v4557
    %v5175 = vadd.f32 %v5174, %v4567
    %v5176 = vadd.f32 %v5175, %v4577
    %v5177 = vadd.f32 %v5176, %v4587
    %v5178 = vadd.f32 %v5177, %v4597
    %v5179 = vadd.f32 %v5178, %v4607
    %v5180 = vadd.f32 %v5179, %v4617
    %v5181 = vadd.f32 %v5180, %v4627
    %v5182 = vadd.f32 %v5181, %v4637
    %v5183 = vadd.f32 %v5182, %v4647
    %v5184 = vadd.f32 %v5183, %v4657
    %v5185 = vadd.f32 %v5184, %v4667
    %v5186 = vrot.slane %v5185, 4
    %v5187 = vadd.f32 %v5185, %v5186
    %v5188 = vrot.slane %v5187, 2
    %v5189 = vadd.f32 %v5187, %v5188
    %v5190 = vrot.slane %v5189, 1
    %v5191 = vadd.f32 %v5189, %v5190
    %v5192 = vadd.f32 %v4358, %v4368
    %v5193 = vadd.f32 %v5192, %v4378
    %v5194 = vadd.f32 %v5193, %v4388
    %v5195 = vadd.f32 %v5194, %v4398
    %v5196 = vadd.f32 %v5195, %v4408
    %v5197 = vadd.f32 %v5196, %v4418
    %v5198 = vadd.f32 %v5197, %v4428
    %v5199 = vadd.f32 %v5198, %v4438
    %v5200 = vadd.f32 %v5199, %v4448
    %v5201 = vadd.f32 %v5200, %v4458
    %v5202 = vadd.f32 %v5201, %v4468
    %v5203 = vadd.f32 %v5202, %v4478
    %v5204 = vadd.f32 %v5203, %v4488
    %v5205 = vadd.f32 %v5204, %v4498
    %v5206 = vadd.f32 %v5205, %v4508
    %v5207 = vadd.f32 %v5206, %v4518
    %v5208 = vadd.f32 %v5207, %v4528
    %v5209 = vadd.f32 %v5208, %v4538
    %v5210 = vadd.f32 %v5209, %v4548
    %v5211 = vadd.f32 %v5210, %v4558
    %v5212 = vadd.f32 %v5211, %v4568
    %v5213 = vadd.f32 %v5212, %v4578
    %v5214 = vadd.f32 %v5213, %v4588
    %v5215 = vadd.f32 %v5214, %v4598
    %v5216 = vadd.f32 %v5215, %v4608
    %v5217 = vadd.f32 %v5216, %v4618
    %v5218 = vadd.f32 %v5217, %v4628
    %v5219 = vadd.f32 %v5218, %v4638
    %v5220 = vadd.f32 %v5219, %v4648
    %v5221 = vadd.f32 %v5220, %v4658
    %v5222 = vadd.f32 %v5221, %v4668
    %v5223 = vrot.slane %v5222, 4
    %v5224 = vadd.f32 %v5222, %v5223
    %v5225 = vrot.slane %v5224, 2
    %v5226 = vadd.f32 %v5224, %v5225
    %v5227 = vrot.slane %v5226, 1
    %v5228 = vadd.f32 %v5226, %v5227
    %v5229 = vadd.f32 %v4359, %v4369
    %v5230 = vadd.f32 %v5229, %v4379
    %v5231 = vadd.f32 %v5230, %v4389
    %v5232 = vadd.f32 %v5231, %v4399
    %v5233 = vadd.f32 %v5232, %v4409
    %v5234 = vadd.f32 %v5233, %v4419
    %v5235 = vadd.f32 %v5234, %v4429
    %v5236 = vadd.f32 %v5235, %v4439
    %v5237 = vadd.f32 %v5236, %v4449
    %v5238 = vadd.f32 %v5237, %v4459
    %v5239 = vadd.f32 %v5238, %v4469
    %v5240 = vadd.f32 %v5239, %v4479
    %v5241 = vadd.f32 %v5240, %v4489
    %v5242 = vadd.f32 %v5241, %v4499
    %v5243 = vadd.f32 %v5242, %v4509
    %v5244 = vadd.f32 %v5243, %v4519
    %v5245 = vadd.f32 %v5244, %v4529
    %v5246 = vadd.f32 %v5245, %v4539
    %v5247 = vadd.f32 %v5246, %v4549
    %v5248 = vadd.f32 %v5247, %v4559
    %v5249 = vadd.f32 %v5248, %v4569
    %v5250 = vadd.f32 %v5249, %v4579
    %v5251 = vadd.f32 %v5250, %v4589
    %v5252 = vadd.f32 %v5251, %v4599
    %v5253 = vadd.f32 %v5252, %v4609
    %v5254 = vadd.f32 %v5253, %v4619
    %v5255 = vadd.f32 %v5254, %v4629
    %v5256 = vadd.f32 %v5255, %v4639
    %v5257 = vadd.f32 %v5256, %v4649
    %v5258 = vadd.f32 %v5257, %v4659
    %v5259 = vadd.f32 %v5258, %v4669
    %v5260 = vrot.slane %v5259, 4
    %v5261 = vadd.f32 %v5259, %v5260
    %v5262 = vrot.slane %v5261, 2
    %v5263 = vadd.f32 %v5261, %v5262
    %v5264 = vrot.slane %v5263, 1
    %v5265 = vadd.f32 %v5263, %v5264
    %v5266 = vadd.f32 %v4360, %v4370
    %v5267 = vadd.f32 %v5266, %v4380
    %v5268 = vadd.f32 %v5267, %v4390
    %v5269 = vadd.f32 %v5268, %v4400
    %v5270 = vadd.f32 %v5269, %v4410
    %v5271 = vadd.f32 %v5270, %v4420
    %v5272 = vadd.f32 %v5271, %v4430
    %v5273 = vadd.f32 %v5272, %v4440
    %v5274 = vadd.f32 %v5273, %v4450
    %v5275 = vadd.f32 %v5274, %v4460
    %v5276 = vadd.f32 %v5275, %v4470
    %v5277 = vadd.f32 %v5276, %v4480
    %v5278 = vadd.f32 %v5277, %v4490
    %v5279 = vadd.f32 %v5278, %v4500
    %v5280 = vadd.f32 %v5279, %v4510
    %v5281 = vadd.f32 %v5280, %v4520
    %v5282 = vadd.f32 %v5281, %v4530
    %v5283 = vadd.f32 %v5282, %v4540
    %v5284 = vadd.f32 %v5283, %v4550
    %v5285 = vadd.f32 %v5284, %v4560
    %v5286 = vadd.f32 %v5285, %v4570
    %v5287 = vadd.f32 %v5286, %v4580
    %v5288 = vadd.f32 %v5287, %v4590
    %v5289 = vadd.f32 %v5288, %v4600
    %v5290 = vadd.f32 %v5289, %v4610
    %v5291 = vadd.f32 %v5290, %v4620
    %v5292 = vadd.f32 %v5291, %v4630
    %v5293 = vadd.f32 %v5292, %v4640
    %v5294 = vadd.f32 %v5293, %v4650
    %v5295 = vadd.f32 %v5294, %v4660
    %v5296 = vadd.f32 %v5295, %v4670
    %v5297 = vrot.slane %v5296, 4
    %v5298 = vadd.f32 %v5296, %v5297
    %v5299 = vrot.slane %v5298, 2
    %v5300 = vadd.f32 %v5298, %v5299
    %v5301 = vrot.slane %v5300, 1
    %v5302 = vadd.f32 %v5300, %v5301
    %v5303 = vadd.f32 %v4361, %v4371
    %v5304 = vadd.f32 %v5303, %v4381
    %v5305 = vadd.f32 %v5304, %v4391
    %v5306 = vadd.f32 %v5305, %v4401
    %v5307 = vadd.f32 %v5306, %v4411
    %v5308 = vadd.f32 %v5307, %v4421
    %v5309 = vadd.f32 %v5308, %v4431
    %v5310 = vadd.f32 %v5309, %v4441
    %v5311 = vadd.f32 %v5310, %v4451
    %v5312 = vadd.f32 %v5311, %v4461
    %v5313 = vadd.f32 %v5312, %v4471
    %v5314 = vadd.f32 %v5313, %v4481
    %v5315 = vadd.f32 %v5314, %v4491
    %v5316 = vadd.f32 %v5315, %v4501
    %v5317 = vadd.f32 %v5316, %v4511
    %v5318 = vadd.f32 %v5317, %v4521
    %v5319 = vadd.f32 %v5318, %v4531
    %v5320 = vadd.f32 %v5319, %v4541
    %v5321 = vadd.f32 %v5320, %v4551
    %v5322 = vadd.f32 %v5321, %v4561
    %v5323 = vadd.f32 %v5322, %v4571
    %v5324 = vadd.f32 %v5323, %v4581
    %v5325 = vadd.f32 %v5324, %v4591
    %v5326 = vadd.f32 %v5325, %v4601
    %v5327 = vadd.f32 %v5326, %v4611
    %v5328 = vadd.f32 %v5327, %v4621
    %v5329 = vadd.f32 %v5328, %v4631
    %v5330 = vadd.f32 %v5329, %v4641
    %v5331 = vadd.f32 %v5330, %v4651
    %v5332 = vadd.f32 %v5331, %v4661
    %v5333 = vadd.f32 %v5332, %v4671
    %v5334 = vrot.slane %v5333, 4
    %v5335 = vadd.f32 %v5333, %v5334
    %v5336 = vrot.slane %v5335, 2
    %v5337 = vadd.f32 %v5335, %v5336
    %v5338 = vrot.slane %v5337, 1
    %v5339 = vadd.f32 %v5337, %v5338
    %v5340 = vadd.f32 %v4362, %v4372
    %v5341 = vadd.f32 %v5340, %v4382
    %v5342 = vadd.f32 %v5341, %v4392
    %v5343 = vadd.f32 %v5342, %v4402
    %v5344 = vadd.f32 %v5343, %v4412
    %v5345 = vadd.f32 %v5344, %v4422
    %v5346 = vadd.f32 %v5345, %v4432
    %v5347 = vadd.f32 %v5346, %v4442
    %v5348 = vadd.f32 %v5347, %v4452
    %v5349 = vadd.f32 %v5348, %v4462
    %v5350 = vadd.f32 %v5349, %v4472
    %v5351 = vadd.f32 %v5350, %v4482
    %v5352 = vadd.f32 %v5351, %v4492
    %v5353 = vadd.f32 %v5352, %v4502
    %v5354 = vadd.f32 %v5353, %v4512
    %v5355 = vadd.f32 %v5354, %v4522
    %v5356 = vadd.f32 %v5355, %v4532
    %v5357 = vadd.f32 %v5356, %v4542
    %v5358 = vadd.f32 %v5357, %v4552
    %v5359 = vadd.f32 %v5358, %v4562
    %v5360 = vadd.f32 %v5359, %v4572
    %v5361 = vadd.f32 %v5360, %v4582
    %v5362 = vadd.f32 %v5361, %v4592
    %v5363 = vadd.f32 %v5362, %v4602
    %v5364 = vadd.f32 %v5363, %v4612
    %v5365 = vadd.f32 %v5364, %v4622
    %v5366 = vadd.f32 %v5365, %v4632
    %v5367 = vadd.f32 %v5366, %v4642
    %v5368 = vadd.f32 %v5367, %v4652
    %v5369 = vadd.f32 %v5368, %v4662
    %v5370 = vadd.f32 %v5369, %v4672
    %v5371 = vrot.slane %v5370, 4
    %v5372 = vadd.f32 %v5370, %v5371
    %v5373 = vrot.slane %v5372, 2
    %v5374 = vadd.f32 %v5372, %v5373
    %v5375 = vrot.slane %v5374, 1
    %v5376 = vadd.f32 %v5374, %v5375
    %v5377 = vadd.f32 %v4363, %v4373
    %v5378 = vadd.f32 %v5377, %v4383
    %v5379 = vadd.f32 %v5378, %v4393
    %v5380 = vadd.f32 %v5379, %v4403
    %v5381 = vadd.f32 %v5380, %v4413
    %v5382 = vadd.f32 %v5381, %v4423
    %v5383 = vadd.f32 %v5382, %v4433
    %v5384 = vadd.f32 %v5383, %v4443
    %v5385 = vadd.f32 %v5384, %v4453
    %v5386 = vadd.f32 %v5385, %v4463
    %v5387 = vadd.f32 %v5386, %v4473
    %v5388 = vadd.f32 %v5387, %v4483
    %v5389 = vadd.f32 %v5388, %v4493
    %v5390 = vadd.f32 %v5389, %v4503
    %v5391 = vadd.f32 %v5390, %v4513
    %v5392 = vadd.f32 %v5391, %v4523
    %v5393 = vadd.f32 %v5392, %v4533
    %v5394 = vadd.f32 %v5393, %v4543
    %v5395 = vadd.f32 %v5394, %v4553
    %v5396 = vadd.f32 %v5395, %v4563
    %v5397 = vadd.f32 %v5396, %v4573
    %v5398 = vadd.f32 %v5397, %v4583
    %v5399 = vadd.f32 %v5398, %v4593
    %v5400 = vadd.f32 %v5399, %v4603
    %v5401 = vadd.f32 %v5400, %v4613
    %v5402 = vadd.f32 %v5401, %v4623
    %v5403 = vadd.f32 %v5402, %v4633
    %v5404 = vadd.f32 %v5403, %v4643
    %v5405 = vadd.f32 %v5404, %v4653
    %v5406 = vadd.f32 %v5405, %v4663
    %v5407 = vadd.f32 %v5406, %v4673
    %v5408 = vrot.slane %v5407, 4
    %v5409 = vadd.f32 %v5407, %v5408
    %v5410 = vrot.slane %v5409, 2
    %v5411 = vadd.f32 %v5409, %v5410
    %v5412 = vrot.slane %v5411, 1
    %v5413 = vadd.f32 %v5411, %v5412
    %v5414 = vmul.f32 %v4710, 0.00390625
    %v5415 = vmul.f32 %v4747, 0.00390625
    %v5416 = vmul.f32 %v4784, 0.00390625
    %v5417 = vmul.f32 %v4821, 0.00390625
    %v5418 = vmul.f32 %v4858, 0.00390625
    %v5419 = vmul.f32 %v4895, 0.00390625
    %v5420 = vmul.f32 %v4932, 0.00390625
    %v5421 = vmul.f32 %v4969, 0.00390625
    %v5422 = vmul.f32 %v5006, 0.00390625
    %v5423 = vmul.f32 %v5043, 0.00390625
    %v5424 = vmul.f32 %v5080, 0.00390625
    %v5425 = vmul.f32 %v5117, 0.00390625
    %v5426 = vmul.f32 %v5154, 0.00390625
    %v5427 = vmul.f32 %v5191, 0.00390625
    %v5428 = vmul.f32 %v5228, 0.00390625
    %v5429 = vmul.f32 %v5265, 0.00390625
    %v5430 = vmul.f32 %v5302, 0.00390625
    %v5431 = vmul.f32 %v5339, 0.00390625
    %v5432 = vmul.f32 %v5376, 0.00390625
    %v5433 = vmul.f32 %v5413, 0.00390625
    %v5434 = vpack.c.bf16 %v5414, %v5414
    %v5435 = vpack.c.bf16 %v5415, %v5415
    %v5436 = vpack.c.bf16 %v5416, %v5416
    %v5437 = vpack.c.bf16 %v5417, %v5417
    %v5438 = vpack.c.bf16 %v5418, %v5418
    %v5439 = vpack.c.bf16 %v5419, %v5419
    %v5440 = vpack.c.bf16 %v5420, %v5420
    %v5441 = vpack.c.bf16 %v5421, %v5421
    %v5442 = vpack.c.bf16 %v5422, %v5422
    %v5443 = vpack.c.bf16 %v5423, %v5423
    %v5444 = vpack.c.bf16 %v5424, %v5424
    %v5445 = vpack.c.bf16 %v5425, %v5425
    %v5446 = vpack.c.bf16 %v5426, %v5426
    %v5447 = vpack.c.bf16 %v5427, %v5427
    %v5448 = vpack.c.bf16 %v5428, %v5428
    %v5449 = vpack.c.bf16 %v5429, %v5429
    %v5450 = vpack.c.bf16 %v5430, %v5430
    %v5451 = vpack.c.bf16 %v5431, %v5431
    %v5452 = vpack.c.bf16 %v5432, %v5432
    %v5453 = vpack.c.bf16 %v5433, %v5433
    %v5454 = vld [vmem:[#allocation2] sm:$0xf]
    %v5455 = vld [vmem:[#allocation2 + $0x4] sm:$0xf]
    %v5456 = vld [vmem:[#allocation2 + $0x8] sm:$0xf]
    %v5457 = vld [vmem:[#allocation2 + $0xc] sm:$0xf]
    %v5458 = vld [vmem:[#allocation2 + $0x10] sm:$0xf]
    %v5459 = vld [vmem:[#allocation2 + $0x14] sm:$0xf]
    %v5460 = vld [vmem:[#allocation2 + $0x18] sm:$0xf]
    %v5461 = vld [vmem:[#allocation2 + $0x1c] sm:$0xf]
    %v5462 = vld [vmem:[#allocation2 + $0x20] sm:$0xf]
    %v5463 = vld [vmem:[#allocation2 + $0x24] sm:$0xf]
    %v5464 = vld [vmem:[#allocation2 + $0x28] sm:$0xf]
    %v5465 = vld [vmem:[#allocation2 + $0x2c] sm:$0xf]
    %v5466 = vld [vmem:[#allocation2 + $0x30] sm:$0xf]
    %v5467 = vld [vmem:[#allocation2 + $0x34] sm:$0xf]
    %v5468 = vld [vmem:[#allocation2 + $0x38] sm:$0xf]
    %v5469 = vld [vmem:[#allocation2 + $0x3c] sm:$0xf]
    %v5470 = vld [vmem:[#allocation2 + $0x40] sm:$0xf]
    %v5471 = vld [vmem:[#allocation2 + $0x44] sm:$0xf]
    %v5472 = vld [vmem:[#allocation2 + $0x48] sm:$0xf]
    %v5473 = vld [vmem:[#allocation2 + $0x4c] sm:$0xf]
    %v5474 = vld [vmem:[#allocation2 + $0x50] sm:$0xf]
    %v5475 = vld [vmem:[#allocation2 + $0x54] sm:$0xf]
    %v5476 = vld [vmem:[#allocation2 + $0x58] sm:$0xf]
    %v5477 = vld [vmem:[#allocation2 + $0x5c] sm:$0xf]
    %v5478 = vld [vmem:[#allocation2 + $0x60] sm:$0xf]
    %v5479 = vld [vmem:[#allocation2 + $0x64] sm:$0xf]
    %v5480 = vld [vmem:[#allocation2 + $0x68] sm:$0xf]
    %v5481 = vld [vmem:[#allocation2 + $0x6c] sm:$0xf]
    %v5482 = vld [vmem:[#allocation2 + $0x70] sm:$0xf]
    %v5483 = vld [vmem:[#allocation2 + $0x74] sm:$0xf]
    %v5484 = vld [vmem:[#allocation2 + $0x78] sm:$0xf]
    %v5485 = vld [vmem:[#allocation2 + $0x7c] sm:$0xf]
    %v5486 = vld [vmem:[#allocation2 + $0x80] sm:$0xf]
    %v5487 = vld [vmem:[#allocation2 + $0x84] sm:$0xf]
    %v5488 = vld [vmem:[#allocation2 + $0x88] sm:$0xf]
    %v5489 = vld [vmem:[#allocation2 + $0x8c] sm:$0xf]
    %v5490 = vld [vmem:[#allocation2 + $0x90] sm:$0xf]
    %v5491 = vld [vmem:[#allocation2 + $0x94] sm:$0xf]
    %v5492 = vld [vmem:[#allocation2 + $0x98] sm:$0xf]
    %v5493 = vld [vmem:[#allocation2 + $0x9c] sm:$0xf]
    %v5494 = vld [vmem:[#allocation2 + $0xa0] sm:$0xf]
    %v5495 = vld [vmem:[#allocation2 + $0xa4] sm:$0xf]
    %v5496 = vld [vmem:[#allocation2 + $0xa8] sm:$0xf]
    %v5497 = vld [vmem:[#allocation2 + $0xac] sm:$0xf]
    %v5498 = vld [vmem:[#allocation2 + $0xb0] sm:$0xf]
    %v5499 = vld [vmem:[#allocation2 + $0xb4] sm:$0xf]
    %v5500 = vld [vmem:[#allocation2 + $0xb8] sm:$0xf]
    %v5501 = vld [vmem:[#allocation2 + $0xbc] sm:$0xf]
    %v5502 = vld [vmem:[#allocation2 + $0xc0] sm:$0xf]
    %v5503 = vld [vmem:[#allocation2 + $0xc4] sm:$0xf]
    %v5504 = vld [vmem:[#allocation2 + $0xc8] sm:$0xf]
    %v5505 = vld [vmem:[#allocation2 + $0xcc] sm:$0xf]
    %v5506 = vld [vmem:[#allocation2 + $0xd0] sm:$0xf]
    %v5507 = vld [vmem:[#allocation2 + $0xd4] sm:$0xf]
    %v5508 = vld [vmem:[#allocation2 + $0xd8] sm:$0xf]
    %v5509 = vld [vmem:[#allocation2 + $0xdc] sm:$0xf]
    %v5510 = vld [vmem:[#allocation2 + $0xe0] sm:$0xf]
    %v5511 = vld [vmem:[#allocation2 + $0xe4] sm:$0xf]
    %v5512 = vld [vmem:[#allocation2 + $0xe8] sm:$0xf]
    %v5513 = vld [vmem:[#allocation2 + $0xec] sm:$0xf]
    %v5514 = vld [vmem:[#allocation2 + $0xf0] sm:$0xf]
    %v5515 = vld [vmem:[#allocation2 + $0xf4] sm:$0xf]
    %v5516 = vld [vmem:[#allocation2 + $0xf8] sm:$0xf]
    %v5517 = vld [vmem:[#allocation2 + $0xfc] sm:$0xf]
    %v5518 = vld [vmem:[#allocation2 + $0x100] sm:$0xf]
    %v5519 = vld [vmem:[#allocation2 + $0x104] sm:$0xf]
    %v5520 = vld [vmem:[#allocation2 + $0x108] sm:$0xf]
    %v5521 = vld [vmem:[#allocation2 + $0x10c] sm:$0xf]
    %v5522 = vld [vmem:[#allocation2 + $0x110] sm:$0xf]
    %v5523 = vld [vmem:[#allocation2 + $0x114] sm:$0xf]
    %v5524 = vld [vmem:[#allocation2 + $0x118] sm:$0xf]
    %v5525 = vld [vmem:[#allocation2 + $0x11c] sm:$0xf]
    %v5526 = vld [vmem:[#allocation2 + $0x120] sm:$0xf]
    %v5527 = vld [vmem:[#allocation2 + $0x124] sm:$0xf]
    %v5528 = vld [vmem:[#allocation2 + $0x128] sm:$0xf]
    %v5529 = vld [vmem:[#allocation2 + $0x12c] sm:$0xf]
    %v5530 = vld [vmem:[#allocation2 + $0x130] sm:$0xf]
    %v5531 = vld [vmem:[#allocation2 + $0x134] sm:$0xf]
    %v5532 = vld [vmem:[#allocation2 + $0x138] sm:$0xf]
    %v5533 = vld [vmem:[#allocation2 + $0x13c] sm:$0xf]
    %v5534 = vld [vmem:[#allocation2 + $0x140] sm:$0xf]
    %v5535 = vld [vmem:[#allocation2 + $0x144] sm:$0xf]
    %v5536 = vld [vmem:[#allocation2 + $0x148] sm:$0xf]
    %v5537 = vld [vmem:[#allocation2 + $0x14c] sm:$0xf]
    %v5538 = vld [vmem:[#allocation2 + $0x150] sm:$0xf]
    %v5539 = vld [vmem:[#allocation2 + $0x154] sm:$0xf]
    %v5540 = vld [vmem:[#allocation2 + $0x158] sm:$0xf]
    %v5541 = vld [vmem:[#allocation2 + $0x15c] sm:$0xf]
    %v5542 = vld [vmem:[#allocation2 + $0x160] sm:$0xf]
    %v5543 = vld [vmem:[#allocation2 + $0x164] sm:$0xf]
    %v5544 = vld [vmem:[#allocation2 + $0x168] sm:$0xf]
    %v5545 = vld [vmem:[#allocation2 + $0x16c] sm:$0xf]
    %v5546 = vld [vmem:[#allocation2 + $0x170] sm:$0xf]
    %v5547 = vld [vmem:[#allocation2 + $0x174] sm:$0xf]
    %v5548 = vld [vmem:[#allocation2 + $0x178] sm:$0xf]
    %v5549 = vld [vmem:[#allocation2 + $0x17c] sm:$0xf]
    %v5550 = vld [vmem:[#allocation2 + $0x180] sm:$0xf]
    %v5551 = vld [vmem:[#allocation2 + $0x184] sm:$0xf]
    %v5552 = vld [vmem:[#allocation2 + $0x188] sm:$0xf]
    %v5553 = vld [vmem:[#allocation2 + $0x18c] sm:$0xf]
    %v5554 = vld [vmem:[#allocation2 + $0x190] sm:$0xf]
    %v5555 = vld [vmem:[#allocation2 + $0x194] sm:$0xf]
    %v5556 = vld [vmem:[#allocation2 + $0x198] sm:$0xf]
    %v5557 = vld [vmem:[#allocation2 + $0x19c] sm:$0xf]
    %v5558 = vld [vmem:[#allocation2 + $0x1a0] sm:$0xf]
    %v5559 = vld [vmem:[#allocation2 + $0x1a4] sm:$0xf]
    %v5560 = vld [vmem:[#allocation2 + $0x1a8] sm:$0xf]
    %v5561 = vld [vmem:[#allocation2 + $0x1ac] sm:$0xf]
    %v5562 = vld [vmem:[#allocation2 + $0x1b0] sm:$0xf]
    %v5563 = vld [vmem:[#allocation2 + $0x1b4] sm:$0xf]
    %v5564 = vld [vmem:[#allocation2 + $0x1b8] sm:$0xf]
    %v5565 = vld [vmem:[#allocation2 + $0x1bc] sm:$0xf]
    %v5566 = vld [vmem:[#allocation2 + $0x1c0] sm:$0xf]
    %v5567 = vld [vmem:[#allocation2 + $0x1c4] sm:$0xf]
    %v5568 = vld [vmem:[#allocation2 + $0x1c8] sm:$0xf]
    %v5569 = vld [vmem:[#allocation2 + $0x1cc] sm:$0xf]
    %v5570 = vld [vmem:[#allocation2 + $0x1d0] sm:$0xf]
    %v5571 = vld [vmem:[#allocation2 + $0x1d4] sm:$0xf]
    %v5572 = vld [vmem:[#allocation2 + $0x1d8] sm:$0xf]
    %v5573 = vld [vmem:[#allocation2 + $0x1dc] sm:$0xf]
    %v5574 = vld [vmem:[#allocation2 + $0x1e0] sm:$0xf]
    %v5575 = vld [vmem:[#allocation2 + $0x1e4] sm:$0xf]
    %v5576 = vld [vmem:[#allocation2 + $0x1e8] sm:$0xf]
    %v5577 = vld [vmem:[#allocation2 + $0x1ec] sm:$0xf]
    %v5578 = vld [vmem:[#allocation2 + $0x1f0] sm:$0xf]
    %v5579 = vld [vmem:[#allocation2 + $0x1f4] sm:$0xf]
    %v5580 = vld [vmem:[#allocation2 + $0x1f8] sm:$0xf]
    %v5581 = vld [vmem:[#allocation2 + $0x1fc] sm:$0xf]
    %v5582 = vld [vmem:[#allocation2 + $0x200] sm:$0xf]
    %v5583 = vld [vmem:[#allocation2 + $0x204] sm:$0xf]
    %v5584 = vld [vmem:[#allocation2 + $0x208] sm:$0xf]
    %v5585 = vld [vmem:[#allocation2 + $0x20c] sm:$0xf]
    %v5586 = vld [vmem:[#allocation2 + $0x210] sm:$0xf]
    %v5587 = vld [vmem:[#allocation2 + $0x214] sm:$0xf]
    %v5588 = vld [vmem:[#allocation2 + $0x218] sm:$0xf]
    %v5589 = vld [vmem:[#allocation2 + $0x21c] sm:$0xf]
    %v5590 = vld [vmem:[#allocation2 + $0x220] sm:$0xf]
    %v5591 = vld [vmem:[#allocation2 + $0x224] sm:$0xf]
    %v5592 = vld [vmem:[#allocation2 + $0x228] sm:$0xf]
    %v5593 = vld [vmem:[#allocation2 + $0x22c] sm:$0xf]
    %v5594 = vld [vmem:[#allocation2 + $0x230] sm:$0xf]
    %v5595 = vld [vmem:[#allocation2 + $0x234] sm:$0xf]
    %v5596 = vld [vmem:[#allocation2 + $0x238] sm:$0xf]
    %v5597 = vld [vmem:[#allocation2 + $0x23c] sm:$0xf]
    %v5598 = vld [vmem:[#allocation2 + $0x240] sm:$0xf]
    %v5599 = vld [vmem:[#allocation2 + $0x244] sm:$0xf]
    %v5600 = vld [vmem:[#allocation2 + $0x248] sm:$0xf]
    %v5601 = vld [vmem:[#allocation2 + $0x24c] sm:$0xf]
    %v5602 = vld [vmem:[#allocation2 + $0x250] sm:$0xf]
    %v5603 = vld [vmem:[#allocation2 + $0x254] sm:$0xf]
    %v5604 = vld [vmem:[#allocation2 + $0x258] sm:$0xf]
    %v5605 = vld [vmem:[#allocation2 + $0x25c] sm:$0xf]
    %v5606 = vld [vmem:[#allocation2 + $0x260] sm:$0xf]
    %v5607 = vld [vmem:[#allocation2 + $0x264] sm:$0xf]
    %v5608 = vld [vmem:[#allocation2 + $0x268] sm:$0xf]
    %v5609 = vld [vmem:[#allocation2 + $0x26c] sm:$0xf]
    %v5610 = vld [vmem:[#allocation2 + $0x270] sm:$0xf]
    %v5611 = vld [vmem:[#allocation2 + $0x274] sm:$0xf]
    %v5612 = vld [vmem:[#allocation2 + $0x278] sm:$0xf]
    %v5613 = vld [vmem:[#allocation2 + $0x27c] sm:$0xf]
    %v5614 = vld [vmem:[%s4] sm:$0x1]
    %v5616 = vperm.slane %v5614, 0
    %v5638 = vunpack.c.l.b16 %v5434
    %v5639 = vunpack.c.l.b16 %v5435
    %v5640 = vunpack.c.l.b16 %v5436
    %v5641 = vunpack.c.l.b16 %v5437
    %v5642 = vunpack.c.l.b16 %v5438
    %v5643 = vunpack.c.l.b16 %v5439
    %v5644 = vunpack.c.l.b16 %v5440
    %v5645 = vunpack.c.l.b16 %v5441
    %v5646 = vunpack.c.l.b16 %v5442
    %v5647 = vunpack.c.l.b16 %v5443
    %v5648 = vunpack.c.l.b16 %v5444
    %v5649 = vunpack.c.l.b16 %v5445
    %v5650 = vunpack.c.l.b16 %v5446
    %v5651 = vunpack.c.l.b16 %v5447
    %v5652 = vunpack.c.l.b16 %v5448
    %v5653 = vunpack.c.l.b16 %v5449
    %v5654 = vunpack.c.l.b16 %v5450
    %v5655 = vunpack.c.l.b16 %v5451
    %v5656 = vunpack.c.l.b16 %v5452
    %v5657 = vunpack.c.l.b16 %v5453
    %vm5658 = vcmask 1041409
    %v5659 = vsel %vm5658, %v5648, %v5638
    %v5660 = vsel %vm5658, %v5649, %v5639
    %v5661 = vsel %vm5658, %v5650, %v5640
    %v5662 = vsel %vm5658, %v5651, %v5641
    %v5663 = vsel %vm5658, %v5652, %v5642
    %v5664 = vsel %vm5658, %v5653, %v5643
    %v5665 = vsel %vm5658, %v5654, %v5644
    %v5666 = vsel %vm5658, %v5655, %v5645
    %v5667 = vsel %vm5658, %v5656, %v5646
    %v5668 = vsel %vm5658, %v5657, %v5647
    %v5669 = vpack.c.b16 %v5659, %v5659
    %v5670 = vpack.c.b16 %v5660, %v5660
    %v5671 = vpack.c.b16 %v5661, %v5661
    %v5672 = vpack.c.b16 %v5662, %v5662
    %v5673 = vpack.c.b16 %v5663, %v5663
    %v5674 = vpack.c.b16 %v5664, %v5664
    %v5675 = vpack.c.b16 %v5665, %v5665
    %v5676 = vpack.c.b16 %v5666, %v5666
    %v5677 = vpack.c.b16 %v5667, %v5667
    %v5678 = vpack.c.b16 %v5668, %v5668
    %v5849 = vunpack.c.l.b16 %v5454
    %v5850 = vunpack.c.l.b16 %v5455
    %v5851 = vunpack.c.l.b16 %v5456
    %v5852 = vunpack.c.l.b16 %v5457
    %v5853 = vunpack.c.l.b16 %v5458
    %v5854 = vunpack.c.l.b16 %v5459
    %v5855 = vunpack.c.l.b16 %v5460
    %v5856 = vunpack.c.l.b16 %v5461
    %v5857 = vunpack.c.l.b16 %v5462
    %v5858 = vunpack.c.l.b16 %v5463
    %v5859 = vunpack.c.l.b16 %v5464
    %v5860 = vunpack.c.l.b16 %v5465
    %v5861 = vunpack.c.l.b16 %v5466
    %v5862 = vunpack.c.l.b16 %v5467
    %v5863 = vunpack.c.l.b16 %v5468
    %v5864 = vunpack.c.l.b16 %v5469
    %v5865 = vunpack.c.l.b16 %v5470
    %v5866 = vunpack.c.l.b16 %v5471
    %v5867 = vunpack.c.l.b16 %v5472
    %v5868 = vunpack.c.l.b16 %v5473
    %v5869 = vunpack.c.l.b16 %v5474
    %v5870 = vunpack.c.l.b16 %v5475
    %v5871 = vunpack.c.l.b16 %v5476
    %v5872 = vunpack.c.l.b16 %v5477
    %v5873 = vunpack.c.l.b16 %v5478
    %v5874 = vunpack.c.l.b16 %v5479
    %v5875 = vunpack.c.l.b16 %v5480
    %v5876 = vunpack.c.l.b16 %v5481
    %v5877 = vunpack.c.l.b16 %v5482
    %v5878 = vunpack.c.l.b16 %v5483
    %v5879 = vunpack.c.l.b16 %v5484
    %v5880 = vunpack.c.l.b16 %v5485
    %v5881 = vunpack.c.l.b16 %v5486
    %v5882 = vunpack.c.l.b16 %v5487
    %v5883 = vunpack.c.l.b16 %v5488
    %v5884 = vunpack.c.l.b16 %v5489
    %v5885 = vunpack.c.l.b16 %v5490
    %v5886 = vunpack.c.l.b16 %v5491
    %v5887 = vunpack.c.l.b16 %v5492
    %v5888 = vunpack.c.l.b16 %v5493
    %v5889 = vunpack.c.l.b16 %v5494
    %v5890 = vunpack.c.l.b16 %v5495
    %v5891 = vunpack.c.l.b16 %v5496
    %v5892 = vunpack.c.l.b16 %v5497
    %v5893 = vunpack.c.l.b16 %v5498
    %v5894 = vunpack.c.l.b16 %v5499
    %v5895 = vunpack.c.l.b16 %v5500
    %v5896 = vunpack.c.l.b16 %v5501
    %v5897 = vunpack.c.l.b16 %v5502
    %v5898 = vunpack.c.l.b16 %v5503
    %v5899 = vunpack.c.l.b16 %v5504
    %v5900 = vunpack.c.l.b16 %v5505
    %v5901 = vunpack.c.l.b16 %v5506
    %v5902 = vunpack.c.l.b16 %v5507
    %v5903 = vunpack.c.l.b16 %v5508
    %v5904 = vunpack.c.l.b16 %v5509
    %v5905 = vunpack.c.l.b16 %v5510
    %v5906 = vunpack.c.l.b16 %v5511
    %v5907 = vunpack.c.l.b16 %v5512
    %v5908 = vunpack.c.l.b16 %v5513
    %v5909 = vunpack.c.l.b16 %v5514
    %v5910 = vunpack.c.l.b16 %v5515
    %v5911 = vunpack.c.l.b16 %v5516
    %v5912 = vunpack.c.l.b16 %v5517
    %v5913 = vunpack.c.l.b16 %v5518
    %v5914 = vunpack.c.l.b16 %v5519
    %v5915 = vunpack.c.l.b16 %v5520
    %v5916 = vunpack.c.l.b16 %v5521
    %v5917 = vunpack.c.l.b16 %v5522
    %v5918 = vunpack.c.l.b16 %v5523
    %v5919 = vunpack.c.l.b16 %v5524
    %v5920 = vunpack.c.l.b16 %v5525
    %v5921 = vunpack.c.l.b16 %v5526
    %v5922 = vunpack.c.l.b16 %v5527
    %v5923 = vunpack.c.l.b16 %v5528
    %v5924 = vunpack.c.l.b16 %v5529
    %v5925 = vunpack.c.l.b16 %v5530
    %v5926 = vunpack.c.l.b16 %v5531
    %v5927 = vunpack.c.l.b16 %v5532
    %v5928 = vunpack.c.l.b16 %v5533
    %v5929 = vunpack.c.l.b16 %v5534
    %v5930 = vunpack.c.l.b16 %v5535
    %v5931 = vunpack.c.l.b16 %v5536
    %v5932 = vunpack.c.l.b16 %v5537
    %v5933 = vunpack.c.l.b16 %v5538
    %v5934 = vunpack.c.l.b16 %v5539
    %v5935 = vunpack.c.l.b16 %v5540
    %v5936 = vunpack.c.l.b16 %v5541
    %v5937 = vunpack.c.l.b16 %v5542
    %v5938 = vunpack.c.l.b16 %v5543
    %v5939 = vunpack.c.l.b16 %v5544
    %v5940 = vunpack.c.l.b16 %v5545
    %v5941 = vunpack.c.l.b16 %v5546
    %v5942 = vunpack.c.l.b16 %v5547
    %v5943 = vunpack.c.l.b16 %v5548
    %v5944 = vunpack.c.l.b16 %v5549
    %v5945 = vunpack.c.l.b16 %v5550
    %v5946 = vunpack.c.l.b16 %v5551
    %v5947 = vunpack.c.l.b16 %v5552
    %v5948 = vunpack.c.l.b16 %v5553
    %v5949 = vunpack.c.l.b16 %v5554
    %v5950 = vunpack.c.l.b16 %v5555
    %v5951 = vunpack.c.l.b16 %v5556
    %v5952 = vunpack.c.l.b16 %v5557
    %v5953 = vunpack.c.l.b16 %v5558
    %v5954 = vunpack.c.l.b16 %v5559
    %v5955 = vunpack.c.l.b16 %v5560
    %v5956 = vunpack.c.l.b16 %v5561
    %v5957 = vunpack.c.l.b16 %v5562
    %v5958 = vunpack.c.l.b16 %v5563
    %v5959 = vunpack.c.l.b16 %v5564
    %v5960 = vunpack.c.l.b16 %v5565
    %v5961 = vunpack.c.l.b16 %v5566
    %v5962 = vunpack.c.l.b16 %v5567
    %v5963 = vunpack.c.l.b16 %v5568
    %v5964 = vunpack.c.l.b16 %v5569
    %v5965 = vunpack.c.l.b16 %v5570
    %v5966 = vunpack.c.l.b16 %v5571
    %v5967 = vunpack.c.l.b16 %v5572
    %v5968 = vunpack.c.l.b16 %v5573
    %v5969 = vunpack.c.l.b16 %v5574
    %v5970 = vunpack.c.l.b16 %v5575
    %v5971 = vunpack.c.l.b16 %v5576
    %v5972 = vunpack.c.l.b16 %v5577
    %v5973 = vunpack.c.l.b16 %v5578
    %v5974 = vunpack.c.l.b16 %v5579
    %v5975 = vunpack.c.l.b16 %v5580
    %v5976 = vunpack.c.l.b16 %v5581
    %v5977 = vunpack.c.l.b16 %v5582
    %v5978 = vunpack.c.l.b16 %v5583
    %v5979 = vunpack.c.l.b16 %v5584
    %v5980 = vunpack.c.l.b16 %v5585
    %v5981 = vunpack.c.l.b16 %v5586
    %v5982 = vunpack.c.l.b16 %v5587
    %v5983 = vunpack.c.l.b16 %v5588
    %v5984 = vunpack.c.l.b16 %v5589
    %v5985 = vunpack.c.l.b16 %v5590
    %v5986 = vunpack.c.l.b16 %v5591
    %v5987 = vunpack.c.l.b16 %v5592
    %v5988 = vunpack.c.l.b16 %v5593
    %v5989 = vunpack.c.l.b16 %v5594
    %v5990 = vunpack.c.l.b16 %v5595
    %v5991 = vunpack.c.l.b16 %v5596
    %v5992 = vunpack.c.l.b16 %v5597
    %v5993 = vunpack.c.l.b16 %v5598
    %v5994 = vunpack.c.l.b16 %v5599
    %v5995 = vunpack.c.l.b16 %v5600
    %v5996 = vunpack.c.l.b16 %v5601
    %v5997 = vunpack.c.l.b16 %v5602
    %v5998 = vunpack.c.l.b16 %v5603
    %v5999 = vunpack.c.l.b16 %v5604
    %v6000 = vunpack.c.l.b16 %v5605
    %v6001 = vunpack.c.l.b16 %v5606
    %v6002 = vunpack.c.l.b16 %v5607
    %v6003 = vunpack.c.l.b16 %v5608
    %v6004 = vunpack.c.l.b16 %v5609
    %v6005 = vunpack.c.l.b16 %v5610
    %v6006 = vunpack.c.l.b16 %v5611
    %v6007 = vunpack.c.l.b16 %v5612
    %v6008 = vunpack.c.l.b16 %v5613
    %v6009 = vpack.c.b16 %v5850, %v5849
    %v6010 = vpack.c.b16 %v5852, %v5851
    %v6011 = vpack.c.b16 %v5854, %v5853
    %v6012 = vpack.c.b16 %v5856, %v5855
    %v6013 = vpack.c.b16 %v5858, %v5857
    %v6014 = vpack.c.b16 %v5860, %v5859
    %v6015 = vpack.c.b16 %v5862, %v5861
    %v6016 = vpack.c.b16 %v5864, %v5863
    %v6017 = vpack.c.b16 %v5866, %v5865
    %v6018 = vpack.c.b16 %v5868, %v5867
    %v6019 = vpack.c.b16 %v5870, %v5869
    %v6020 = vpack.c.b16 %v5872, %v5871
    %v6021 = vpack.c.b16 %v5874, %v5873
    %v6022 = vpack.c.b16 %v5876, %v5875
    %v6023 = vpack.c.b16 %v5878, %v5877
    %v6024 = vpack.c.b16 %v5880, %v5879
    %v6025 = vpack.c.b16 %v5882, %v5881
    %v6026 = vpack.c.b16 %v5884, %v5883
    %v6027 = vpack.c.b16 %v5886, %v5885
    %v6028 = vpack.c.b16 %v5888, %v5887
    %v6029 = vpack.c.b16 %v5890, %v5889
    %v6030 = vpack.c.b16 %v5892, %v5891
    %v6031 = vpack.c.b16 %v5894, %v5893
    %v6032 = vpack.c.b16 %v5896, %v5895
    %v6033 = vpack.c.b16 %v5898, %v5897
    %v6034 = vpack.c.b16 %v5900, %v5899
    %v6035 = vpack.c.b16 %v5902, %v5901
    %v6036 = vpack.c.b16 %v5904, %v5903
    %v6037 = vpack.c.b16 %v5906, %v5905
    %v6038 = vpack.c.b16 %v5908, %v5907
    %v6039 = vpack.c.b16 %v5910, %v5909
    %v6040 = vpack.c.b16 %v5912, %v5911
    %v6041 = vpack.c.b16 %v5914, %v5913
    %v6042 = vpack.c.b16 %v5916, %v5915
    %v6043 = vpack.c.b16 %v5918, %v5917
    %v6044 = vpack.c.b16 %v5920, %v5919
    %v6045 = vpack.c.b16 %v5922, %v5921
    %v6046 = vpack.c.b16 %v5924, %v5923
    %v6047 = vpack.c.b16 %v5926, %v5925
    %v6048 = vpack.c.b16 %v5928, %v5927
    %v6049 = vpack.c.b16 %v5930, %v5929
    %v6050 = vpack.c.b16 %v5932, %v5931
    %v6051 = vpack.c.b16 %v5934, %v5933
    %v6052 = vpack.c.b16 %v5936, %v5935
    %v6053 = vpack.c.b16 %v5938, %v5937
    %v6054 = vpack.c.b16 %v5940, %v5939
    %v6055 = vpack.c.b16 %v5942, %v5941
    %v6056 = vpack.c.b16 %v5944, %v5943
    %v6057 = vpack.c.b16 %v5946, %v5945
    %v6058 = vpack.c.b16 %v5948, %v5947
    %v6059 = vpack.c.b16 %v5950, %v5949
    %v6060 = vpack.c.b16 %v5952, %v5951
    %v6061 = vpack.c.b16 %v5954, %v5953
    %v6062 = vpack.c.b16 %v5956, %v5955
    %v6063 = vpack.c.b16 %v5958, %v5957
    %v6064 = vpack.c.b16 %v5960, %v5959
    %v6065 = vpack.c.b16 %v5962, %v5961
    %v6066 = vpack.c.b16 %v5964, %v5963
    %v6067 = vpack.c.b16 %v5966, %v5965
    %v6068 = vpack.c.b16 %v5968, %v5967
    %v6069 = vpack.c.b16 %v5970, %v5969
    %v6070 = vpack.c.b16 %v5972, %v5971
    %v6071 = vpack.c.b16 %v5974, %v5973
    %v6072 = vpack.c.b16 %v5976, %v5975
    %v6073 = vpack.c.b16 %v5978, %v5977
    %v6074 = vpack.c.b16 %v5980, %v5979
    %v6075 = vpack.c.b16 %v5982, %v5981
    %v6076 = vpack.c.b16 %v5984, %v5983
    %v6077 = vpack.c.b16 %v5986, %v5985
    %v6078 = vpack.c.b16 %v5988, %v5987
    %v6079 = vpack.c.b16 %v5990, %v5989
    %v6080 = vpack.c.b16 %v5992, %v5991
    %v6081 = vpack.c.b16 %v5994, %v5993
    %v6082 = vpack.c.b16 %v5996, %v5995
    %v6083 = vpack.c.b16 %v5998, %v5997
    %v6084 = vpack.c.b16 %v6000, %v5999
    %v6085 = vpack.c.b16 %v6002, %v6001
    %v6086 = vpack.c.b16 %v6004, %v6003
    %v6087 = vpack.c.b16 %v6006, %v6005
    %v6088 = vpack.c.b16 %v6008, %v6007
    %6169 = vmatpush.bf16.msra.mxu0 %v6016
    %6170 = vmatpush.bf16.msra.mxu0 %v6015
    %6171 = vmatpush.bf16.msra.mxu0 %v6014
    %6172 = vmatpush.bf16.msra.mxu0 %v6013
    %6173 = vmatpush.bf16.msra.mxu0 %v6012
    %6174 = vmatpush.bf16.msra.mxu0 %v6011
    %6175 = vmatpush.bf16.msra.mxu0 %v6010
    %6176 = vmatpush.bf16.msra.mxu0 %v6009
    %6177 = vmatmul.bf16.gmra.mxu0 %v5669
    %v6178 = vpop.f32.mrf.mxu0
    %v6179 = vadd.f32 %v5616, %v6178
    %v6180 = vpop.f32.mrf.mxu0
    %6181 = vdwg.mxu0
    %6182 = vmatpush.bf16.msra.mxu0 %v6024
    %6183 = vmatpush.bf16.msra.mxu0 %v6023
    %6184 = vmatpush.bf16.msra.mxu0 %v6022
    %6185 = vmatpush.bf16.msra.mxu0 %v6021
    %6186 = vmatpush.bf16.msra.mxu0 %v6020
    %6187 = vmatpush.bf16.msra.mxu0 %v6019
    %6188 = vmatpush.bf16.msra.mxu0 %v6018
    %6189 = vmatpush.bf16.msra.mxu0 %v6017
    %6190 = vmatmul.bf16.gmra.mxu0 %v5670
    %v6191 = vpop.f32.mrf.mxu0
    %v6192 = vadd.f32 %v6179, %v6191
    %v6193 = vpop.f32.mrf.mxu0
    %6194 = vdwg.mxu0
    %6195 = vmatpush.bf16.msra.mxu0 %v6032
    %6196 = vmatpush.bf16.msra.mxu0 %v6031
    %6197 = vmatpush.bf16.msra.mxu0 %v6030
    %6198 = vmatpush.bf16.msra.mxu0 %v6029
    %6199 = vmatpush.bf16.msra.mxu0 %v6028
    %6200 = vmatpush.bf16.msra.mxu0 %v6027
    %6201 = vmatpush.bf16.msra.mxu0 %v6026
    %6202 = vmatpush.bf16.msra.mxu0 %v6025
    %6203 = vmatmul.bf16.gmra.mxu0 %v5671
    %v6204 = vpop.f32.mrf.mxu0
    %v6205 = vadd.f32 %v6192, %v6204
    %v6206 = vpop.f32.mrf.mxu0
    %6207 = vdwg.mxu0
    %6208 = vmatpush.bf16.msra.mxu0 %v6040
    %6209 = vmatpush.bf16.msra.mxu0 %v6039
    %6210 = vmatpush.bf16.msra.mxu0 %v6038
    %6211 = vmatpush.bf16.msra.mxu0 %v6037
    %6212 = vmatpush.bf16.msra.mxu0 %v6036
    %6213 = vmatpush.bf16.msra.mxu0 %v6035
    %6214 = vmatpush.bf16.msra.mxu0 %v6034
    %6215 = vmatpush.bf16.msra.mxu0 %v6033
    %6216 = vmatmul.bf16.gmra.mxu0 %v5672
    %v6217 = vpop.f32.mrf.mxu0
    %v6218 = vadd.f32 %v6205, %v6217
    %v6219 = vpop.f32.mrf.mxu0
    %6220 = vdwg.mxu0
    %6221 = vmatpush.bf16.msra.mxu0 %v6048
    %6222 = vmatpush.bf16.msra.mxu0 %v6047
    %6223 = vmatpush.bf16.msra.mxu0 %v6046
    %6224 = vmatpush.bf16.msra.mxu0 %v6045
    %6225 = vmatpush.bf16.msra.mxu0 %v6044
    %6226 = vmatpush.bf16.msra.mxu0 %v6043
    %6227 = vmatpush.bf16.msra.mxu0 %v6042
    %6228 = vmatpush.bf16.msra.mxu0 %v6041
    %6229 = vmatmul.bf16.gmra.mxu0 %v5673
    %v6230 = vpop.f32.mrf.mxu0
    %v6231 = vadd.f32 %v6218, %v6230
    %v6232 = vpop.f32.mrf.mxu0
    %6233 = vdwg.mxu0
    %6234 = vmatpush.bf16.msra.mxu0 %v6056
    %6235 = vmatpush.bf16.msra.mxu0 %v6055
    %6236 = vmatpush.bf16.msra.mxu0 %v6054
    %6237 = vmatpush.bf16.msra.mxu0 %v6053
    %6238 = vmatpush.bf16.msra.mxu0 %v6052
    %6239 = vmatpush.bf16.msra.mxu0 %v6051
    %6240 = vmatpush.bf16.msra.mxu0 %v6050
    %6241 = vmatpush.bf16.msra.mxu0 %v6049
    %6242 = vmatmul.bf16.gmra.mxu0 %v5674
    %v6243 = vpop.f32.mrf.mxu0
    %v6244 = vadd.f32 %v6231, %v6243
    %v6245 = vpop.f32.mrf.mxu0
    %6246 = vdwg.mxu0
    %6247 = vmatpush.bf16.msra.mxu0 %v6064
    %6248 = vmatpush.bf16.msra.mxu0 %v6063
    %6249 = vmatpush.bf16.msra.mxu0 %v6062
    %6250 = vmatpush.bf16.msra.mxu0 %v6061
    %6251 = vmatpush.bf16.msra.mxu0 %v6060
    %6252 = vmatpush.bf16.msra.mxu0 %v6059
    %6253 = vmatpush.bf16.msra.mxu0 %v6058
    %6254 = vmatpush.bf16.msra.mxu0 %v6057
    %6255 = vmatmul.bf16.gmra.mxu0 %v5675
    %v6256 = vpop.f32.mrf.mxu0
    %v6257 = vadd.f32 %v6244, %v6256
    %v6258 = vpop.f32.mrf.mxu0
    %6259 = vdwg.mxu0
    %6260 = vmatpush.bf16.msra.mxu0 %v6072
    %6261 = vmatpush.bf16.msra.mxu0 %v6071
    %6262 = vmatpush.bf16.msra.mxu0 %v6070
    %6263 = vmatpush.bf16.msra.mxu0 %v6069
    %6264 = vmatpush.bf16.msra.mxu0 %v6068
    %6265 = vmatpush.bf16.msra.mxu0 %v6067
    %6266 = vmatpush.bf16.msra.mxu0 %v6066
    %6267 = vmatpush.bf16.msra.mxu0 %v6065
    %6268 = vmatmul.bf16.gmra.mxu0 %v5676
    %v6269 = vpop.f32.mrf.mxu0
    %v6270 = vadd.f32 %v6257, %v6269
    %v6271 = vpop.f32.mrf.mxu0
    %6272 = vdwg.mxu0
    %6273 = vmatpush.bf16.msra.mxu0 %v6080
    %6274 = vmatpush.bf16.msra.mxu0 %v6079
    %6275 = vmatpush.bf16.msra.mxu0 %v6078
    %6276 = vmatpush.bf16.msra.mxu0 %v6077
    %6277 = vmatpush.bf16.msra.mxu0 %v6076
    %6278 = vmatpush.bf16.msra.mxu0 %v6075
    %6279 = vmatpush.bf16.msra.mxu0 %v6074
    %6280 = vmatpush.bf16.msra.mxu0 %v6073
    %6281 = vmatmul.bf16.gmra.mxu0 %v5677
    %v6282 = vpop.f32.mrf.mxu0
    %v6283 = vadd.f32 %v6270, %v6282
    %v6284 = vpop.f32.mrf.mxu0
    %6285 = vdwg.mxu0
    %6286 = vmatpush.bf16.msra.mxu0 %v6088
    %6287 = vmatpush.bf16.msra.mxu0 %v6087
    %6288 = vmatpush.bf16.msra.mxu0 %v6086
    %6289 = vmatpush.bf16.msra.mxu0 %v6085
    %6290 = vmatpush.bf16.msra.mxu0 %v6084
    %6291 = vmatpush.bf16.msra.mxu0 %v6083
    %6292 = vmatpush.bf16.msra.mxu0 %v6082
    %6293 = vmatpush.bf16.msra.mxu0 %v6081
    %6294 = vmatmul.bf16.gmra.mxu0 %v5678
    %v6295 = vpop.f32.mrf.mxu0
    %v6296 = vadd.f32 %v6283, %v6295
    %v6297 = vpop.f32.mrf.mxu0
    %6298 = vdwg.mxu0
    %v6299 = vsel %vm403, %v6296, -inf
    %6300 = vmax.xlane.f32.xlu0 %v6299
    %v6301 = vpop.xlane.xlu0 %6300
    %v6302 = vsub.f32 %v6296, %v6301
    %v6303 = vmul.f32 %v6302, 1.442695
    %v6304 = vpow.pop %v6303
    %v6305 = vsel %vm403, %v6304, 0.0
    %6306 = vadd.xlane.f32.xlu0 %v6305
    %v6307 = vpop.xlane.xlu0 %6306
    %v6308 = vrcp.pop %v6307
    %v6309 = vmul.f32 %v6307, %v6308
    %v6310 = vsub.f32 2.0, %v6309
    %v6311 = vmul.f32 %v6308, %v6310
    %v6312 = vmul.f32 %v6304, %v6311
    %6313 = vst [vmem:[#allocation5] sm:$0x3] %v6312
    // Predicated region
    $region26: #{tpu_custom_call.1} parent=1 // pred_check
      _
    $region27: #{tpu_custom_call.1} parent=1 // pred_check_branch
      %6315 = sbr.rel (0) target = $region29
    $region28: #{tpu_custom_call.1} parent=1 // pred_region
      %6317 = vsyncadd [#allocation4], 0
      %s6319 = sshll.u32 [#allocation5], 4
      %s6320 = int_to_ptr.vmem [resolvable:$true] %s6319
      %s6321 = sshll.u32 %s5, 4
      %s6322 = int_to_ptr.hbm [resolvable:$true] %s6321
      %6324 = dma.vmem_to_hbm [thread:$0]  %s6320, 32, %s6322, [#allocation4]
    $region29: #{tpu_custom_call.1} parent=1 // pred_fallthru
      _
    // Predicated region
    $region30: #{tpu_custom_call.1} parent=1 // pred_check
      _
    $region31: #{tpu_custom_call.1} parent=1 // pred_check_branch
      %6326 = sbr.rel (0) target = $region33
    $region32: #{tpu_custom_call.1} parent=1 // pred_region
      %6328 = dma.done [#allocation4], 32
    $region33: #{tpu_custom_call.1} parent=1 // pred_fallthru
      _
    %6329 = vsyncpa [#allocation3], 1
    %6330 = vsyncpa [#allocation4], 1

// kernel: tpu_custom_call.1
$region0: #{tpu_custom_call.1}
  #allocation0 [shape = 'u32[]', space=smem, size = 0x4, offset = 0x4, fixed_abs, tag = 'smem constant byte address 0x4 - core index']
  #allocation1 [shape = 'u32[72,128]{1,0:T(1,128)}', space=vmem, size = 0x9000, scoped, tag = 'internal scratch']
  %s0 = inlined_call_operand.vmem [shape: bf16[512,4], index: 0, kind: input, shape index: {}]
  %s1 = inlined_call_operand.vmem [shape: bf16[4,1280], index: 1, kind: input, shape index: {}]
  %s2 = inlined_call_operand.vmem [shape: f32[1,1280], index: 2, kind: input, shape index: {}]
  %s3 = inlined_call_operand.hbm [shape: bf16[1280,128], index: 3, kind: input, shape index: {}]
  %s4 = inlined_call_operand.vmem [shape: f32[1,128], index: 4, kind: input, shape index: {}]
  %s5 = inlined_call_operand.hbm [shape: f32[1,2,128], index: 5, kind: output, shape index: {}]
  %s6 = sld [smem:[#allocation0]]
  $region34: #{tpu_custom_call.1} parent=0
    _
  %s8 = ssub.s32 1, %s6
  %s9 = scalar_select 0, %s8, %s6
  $region1: #{tpu_custom_call.1} parent=0
    #allocation2 [shape = 'u8[327680]{0}', space=vmem, size = 0x50000, scoped, tag = 'input window, operand 3, single buffered']
    #allocation3 [shape = 's32[1]{0}', space=sflag, size = 0x4, scoped, tag = 'scoped memory for tpu_custom_call.1']
    #allocation4 [shape = 's32[1]{0}', space=sflag, size = 0x4, scoped, tag = 'scoped memory for tpu_custom_call.1']
    #allocation5 [shape = 'u8[1024]{0}', space=vmem, size = 0x400, scoped, tag = 'output window, operand 0, single buffered']
    %10 = vsyncpa [#allocation3], 0
    %11 = vsyncpa [#allocation4], 0
    // Predicated region
    $region2: #{tpu_custom_call.1} parent=1 // pred_check
      _
    $region3: #{tpu_custom_call.1} parent=1 // pred_check_branch
      %13 = sbr.rel (0) target = $region5
    $region4: #{tpu_custom_call.1} parent=1 // pred_region
      _
    $region5: #{tpu_custom_call.1} parent=1 // pred_fallthru
      _
    // Predicated region
    $region6: #{tpu_custom_call.1} parent=1 // pred_check
      _
    $region7: #{tpu_custom_call.1} parent=1 // pred_check_branch
      %15 = sbr.rel (0) target = $region9
    $region8: #{tpu_custom_call.1} parent=1 // pred_region
      _
    $region9: #{tpu_custom_call.1} parent=1 // pred_fallthru
      _
    // Predicated region
    $region10: #{tpu_custom_call.1} parent=1 // pred_check
      _
    $region11: #{tpu_custom_call.1} parent=1 // pred_check_branch
      %17 = sbr.rel (0) target = $region13
    $region12: #{tpu_custom_call.1} parent=1 // pred_region
      _
    $region13: #{tpu_custom_call.1} parent=1 // pred_fallthru
      _
    // Predicated region
    $region14: #{tpu_custom_call.1} parent=1 // pred_check
      _
    $region15: #{tpu_custom_call.1} parent=1 // pred_check_branch
      %19 = sbr.rel (0) target = $region17
    $region16: #{tpu_custom_call.1} parent=1 // pred_region
      %21 = vsyncadd [#allocation3], 0
      %s22 = sshll.u32 %s3, 4
      %s23 = int_to_ptr.hbm [resolvable:$true] %s22
      %s24 = sshll.u32 [#allocation2], 4
      %s25 = int_to_ptr.vmem [resolvable:$true] %s24
      %30 = dma.hbm_to_vmem [thread:$0]  %s23, 10240, %s25, [#allocation3], 64, 64, 4
    $region17: #{tpu_custom_call.1} parent=1 // pred_fallthru
      _
    // Predicated region
    $region18: #{tpu_custom_call.1} parent=1 // pred_check
      _
    $region19: #{tpu_custom_call.1} parent=1 // pred_check_branch
      %32 = sbr.rel (0) target = $region21
    $region20: #{tpu_custom_call.1} parent=1 // pred_region
      _
    $region21: #{tpu_custom_call.1} parent=1 // pred_fallthru
      _
    // Predicated region
    $region22: #{tpu_custom_call.1} parent=1 // pred_check
      _
    $region23: #{tpu_custom_call.1} parent=1 // pred_check_branch
      %34 = sbr.rel (0) target = $region25
    $region24: #{tpu_custom_call.1} parent=1 // pred_region
      %36 = dma.done [#allocation3], 10240
    $region25: #{tpu_custom_call.1} parent=1 // pred_fallthru
      _
    %v38 = vld [vmem:[%s0] sm:$0xf]
    %v39 = vld [vmem:[%s0 + $0x4] sm:$0xf]
    %v40 = vld [vmem:[%s0 + $0x8] sm:$0xf]
    %v41 = vld [vmem:[%s0 + $0xc] sm:$0xf]
    %v42 = vld [vmem:[%s0 + $0x10] sm:$0xf]
    %v43 = vld [vmem:[%s0 + $0x14] sm:$0xf]
    %v44 = vld [vmem:[%s0 + $0x18] sm:$0xf]
    %v45 = vld [vmem:[%s0 + $0x1c] sm:$0xf]
    %v46 = vld [vmem:[%s0 + $0x20] sm:$0xf]
    %v47 = vld [vmem:[%s0 + $0x24] sm:$0xf]
    %v48 = vld [vmem:[%s0 + $0x28] sm:$0xf]
    %v49 = vld [vmem:[%s0 + $0x2c] sm:$0xf]
    %v50 = vld [vmem:[%s0 + $0x30] sm:$0xf]
    %v51 = vld [vmem:[%s0 + $0x34] sm:$0xf]
    %v52 = vld [vmem:[%s0 + $0x38] sm:$0xf]
    %v53 = vld [vmem:[%s0 + $0x3c] sm:$0xf]
    %v54 = vld [vmem:[%s0 + $0x40] sm:$0xf]
    %v55 = vld [vmem:[%s0 + $0x44] sm:$0xf]
    %v56 = vld [vmem:[%s0 + $0x48] sm:$0xf]
    %v57 = vld [vmem:[%s0 + $0x4c] sm:$0xf]
    %v58 = vld [vmem:[%s0 + $0x50] sm:$0xf]
    %v59 = vld [vmem:[%s0 + $0x54] sm:$0xf]
    %v60 = vld [vmem:[%s0 + $0x58] sm:$0xf]
    %v61 = vld [vmem:[%s0 + $0x5c] sm:$0xf]
    %v62 = vld [vmem:[%s0 + $0x60] sm:$0xf]
    %v63 = vld [vmem:[%s0 + $0x64] sm:$0xf]
    %v64 = vld [vmem:[%s0 + $0x68] sm:$0xf]
    %v65 = vld [vmem:[%s0 + $0x6c] sm:$0xf]
    %v66 = vld [vmem:[%s0 + $0x70] sm:$0xf]
    %v67 = vld [vmem:[%s0 + $0x74] sm:$0xf]
    %v68 = vld [vmem:[%s0 + $0x78] sm:$0xf]
    %v69 = vld [vmem:[%s0 + $0x7c] sm:$0xf]
    %v70 = vld [vmem:[%s0 + $0x80] sm:$0xf]
    %v71 = vld [vmem:[%s0 + $0x84] sm:$0xf]
    %v72 = vld [vmem:[%s0 + $0x88] sm:$0xf]
    %v73 = vld [vmem:[%s0 + $0x8c] sm:$0xf]
    %v74 = vld [vmem:[%s0 + $0x90] sm:$0xf]
    %v75 = vld [vmem:[%s0 + $0x94] sm:$0xf]
    %v76 = vld [vmem:[%s0 + $0x98] sm:$0xf]
    %v77 = vld [vmem:[%s0 + $0x9c] sm:$0xf]
    %v78 = vld [vmem:[%s0 + $0xa0] sm:$0xf]
    %v79 = vld [vmem:[%s0 + $0xa4] sm:$0xf]
    %v80 = vld [vmem:[%s0 + $0xa8] sm:$0xf]
    %v81 = vld [vmem:[%s0 + $0xac] sm:$0xf]
    %v82 = vld [vmem:[%s0 + $0xb0] sm:$0xf]
    %v83 = vld [vmem:[%s0 + $0xb4] sm:$0xf]
    %v84 = vld [vmem:[%s0 + $0xb8] sm:$0xf]
    %v85 = vld [vmem:[%s0 + $0xbc] sm:$0xf]
    %v86 = vld [vmem:[%s0 + $0xc0] sm:$0xf]
    %v87 = vld [vmem:[%s0 + $0xc4] sm:$0xf]
    %v88 = vld [vmem:[%s0 + $0xc8] sm:$0xf]
    %v89 = vld [vmem:[%s0 + $0xcc] sm:$0xf]
    %v90 = vld [vmem:[%s0 + $0xd0] sm:$0xf]
    %v91 = vld [vmem:[%s0 + $0xd4] sm:$0xf]
    %v92 = vld [vmem:[%s0 + $0xd8] sm:$0xf]
    %v93 = vld [vmem:[%s0 + $0xdc] sm:$0xf]
    %v94 = vld [vmem:[%s0 + $0xe0] sm:$0xf]
    %v95 = vld [vmem:[%s0 + $0xe4] sm:$0xf]
    %v96 = vld [vmem:[%s0 + $0xe8] sm:$0xf]
    %v97 = vld [vmem:[%s0 + $0xec] sm:$0xf]
    %v98 = vld [vmem:[%s0 + $0xf0] sm:$0xf]
    %v99 = vld [vmem:[%s0 + $0xf4] sm:$0xf]
    %v100 = vld [vmem:[%s0 + $0xf8] sm:$0xf]
    %v101 = vld [vmem:[%s0 + $0xfc] sm:$0xf]
    %v102 = vld [vmem:[%s1] sm:$0xff]
    %v103 = vld [vmem:[%s1 + $0x8] sm:$0xff]
    %v104 = vld [vmem:[%s1 + $0x10] sm:$0xf]
    %v105 = vld [vmem:[%s2] sm:$0xff]
    %v106 = vld [vmem:[%s2 + $0x8] sm:$0x3]
    %v109 = vperm.slane %v105, 0
    %v110 = vperm.slane %v105, 1
    %v111 = vperm.slane %v105, 2
    %v112 = vperm.slane %v105, 3
    %v113 = vperm.slane %v105, 4
    %v114 = vperm.slane %v105, 5
    %v115 = vperm.slane %v105, 6
    %v116 = vperm.slane %v105, 7
    %v117 = vperm.slane %v106, 0
    %v118 = vperm.slane %v106, 1
    %v193 = vunpack.c.l.b16 %v38
    %v194 = vunpack.c.l.b16 %v39
    %v195 = vunpack.c.l.b16 %v40
    %v196 = vunpack.c.l.b16 %v41
    %v197 = vunpack.c.l.b16 %v42
    %v198 = vunpack.c.l.b16 %v43
    %v199 = vunpack.c.l.b16 %v44
    %v200 = vunpack.c.l.b16 %v45
    %v201 = vunpack.c.l.b16 %v46
    %v202 = vunpack.c.l.b16 %v47
    %v203 = vunpack.c.l.b16 %v48
    %v204 = vunpack.c.l.b16 %v49
    %v205 = vunpack.c.l.b16 %v50
    %v206 = vunpack.c.l.b16 %v51
    %v207 = vunpack.c.l.b16 %v52
    %v208 = vunpack.c.l.b16 %v53
    %v209 = vunpack.c.l.b16 %v54
    %v210 = vunpack.c.l.b16 %v55
    %v211 = vunpack.c.l.b16 %v56
    %v212 = vunpack.c.l.b16 %v57
    %v213 = vunpack.c.l.b16 %v58
    %v214 = vunpack.c.l.b16 %v59
    %v215 = vunpack.c.l.b16 %v60
    %v216 = vunpack.c.l.b16 %v61
    %v217 = vunpack.c.l.b16 %v62
    %v218 = vunpack.c.l.b16 %v63
    %v219 = vunpack.c.l.b16 %v64
    %v220 = vunpack.c.l.b16 %v65
    %v221 = vunpack.c.l.b16 %v66
    %v222 = vunpack.c.l.b16 %v67
    %v223 = vunpack.c.l.b16 %v68
    %v224 = vunpack.c.l.b16 %v69
    %v225 = vunpack.c.l.b16 %v70
    %v226 = vunpack.c.l.b16 %v71
    %v227 = vunpack.c.l.b16 %v72
    %v228 = vunpack.c.l.b16 %v73
    %v229 = vunpack.c.l.b16 %v74
    %v230 = vunpack.c.l.b16 %v75
    %v231 = vunpack.c.l.b16 %v76
    %v232 = vunpack.c.l.b16 %v77
    %v233 = vunpack.c.l.b16 %v78
    %v234 = vunpack.c.l.b16 %v79
    %v235 = vunpack.c.l.b16 %v80
    %v236 = vunpack.c.l.b16 %v81
    %v237 = vunpack.c.l.b16 %v82
    %v238 = vunpack.c.l.b16 %v83
    %v239 = vunpack.c.l.b16 %v84
    %v240 = vunpack.c.l.b16 %v85
    %v241 = vunpack.c.l.b16 %v86
    %v242 = vunpack.c.l.b16 %v87
    %v243 = vunpack.c.l.b16 %v88
    %v244 = vunpack.c.l.b16 %v89
    %v245 = vunpack.c.l.b16 %v90
    %v246 = vunpack.c.l.b16 %v91
    %v247 = vunpack.c.l.b16 %v92
    %v248 = vunpack.c.l.b16 %v93
    %v249 = vunpack.c.l.b16 %v94
    %v250 = vunpack.c.l.b16 %v95
    %v251 = vunpack.c.l.b16 %v96
    %v252 = vunpack.c.l.b16 %v97
    %v253 = vunpack.c.l.b16 %v98
    %v254 = vunpack.c.l.b16 %v99
    %v255 = vunpack.c.l.b16 %v100
    %v256 = vunpack.c.l.b16 %v101
    %v257 = vpack.c.b16 %v194, %v193
    %v258 = vpack.c.b16 %v196, %v195
    %v259 = vpack.c.b16 %v198, %v197
    %v260 = vpack.c.b16 %v200, %v199
    %v261 = vpack.c.b16 %v202, %v201
    %v262 = vpack.c.b16 %v204, %v203
    %v263 = vpack.c.b16 %v206, %v205
    %v264 = vpack.c.b16 %v208, %v207
    %v265 = vpack.c.b16 %v210, %v209
    %v266 = vpack.c.b16 %v212, %v211
    %v267 = vpack.c.b16 %v214, %v213
    %v268 = vpack.c.b16 %v216, %v215
    %v269 = vpack.c.b16 %v218, %v217
    %v270 = vpack.c.b16 %v220, %v219
    %v271 = vpack.c.b16 %v222, %v221
    %v272 = vpack.c.b16 %v224, %v223
    %v273 = vpack.c.b16 %v226, %v225
    %v274 = vpack.c.b16 %v228, %v227
    %v275 = vpack.c.b16 %v230, %v229
    %v276 = vpack.c.b16 %v232, %v231
    %v277 = vpack.c.b16 %v234, %v233
    %v278 = vpack.c.b16 %v236, %v235
    %v279 = vpack.c.b16 %v238, %v237
    %v280 = vpack.c.b16 %v240, %v239
    %v281 = vpack.c.b16 %v242, %v241
    %v282 = vpack.c.b16 %v244, %v243
    %v283 = vpack.c.b16 %v246, %v245
    %v284 = vpack.c.b16 %v248, %v247
    %v285 = vpack.c.b16 %v250, %v249
    %v286 = vpack.c.b16 %v252, %v251
    %v287 = vpack.c.b16 %v254, %v253
    %v288 = vpack.c.b16 %v256, %v255
    %290 = vst [vmem:[#allocation1] ss:$4 sm:$0xff] %v102
    %s292 = scalar_lea.vmem [#allocation1], 32
    %293 = vst [vmem:[%s292] ss:$4 sm:$0xff] %v103
    %v294 = vld.sshfl [vmem:[#allocation1] sm:$0xff pattern:$0x73625140]
    %v295 = vld.sshfl [vmem:[#allocation1 + $0x8] sm:$0xff pattern:$0x73625140]
    %v296 = vld.sshfl [vmem:[#allocation1 + $0x10] sm:$0xff pattern:$0x73625140]
    %v297 = vld.sshfl [vmem:[#allocation1 + $0x18] sm:$0xff pattern:$0x73625140]
    %v298 = vld.sshfl [vmem:[#allocation1 + $0x20] sm:$0xff pattern:$0x73625140]
    %v299 = vld.sshfl [vmem:[#allocation1 + $0x28] sm:$0xff pattern:$0x73625140]
    %v300 = vld.sshfl [vmem:[#allocation1 + $0x30] sm:$0xff pattern:$0x73625140]
    %v301 = vld.sshfl [vmem:[#allocation1 + $0x38] sm:$0xff pattern:$0x73625140]
    %303 = vst [vmem:[#allocation1] ss:$4 sm:$0xff] %v104
    %v304 = vld.sshfl [vmem:[#allocation1] sm:$0xff pattern:$0x73625140]
    %v305 = vld.sshfl [vmem:[#allocation1 + $0x8] sm:$0xff pattern:$0x73625140]
    %vm306 = vcmask 31744
    %v308 = vsel %vm306, %v257, 0
    %v311 = vsel %vm306, %v258, 0
    %v314 = vsel %vm306, %v259, 0
    %v317 = vsel %vm306, %v260, 0
    %v320 = vsel %vm306, %v261, 0
    %v323 = vsel %vm306, %v262, 0
    %v326 = vsel %vm306, %v263, 0
    %v329 = vsel %vm306, %v264, 0
    %v332 = vsel %vm306, %v265, 0
    %v335 = vsel %vm306, %v266, 0
    %v338 = vsel %vm306, %v267, 0
    %v341 = vsel %vm306, %v268, 0
    %v344 = vsel %vm306, %v269, 0
    %v347 = vsel %vm306, %v270, 0
    %v350 = vsel %vm306, %v271, 0
    %v353 = vsel %vm306, %v272, 0
    %v356 = vsel %vm306, %v273, 0
    %v359 = vsel %vm306, %v274, 0
    %v362 = vsel %vm306, %v275, 0
    %v365 = vsel %vm306, %v276, 0
    %v368 = vsel %vm306, %v277, 0
    %v371 = vsel %vm306, %v278, 0
    %v374 = vsel %vm306, %v279, 0
    %v377 = vsel %vm306, %v280, 0
    %v380 = vsel %vm306, %v281, 0
    %v383 = vsel %vm306, %v282, 0
    %v386 = vsel %vm306, %v283, 0
    %v389 = vsel %vm306, %v284, 0
    %v392 = vsel %vm306, %v285, 0
    %v395 = vsel %vm306, %v286, 0
    %v398 = vsel %vm306, %v287, 0
    %v401 = vsel %vm306, %v288, 0
    %vm403 = vcmask 1041408
    %v404 = vsel %vm403, %v294, 0
    %v406 = vsel %vm403, %v295, 0
    %v408 = vsel %vm403, %v296, 0
    %v410 = vsel %vm403, %v297, 0
    %v412 = vsel %vm403, %v298, 0
    %v414 = vsel %vm403, %v299, 0
    %v416 = vsel %vm403, %v300, 0
    %v418 = vsel %vm403, %v301, 0
    %v420 = vsel %vm403, %v304, 0
    %v422 = vsel %vm403, %v305, 0
    %424 = vmatpush.bf16.msra.mxu0 0
    %425 = vmatpush.bf16.msra.mxu0 0
    %426 = vmatpush.bf16.msra.mxu0 0
    %427 = vmatpush.bf16.msra.mxu0 0
    %428 = vmatpush.bf16.msra.mxu0 0
    %429 = vmatpush.bf16.msra.mxu0 0
    %430 = vmatpush.bf16.msra.mxu0 0
    %431 = vmatpush.bf16.msra.mxu0 %v404
    %432 = vmatmul.bf16.gmra.mxu0 %v308
    %v433 = vpop.f32.mrf.mxu0
    %v434 = vadd.f32 %v109, %v433
    %v435 = vpop.f32.mrf.mxu0
    %v436 = vadd.f32 %v109, %v435
    %437 = vmatmul.bf16.gmra.mxu0 %v311
    %v438 = vpop.f32.mrf.mxu0
    %v439 = vadd.f32 %v109, %v438
    %v440 = vpop.f32.mrf.mxu0
    %v441 = vadd.f32 %v109, %v440
    %442 = vmatmul.bf16.gmra.mxu0 %v314
    %v443 = vpop.f32.mrf.mxu0
    %v444 = vadd.f32 %v109, %v443
    %v445 = vpop.f32.mrf.mxu0
    %v446 = vadd.f32 %v109, %v445
    %447 = vmatmul.bf16.gmra.mxu0 %v317
    %v448 = vpop.f32.mrf.mxu0
    %v449 = vadd.f32 %v109, %v448
    %v450 = vpop.f32.mrf.mxu0
    %v451 = vadd.f32 %v109, %v450
    %452 = vmatmul.bf16.gmra.mxu0 %v320
    %v453 = vpop.f32.mrf.mxu0
    %v454 = vadd.f32 %v109, %v453
    %v455 = vpop.f32.mrf.mxu0
    %v456 = vadd.f32 %v109, %v455
    %457 = vmatmul.bf16.gmra.mxu0 %v323
    %v458 = vpop.f32.mrf.mxu0
    %v459 = vadd.f32 %v109, %v458
    %v460 = vpop.f32.mrf.mxu0
    %v461 = vadd.f32 %v109, %v460
    %462 = vmatmul.bf16.gmra.mxu0 %v326
    %v463 = vpop.f32.mrf.mxu0
    %v464 = vadd.f32 %v109, %v463
    %v465 = vpop.f32.mrf.mxu0
    %v466 = vadd.f32 %v109, %v465
    %467 = vmatmul.bf16.gmra.mxu0 %v329
    %v468 = vpop.f32.mrf.mxu0
    %v469 = vadd.f32 %v109, %v468
    %v470 = vpop.f32.mrf.mxu0
    %v471 = vadd.f32 %v109, %v470
    %472 = vmatmul.bf16.gmra.mxu0 %v332
    %v473 = vpop.f32.mrf.mxu0
    %v474 = vadd.f32 %v109, %v473
    %v475 = vpop.f32.mrf.mxu0
    %v476 = vadd.f32 %v109, %v475
    %477 = vmatmul.bf16.gmra.mxu0 %v335
    %v478 = vpop.f32.mrf.mxu0
    %v479 = vadd.f32 %v109, %v478
    %v480 = vpop.f32.mrf.mxu0
    %v481 = vadd.f32 %v109, %v480
    %482 = vmatmul.bf16.gmra.mxu0 %v338
    %v483 = vpop.f32.mrf.mxu0
    %v484 = vadd.f32 %v109, %v483
    %v485 = vpop.f32.mrf.mxu0
    %v486 = vadd.f32 %v109, %v485
    %487 = vmatmul.bf16.gmra.mxu0 %v341
    %v488 = vpop.f32.mrf.mxu0
    %v489 = vadd.f32 %v109, %v488
    %v490 = vpop.f32.mrf.mxu0
    %v491 = vadd.f32 %v109, %v490
    %492 = vmatmul.bf16.gmra.mxu0 %v344
    %v493 = vpop.f32.mrf.mxu0
    %v494 = vadd.f32 %v109, %v493
    %v495 = vpop.f32.mrf.mxu0
    %v496 = vadd.f32 %v109, %v495
    %497 = vmatmul.bf16.gmra.mxu0 %v347
    %v498 = vpop.f32.mrf.mxu0
    %v499 = vadd.f32 %v109, %v498
    %v500 = vpop.f32.mrf.mxu0
    %v501 = vadd.f32 %v109, %v500
    %502 = vmatmul.bf16.gmra.mxu0 %v350
    %v503 = vpop.f32.mrf.mxu0
    %v504 = vadd.f32 %v109, %v503
    %v505 = vpop.f32.mrf.mxu0
    %v506 = vadd.f32 %v109, %v505
    %507 = vmatmul.bf16.gmra.mxu0 %v353
    %v508 = vpop.f32.mrf.mxu0
    %v509 = vadd.f32 %v109, %v508
    %v510 = vpop.f32.mrf.mxu0
    %v511 = vadd.f32 %v109, %v510
    %512 = vmatmul.bf16.gmra.mxu0 %v356
    %v513 = vpop.f32.mrf.mxu0
    %v514 = vadd.f32 %v109, %v513
    %v515 = vpop.f32.mrf.mxu0
    %v516 = vadd.f32 %v109, %v515
    %517 = vmatmul.bf16.gmra.mxu0 %v359
    %v518 = vpop.f32.mrf.mxu0
    %v519 = vadd.f32 %v109, %v518
    %v520 = vpop.f32.mrf.mxu0
    %v521 = vadd.f32 %v109, %v520
    %522 = vmatmul.bf16.gmra.mxu0 %v362
    %v523 = vpop.f32.mrf.mxu0
    %v524 = vadd.f32 %v109, %v523
    %v525 = vpop.f32.mrf.mxu0
    %v526 = vadd.f32 %v109, %v525
    %527 = vmatmul.bf16.gmra.mxu0 %v365
    %v528 = vpop.f32.mrf.mxu0
    %v529 = vadd.f32 %v109, %v528
    %v530 = vpop.f32.mrf.mxu0
    %v531 = vadd.f32 %v109, %v530
    %532 = vmatmul.bf16.gmra.mxu0 %v368
    %v533 = vpop.f32.mrf.mxu0
    %v534 = vadd.f32 %v109, %v533
    %v535 = vpop.f32.mrf.mxu0
    %v536 = vadd.f32 %v109, %v535
    %537 = vmatmul.bf16.gmra.mxu0 %v371
    %v538 = vpop.f32.mrf.mxu0
    %v539 = vadd.f32 %v109, %v538
    %v540 = vpop.f32.mrf.mxu0
    %v541 = vadd.f32 %v109, %v540
    %542 = vmatmul.bf16.gmra.mxu0 %v374
    %v543 = vpop.f32.mrf.mxu0
    %v544 = vadd.f32 %v109, %v543
    %v545 = vpop.f32.mrf.mxu0
    %v546 = vadd.f32 %v109, %v545
    %547 = vmatmul.bf16.gmra.mxu0 %v377
    %v548 = vpop.f32.mrf.mxu0
    %v549 = vadd.f32 %v109, %v548
    %v550 = vpop.f32.mrf.mxu0
    %v551 = vadd.f32 %v109, %v550
    %552 = vmatmul.bf16.gmra.mxu0 %v380
    %v553 = vpop.f32.mrf.mxu0
    %v554 = vadd.f32 %v109, %v553
    %v555 = vpop.f32.mrf.mxu0
    %v556 = vadd.f32 %v109, %v555
    %557 = vmatmul.bf16.gmra.mxu0 %v383
    %v558 = vpop.f32.mrf.mxu0
    %v559 = vadd.f32 %v109, %v558
    %v560 = vpop.f32.mrf.mxu0
    %v561 = vadd.f32 %v109, %v560
    %562 = vmatmul.bf16.gmra.mxu0 %v386
    %v563 = vpop.f32.mrf.mxu0
    %v564 = vadd.f32 %v109, %v563
    %v565 = vpop.f32.mrf.mxu0
    %v566 = vadd.f32 %v109, %v565
    %567 = vmatmul.bf16.gmra.mxu0 %v389
    %v568 = vpop.f32.mrf.mxu0
    %v569 = vadd.f32 %v109, %v568
    %v570 = vpop.f32.mrf.mxu0
    %v571 = vadd.f32 %v109, %v570
    %572 = vmatmul.bf16.gmra.mxu0 %v392
    %v573 = vpop.f32.mrf.mxu0
    %v574 = vadd.f32 %v109, %v573
    %v575 = vpop.f32.mrf.mxu0
    %v576 = vadd.f32 %v109, %v575
    %577 = vmatmul.bf16.gmra.mxu0 %v395
    %v578 = vpop.f32.mrf.mxu0
    %v579 = vadd.f32 %v109, %v578
    %v580 = vpop.f32.mrf.mxu0
    %v581 = vadd.f32 %v109, %v580
    %582 = vmatmul.bf16.gmra.mxu0 %v398
    %v583 = vpop.f32.mrf.mxu0
    %v584 = vadd.f32 %v109, %v583
    %v585 = vpop.f32.mrf.mxu0
    %v586 = vadd.f32 %v109, %v585
    %587 = vmatmul.bf16.gmra.mxu0 %v401
    %v588 = vpop.f32.mrf.mxu0
    %v589 = vadd.f32 %v109, %v588
    %v590 = vpop.f32.mrf.mxu0
    %v591 = vadd.f32 %v109, %v590
    %592 = vdwg.mxu0
    %593 = vmatpush.bf16.msra.mxu0 0
    %594 = vmatpush.bf16.msra.mxu0 0
    %595 = vmatpush.bf16.msra.mxu0 0
    %596 = vmatpush.bf16.msra.mxu0 0
    %597 = vmatpush.bf16.msra.mxu0 0
    %598 = vmatpush.bf16.msra.mxu0 0
    %599 = vmatpush.bf16.msra.mxu0 0
    %600 = vmatpush.bf16.msra.mxu0 %v406
    %601 = vmatmul.bf16.gmra.mxu0 %v308
    %v602 = vpop.f32.mrf.mxu0
    %v603 = vadd.f32 %v110, %v602
    %v604 = vpop.f32.mrf.mxu0
    %v605 = vadd.f32 %v110, %v604
    %606 = vmatmul.bf16.gmra.mxu0 %v311
    %v607 = vpop.f32.mrf.mxu0
    %v608 = vadd.f32 %v110, %v607
    %v609 = vpop.f32.mrf.mxu0
    %v610 = vadd.f32 %v110, %v609
    %611 = vmatmul.bf16.gmra.mxu0 %v314
    %v612 = vpop.f32.mrf.mxu0
    %v613 = vadd.f32 %v110, %v612
    %v614 = vpop.f32.mrf.mxu0
    %v615 = vadd.f32 %v110, %v614
    %616 = vmatmul.bf16.gmra.mxu0 %v317
    %v617 = vpop.f32.mrf.mxu0
    %v618 = vadd.f32 %v110, %v617
    %v619 = vpop.f32.mrf.mxu0
    %v620 = vadd.f32 %v110, %v619
    %621 = vmatmul.bf16.gmra.mxu0 %v320
    %v622 = vpop.f32.mrf.mxu0
    %v623 = vadd.f32 %v110, %v622
    %v624 = vpop.f32.mrf.mxu0
    %v625 = vadd.f32 %v110, %v624
    %626 = vmatmul.bf16.gmra.mxu0 %v323
    %v627 = vpop.f32.mrf.mxu0
    %v628 = vadd.f32 %v110, %v627
    %v629 = vpop.f32.mrf.mxu0
    %v630 = vadd.f32 %v110, %v629
    %631 = vmatmul.bf16.gmra.mxu0 %v326
    %v632 = vpop.f32.mrf.mxu0
    %v633 = vadd.f32 %v110, %v632
    %v634 = vpop.f32.mrf.mxu0
    %v635 = vadd.f32 %v110, %v634
    %636 = vmatmul.bf16.gmra.mxu0 %v329
    %v637 = vpop.f32.mrf.mxu0
    %v638 = vadd.f32 %v110, %v637
    %v639 = vpop.f32.mrf.mxu0
    %v640 = vadd.f32 %v110, %v639
    %641 = vmatmul.bf16.gmra.mxu0 %v332
    %v642 = vpop.f32.mrf.mxu0
    %v643 = vadd.f32 %v110, %v642
    %v644 = vpop.f32.mrf.mxu0
    %v645 = vadd.f32 %v110, %v644
    %646 = vmatmul.bf16.gmra.mxu0 %v335
    %v647 = vpop.f32.mrf.mxu0
    %v648 = vadd.f32 %v110, %v647
    %v649 = vpop.f32.mrf.mxu0
    %v650 = vadd.f32 %v110, %v649
    %651 = vmatmul.bf16.gmra.mxu0 %v338
    %v652 = vpop.f32.mrf.mxu0
    %v653 = vadd.f32 %v110, %v652
    %v654 = vpop.f32.mrf.mxu0
    %v655 = vadd.f32 %v110, %v654
    %656 = vmatmul.bf16.gmra.mxu0 %v341
    %v657 = vpop.f32.mrf.mxu0
    %v658 = vadd.f32 %v110, %v657
    %v659 = vpop.f32.mrf.mxu0
    %v660 = vadd.f32 %v110, %v659
    %661 = vmatmul.bf16.gmra.mxu0 %v344
    %v662 = vpop.f32.mrf.mxu0
    %v663 = vadd.f32 %v110, %v662
    %v664 = vpop.f32.mrf.mxu0
    %v665 = vadd.f32 %v110, %v664
    %666 = vmatmul.bf16.gmra.mxu0 %v347
    %v667 = vpop.f32.mrf.mxu0
    %v668 = vadd.f32 %v110, %v667
    %v669 = vpop.f32.mrf.mxu0
    %v670 = vadd.f32 %v110, %v669
    %671 = vmatmul.bf16.gmra.mxu0 %v350
    %v672 = vpop.f32.mrf.mxu0
    %v673 = vadd.f32 %v110, %v672
    %v674 = vpop.f32.mrf.mxu0
    %v675 = vadd.f32 %v110, %v674
    %676 = vmatmul.bf16.gmra.mxu0 %v353
    %v677 = vpop.f32.mrf.mxu0
    %v678 = vadd.f32 %v110, %v677
    %v679 = vpop.f32.mrf.mxu0
    %v680 = vadd.f32 %v110, %v679
    %681 = vmatmul.bf16.gmra.mxu0 %v356
    %v682 = vpop.f32.mrf.mxu0
    %v683 = vadd.f32 %v110, %v682
    %v684 = vpop.f32.mrf.mxu0
    %v685 = vadd.f32 %v110, %v684
    %686 = vmatmul.bf16.gmra.mxu0 %v359
    %v687 = vpop.f32.mrf.mxu0
    %v688 = vadd.f32 %v110, %v687
    %v689 = vpop.f32.mrf.mxu0
    %v690 = vadd.f32 %v110, %v689
    %691 = vmatmul.bf16.gmra.mxu0 %v362
    %v692 = vpop.f32.mrf.mxu0
    %v693 = vadd.f32 %v110, %v692
    %v694 = vpop.f32.mrf.mxu0
    %v695 = vadd.f32 %v110, %v694
    %696 = vmatmul.bf16.gmra.mxu0 %v365
    %v697 = vpop.f32.mrf.mxu0
    %v698 = vadd.f32 %v110, %v697
    %v699 = vpop.f32.mrf.mxu0
    %v700 = vadd.f32 %v110, %v699
    %701 = vmatmul.bf16.gmra.mxu0 %v368
    %v702 = vpop.f32.mrf.mxu0
    %v703 = vadd.f32 %v110, %v702
    %v704 = vpop.f32.mrf.mxu0
    %v705 = vadd.f32 %v110, %v704
    %706 = vmatmul.bf16.gmra.mxu0 %v371
    %v707 = vpop.f32.mrf.mxu0
    %v708 = vadd.f32 %v110, %v707
    %v709 = vpop.f32.mrf.mxu0
    %v710 = vadd.f32 %v110, %v709
    %711 = vmatmul.bf16.gmra.mxu0 %v374
    %v712 = vpop.f32.mrf.mxu0
    %v713 = vadd.f32 %v110, %v712
    %v714 = vpop.f32.mrf.mxu0
    %v715 = vadd.f32 %v110, %v714
    %716 = vmatmul.bf16.gmra.mxu0 %v377
    %v717 = vpop.f32.mrf.mxu0
    %v718 = vadd.f32 %v110, %v717
    %v719 = vpop.f32.mrf.mxu0
    %v720 = vadd.f32 %v110, %v719
    %721 = vmatmul.bf16.gmra.mxu0 %v380
    %v722 = vpop.f32.mrf.mxu0
    %v723 = vadd.f32 %v110, %v722
    %v724 = vpop.f32.mrf.mxu0
    %v725 = vadd.f32 %v110, %v724
    %726 = vmatmul.bf16.gmra.mxu0 %v383
    %v727 = vpop.f32.mrf.mxu0
    %v728 = vadd.f32 %v110, %v727
    %v729 = vpop.f32.mrf.mxu0
    %v730 = vadd.f32 %v110, %v729
    %731 = vmatmul.bf16.gmra.mxu0 %v386
    %v732 = vpop.f32.mrf.mxu0
    %v733 = vadd.f32 %v110, %v732
    %v734 = vpop.f32.mrf.mxu0
    %v735 = vadd.f32 %v110, %v734
    %736 = vmatmul.bf16.gmra.mxu0 %v389
    %v737 = vpop.f32.mrf.mxu0
    %v738 = vadd.f32 %v110, %v737
    %v739 = vpop.f32.mrf.mxu0
    %v740 = vadd.f32 %v110, %v739
    %741 = vmatmul.bf16.gmra.mxu0 %v392
    %v742 = vpop.f32.mrf.mxu0
    %v743 = vadd.f32 %v110, %v742
    %v744 = vpop.f32.mrf.mxu0
    %v745 = vadd.f32 %v110, %v744
    %746 = vmatmul.bf16.gmra.mxu0 %v395
    %v747 = vpop.f32.mrf.mxu0
    %v748 = vadd.f32 %v110, %v747
    %v749 = vpop.f32.mrf.mxu0
    %v750 = vadd.f32 %v110, %v749
    %751 = vmatmul.bf16.gmra.mxu0 %v398
    %v752 = vpop.f32.mrf.mxu0
    %v753 = vadd.f32 %v110, %v752
    %v754 = vpop.f32.mrf.mxu0
    %v755 = vadd.f32 %v110, %v754
    %756 = vmatmul.bf16.gmra.mxu0 %v401
    %v757 = vpop.f32.mrf.mxu0
    %v758 = vadd.f32 %v110, %v757
    %v759 = vpop.f32.mrf.mxu0
    %v760 = vadd.f32 %v110, %v759
    %761 = vdwg.mxu0
    %762 = vmatpush.bf16.msra.mxu0 0
    %763 = vmatpush.bf16.msra.mxu0 0
    %764 = vmatpush.bf16.msra.mxu0 0
    %765 = vmatpush.bf16.msra.mxu0 0
    %766 = vmatpush.bf16.msra.mxu0 0
    %767 = vmatpush.bf16.msra.mxu0 0
    %768 = vmatpush.bf16.msra.mxu0 0
    %769 = vmatpush.bf16.msra.mxu0 %v408
    %770 = vmatmul.bf16.gmra.mxu0 %v308
    %v771 = vpop.f32.mrf.mxu0
    %v772 = vadd.f32 %v111, %v771
    %v773 = vpop.f32.mrf.mxu0
    %v774 = vadd.f32 %v111, %v773
    %775 = vmatmul.bf16.gmra.mxu0 %v311
    %v776 = vpop.f32.mrf.mxu0
    %v777 = vadd.f32 %v111, %v776
    %v778 = vpop.f32.mrf.mxu0
    %v779 = vadd.f32 %v111, %v778
    %780 = vmatmul.bf16.gmra.mxu0 %v314
    %v781 = vpop.f32.mrf.mxu0
    %v782 = vadd.f32 %v111, %v781
    %v783 = vpop.f32.mrf.mxu0
    %v784 = vadd.f32 %v111, %v783
    %785 = vmatmul.bf16.gmra.mxu0 %v317
    %v786 = vpop.f32.mrf.mxu0
    %v787 = vadd.f32 %v111, %v786
    %v788 = vpop.f32.mrf.mxu0
    %v789 = vadd.f32 %v111, %v788
    %790 = vmatmul.bf16.gmra.mxu0 %v320
    %v791 = vpop.f32.mrf.mxu0
    %v792 = vadd.f32 %v111, %v791
    %v793 = vpop.f32.mrf.mxu0
    %v794 = vadd.f32 %v111, %v793
    %795 = vmatmul.bf16.gmra.mxu0 %v323
    %v796 = vpop.f32.mrf.mxu0
    %v797 = vadd.f32 %v111, %v796
    %v798 = vpop.f32.mrf.mxu0
    %v799 = vadd.f32 %v111, %v798
    %800 = vmatmul.bf16.gmra.mxu0 %v326
    %v801 = vpop.f32.mrf.mxu0
    %v802 = vadd.f32 %v111, %v801
    %v803 = vpop.f32.mrf.mxu0
    %v804 = vadd.f32 %v111, %v803
    %805 = vmatmul.bf16.gmra.mxu0 %v329
    %v806 = vpop.f32.mrf.mxu0
    %v807 = vadd.f32 %v111, %v806
    %v808 = vpop.f32.mrf.mxu0
    %v809 = vadd.f32 %v111, %v808
    %810 = vmatmul.bf16.gmra.mxu0 %v332
    %v811 = vpop.f32.mrf.mxu0
    %v812 = vadd.f32 %v111, %v811
    %v813 = vpop.f32.mrf.mxu0
    %v814 = vadd.f32 %v111, %v813
    %815 = vmatmul.bf16.gmra.mxu0 %v335
    %v816 = vpop.f32.mrf.mxu0
    %v817 = vadd.f32 %v111, %v816
    %v818 = vpop.f32.mrf.mxu0
    %v819 = vadd.f32 %v111, %v818
    %820 = vmatmul.bf16.gmra.mxu0 %v338
    %v821 = vpop.f32.mrf.mxu0
    %v822 = vadd.f32 %v111, %v821
    %v823 = vpop.f32.mrf.mxu0
    %v824 = vadd.f32 %v111, %v823
    %825 = vmatmul.bf16.gmra.mxu0 %v341
    %v826 = vpop.f32.mrf.mxu0
    %v827 = vadd.f32 %v111, %v826
    %v828 = vpop.f32.mrf.mxu0
    %v829 = vadd.f32 %v111, %v828
    %830 = vmatmul.bf16.gmra.mxu0 %v344
    %v831 = vpop.f32.mrf.mxu0
    %v832 = vadd.f32 %v111, %v831
    %v833 = vpop.f32.mrf.mxu0
    %v834 = vadd.f32 %v111, %v833
    %835 = vmatmul.bf16.gmra.mxu0 %v347
    %v836 = vpop.f32.mrf.mxu0
    %v837 = vadd.f32 %v111, %v836
    %v838 = vpop.f32.mrf.mxu0
    %v839 = vadd.f32 %v111, %v838
    %840 = vmatmul.bf16.gmra.mxu0 %v350
    %v841 = vpop.f32.mrf.mxu0
    %v842 = vadd.f32 %v111, %v841
    %v843 = vpop.f32.mrf.mxu0
    %v844 = vadd.f32 %v111, %v843
    %845 = vmatmul.bf16.gmra.mxu0 %v353
    %v846 = vpop.f32.mrf.mxu0
    %v847 = vadd.f32 %v111, %v846
    %v848 = vpop.f32.mrf.mxu0
    %v849 = vadd.f32 %v111, %v848
    %850 = vmatmul.bf16.gmra.mxu0 %v356
    %v851 = vpop.f32.mrf.mxu0
    %v852 = vadd.f32 %v111, %v851
    %v853 = vpop.f32.mrf.mxu0
    %v854 = vadd.f32 %v111, %v853
    %855 = vmatmul.bf16.gmra.mxu0 %v359
    %v856 = vpop.f32.mrf.mxu0
    %v857 = vadd.f32 %v111, %v856
    %v858 = vpop.f32.mrf.mxu0
    %v859 = vadd.f32 %v111, %v858
    %860 = vmatmul.bf16.gmra.mxu0 %v362
    %v861 = vpop.f32.mrf.mxu0
    %v862 = vadd.f32 %v111, %v861
    %v863 = vpop.f32.mrf.mxu0
    %v864 = vadd.f32 %v111, %v863
    %865 = vmatmul.bf16.gmra.mxu0 %v365
    %v866 = vpop.f32.mrf.mxu0
    %v867 = vadd.f32 %v111, %v866
    %v868 = vpop.f32.mrf.mxu0
    %v869 = vadd.f32 %v111, %v868
    %870 = vmatmul.bf16.gmra.mxu0 %v368
    %v871 = vpop.f32.mrf.mxu0
    %v872 = vadd.f32 %v111, %v871
    %v873 = vpop.f32.mrf.mxu0
    %v874 = vadd.f32 %v111, %v873
    %875 = vmatmul.bf16.gmra.mxu0 %v371
    %v876 = vpop.f32.mrf.mxu0
    %v877 = vadd.f32 %v111, %v876
    %v878 = vpop.f32.mrf.mxu0
    %v879 = vadd.f32 %v111, %v878
    %880 = vmatmul.bf16.gmra.mxu0 %v374
    %v881 = vpop.f32.mrf.mxu0
    %v882 = vadd.f32 %v111, %v881
    %v883 = vpop.f32.mrf.mxu0
    %v884 = vadd.f32 %v111, %v883
    %885 = vmatmul.bf16.gmra.mxu0 %v377
    %v886 = vpop.f32.mrf.mxu0
    %v887 = vadd.f32 %v111, %v886
    %v888 = vpop.f32.mrf.mxu0
    %v889 = vadd.f32 %v111, %v888
    %890 = vmatmul.bf16.gmra.mxu0 %v380
    %v891 = vpop.f32.mrf.mxu0
    %v892 = vadd.f32 %v111, %v891
    %v893 = vpop.f32.mrf.mxu0
    %v894 = vadd.f32 %v111, %v893
    %895 = vmatmul.bf16.gmra.mxu0 %v383
    %v896 = vpop.f32.mrf.mxu0
    %v897 = vadd.f32 %v111, %v896
    %v898 = vpop.f32.mrf.mxu0
    %v899 = vadd.f32 %v111, %v898
    %900 = vmatmul.bf16.gmra.mxu0 %v386
    %v901 = vpop.f32.mrf.mxu0
    %v902 = vadd.f32 %v111, %v901
    %v903 = vpop.f32.mrf.mxu0
    %v904 = vadd.f32 %v111, %v903
    %905 = vmatmul.bf16.gmra.mxu0 %v389
    %v906 = vpop.f32.mrf.mxu0
    %v907 = vadd.f32 %v111, %v906
    %v908 = vpop.f32.mrf.mxu0
    %v909 = vadd.f32 %v111, %v908
    %910 = vmatmul.bf16.gmra.mxu0 %v392
    %v911 = vpop.f32.mrf.mxu0
    %v912 = vadd.f32 %v111, %v911
    %v913 = vpop.f32.mrf.mxu0
    %v914 = vadd.f32 %v111, %v913
    %915 = vmatmul.bf16.gmra.mxu0 %v395
    %v916 = vpop.f32.mrf.mxu0
    %v917 = vadd.f32 %v111, %v916
    %v918 = vpop.f32.mrf.mxu0
    %v919 = vadd.f32 %v111, %v918
    %920 = vmatmul.bf16.gmra.mxu0 %v398
    %v921 = vpop.f32.mrf.mxu0
    %v922 = vadd.f32 %v111, %v921
    %v923 = vpop.f32.mrf.mxu0
    %v924 = vadd.f32 %v111, %v923
    %925 = vmatmul.bf16.gmra.mxu0 %v401
    %v926 = vpop.f32.mrf.mxu0
    %v927 = vadd.f32 %v111, %v926
    %v928 = vpop.f32.mrf.mxu0
    %v929 = vadd.f32 %v111, %v928
    %930 = vdwg.mxu0
    %931 = vmatpush.bf16.msra.mxu0 0
    %932 = vmatpush.bf16.msra.mxu0 0
    %933 = vmatpush.bf16.msra.mxu0 0
    %934 = vmatpush.bf16.msra.mxu0 0
    %935 = vmatpush.bf16.msra.mxu0 0
    %936 = vmatpush.bf16.msra.mxu0 0
    %937 = vmatpush.bf16.msra.mxu0 0
    %938 = vmatpush.bf16.msra.mxu0 %v410
    %939 = vmatmul.bf16.gmra.mxu0 %v308
    %v940 = vpop.f32.mrf.mxu0
    %v941 = vadd.f32 %v112, %v940
    %v942 = vpop.f32.mrf.mxu0
    %v943 = vadd.f32 %v112, %v942
    %944 = vmatmul.bf16.gmra.mxu0 %v311
    %v945 = vpop.f32.mrf.mxu0
    %v946 = vadd.f32 %v112, %v945
    %v947 = vpop.f32.mrf.mxu0
    %v948 = vadd.f32 %v112, %v947
    %949 = vmatmul.bf16.gmra.mxu0 %v314
    %v950 = vpop.f32.mrf.mxu0
    %v951 = vadd.f32 %v112, %v950
    %v952 = vpop.f32.mrf.mxu0
    %v953 = vadd.f32 %v112, %v952
    %954 = vmatmul.bf16.gmra.mxu0 %v317
    %v955 = vpop.f32.mrf.mxu0
    %v956 = vadd.f32 %v112, %v955
    %v957 = vpop.f32.mrf.mxu0
    %v958 = vadd.f32 %v112, %v957
    %959 = vmatmul.bf16.gmra.mxu0 %v320
    %v960 = vpop.f32.mrf.mxu0
    %v961 = vadd.f32 %v112, %v960
    %v962 = vpop.f32.mrf.mxu0
    %v963 = vadd.f32 %v112, %v962
    %964 = vmatmul.bf16.gmra.mxu0 %v323
    %v965 = vpop.f32.mrf.mxu0
    %v966 = vadd.f32 %v112, %v965
    %v967 = vpop.f32.mrf.mxu0
    %v968 = vadd.f32 %v112, %v967
    %969 = vmatmul.bf16.gmra.mxu0 %v326
    %v970 = vpop.f32.mrf.mxu0
    %v971 = vadd.f32 %v112, %v970
    %v972 = vpop.f32.mrf.mxu0
    %v973 = vadd.f32 %v112, %v972
    %974 = vmatmul.bf16.gmra.mxu0 %v329
    %v975 = vpop.f32.mrf.mxu0
    %v976 = vadd.f32 %v112, %v975
    %v977 = vpop.f32.mrf.mxu0
    %v978 = vadd.f32 %v112, %v977
    %979 = vmatmul.bf16.gmra.mxu0 %v332
    %v980 = vpop.f32.mrf.mxu0
    %v981 = vadd.f32 %v112, %v980
    %v982 = vpop.f32.mrf.mxu0
    %v983 = vadd.f32 %v112, %v982
    %984 = vmatmul.bf16.gmra.mxu0 %v335
    %v985 = vpop.f32.mrf.mxu0
    %v986 = vadd.f32 %v112, %v985
    %v987 = vpop.f32.mrf.mxu0
    %v988 = vadd.f32 %v112, %v987
    %989 = vmatmul.bf16.gmra.mxu0 %v338
    %v990 = vpop.f32.mrf.mxu0
    %v991 = vadd.f32 %v112, %v990
    %v992 = vpop.f32.mrf.mxu0
    %v993 = vadd.f32 %v112, %v992
    %994 = vmatmul.bf16.gmra.mxu0 %v341
    %v995 = vpop.f32.mrf.mxu0
    %v996 = vadd.f32 %v112, %v995
    %v997 = vpop.f32.mrf.mxu0
    %v998 = vadd.f32 %v112, %v997
    %999 = vmatmul.bf16.gmra.mxu0 %v344
    %v1000 = vpop.f32.mrf.mxu0
    %v1001 = vadd.f32 %v112, %v1000
    %v1002 = vpop.f32.mrf.mxu0
    %v1003 = vadd.f32 %v112, %v1002
    %1004 = vmatmul.bf16.gmra.mxu0 %v347
    %v1005 = vpop.f32.mrf.mxu0
    %v1006 = vadd.f32 %v112, %v1005
    %v1007 = vpop.f32.mrf.mxu0
    %v1008 = vadd.f32 %v112, %v1007
    %1009 = vmatmul.bf16.gmra.mxu0 %v350
    %v1010 = vpop.f32.mrf.mxu0
    %v1011 = vadd.f32 %v112, %v1010
    %v1012 = vpop.f32.mrf.mxu0
    %v1013 = vadd.f32 %v112, %v1012
    %1014 = vmatmul.bf16.gmra.mxu0 %v353
    %v1015 = vpop.f32.mrf.mxu0
    %v1016 = vadd.f32 %v112, %v1015
    %v1017 = vpop.f32.mrf.mxu0
    %v1018 = vadd.f32 %v112, %v1017
    %1019 = vmatmul.bf16.gmra.mxu0 %v356
    %v1020 = vpop.f32.mrf.mxu0
    %v1021 = vadd.f32 %v112, %v1020
    %v1022 = vpop.f32.mrf.mxu0
    %v1023 = vadd.f32 %v112, %v1022
    %1024 = vmatmul.bf16.gmra.mxu0 %v359
    %v1025 = vpop.f32.mrf.mxu0
    %v1026 = vadd.f32 %v112, %v1025
    %v1027 = vpop.f32.mrf.mxu0
    %v1028 = vadd.f32 %v112, %v1027
    %1029 = vmatmul.bf16.gmra.mxu0 %v362
    %v1030 = vpop.f32.mrf.mxu0
    %v1031 = vadd.f32 %v112, %v1030
    %v1032 = vpop.f32.mrf.mxu0
    %v1033 = vadd.f32 %v112, %v1032
    %1034 = vmatmul.bf16.gmra.mxu0 %v365
    %v1035 = vpop.f32.mrf.mxu0
    %v1036 = vadd.f32 %v112, %v1035
    %v1037 = vpop.f32.mrf.mxu0
    %v1038 = vadd.f32 %v112, %v1037
    %1039 = vmatmul.bf16.gmra.mxu0 %v368
    %v1040 = vpop.f32.mrf.mxu0
    %v1041 = vadd.f32 %v112, %v1040
    %v1042 = vpop.f32.mrf.mxu0
    %v1043 = vadd.f32 %v112, %v1042
    %1044 = vmatmul.bf16.gmra.mxu0 %v371
    %v1045 = vpop.f32.mrf.mxu0
    %v1046 = vadd.f32 %v112, %v1045
    %v1047 = vpop.f32.mrf.mxu0
    %v1048 = vadd.f32 %v112, %v1047
    %1049 = vmatmul.bf16.gmra.mxu0 %v374
    %v1050 = vpop.f32.mrf.mxu0
    %v1051 = vadd.f32 %v112, %v1050
    %v1052 = vpop.f32.mrf.mxu0
    %v1053 = vadd.f32 %v112, %v1052
    %1054 = vmatmul.bf16.gmra.mxu0 %v377
    %v1055 = vpop.f32.mrf.mxu0
    %v1056 = vadd.f32 %v112, %v1055
    %v1057 = vpop.f32.mrf.mxu0
    %v1058 = vadd.f32 %v112, %v1057
    %1059 = vmatmul.bf16.gmra.mxu0 %v380
    %v1060 = vpop.f32.mrf.mxu0
    %v1061 = vadd.f32 %v112, %v1060
    %v1062 = vpop.f32.mrf.mxu0
    %v1063 = vadd.f32 %v112, %v1062
    %1064 = vmatmul.bf16.gmra.mxu0 %v383
    %v1065 = vpop.f32.mrf.mxu0
    %v1066 = vadd.f32 %v112, %v1065
    %v1067 = vpop.f32.mrf.mxu0
    %v1068 = vadd.f32 %v112, %v1067
    %1069 = vmatmul.bf16.gmra.mxu0 %v386
    %v1070 = vpop.f32.mrf.mxu0
    %v1071 = vadd.f32 %v112, %v1070
    %v1072 = vpop.f32.mrf.mxu0
    %v1073 = vadd.f32 %v112, %v1072
    %1074 = vmatmul.bf16.gmra.mxu0 %v389
    %v1075 = vpop.f32.mrf.mxu0
    %v1076 = vadd.f32 %v112, %v1075
    %v1077 = vpop.f32.mrf.mxu0
    %v1078 = vadd.f32 %v112, %v1077
    %1079 = vmatmul.bf16.gmra.mxu0 %v392
    %v1080 = vpop.f32.mrf.mxu0
    %v1081 = vadd.f32 %v112, %v1080
    %v1082 = vpop.f32.mrf.mxu0
    %v1083 = vadd.f32 %v112, %v1082
    %1084 = vmatmul.bf16.gmra.mxu0 %v395
    %v1085 = vpop.f32.mrf.mxu0
    %v1086 = vadd.f32 %v112, %v1085
    %v1087 = vpop.f32.mrf.mxu0
    %v1088 = vadd.f32 %v112, %v1087
    %1089 = vmatmul.bf16.gmra.mxu0 %v398
    %v1090 = vpop.f32.mrf.mxu0
    %v1091 = vadd.f32 %v112, %v1090
    %v1092 = vpop.f32.mrf.mxu0
    %v1093 = vadd.f32 %v112, %v1092
    %1094 = vmatmul.bf16.gmra.mxu0 %v401
    %v1095 = vpop.f32.mrf.mxu0
    %v1096 = vadd.f32 %v112, %v1095
    %v1097 = vpop.f32.mrf.mxu0
    %v1098 = vadd.f32 %v112, %v1097
    %1099 = vdwg.mxu0
    %1100 = vmatpush.bf16.msra.mxu0 0
    %1101 = vmatpush.bf16.msra.mxu0 0
    %1102 = vmatpush.bf16.msra.mxu0 0
    %1103 = vmatpush.bf16.msra.mxu0 0
    %1104 = vmatpush.bf16.msra.mxu0 0
    %1105 = vmatpush.bf16.msra.mxu0 0
    %1106 = vmatpush.bf16.msra.mxu0 0
    %1107 = vmatpush.bf16.msra.mxu0 %v412
    %1108 = vmatmul.bf16.gmra.mxu0 %v308
    %v1109 = vpop.f32.mrf.mxu0
    %v1110 = vadd.f32 %v113, %v1109
    %v1111 = vpop.f32.mrf.mxu0
    %v1112 = vadd.f32 %v113, %v1111
    %1113 = vmatmul.bf16.gmra.mxu0 %v311
    %v1114 = vpop.f32.mrf.mxu0
    %v1115 = vadd.f32 %v113, %v1114
    %v1116 = vpop.f32.mrf.mxu0
    %v1117 = vadd.f32 %v113, %v1116
    %1118 = vmatmul.bf16.gmra.mxu0 %v314
    %v1119 = vpop.f32.mrf.mxu0
    %v1120 = vadd.f32 %v113, %v1119
    %v1121 = vpop.f32.mrf.mxu0
    %v1122 = vadd.f32 %v113, %v1121
    %1123 = vmatmul.bf16.gmra.mxu0 %v317
    %v1124 = vpop.f32.mrf.mxu0
    %v1125 = vadd.f32 %v113, %v1124
    %v1126 = vpop.f32.mrf.mxu0
    %v1127 = vadd.f32 %v113, %v1126
    %1128 = vmatmul.bf16.gmra.mxu0 %v320
    %v1129 = vpop.f32.mrf.mxu0
    %v1130 = vadd.f32 %v113, %v1129
    %v1131 = vpop.f32.mrf.mxu0
    %v1132 = vadd.f32 %v113, %v1131
    %1133 = vmatmul.bf16.gmra.mxu0 %v323
    %v1134 = vpop.f32.mrf.mxu0
    %v1135 = vadd.f32 %v113, %v1134
    %v1136 = vpop.f32.mrf.mxu0
    %v1137 = vadd.f32 %v113, %v1136
    %1138 = vmatmul.bf16.gmra.mxu0 %v326
    %v1139 = vpop.f32.mrf.mxu0
    %v1140 = vadd.f32 %v113, %v1139
    %v1141 = vpop.f32.mrf.mxu0
    %v1142 = vadd.f32 %v113, %v1141
    %1143 = vmatmul.bf16.gmra.mxu0 %v329
    %v1144 = vpop.f32.mrf.mxu0
    %v1145 = vadd.f32 %v113, %v1144
    %v1146 = vpop.f32.mrf.mxu0
    %v1147 = vadd.f32 %v113, %v1146
    %1148 = vmatmul.bf16.gmra.mxu0 %v332
    %v1149 = vpop.f32.mrf.mxu0
    %v1150 = vadd.f32 %v113, %v1149
    %v1151 = vpop.f32.mrf.mxu0
    %v1152 = vadd.f32 %v113, %v1151
    %1153 = vmatmul.bf16.gmra.mxu0 %v335
    %v1154 = vpop.f32.mrf.mxu0
    %v1155 = vadd.f32 %v113, %v1154
    %v1156 = vpop.f32.mrf.mxu0
    %v1157 = vadd.f32 %v113, %v1156
    %1158 = vmatmul.bf16.gmra.mxu0 %v338
    %v1159 = vpop.f32.mrf.mxu0
    %v1160 = vadd.f32 %v113, %v1159
    %v1161 = vpop.f32.mrf.mxu0
    %v1162 = vadd.f32 %v113, %v1161
    %1163 = vmatmul.bf16.gmra.mxu0 %v341
    %v1164 = vpop.f32.mrf.mxu0
    %v1165 = vadd.f32 %v113, %v1164
    %v1166 = vpop.f32.mrf.mxu0
    %v1167 = vadd.f32 %v113, %v1166
    %1168 = vmatmul.bf16.gmra.mxu0 %v344
    %v1169 = vpop.f32.mrf.mxu0
    %v1170 = vadd.f32 %v113, %v1169
    %v1171 = vpop.f32.mrf.mxu0
    %v1172 = vadd.f32 %v113, %v1171
    %1173 = vmatmul.bf16.gmra.mxu0 %v347
    %v1174 = vpop.f32.mrf.mxu0
    %v1175 = vadd.f32 %v113, %v1174
    %v1176 = vpop.f32.mrf.mxu0
    %v1177 = vadd.f32 %v113, %v1176
    %1178 = vmatmul.bf16.gmra.mxu0 %v350
    %v1179 = vpop.f32.mrf.mxu0
    %v1180 = vadd.f32 %v113, %v1179
    %v1181 = vpop.f32.mrf.mxu0
    %v1182 = vadd.f32 %v113, %v1181
    %1183 = vmatmul.bf16.gmra.mxu0 %v353
    %v1184 = vpop.f32.mrf.mxu0
    %v1185 = vadd.f32 %v113, %v1184
    %v1186 = vpop.f32.mrf.mxu0
    %v1187 = vadd.f32 %v113, %v1186
    %1188 = vmatmul.bf16.gmra.mxu0 %v356
    %v1189 = vpop.f32.mrf.mxu0
    %v1190 = vadd.f32 %v113, %v1189
    %v1191 = vpop.f32.mrf.mxu0
    %v1192 = vadd.f32 %v113, %v1191
    %1193 = vmatmul.bf16.gmra.mxu0 %v359
    %v1194 = vpop.f32.mrf.mxu0
    %v1195 = vadd.f32 %v113, %v1194
    %v1196 = vpop.f32.mrf.mxu0
    %v1197 = vadd.f32 %v113, %v1196
    %1198 = vmatmul.bf16.gmra.mxu0 %v362
    %v1199 = vpop.f32.mrf.mxu0
    %v1200 = vadd.f32 %v113, %v1199
    %v1201 = vpop.f32.mrf.mxu0
    %v1202 = vadd.f32 %v113, %v1201
    %1203 = vmatmul.bf16.gmra.mxu0 %v365
    %v1204 = vpop.f32.mrf.mxu0
    %v1205 = vadd.f32 %v113, %v1204
    %v1206 = vpop.f32.mrf.mxu0
    %v1207 = vadd.f32 %v113, %v1206
    %1208 = vmatmul.bf16.gmra.mxu0 %v368
    %v1209 = vpop.f32.mrf.mxu0
    %v1210 = vadd.f32 %v113, %v1209
    %v1211 = vpop.f32.mrf.mxu0
    %v1212 = vadd.f32 %v113, %v1211
    %1213 = vmatmul.bf16.gmra.mxu0 %v371
    %v1214 = vpop.f32.mrf.mxu0
    %v1215 = vadd.f32 %v113, %v1214
    %v1216 = vpop.f32.mrf.mxu0
    %v1217 = vadd.f32 %v113, %v1216
    %1218 = vmatmul.bf16.gmra.mxu0 %v374
    %v1219 = vpop.f32.mrf.mxu0
    %v1220 = vadd.f32 %v113, %v1219
    %v1221 = vpop.f32.mrf.mxu0
    %v1222 = vadd.f32 %v113, %v1221
    %1223 = vmatmul.bf16.gmra.mxu0 %v377
    %v1224 = vpop.f32.mrf.mxu0
    %v1225 = vadd.f32 %v113, %v1224
    %v1226 = vpop.f32.mrf.mxu0
    %v1227 = vadd.f32 %v113, %v1226
    %1228 = vmatmul.bf16.gmra.mxu0 %v380
    %v1229 = vpop.f32.mrf.mxu0
    %v1230 = vadd.f32 %v113, %v1229
    %v1231 = vpop.f32.mrf.mxu0
    %v1232 = vadd.f32 %v113, %v1231
    %1233 = vmatmul.bf16.gmra.mxu0 %v383
    %v1234 = vpop.f32.mrf.mxu0
    %v1235 = vadd.f32 %v113, %v1234
    %v1236 = vpop.f32.mrf.mxu0
    %v1237 = vadd.f32 %v113, %v1236
    %1238 = vmatmul.bf16.gmra.mxu0 %v386
    %v1239 = vpop.f32.mrf.mxu0
    %v1240 = vadd.f32 %v113, %v1239
    %v1241 = vpop.f32.mrf.mxu0
    %v1242 = vadd.f32 %v113, %v1241
    %1243 = vmatmul.bf16.gmra.mxu0 %v389
    %v1244 = vpop.f32.mrf.mxu0
    %v1245 = vadd.f32 %v113, %v1244
    %v1246 = vpop.f32.mrf.mxu0
    %v1247 = vadd.f32 %v113, %v1246
    %1248 = vmatmul.bf16.gmra.mxu0 %v392
    %v1249 = vpop.f32.mrf.mxu0
    %v1250 = vadd.f32 %v113, %v1249
    %v1251 = vpop.f32.mrf.mxu0
    %v1252 = vadd.f32 %v113, %v1251
    %1253 = vmatmul.bf16.gmra.mxu0 %v395
    %v1254 = vpop.f32.mrf.mxu0
    %v1255 = vadd.f32 %v113, %v1254
    %v1256 = vpop.f32.mrf.mxu0
    %v1257 = vadd.f32 %v113, %v1256
    %1258 = vmatmul.bf16.gmra.mxu0 %v398
    %v1259 = vpop.f32.mrf.mxu0
    %v1260 = vadd.f32 %v113, %v1259
    %v1261 = vpop.f32.mrf.mxu0
    %v1262 = vadd.f32 %v113, %v1261
    %1263 = vmatmul.bf16.gmra.mxu0 %v401
    %v1264 = vpop.f32.mrf.mxu0
    %v1265 = vadd.f32 %v113, %v1264
    %v1266 = vpop.f32.mrf.mxu0
    %v1267 = vadd.f32 %v113, %v1266
    %1268 = vdwg.mxu0
    %1269 = vmatpush.bf16.msra.mxu0 0
    %1270 = vmatpush.bf16.msra.mxu0 0
    %1271 = vmatpush.bf16.msra.mxu0 0
    %1272 = vmatpush.bf16.msra.mxu0 0
    %1273 = vmatpush.bf16.msra.mxu0 0
    %1274 = vmatpush.bf16.msra.mxu0 0
    %1275 = vmatpush.bf16.msra.mxu0 0
    %1276 = vmatpush.bf16.msra.mxu0 %v414
    %1277 = vmatmul.bf16.gmra.mxu0 %v308
    %v1278 = vpop.f32.mrf.mxu0
    %v1279 = vadd.f32 %v114, %v1278
    %v1280 = vpop.f32.mrf.mxu0
    %v1281 = vadd.f32 %v114, %v1280
    %1282 = vmatmul.bf16.gmra.mxu0 %v311
    %v1283 = vpop.f32.mrf.mxu0
    %v1284 = vadd.f32 %v114, %v1283
    %v1285 = vpop.f32.mrf.mxu0
    %v1286 = vadd.f32 %v114, %v1285
    %1287 = vmatmul.bf16.gmra.mxu0 %v314
    %v1288 = vpop.f32.mrf.mxu0
    %v1289 = vadd.f32 %v114, %v1288
    %v1290 = vpop.f32.mrf.mxu0
    %v1291 = vadd.f32 %v114, %v1290
    %1292 = vmatmul.bf16.gmra.mxu0 %v317
    %v1293 = vpop.f32.mrf.mxu0
    %v1294 = vadd.f32 %v114, %v1293
    %v1295 = vpop.f32.mrf.mxu0
    %v1296 = vadd.f32 %v114, %v1295
    %1297 = vmatmul.bf16.gmra.mxu0 %v320
    %v1298 = vpop.f32.mrf.mxu0
    %v1299 = vadd.f32 %v114, %v1298
    %v1300 = vpop.f32.mrf.mxu0
    %v1301 = vadd.f32 %v114, %v1300
    %1302 = vmatmul.bf16.gmra.mxu0 %v323
    %v1303 = vpop.f32.mrf.mxu0
    %v1304 = vadd.f32 %v114, %v1303
    %v1305 = vpop.f32.mrf.mxu0
    %v1306 = vadd.f32 %v114, %v1305
    %1307 = vmatmul.bf16.gmra.mxu0 %v326
    %v1308 = vpop.f32.mrf.mxu0
    %v1309 = vadd.f32 %v114, %v1308
    %v1310 = vpop.f32.mrf.mxu0
    %v1311 = vadd.f32 %v114, %v1310
    %1312 = vmatmul.bf16.gmra.mxu0 %v329
    %v1313 = vpop.f32.mrf.mxu0
    %v1314 = vadd.f32 %v114, %v1313
    %v1315 = vpop.f32.mrf.mxu0
    %v1316 = vadd.f32 %v114, %v1315
    %1317 = vmatmul.bf16.gmra.mxu0 %v332
    %v1318 = vpop.f32.mrf.mxu0
    %v1319 = vadd.f32 %v114, %v1318
    %v1320 = vpop.f32.mrf.mxu0
    %v1321 = vadd.f32 %v114, %v1320
    %1322 = vmatmul.bf16.gmra.mxu0 %v335
    %v1323 = vpop.f32.mrf.mxu0
    %v1324 = vadd.f32 %v114, %v1323
    %v1325 = vpop.f32.mrf.mxu0
    %v1326 = vadd.f32 %v114, %v1325
    %1327 = vmatmul.bf16.gmra.mxu0 %v338
    %v1328 = vpop.f32.mrf.mxu0
    %v1329 = vadd.f32 %v114, %v1328
    %v1330 = vpop.f32.mrf.mxu0
    %v1331 = vadd.f32 %v114, %v1330
    %1332 = vmatmul.bf16.gmra.mxu0 %v341
    %v1333 = vpop.f32.mrf.mxu0
    %v1334 = vadd.f32 %v114, %v1333
    %v1335 = vpop.f32.mrf.mxu0
    %v1336 = vadd.f32 %v114, %v1335
    %1337 = vmatmul.bf16.gmra.mxu0 %v344
    %v1338 = vpop.f32.mrf.mxu0
    %v1339 = vadd.f32 %v114, %v1338
    %v1340 = vpop.f32.mrf.mxu0
    %v1341 = vadd.f32 %v114, %v1340
    %1342 = vmatmul.bf16.gmra.mxu0 %v347
    %v1343 = vpop.f32.mrf.mxu0
    %v1344 = vadd.f32 %v114, %v1343
    %v1345 = vpop.f32.mrf.mxu0
    %v1346 = vadd.f32 %v114, %v1345
    %1347 = vmatmul.bf16.gmra.mxu0 %v350
    %v1348 = vpop.f32.mrf.mxu0
    %v1349 = vadd.f32 %v114, %v1348
    %v1350 = vpop.f32.mrf.mxu0
    %v1351 = vadd.f32 %v114, %v1350
    %1352 = vmatmul.bf16.gmra.mxu0 %v353
    %v1353 = vpop.f32.mrf.mxu0
    %v1354 = vadd.f32 %v114, %v1353
    %v1355 = vpop.f32.mrf.mxu0
    %v1356 = vadd.f32 %v114, %v1355
    %1357 = vmatmul.bf16.gmra.mxu0 %v356
    %v1358 = vpop.f32.mrf.mxu0
    %v1359 = vadd.f32 %v114, %v1358
    %v1360 = vpop.f32.mrf.mxu0
    %v1361 = vadd.f32 %v114, %v1360
    %1362 = vmatmul.bf16.gmra.mxu0 %v359
    %v1363 = vpop.f32.mrf.mxu0
    %v1364 = vadd.f32 %v114, %v1363
    %v1365 = vpop.f32.mrf.mxu0
    %v1366 = vadd.f32 %v114, %v1365
    %1367 = vmatmul.bf16.gmra.mxu0 %v362
    %v1368 = vpop.f32.mrf.mxu0
    %v1369 = vadd.f32 %v114, %v1368
    %v1370 = vpop.f32.mrf.mxu0
    %v1371 = vadd.f32 %v114, %v1370
    %1372 = vmatmul.bf16.gmra.mxu0 %v365
    %v1373 = vpop.f32.mrf.mxu0
    %v1374 = vadd.f32 %v114, %v1373
    %v1375 = vpop.f32.mrf.mxu0
    %v1376 = vadd.f32 %v114, %v1375
    %1377 = vmatmul.bf16.gmra.mxu0 %v368
    %v1378 = vpop.f32.mrf.mxu0
    %v1379 = vadd.f32 %v114, %v1378
    %v1380 = vpop.f32.mrf.mxu0
    %v1381 = vadd.f32 %v114, %v1380
    %1382 = vmatmul.bf16.gmra.mxu0 %v371
    %v1383 = vpop.f32.mrf.mxu0
    %v1384 = vadd.f32 %v114, %v1383
    %v1385 = vpop.f32.mrf.mxu0
    %v1386 = vadd.f32 %v114, %v1385
    %1387 = vmatmul.bf16.gmra.mxu0 %v374
    %v1388 = vpop.f32.mrf.mxu0
    %v1389 = vadd.f32 %v114, %v1388
    %v1390 = vpop.f32.mrf.mxu0
    %v1391 = vadd.f32 %v114, %v1390
    %1392 = vmatmul.bf16.gmra.mxu0 %v377
    %v1393 = vpop.f32.mrf.mxu0
    %v1394 = vadd.f32 %v114, %v1393
    %v1395 = vpop.f32.mrf.mxu0
    %v1396 = vadd.f32 %v114, %v1395
    %1397 = vmatmul.bf16.gmra.mxu0 %v380
    %v1398 = vpop.f32.mrf.mxu0
    %v1399 = vadd.f32 %v114, %v1398
    %v1400 = vpop.f32.mrf.mxu0
    %v1401 = vadd.f32 %v114, %v1400
    %1402 = vmatmul.bf16.gmra.mxu0 %v383
    %v1403 = vpop.f32.mrf.mxu0
    %v1404 = vadd.f32 %v114, %v1403
    %v1405 = vpop.f32.mrf.mxu0
    %v1406 = vadd.f32 %v114, %v1405
    %1407 = vmatmul.bf16.gmra.mxu0 %v386
    %v1408 = vpop.f32.mrf.mxu0
    %v1409 = vadd.f32 %v114, %v1408
    %v1410 = vpop.f32.mrf.mxu0
    %v1411 = vadd.f32 %v114, %v1410
    %1412 = vmatmul.bf16.gmra.mxu0 %v389
    %v1413 = vpop.f32.mrf.mxu0
    %v1414 = vadd.f32 %v114, %v1413
    %v1415 = vpop.f32.mrf.mxu0
    %v1416 = vadd.f32 %v114, %v1415
    %1417 = vmatmul.bf16.gmra.mxu0 %v392
    %v1418 = vpop.f32.mrf.mxu0
    %v1419 = vadd.f32 %v114, %v1418
    %v1420 = vpop.f32.mrf.mxu0
    %v1421 = vadd.f32 %v114, %v1420
    %1422 = vmatmul.bf16.gmra.mxu0 %v395
    %v1423 = vpop.f32.mrf.mxu0
    %v1424 = vadd.f32 %v114, %v1423
    %v1425 = vpop.f32.mrf.mxu0
    %v1426 = vadd.f32 %v114, %v1425
    %1427 = vmatmul.bf16.gmra.mxu0 %v398
    %v1428 = vpop.f32.mrf.mxu0
    %v1429 = vadd.f32 %v114, %v1428
    %v1430 = vpop.f32.mrf.mxu0
    %v1431 = vadd.f32 %v114, %v1430
    %1432 = vmatmul.bf16.gmra.mxu0 %v401
    %v1433 = vpop.f32.mrf.mxu0
    %v1434 = vadd.f32 %v114, %v1433
    %v1435 = vpop.f32.mrf.mxu0
    %v1436 = vadd.f32 %v114, %v1435
    %1437 = vdwg.mxu0
    %1438 = vmatpush.bf16.msra.mxu0 0
    %1439 = vmatpush.bf16.msra.mxu0 0
    %1440 = vmatpush.bf16.msra.mxu0 0
    %1441 = vmatpush.bf16.msra.mxu0 0
    %1442 = vmatpush.bf16.msra.mxu0 0
    %1443 = vmatpush.bf16.msra.mxu0 0
    %1444 = vmatpush.bf16.msra.mxu0 0
    %1445 = vmatpush.bf16.msra.mxu0 %v416
    %1446 = vmatmul.bf16.gmra.mxu0 %v308
    %v1447 = vpop.f32.mrf.mxu0
    %v1448 = vadd.f32 %v115, %v1447
    %v1449 = vpop.f32.mrf.mxu0
    %v1450 = vadd.f32 %v115, %v1449
    %1451 = vmatmul.bf16.gmra.mxu0 %v311
    %v1452 = vpop.f32.mrf.mxu0
    %v1453 = vadd.f32 %v115, %v1452
    %v1454 = vpop.f32.mrf.mxu0
    %v1455 = vadd.f32 %v115, %v1454
    %1456 = vmatmul.bf16.gmra.mxu0 %v314
    %v1457 = vpop.f32.mrf.mxu0
    %v1458 = vadd.f32 %v115, %v1457
    %v1459 = vpop.f32.mrf.mxu0
    %v1460 = vadd.f32 %v115, %v1459
    %1461 = vmatmul.bf16.gmra.mxu0 %v317
    %v1462 = vpop.f32.mrf.mxu0
    %v1463 = vadd.f32 %v115, %v1462
    %v1464 = vpop.f32.mrf.mxu0
    %v1465 = vadd.f32 %v115, %v1464
    %1466 = vmatmul.bf16.gmra.mxu0 %v320
    %v1467 = vpop.f32.mrf.mxu0
    %v1468 = vadd.f32 %v115, %v1467
    %v1469 = vpop.f32.mrf.mxu0
    %v1470 = vadd.f32 %v115, %v1469
    %1471 = vmatmul.bf16.gmra.mxu0 %v323
    %v1472 = vpop.f32.mrf.mxu0
    %v1473 = vadd.f32 %v115, %v1472
    %v1474 = vpop.f32.mrf.mxu0
    %v1475 = vadd.f32 %v115, %v1474
    %1476 = vmatmul.bf16.gmra.mxu0 %v326
    %v1477 = vpop.f32.mrf.mxu0
    %v1478 = vadd.f32 %v115, %v1477
    %v1479 = vpop.f32.mrf.mxu0
    %v1480 = vadd.f32 %v115, %v1479
    %1481 = vmatmul.bf16.gmra.mxu0 %v329
    %v1482 = vpop.f32.mrf.mxu0
    %v1483 = vadd.f32 %v115, %v1482
    %v1484 = vpop.f32.mrf.mxu0
    %v1485 = vadd.f32 %v115, %v1484
    %1486 = vmatmul.bf16.gmra.mxu0 %v332
    %v1487 = vpop.f32.mrf.mxu0
    %v1488 = vadd.f32 %v115, %v1487
    %v1489 = vpop.f32.mrf.mxu0
    %v1490 = vadd.f32 %v115, %v1489
    %1491 = vmatmul.bf16.gmra.mxu0 %v335
    %v1492 = vpop.f32.mrf.mxu0
    %v1493 = vadd.f32 %v115, %v1492
    %v1494 = vpop.f32.mrf.mxu0
    %v1495 = vadd.f32 %v115, %v1494
    %1496 = vmatmul.bf16.gmra.mxu0 %v338
    %v1497 = vpop.f32.mrf.mxu0
    %v1498 = vadd.f32 %v115, %v1497
    %v1499 = vpop.f32.mrf.mxu0
    %v1500 = vadd.f32 %v115, %v1499
    %1501 = vmatmul.bf16.gmra.mxu0 %v341
    %v1502 = vpop.f32.mrf.mxu0
    %v1503 = vadd.f32 %v115, %v1502
    %v1504 = vpop.f32.mrf.mxu0
    %v1505 = vadd.f32 %v115, %v1504
    %1506 = vmatmul.bf16.gmra.mxu0 %v344
    %v1507 = vpop.f32.mrf.mxu0
    %v1508 = vadd.f32 %v115, %v1507
    %v1509 = vpop.f32.mrf.mxu0
    %v1510 = vadd.f32 %v115, %v1509
    %1511 = vmatmul.bf16.gmra.mxu0 %v347
    %v1512 = vpop.f32.mrf.mxu0
    %v1513 = vadd.f32 %v115, %v1512
    %v1514 = vpop.f32.mrf.mxu0
    %v1515 = vadd.f32 %v115, %v1514
    %1516 = vmatmul.bf16.gmra.mxu0 %v350
    %v1517 = vpop.f32.mrf.mxu0
    %v1518 = vadd.f32 %v115, %v1517
    %v1519 = vpop.f32.mrf.mxu0
    %v1520 = vadd.f32 %v115, %v1519
    %1521 = vmatmul.bf16.gmra.mxu0 %v353
    %v1522 = vpop.f32.mrf.mxu0
    %v1523 = vadd.f32 %v115, %v1522
    %v1524 = vpop.f32.mrf.mxu0
    %v1525 = vadd.f32 %v115, %v1524
    %1526 = vmatmul.bf16.gmra.mxu0 %v356
    %v1527 = vpop.f32.mrf.mxu0
    %v1528 = vadd.f32 %v115, %v1527
    %v1529 = vpop.f32.mrf.mxu0
    %v1530 = vadd.f32 %v115, %v1529
    %1531 = vmatmul.bf16.gmra.mxu0 %v359
    %v1532 = vpop.f32.mrf.mxu0
    %v1533 = vadd.f32 %v115, %v1532
    %v1534 = vpop.f32.mrf.mxu0
    %v1535 = vadd.f32 %v115, %v1534
    %1536 = vmatmul.bf16.gmra.mxu0 %v362
    %v1537 = vpop.f32.mrf.mxu0
    %v1538 = vadd.f32 %v115, %v1537
    %v1539 = vpop.f32.mrf.mxu0
    %v1540 = vadd.f32 %v115, %v1539
    %1541 = vmatmul.bf16.gmra.mxu0 %v365
    %v1542 = vpop.f32.mrf.mxu0
    %v1543 = vadd.f32 %v115, %v1542
    %v1544 = vpop.f32.mrf.mxu0
    %v1545 = vadd.f32 %v115, %v1544
    %1546 = vmatmul.bf16.gmra.mxu0 %v368
    %v1547 = vpop.f32.mrf.mxu0
    %v1548 = vadd.f32 %v115, %v1547
    %v1549 = vpop.f32.mrf.mxu0
    %v1550 = vadd.f32 %v115, %v1549
    %1551 = vmatmul.bf16.gmra.mxu0 %v371
    %v1552 = vpop.f32.mrf.mxu0
    %v1553 = vadd.f32 %v115, %v1552
    %v1554 = vpop.f32.mrf.mxu0
    %v1555 = vadd.f32 %v115, %v1554
    %1556 = vmatmul.bf16.gmra.mxu0 %v374
    %v1557 = vpop.f32.mrf.mxu0
    %v1558 = vadd.f32 %v115, %v1557
    %v1559 = vpop.f32.mrf.mxu0
    %v1560 = vadd.f32 %v115, %v1559
    %1561 = vmatmul.bf16.gmra.mxu0 %v377
    %v1562 = vpop.f32.mrf.mxu0
    %v1563 = vadd.f32 %v115, %v1562
    %v1564 = vpop.f32.mrf.mxu0
    %v1565 = vadd.f32 %v115, %v1564
    %1566 = vmatmul.bf16.gmra.mxu0 %v380
    %v1567 = vpop.f32.mrf.mxu0
    %v1568 = vadd.f32 %v115, %v1567
    %v1569 = vpop.f32.mrf.mxu0
    %v1570 = vadd.f32 %v115, %v1569
    %1571 = vmatmul.bf16.gmra.mxu0 %v383
    %v1572 = vpop.f32.mrf.mxu0
    %v1573 = vadd.f32 %v115, %v1572
    %v1574 = vpop.f32.mrf.mxu0
    %v1575 = vadd.f32 %v115, %v1574
    %1576 = vmatmul.bf16.gmra.mxu0 %v386
    %v1577 = vpop.f32.mrf.mxu0
    %v1578 = vadd.f32 %v115, %v1577
    %v1579 = vpop.f32.mrf.mxu0
    %v1580 = vadd.f32 %v115, %v1579
    %1581 = vmatmul.bf16.gmra.mxu0 %v389
    %v1582 = vpop.f32.mrf.mxu0
    %v1583 = vadd.f32 %v115, %v1582
    %v1584 = vpop.f32.mrf.mxu0
    %v1585 = vadd.f32 %v115, %v1584
    %1586 = vmatmul.bf16.gmra.mxu0 %v392
    %v1587 = vpop.f32.mrf.mxu0
    %v1588 = vadd.f32 %v115, %v1587
    %v1589 = vpop.f32.mrf.mxu0
    %v1590 = vadd.f32 %v115, %v1589
    %1591 = vmatmul.bf16.gmra.mxu0 %v395
    %v1592 = vpop.f32.mrf.mxu0
    %v1593 = vadd.f32 %v115, %v1592
    %v1594 = vpop.f32.mrf.mxu0
    %v1595 = vadd.f32 %v115, %v1594
    %1596 = vmatmul.bf16.gmra.mxu0 %v398
    %v1597 = vpop.f32.mrf.mxu0
    %v1598 = vadd.f32 %v115, %v1597
    %v1599 = vpop.f32.mrf.mxu0
    %v1600 = vadd.f32 %v115, %v1599
    %1601 = vmatmul.bf16.gmra.mxu0 %v401
    %v1602 = vpop.f32.mrf.mxu0
    %v1603 = vadd.f32 %v115, %v1602
    %v1604 = vpop.f32.mrf.mxu0
    %v1605 = vadd.f32 %v115, %v1604
    %1606 = vdwg.mxu0
    %1607 = vmatpush.bf16.msra.mxu0 0
    %1608 = vmatpush.bf16.msra.mxu0 0
    %1609 = vmatpush.bf16.msra.mxu0 0
    %1610 = vmatpush.bf16.msra.mxu0 0
    %1611 = vmatpush.bf16.msra.mxu0 0
    %1612 = vmatpush.bf16.msra.mxu0 0
    %1613 = vmatpush.bf16.msra.mxu0 0
    %1614 = vmatpush.bf16.msra.mxu0 %v418
    %1615 = vmatmul.bf16.gmra.mxu0 %v308
    %v1616 = vpop.f32.mrf.mxu0
    %v1617 = vadd.f32 %v116, %v1616
    %v1618 = vpop.f32.mrf.mxu0
    %v1619 = vadd.f32 %v116, %v1618
    %1620 = vmatmul.bf16.gmra.mxu0 %v311
    %v1621 = vpop.f32.mrf.mxu0
    %v1622 = vadd.f32 %v116, %v1621
    %v1623 = vpop.f32.mrf.mxu0
    %v1624 = vadd.f32 %v116, %v1623
    %1625 = vmatmul.bf16.gmra.mxu0 %v314
    %v1626 = vpop.f32.mrf.mxu0
    %v1627 = vadd.f32 %v116, %v1626
    %v1628 = vpop.f32.mrf.mxu0
    %v1629 = vadd.f32 %v116, %v1628
    %1630 = vmatmul.bf16.gmra.mxu0 %v317
    %v1631 = vpop.f32.mrf.mxu0
    %v1632 = vadd.f32 %v116, %v1631
    %v1633 = vpop.f32.mrf.mxu0
    %v1634 = vadd.f32 %v116, %v1633
    %1635 = vmatmul.bf16.gmra.mxu0 %v320
    %v1636 = vpop.f32.mrf.mxu0
    %v1637 = vadd.f32 %v116, %v1636
    %v1638 = vpop.f32.mrf.mxu0
    %v1639 = vadd.f32 %v116, %v1638
    %1640 = vmatmul.bf16.gmra.mxu0 %v323
    %v1641 = vpop.f32.mrf.mxu0
    %v1642 = vadd.f32 %v116, %v1641
    %v1643 = vpop.f32.mrf.mxu0
    %v1644 = vadd.f32 %v116, %v1643
    %1645 = vmatmul.bf16.gmra.mxu0 %v326
    %v1646 = vpop.f32.mrf.mxu0
    %v1647 = vadd.f32 %v116, %v1646
    %v1648 = vpop.f32.mrf.mxu0
    %v1649 = vadd.f32 %v116, %v1648
    %1650 = vmatmul.bf16.gmra.mxu0 %v329
    %v1651 = vpop.f32.mrf.mxu0
    %v1652 = vadd.f32 %v116, %v1651
    %v1653 = vpop.f32.mrf.mxu0
    %v1654 = vadd.f32 %v116, %v1653
    %1655 = vmatmul.bf16.gmra.mxu0 %v332
    %v1656 = vpop.f32.mrf.mxu0
    %v1657 = vadd.f32 %v116, %v1656
    %v1658 = vpop.f32.mrf.mxu0
    %v1659 = vadd.f32 %v116, %v1658
    %1660 = vmatmul.bf16.gmra.mxu0 %v335
    %v1661 = vpop.f32.mrf.mxu0
    %v1662 = vadd.f32 %v116, %v1661
    %v1663 = vpop.f32.mrf.mxu0
    %v1664 = vadd.f32 %v116, %v1663
    %1665 = vmatmul.bf16.gmra.mxu0 %v338
    %v1666 = vpop.f32.mrf.mxu0
    %v1667 = vadd.f32 %v116, %v1666
    %v1668 = vpop.f32.mrf.mxu0
    %v1669 = vadd.f32 %v116, %v1668
    %1670 = vmatmul.bf16.gmra.mxu0 %v341
    %v1671 = vpop.f32.mrf.mxu0
    %v1672 = vadd.f32 %v116, %v1671
    %v1673 = vpop.f32.mrf.mxu0
    %v1674 = vadd.f32 %v116, %v1673
    %1675 = vmatmul.bf16.gmra.mxu0 %v344
    %v1676 = vpop.f32.mrf.mxu0
    %v1677 = vadd.f32 %v116, %v1676
    %v1678 = vpop.f32.mrf.mxu0
    %v1679 = vadd.f32 %v116, %v1678
    %1680 = vmatmul.bf16.gmra.mxu0 %v347
    %v1681 = vpop.f32.mrf.mxu0
    %v1682 = vadd.f32 %v116, %v1681
    %v1683 = vpop.f32.mrf.mxu0
    %v1684 = vadd.f32 %v116, %v1683
    %1685 = vmatmul.bf16.gmra.mxu0 %v350
    %v1686 = vpop.f32.mrf.mxu0
    %v1687 = vadd.f32 %v116, %v1686
    %v1688 = vpop.f32.mrf.mxu0
    %v1689 = vadd.f32 %v116, %v1688
    %1690 = vmatmul.bf16.gmra.mxu0 %v353
    %v1691 = vpop.f32.mrf.mxu0
    %v1692 = vadd.f32 %v116, %v1691
    %v1693 = vpop.f32.mrf.mxu0
    %v1694 = vadd.f32 %v116, %v1693
    %1695 = vmatmul.bf16.gmra.mxu0 %v356
    %v1696 = vpop.f32.mrf.mxu0
    %v1697 = vadd.f32 %v116, %v1696
    %v1698 = vpop.f32.mrf.mxu0
    %v1699 = vadd.f32 %v116, %v1698
    %1700 = vmatmul.bf16.gmra.mxu0 %v359
    %v1701 = vpop.f32.mrf.mxu0
    %v1702 = vadd.f32 %v116, %v1701
    %v1703 = vpop.f32.mrf.mxu0
    %v1704 = vadd.f32 %v116, %v1703
    %1705 = vmatmul.bf16.gmra.mxu0 %v362
    %v1706 = vpop.f32.mrf.mxu0
    %v1707 = vadd.f32 %v116, %v1706
    %v1708 = vpop.f32.mrf.mxu0
    %v1709 = vadd.f32 %v116, %v1708
    %1710 = vmatmul.bf16.gmra.mxu0 %v365
    %v1711 = vpop.f32.mrf.mxu0
    %v1712 = vadd.f32 %v116, %v1711
    %v1713 = vpop.f32.mrf.mxu0
    %v1714 = vadd.f32 %v116, %v1713
    %1715 = vmatmul.bf16.gmra.mxu0 %v368
    %v1716 = vpop.f32.mrf.mxu0
    %v1717 = vadd.f32 %v116, %v1716
    %v1718 = vpop.f32.mrf.mxu0
    %v1719 = vadd.f32 %v116, %v1718
    %1720 = vmatmul.bf16.gmra.mxu0 %v371
    %v1721 = vpop.f32.mrf.mxu0
    %v1722 = vadd.f32 %v116, %v1721
    %v1723 = vpop.f32.mrf.mxu0
    %v1724 = vadd.f32 %v116, %v1723
    %1725 = vmatmul.bf16.gmra.mxu0 %v374
    %v1726 = vpop.f32.mrf.mxu0
    %v1727 = vadd.f32 %v116, %v1726
    %v1728 = vpop.f32.mrf.mxu0
    %v1729 = vadd.f32 %v116, %v1728
    %1730 = vmatmul.bf16.gmra.mxu0 %v377
    %v1731 = vpop.f32.mrf.mxu0
    %v1732 = vadd.f32 %v116, %v1731
    %v1733 = vpop.f32.mrf.mxu0
    %v1734 = vadd.f32 %v116, %v1733
    %1735 = vmatmul.bf16.gmra.mxu0 %v380
    %v1736 = vpop.f32.mrf.mxu0
    %v1737 = vadd.f32 %v116, %v1736
    %v1738 = vpop.f32.mrf.mxu0
    %v1739 = vadd.f32 %v116, %v1738
    %1740 = vmatmul.bf16.gmra.mxu0 %v383
    %v1741 = vpop.f32.mrf.mxu0
    %v1742 = vadd.f32 %v116, %v1741
    %v1743 = vpop.f32.mrf.mxu0
    %v1744 = vadd.f32 %v116, %v1743
    %1745 = vmatmul.bf16.gmra.mxu0 %v386
    %v1746 = vpop.f32.mrf.mxu0
    %v1747 = vadd.f32 %v116, %v1746
    %v1748 = vpop.f32.mrf.mxu0
    %v1749 = vadd.f32 %v116, %v1748
    %1750 = vmatmul.bf16.gmra.mxu0 %v389
    %v1751 = vpop.f32.mrf.mxu0
    %v1752 = vadd.f32 %v116, %v1751
    %v1753 = vpop.f32.mrf.mxu0
    %v1754 = vadd.f32 %v116, %v1753
    %1755 = vmatmul.bf16.gmra.mxu0 %v392
    %v1756 = vpop.f32.mrf.mxu0
    %v1757 = vadd.f32 %v116, %v1756
    %v1758 = vpop.f32.mrf.mxu0
    %v1759 = vadd.f32 %v116, %v1758
    %1760 = vmatmul.bf16.gmra.mxu0 %v395
    %v1761 = vpop.f32.mrf.mxu0
    %v1762 = vadd.f32 %v116, %v1761
    %v1763 = vpop.f32.mrf.mxu0
    %v1764 = vadd.f32 %v116, %v1763
    %1765 = vmatmul.bf16.gmra.mxu0 %v398
    %v1766 = vpop.f32.mrf.mxu0
    %v1767 = vadd.f32 %v116, %v1766
    %v1768 = vpop.f32.mrf.mxu0
    %v1769 = vadd.f32 %v116, %v1768
    %1770 = vmatmul.bf16.gmra.mxu0 %v401
    %v1771 = vpop.f32.mrf.mxu0
    %v1772 = vadd.f32 %v116, %v1771
    %v1773 = vpop.f32.mrf.mxu0
    %v1774 = vadd.f32 %v116, %v1773
    %1775 = vdwg.mxu0
    %1776 = vmatpush.bf16.msra.mxu0 0
    %1777 = vmatpush.bf16.msra.mxu0 0
    %1778 = vmatpush.bf16.msra.mxu0 0
    %1779 = vmatpush.bf16.msra.mxu0 0
    %1780 = vmatpush.bf16.msra.mxu0 0
    %1781 = vmatpush.bf16.msra.mxu0 0
    %1782 = vmatpush.bf16.msra.mxu0 0
    %1783 = vmatpush.bf16.msra.mxu0 %v420
    %1784 = vmatmul.bf16.gmra.mxu0 %v308
    %v1785 = vpop.f32.mrf.mxu0
    %v1786 = vadd.f32 %v117, %v1785
    %v1787 = vpop.f32.mrf.mxu0
    %v1788 = vadd.f32 %v117, %v1787
    %1789 = vmatmul.bf16.gmra.mxu0 %v311
    %v1790 = vpop.f32.mrf.mxu0
    %v1791 = vadd.f32 %v117, %v1790
    %v1792 = vpop.f32.mrf.mxu0
    %v1793 = vadd.f32 %v117, %v1792
    %1794 = vmatmul.bf16.gmra.mxu0 %v314
    %v1795 = vpop.f32.mrf.mxu0
    %v1796 = vadd.f32 %v117, %v1795
    %v1797 = vpop.f32.mrf.mxu0
    %v1798 = vadd.f32 %v117, %v1797
    %1799 = vmatmul.bf16.gmra.mxu0 %v317
    %v1800 = vpop.f32.mrf.mxu0
    %v1801 = vadd.f32 %v117, %v1800
    %v1802 = vpop.f32.mrf.mxu0
    %v1803 = vadd.f32 %v117, %v1802
    %1804 = vmatmul.bf16.gmra.mxu0 %v320
    %v1805 = vpop.f32.mrf.mxu0
    %v1806 = vadd.f32 %v117, %v1805
    %v1807 = vpop.f32.mrf.mxu0
    %v1808 = vadd.f32 %v117, %v1807
    %1809 = vmatmul.bf16.gmra.mxu0 %v323
    %v1810 = vpop.f32.mrf.mxu0
    %v1811 = vadd.f32 %v117, %v1810
    %v1812 = vpop.f32.mrf.mxu0
    %v1813 = vadd.f32 %v117, %v1812
    %1814 = vmatmul.bf16.gmra.mxu0 %v326
    %v1815 = vpop.f32.mrf.mxu0
    %v1816 = vadd.f32 %v117, %v1815
    %v1817 = vpop.f32.mrf.mxu0
    %v1818 = vadd.f32 %v117, %v1817
    %1819 = vmatmul.bf16.gmra.mxu0 %v329
    %v1820 = vpop.f32.mrf.mxu0
    %v1821 = vadd.f32 %v117, %v1820
    %v1822 = vpop.f32.mrf.mxu0
    %v1823 = vadd.f32 %v117, %v1822
    %1824 = vmatmul.bf16.gmra.mxu0 %v332
    %v1825 = vpop.f32.mrf.mxu0
    %v1826 = vadd.f32 %v117, %v1825
    %v1827 = vpop.f32.mrf.mxu0
    %v1828 = vadd.f32 %v117, %v1827
    %1829 = vmatmul.bf16.gmra.mxu0 %v335
    %v1830 = vpop.f32.mrf.mxu0
    %v1831 = vadd.f32 %v117, %v1830
    %v1832 = vpop.f32.mrf.mxu0
    %v1833 = vadd.f32 %v117, %v1832
    %1834 = vmatmul.bf16.gmra.mxu0 %v338
    %v1835 = vpop.f32.mrf.mxu0
    %v1836 = vadd.f32 %v117, %v1835
    %v1837 = vpop.f32.mrf.mxu0
    %v1838 = vadd.f32 %v117, %v1837
    %1839 = vmatmul.bf16.gmra.mxu0 %v341
    %v1840 = vpop.f32.mrf.mxu0
    %v1841 = vadd.f32 %v117, %v1840
    %v1842 = vpop.f32.mrf.mxu0
    %v1843 = vadd.f32 %v117, %v1842
    %1844 = vmatmul.bf16.gmra.mxu0 %v344
    %v1845 = vpop.f32.mrf.mxu0
    %v1846 = vadd.f32 %v117, %v1845
    %v1847 = vpop.f32.mrf.mxu0
    %v1848 = vadd.f32 %v117, %v1847
    %1849 = vmatmul.bf16.gmra.mxu0 %v347
    %v1850 = vpop.f32.mrf.mxu0
    %v1851 = vadd.f32 %v117, %v1850
    %v1852 = vpop.f32.mrf.mxu0
    %v1853 = vadd.f32 %v117, %v1852
    %1854 = vmatmul.bf16.gmra.mxu0 %v350
    %v1855 = vpop.f32.mrf.mxu0
    %v1856 = vadd.f32 %v117, %v1855
    %v1857 = vpop.f32.mrf.mxu0
    %v1858 = vadd.f32 %v117, %v1857
    %1859 = vmatmul.bf16.gmra.mxu0 %v353
    %v1860 = vpop.f32.mrf.mxu0
    %v1861 = vadd.f32 %v117, %v1860
    %v1862 = vpop.f32.mrf.mxu0
    %v1863 = vadd.f32 %v117, %v1862
    %1864 = vmatmul.bf16.gmra.mxu0 %v356
    %v1865 = vpop.f32.mrf.mxu0
    %v1866 = vadd.f32 %v117, %v1865
    %v1867 = vpop.f32.mrf.mxu0
    %v1868 = vadd.f32 %v117, %v1867
    %1869 = vmatmul.bf16.gmra.mxu0 %v359
    %v1870 = vpop.f32.mrf.mxu0
    %v1871 = vadd.f32 %v117, %v1870
    %v1872 = vpop.f32.mrf.mxu0
    %v1873 = vadd.f32 %v117, %v1872
    %1874 = vmatmul.bf16.gmra.mxu0 %v362
    %v1875 = vpop.f32.mrf.mxu0
    %v1876 = vadd.f32 %v117, %v1875
    %v1877 = vpop.f32.mrf.mxu0
    %v1878 = vadd.f32 %v117, %v1877
    %1879 = vmatmul.bf16.gmra.mxu0 %v365
    %v1880 = vpop.f32.mrf.mxu0
    %v1881 = vadd.f32 %v117, %v1880
    %v1882 = vpop.f32.mrf.mxu0
    %v1883 = vadd.f32 %v117, %v1882
    %1884 = vmatmul.bf16.gmra.mxu0 %v368
    %v1885 = vpop.f32.mrf.mxu0
    %v1886 = vadd.f32 %v117, %v1885
    %v1887 = vpop.f32.mrf.mxu0
    %v1888 = vadd.f32 %v117, %v1887
    %1889 = vmatmul.bf16.gmra.mxu0 %v371
    %v1890 = vpop.f32.mrf.mxu0
    %v1891 = vadd.f32 %v117, %v1890
    %v1892 = vpop.f32.mrf.mxu0
    %v1893 = vadd.f32 %v117, %v1892
    %1894 = vmatmul.bf16.gmra.mxu0 %v374
    %v1895 = vpop.f32.mrf.mxu0
    %v1896 = vadd.f32 %v117, %v1895
    %v1897 = vpop.f32.mrf.mxu0
    %v1898 = vadd.f32 %v117, %v1897
    %1899 = vmatmul.bf16.gmra.mxu0 %v377
    %v1900 = vpop.f32.mrf.mxu0
    %v1901 = vadd.f32 %v117, %v1900
    %v1902 = vpop.f32.mrf.mxu0
    %v1903 = vadd.f32 %v117, %v1902
    %1904 = vmatmul.bf16.gmra.mxu0 %v380
    %v1905 = vpop.f32.mrf.mxu0
    %v1906 = vadd.f32 %v117, %v1905
    %v1907 = vpop.f32.mrf.mxu0
    %v1908 = vadd.f32 %v117, %v1907
    %1909 = vmatmul.bf16.gmra.mxu0 %v383
    %v1910 = vpop.f32.mrf.mxu0
    %v1911 = vadd.f32 %v117, %v1910
    %v1912 = vpop.f32.mrf.mxu0
    %v1913 = vadd.f32 %v117, %v1912
    %1914 = vmatmul.bf16.gmra.mxu0 %v386
    %v1915 = vpop.f32.mrf.mxu0
    %v1916 = vadd.f32 %v117, %v1915
    %v1917 = vpop.f32.mrf.mxu0
    %v1918 = vadd.f32 %v117, %v1917
    %1919 = vmatmul.bf16.gmra.mxu0 %v389
    %v1920 = vpop.f32.mrf.mxu0
    %v1921 = vadd.f32 %v117, %v1920
    %v1922 = vpop.f32.mrf.mxu0
    %v1923 = vadd.f32 %v117, %v1922
    %1924 = vmatmul.bf16.gmra.mxu0 %v392
    %v1925 = vpop.f32.mrf.mxu0
    %v1926 = vadd.f32 %v117, %v1925
    %v1927 = vpop.f32.mrf.mxu0
    %v1928 = vadd.f32 %v117, %v1927
    %1929 = vmatmul.bf16.gmra.mxu0 %v395
    %v1930 = vpop.f32.mrf.mxu0
    %v1931 = vadd.f32 %v117, %v1930
    %v1932 = vpop.f32.mrf.mxu0
    %v1933 = vadd.f32 %v117, %v1932
    %1934 = vmatmul.bf16.gmra.mxu0 %v398
    %v1935 = vpop.f32.mrf.mxu0
    %v1936 = vadd.f32 %v117, %v1935
    %v1937 = vpop.f32.mrf.mxu0
    %v1938 = vadd.f32 %v117, %v1937
    %1939 = vmatmul.bf16.gmra.mxu0 %v401
    %v1940 = vpop.f32.mrf.mxu0
    %v1941 = vadd.f32 %v117, %v1940
    %v1942 = vpop.f32.mrf.mxu0
    %v1943 = vadd.f32 %v117, %v1942
    %1944 = vdwg.mxu0
    %1945 = vmatpush.bf16.msra.mxu0 0
    %1946 = vmatpush.bf16.msra.mxu0 0
    %1947 = vmatpush.bf16.msra.mxu0 0
    %1948 = vmatpush.bf16.msra.mxu0 0
    %1949 = vmatpush.bf16.msra.mxu0 0
    %1950 = vmatpush.bf16.msra.mxu0 0
    %1951 = vmatpush.bf16.msra.mxu0 0
    %1952 = vmatpush.bf16.msra.mxu0 %v422
    %1953 = vmatmul.bf16.gmra.mxu0 %v308
    %v1954 = vpop.f32.mrf.mxu0
    %v1955 = vadd.f32 %v118, %v1954
    %v1956 = vpop.f32.mrf.mxu0
    %v1957 = vadd.f32 %v118, %v1956
    %1958 = vmatmul.bf16.gmra.mxu0 %v311
    %v1959 = vpop.f32.mrf.mxu0
    %v1960 = vadd.f32 %v118, %v1959
    %v1961 = vpop.f32.mrf.mxu0
    %v1962 = vadd.f32 %v118, %v1961
    %1963 = vmatmul.bf16.gmra.mxu0 %v314
    %v1964 = vpop.f32.mrf.mxu0
    %v1965 = vadd.f32 %v118, %v1964
    %v1966 = vpop.f32.mrf.mxu0
    %v1967 = vadd.f32 %v118, %v1966
    %1968 = vmatmul.bf16.gmra.mxu0 %v317
    %v1969 = vpop.f32.mrf.mxu0
    %v1970 = vadd.f32 %v118, %v1969
    %v1971 = vpop.f32.mrf.mxu0
    %v1972 = vadd.f32 %v118, %v1971
    %1973 = vmatmul.bf16.gmra.mxu0 %v320
    %v1974 = vpop.f32.mrf.mxu0
    %v1975 = vadd.f32 %v118, %v1974
    %v1976 = vpop.f32.mrf.mxu0
    %v1977 = vadd.f32 %v118, %v1976
    %1978 = vmatmul.bf16.gmra.mxu0 %v323
    %v1979 = vpop.f32.mrf.mxu0
    %v1980 = vadd.f32 %v118, %v1979
    %v1981 = vpop.f32.mrf.mxu0
    %v1982 = vadd.f32 %v118, %v1981
    %1983 = vmatmul.bf16.gmra.mxu0 %v326
    %v1984 = vpop.f32.mrf.mxu0
    %v1985 = vadd.f32 %v118, %v1984
    %v1986 = vpop.f32.mrf.mxu0
    %v1987 = vadd.f32 %v118, %v1986
    %1988 = vmatmul.bf16.gmra.mxu0 %v329
    %v1989 = vpop.f32.mrf.mxu0
    %v1990 = vadd.f32 %v118, %v1989
    %v1991 = vpop.f32.mrf.mxu0
    %v1992 = vadd.f32 %v118, %v1991
    %1993 = vmatmul.bf16.gmra.mxu0 %v332
    %v1994 = vpop.f32.mrf.mxu0
    %v1995 = vadd.f32 %v118, %v1994
    %v1996 = vpop.f32.mrf.mxu0
    %v1997 = vadd.f32 %v118, %v1996
    %1998 = vmatmul.bf16.gmra.mxu0 %v335
    %v1999 = vpop.f32.mrf.mxu0
    %v2000 = vadd.f32 %v118, %v1999
    %v2001 = vpop.f32.mrf.mxu0
    %v2002 = vadd.f32 %v118, %v2001
    %2003 = vmatmul.bf16.gmra.mxu0 %v338
    %v2004 = vpop.f32.mrf.mxu0
    %v2005 = vadd.f32 %v118, %v2004
    %v2006 = vpop.f32.mrf.mxu0
    %v2007 = vadd.f32 %v118, %v2006
    %2008 = vmatmul.bf16.gmra.mxu0 %v341
    %v2009 = vpop.f32.mrf.mxu0
    %v2010 = vadd.f32 %v118, %v2009
    %v2011 = vpop.f32.mrf.mxu0
    %v2012 = vadd.f32 %v118, %v2011
    %2013 = vmatmul.bf16.gmra.mxu0 %v344
    %v2014 = vpop.f32.mrf.mxu0
    %v2015 = vadd.f32 %v118, %v2014
    %v2016 = vpop.f32.mrf.mxu0
    %v2017 = vadd.f32 %v118, %v2016
    %2018 = vmatmul.bf16.gmra.mxu0 %v347
    %v2019 = vpop.f32.mrf.mxu0
    %v2020 = vadd.f32 %v118, %v2019
    %v2021 = vpop.f32.mrf.mxu0
    %v2022 = vadd.f32 %v118, %v2021
    %2023 = vmatmul.bf16.gmra.mxu0 %v350
    %v2024 = vpop.f32.mrf.mxu0
    %v2025 = vadd.f32 %v118, %v2024
    %v2026 = vpop.f32.mrf.mxu0
    %v2027 = vadd.f32 %v118, %v2026
    %2028 = vmatmul.bf16.gmra.mxu0 %v353
    %v2029 = vpop.f32.mrf.mxu0
    %v2030 = vadd.f32 %v118, %v2029
    %v2031 = vpop.f32.mrf.mxu0
    %v2032 = vadd.f32 %v118, %v2031
    %2033 = vmatmul.bf16.gmra.mxu0 %v356
    %v2034 = vpop.f32.mrf.mxu0
    %v2035 = vadd.f32 %v118, %v2034
    %v2036 = vpop.f32.mrf.mxu0
    %v2037 = vadd.f32 %v118, %v2036
    %2038 = vmatmul.bf16.gmra.mxu0 %v359
    %v2039 = vpop.f32.mrf.mxu0
    %v2040 = vadd.f32 %v118, %v2039
    %v2041 = vpop.f32.mrf.mxu0
    %v2042 = vadd.f32 %v118, %v2041
    %2043 = vmatmul.bf16.gmra.mxu0 %v362
    %v2044 = vpop.f32.mrf.mxu0
    %v2045 = vadd.f32 %v118, %v2044
    %v2046 = vpop.f32.mrf.mxu0
    %v2047 = vadd.f32 %v118, %v2046
    %2048 = vmatmul.bf16.gmra.mxu0 %v365
    %v2049 = vpop.f32.mrf.mxu0
    %v2050 = vadd.f32 %v118, %v2049
    %v2051 = vpop.f32.mrf.mxu0
    %v2052 = vadd.f32 %v118, %v2051
    %2053 = vmatmul.bf16.gmra.mxu0 %v368
    %v2054 = vpop.f32.mrf.mxu0
    %v2055 = vadd.f32 %v118, %v2054
    %v2056 = vpop.f32.mrf.mxu0
    %v2057 = vadd.f32 %v118, %v2056
    %2058 = vmatmul.bf16.gmra.mxu0 %v371
    %v2059 = vpop.f32.mrf.mxu0
    %v2060 = vadd.f32 %v118, %v2059
    %v2061 = vpop.f32.mrf.mxu0
    %v2062 = vadd.f32 %v118, %v2061
    %2063 = vmatmul.bf16.gmra.mxu0 %v374
    %v2064 = vpop.f32.mrf.mxu0
    %v2065 = vadd.f32 %v118, %v2064
    %v2066 = vpop.f32.mrf.mxu0
    %v2067 = vadd.f32 %v118, %v2066
    %2068 = vmatmul.bf16.gmra.mxu0 %v377
    %v2069 = vpop.f32.mrf.mxu0
    %v2070 = vadd.f32 %v118, %v2069
    %v2071 = vpop.f32.mrf.mxu0
    %v2072 = vadd.f32 %v118, %v2071
    %2073 = vmatmul.bf16.gmra.mxu0 %v380
    %v2074 = vpop.f32.mrf.mxu0
    %v2075 = vadd.f32 %v118, %v2074
    %v2076 = vpop.f32.mrf.mxu0
    %v2077 = vadd.f32 %v118, %v2076
    %2078 = vmatmul.bf16.gmra.mxu0 %v383
    %v2079 = vpop.f32.mrf.mxu0
    %v2080 = vadd.f32 %v118, %v2079
    %v2081 = vpop.f32.mrf.mxu0
    %v2082 = vadd.f32 %v118, %v2081
    %2083 = vmatmul.bf16.gmra.mxu0 %v386
    %v2084 = vpop.f32.mrf.mxu0
    %v2085 = vadd.f32 %v118, %v2084
    %v2086 = vpop.f32.mrf.mxu0
    %v2087 = vadd.f32 %v118, %v2086
    %2088 = vmatmul.bf16.gmra.mxu0 %v389
    %v2089 = vpop.f32.mrf.mxu0
    %v2090 = vadd.f32 %v118, %v2089
    %v2091 = vpop.f32.mrf.mxu0
    %v2092 = vadd.f32 %v118, %v2091
    %2093 = vmatmul.bf16.gmra.mxu0 %v392
    %v2094 = vpop.f32.mrf.mxu0
    %v2095 = vadd.f32 %v118, %v2094
    %v2096 = vpop.f32.mrf.mxu0
    %v2097 = vadd.f32 %v118, %v2096
    %2098 = vmatmul.bf16.gmra.mxu0 %v395
    %v2099 = vpop.f32.mrf.mxu0
    %v2100 = vadd.f32 %v118, %v2099
    %v2101 = vpop.f32.mrf.mxu0
    %v2102 = vadd.f32 %v118, %v2101
    %2103 = vmatmul.bf16.gmra.mxu0 %v398
    %v2104 = vpop.f32.mrf.mxu0
    %v2105 = vadd.f32 %v118, %v2104
    %v2106 = vpop.f32.mrf.mxu0
    %v2107 = vadd.f32 %v118, %v2106
    %2108 = vmatmul.bf16.gmra.mxu0 %v401
    %v2109 = vpop.f32.mrf.mxu0
    %v2110 = vadd.f32 %v118, %v2109
    %v2111 = vpop.f32.mrf.mxu0
    %v2112 = vadd.f32 %v118, %v2111
    %2113 = vdwg.mxu0
    %v2114 = vmul.f32 %v434, 0.5
    %v2115 = vmul.f32 %v603, 0.5
    %v2116 = vmul.f32 %v772, 0.5
    %v2117 = vmul.f32 %v941, 0.5
    %v2118 = vmul.f32 %v1110, 0.5
    %v2119 = vmul.f32 %v1279, 0.5
    %v2120 = vmul.f32 %v1448, 0.5
    %v2121 = vmul.f32 %v1617, 0.5
    %v2122 = vmul.f32 %v1786, 0.5
    %v2123 = vmul.f32 %v1955, 0.5
    %v2124 = vmul.f32 %v436, 0.5
    %v2125 = vmul.f32 %v605, 0.5
    %v2126 = vmul.f32 %v774, 0.5
    %v2127 = vmul.f32 %v943, 0.5
    %v2128 = vmul.f32 %v1112, 0.5
    %v2129 = vmul.f32 %v1281, 0.5
    %v2130 = vmul.f32 %v1450, 0.5
    %v2131 = vmul.f32 %v1619, 0.5
    %v2132 = vmul.f32 %v1788, 0.5
    %v2133 = vmul.f32 %v1957, 0.5
    %v2134 = vmul.f32 %v439, 0.5
    %v2135 = vmul.f32 %v608, 0.5
    %v2136 = vmul.f32 %v777, 0.5
    %v2137 = vmul.f32 %v946, 0.5
    %v2138 = vmul.f32 %v1115, 0.5
    %v2139 = vmul.f32 %v1284, 0.5
    %v2140 = vmul.f32 %v1453, 0.5
    %v2141 = vmul.f32 %v1622, 0.5
    %v2142 = vmul.f32 %v1791, 0.5
    %v2143 = vmul.f32 %v1960, 0.5
    %v2144 = vmul.f32 %v441, 0.5
    %v2145 = vmul.f32 %v610, 0.5
    %v2146 = vmul.f32 %v779, 0.5
    %v2147 = vmul.f32 %v948, 0.5
    %v2148 = vmul.f32 %v1117, 0.5
    %v2149 = vmul.f32 %v1286, 0.5
    %v2150 = vmul.f32 %v1455, 0.5
    %v2151 = vmul.f32 %v1624, 0.5
    %v2152 = vmul.f32 %v1793, 0.5
    %v2153 = vmul.f32 %v1962, 0.5
    %v2154 = vmul.f32 %v444, 0.5
    %v2155 = vmul.f32 %v613, 0.5
    %v2156 = vmul.f32 %v782, 0.5
    %v2157 = vmul.f32 %v951, 0.5
    %v2158 = vmul.f32 %v1120, 0.5
    %v2159 = vmul.f32 %v1289, 0.5
    %v2160 = vmul.f32 %v1458, 0.5
    %v2161 = vmul.f32 %v1627, 0.5
    %v2162 = vmul.f32 %v1796, 0.5
    %v2163 = vmul.f32 %v1965, 0.5
    %v2164 = vmul.f32 %v446, 0.5
    %v2165 = vmul.f32 %v615, 0.5
    %v2166 = vmul.f32 %v784, 0.5
    %v2167 = vmul.f32 %v953, 0.5
    %v2168 = vmul.f32 %v1122, 0.5
    %v2169 = vmul.f32 %v1291, 0.5
    %v2170 = vmul.f32 %v1460, 0.5
    %v2171 = vmul.f32 %v1629, 0.5
    %v2172 = vmul.f32 %v1798, 0.5
    %v2173 = vmul.f32 %v1967, 0.5
    %v2174 = vmul.f32 %v449, 0.5
    %v2175 = vmul.f32 %v618, 0.5
    %v2176 = vmul.f32 %v787, 0.5
    %v2177 = vmul.f32 %v956, 0.5
    %v2178 = vmul.f32 %v1125, 0.5
    %v2179 = vmul.f32 %v1294, 0.5
    %v2180 = vmul.f32 %v1463, 0.5
    %v2181 = vmul.f32 %v1632, 0.5
    %v2182 = vmul.f32 %v1801, 0.5
    %v2183 = vmul.f32 %v1970, 0.5
    %v2184 = vmul.f32 %v451, 0.5
    %v2185 = vmul.f32 %v620, 0.5
    %v2186 = vmul.f32 %v789, 0.5
    %v2187 = vmul.f32 %v958, 0.5
    %v2188 = vmul.f32 %v1127, 0.5
    %v2189 = vmul.f32 %v1296, 0.5
    %v2190 = vmul.f32 %v1465, 0.5
    %v2191 = vmul.f32 %v1634, 0.5
    %v2192 = vmul.f32 %v1803, 0.5
    %v2193 = vmul.f32 %v1972, 0.5
    %v2194 = vmul.f32 %v454, 0.5
    %v2195 = vmul.f32 %v623, 0.5
    %v2196 = vmul.f32 %v792, 0.5
    %v2197 = vmul.f32 %v961, 0.5
    %v2198 = vmul.f32 %v1130, 0.5
    %v2199 = vmul.f32 %v1299, 0.5
    %v2200 = vmul.f32 %v1468, 0.5
    %v2201 = vmul.f32 %v1637, 0.5
    %v2202 = vmul.f32 %v1806, 0.5
    %v2203 = vmul.f32 %v1975, 0.5
    %v2204 = vmul.f32 %v456, 0.5
    %v2205 = vmul.f32 %v625, 0.5
    %v2206 = vmul.f32 %v794, 0.5
    %v2207 = vmul.f32 %v963, 0.5
    %v2208 = vmul.f32 %v1132, 0.5
    %v2209 = vmul.f32 %v1301, 0.5
    %v2210 = vmul.f32 %v1470, 0.5
    %v2211 = vmul.f32 %v1639, 0.5
    %v2212 = vmul.f32 %v1808, 0.5
    %v2213 = vmul.f32 %v1977, 0.5
    %v2214 = vmul.f32 %v459, 0.5
    %v2215 = vmul.f32 %v628, 0.5
    %v2216 = vmul.f32 %v797, 0.5
    %v2217 = vmul.f32 %v966, 0.5
    %v2218 = vmul.f32 %v1135, 0.5
    %v2219 = vmul.f32 %v1304, 0.5
    %v2220 = vmul.f32 %v1473, 0.5
    %v2221 = vmul.f32 %v1642, 0.5
    %v2222 = vmul.f32 %v1811, 0.5
    %v2223 = vmul.f32 %v1980, 0.5
    %v2224 = vmul.f32 %v461, 0.5
    %v2225 = vmul.f32 %v630, 0.5
    %v2226 = vmul.f32 %v799, 0.5
    %v2227 = vmul.f32 %v968, 0.5
    %v2228 = vmul.f32 %v1137, 0.5
    %v2229 = vmul.f32 %v1306, 0.5
    %v2230 = vmul.f32 %v1475, 0.5
    %v2231 = vmul.f32 %v1644, 0.5
    %v2232 = vmul.f32 %v1813, 0.5
    %v2233 = vmul.f32 %v1982, 0.5
    %v2234 = vmul.f32 %v464, 0.5
    %v2235 = vmul.f32 %v633, 0.5
    %v2236 = vmul.f32 %v802, 0.5
    %v2237 = vmul.f32 %v971, 0.5
    %v2238 = vmul.f32 %v1140, 0.5
    %v2239 = vmul.f32 %v1309, 0.5
    %v2240 = vmul.f32 %v1478, 0.5
    %v2241 = vmul.f32 %v1647, 0.5
    %v2242 = vmul.f32 %v1816, 0.5
    %v2243 = vmul.f32 %v1985, 0.5
    %v2244 = vmul.f32 %v466, 0.5
    %v2245 = vmul.f32 %v635, 0.5
    %v2246 = vmul.f32 %v804, 0.5
    %v2247 = vmul.f32 %v973, 0.5
    %v2248 = vmul.f32 %v1142, 0.5
    %v2249 = vmul.f32 %v1311, 0.5
    %v2250 = vmul.f32 %v1480, 0.5
    %v2251 = vmul.f32 %v1649, 0.5
    %v2252 = vmul.f32 %v1818, 0.5
    %v2253 = vmul.f32 %v1987, 0.5
    %v2254 = vmul.f32 %v469, 0.5
    %v2255 = vmul.f32 %v638, 0.5
    %v2256 = vmul.f32 %v807, 0.5
    %v2257 = vmul.f32 %v976, 0.5
    %v2258 = vmul.f32 %v1145, 0.5
    %v2259 = vmul.f32 %v1314, 0.5
    %v2260 = vmul.f32 %v1483, 0.5
    %v2261 = vmul.f32 %v1652, 0.5
    %v2262 = vmul.f32 %v1821, 0.5
    %v2263 = vmul.f32 %v1990, 0.5
    %v2264 = vmul.f32 %v471, 0.5
    %v2265 = vmul.f32 %v640, 0.5
    %v2266 = vmul.f32 %v809, 0.5
    %v2267 = vmul.f32 %v978, 0.5
    %v2268 = vmul.f32 %v1147, 0.5
    %v2269 = vmul.f32 %v1316, 0.5
    %v2270 = vmul.f32 %v1485, 0.5
    %v2271 = vmul.f32 %v1654, 0.5
    %v2272 = vmul.f32 %v1823, 0.5
    %v2273 = vmul.f32 %v1992, 0.5
    %v2274 = vmul.f32 %v474, 0.5
    %v2275 = vmul.f32 %v643, 0.5
    %v2276 = vmul.f32 %v812, 0.5
    %v2277 = vmul.f32 %v981, 0.5
    %v2278 = vmul.f32 %v1150, 0.5
    %v2279 = vmul.f32 %v1319, 0.5
    %v2280 = vmul.f32 %v1488, 0.5
    %v2281 = vmul.f32 %v1657, 0.5
    %v2282 = vmul.f32 %v1826, 0.5
    %v2283 = vmul.f32 %v1995, 0.5
    %v2284 = vmul.f32 %v476, 0.5
    %v2285 = vmul.f32 %v645, 0.5
    %v2286 = vmul.f32 %v814, 0.5
    %v2287 = vmul.f32 %v983, 0.5
    %v2288 = vmul.f32 %v1152, 0.5
    %v2289 = vmul.f32 %v1321, 0.5
    %v2290 = vmul.f32 %v1490, 0.5
    %v2291 = vmul.f32 %v1659, 0.5
    %v2292 = vmul.f32 %v1828, 0.5
    %v2293 = vmul.f32 %v1997, 0.5
    %v2294 = vmul.f32 %v479, 0.5
    %v2295 = vmul.f32 %v648, 0.5
    %v2296 = vmul.f32 %v817, 0.5
    %v2297 = vmul.f32 %v986, 0.5
    %v2298 = vmul.f32 %v1155, 0.5
    %v2299 = vmul.f32 %v1324, 0.5
    %v2300 = vmul.f32 %v1493, 0.5
    %v2301 = vmul.f32 %v1662, 0.5
    %v2302 = vmul.f32 %v1831, 0.5
    %v2303 = vmul.f32 %v2000, 0.5
    %v2304 = vmul.f32 %v481, 0.5
    %v2305 = vmul.f32 %v650, 0.5
    %v2306 = vmul.f32 %v819, 0.5
    %v2307 = vmul.f32 %v988, 0.5
    %v2308 = vmul.f32 %v1157, 0.5
    %v2309 = vmul.f32 %v1326, 0.5
    %v2310 = vmul.f32 %v1495, 0.5
    %v2311 = vmul.f32 %v1664, 0.5
    %v2312 = vmul.f32 %v1833, 0.5
    %v2313 = vmul.f32 %v2002, 0.5
    %v2314 = vmul.f32 %v484, 0.5
    %v2315 = vmul.f32 %v653, 0.5
    %v2316 = vmul.f32 %v822, 0.5
    %v2317 = vmul.f32 %v991, 0.5
    %v2318 = vmul.f32 %v1160, 0.5
    %v2319 = vmul.f32 %v1329, 0.5
    %v2320 = vmul.f32 %v1498, 0.5
    %v2321 = vmul.f32 %v1667, 0.5
    %v2322 = vmul.f32 %v1836, 0.5
    %v2323 = vmul.f32 %v2005, 0.5
    %v2324 = vmul.f32 %v486, 0.5
    %v2325 = vmul.f32 %v655, 0.5
    %v2326 = vmul.f32 %v824, 0.5
    %v2327 = vmul.f32 %v993, 0.5
    %v2328 = vmul.f32 %v1162, 0.5
    %v2329 = vmul.f32 %v1331, 0.5
    %v2330 = vmul.f32 %v1500, 0.5
    %v2331 = vmul.f32 %v1669, 0.5
    %v2332 = vmul.f32 %v1838, 0.5
    %v2333 = vmul.f32 %v2007, 0.5
    %v2334 = vmul.f32 %v489, 0.5
    %v2335 = vmul.f32 %v658, 0.5
    %v2336 = vmul.f32 %v827, 0.5
    %v2337 = vmul.f32 %v996, 0.5
    %v2338 = vmul.f32 %v1165, 0.5
    %v2339 = vmul.f32 %v1334, 0.5
    %v2340 = vmul.f32 %v1503, 0.5
    %v2341 = vmul.f32 %v1672, 0.5
    %v2342 = vmul.f32 %v1841, 0.5
    %v2343 = vmul.f32 %v2010, 0.5
    %v2344 = vmul.f32 %v491, 0.5
    %v2345 = vmul.f32 %v660, 0.5
    %v2346 = vmul.f32 %v829, 0.5
    %v2347 = vmul.f32 %v998, 0.5
    %v2348 = vmul.f32 %v1167, 0.5
    %v2349 = vmul.f32 %v1336, 0.5
    %v2350 = vmul.f32 %v1505, 0.5
    %v2351 = vmul.f32 %v1674, 0.5
    %v2352 = vmul.f32 %v1843, 0.5
    %v2353 = vmul.f32 %v2012, 0.5
    %v2354 = vmul.f32 %v494, 0.5
    %v2355 = vmul.f32 %v663, 0.5
    %v2356 = vmul.f32 %v832, 0.5
    %v2357 = vmul.f32 %v1001, 0.5
    %v2358 = vmul.f32 %v1170, 0.5
    %v2359 = vmul.f32 %v1339, 0.5
    %v2360 = vmul.f32 %v1508, 0.5
    %v2361 = vmul.f32 %v1677, 0.5
    %v2362 = vmul.f32 %v1846, 0.5
    %v2363 = vmul.f32 %v2015, 0.5
    %v2364 = vmul.f32 %v496, 0.5
    %v2365 = vmul.f32 %v665, 0.5
    %v2366 = vmul.f32 %v834, 0.5
    %v2367 = vmul.f32 %v1003, 0.5
    %v2368 = vmul.f32 %v1172, 0.5
    %v2369 = vmul.f32 %v1341, 0.5
    %v2370 = vmul.f32 %v1510, 0.5
    %v2371 = vmul.f32 %v1679, 0.5
    %v2372 = vmul.f32 %v1848, 0.5
    %v2373 = vmul.f32 %v2017, 0.5
    %v2374 = vmul.f32 %v499, 0.5
    %v2375 = vmul.f32 %v668, 0.5
    %v2376 = vmul.f32 %v837, 0.5
    %v2377 = vmul.f32 %v1006, 0.5
    %v2378 = vmul.f32 %v1175, 0.5
    %v2379 = vmul.f32 %v1344, 0.5
    %v2380 = vmul.f32 %v1513, 0.5
    %v2381 = vmul.f32 %v1682, 0.5
    %v2382 = vmul.f32 %v1851, 0.5
    %v2383 = vmul.f32 %v2020, 0.5
    %v2384 = vmul.f32 %v501, 0.5
    %v2385 = vmul.f32 %v670, 0.5
    %v2386 = vmul.f32 %v839, 0.5
    %v2387 = vmul.f32 %v1008, 0.5
    %v2388 = vmul.f32 %v1177, 0.5
    %v2389 = vmul.f32 %v1346, 0.5
    %v2390 = vmul.f32 %v1515, 0.5
    %v2391 = vmul.f32 %v1684, 0.5
    %v2392 = vmul.f32 %v1853, 0.5
    %v2393 = vmul.f32 %v2022, 0.5
    %v2394 = vmul.f32 %v504, 0.5
    %v2395 = vmul.f32 %v673, 0.5
    %v2396 = vmul.f32 %v842, 0.5
    %v2397 = vmul.f32 %v1011, 0.5
    %v2398 = vmul.f32 %v1180, 0.5
    %v2399 = vmul.f32 %v1349, 0.5
    %v2400 = vmul.f32 %v1518, 0.5
    %v2401 = vmul.f32 %v1687, 0.5
    %v2402 = vmul.f32 %v1856, 0.5
    %v2403 = vmul.f32 %v2025, 0.5
    %v2404 = vmul.f32 %v506, 0.5
    %v2405 = vmul.f32 %v675, 0.5
    %v2406 = vmul.f32 %v844, 0.5
    %v2407 = vmul.f32 %v1013, 0.5
    %v2408 = vmul.f32 %v1182, 0.5
    %v2409 = vmul.f32 %v1351, 0.5
    %v2410 = vmul.f32 %v1520, 0.5
    %v2411 = vmul.f32 %v1689, 0.5
    %v2412 = vmul.f32 %v1858, 0.5
    %v2413 = vmul.f32 %v2027, 0.5
    %v2414 = vmul.f32 %v509, 0.5
    %v2415 = vmul.f32 %v678, 0.5
    %v2416 = vmul.f32 %v847, 0.5
    %v2417 = vmul.f32 %v1016, 0.5
    %v2418 = vmul.f32 %v1185, 0.5
    %v2419 = vmul.f32 %v1354, 0.5
    %v2420 = vmul.f32 %v1523, 0.5
    %v2421 = vmul.f32 %v1692, 0.5
    %v2422 = vmul.f32 %v1861, 0.5
    %v2423 = vmul.f32 %v2030, 0.5
    %v2424 = vmul.f32 %v511, 0.5
    %v2425 = vmul.f32 %v680, 0.5
    %v2426 = vmul.f32 %v849, 0.5
    %v2427 = vmul.f32 %v1018, 0.5
    %v2428 = vmul.f32 %v1187, 0.5
    %v2429 = vmul.f32 %v1356, 0.5
    %v2430 = vmul.f32 %v1525, 0.5
    %v2431 = vmul.f32 %v1694, 0.5
    %v2432 = vmul.f32 %v1863, 0.5
    %v2433 = vmul.f32 %v2032, 0.5
    %v2434 = vmul.f32 %v514, 0.5
    %v2435 = vmul.f32 %v683, 0.5
    %v2436 = vmul.f32 %v852, 0.5
    %v2437 = vmul.f32 %v1021, 0.5
    %v2438 = vmul.f32 %v1190, 0.5
    %v2439 = vmul.f32 %v1359, 0.5
    %v2440 = vmul.f32 %v1528, 0.5
    %v2441 = vmul.f32 %v1697, 0.5
    %v2442 = vmul.f32 %v1866, 0.5
    %v2443 = vmul.f32 %v2035, 0.5
    %v2444 = vmul.f32 %v516, 0.5
    %v2445 = vmul.f32 %v685, 0.5
    %v2446 = vmul.f32 %v854, 0.5
    %v2447 = vmul.f32 %v1023, 0.5
    %v2448 = vmul.f32 %v1192, 0.5
    %v2449 = vmul.f32 %v1361, 0.5
    %v2450 = vmul.f32 %v1530, 0.5
    %v2451 = vmul.f32 %v1699, 0.5
    %v2452 = vmul.f32 %v1868, 0.5
    %v2453 = vmul.f32 %v2037, 0.5
    %v2454 = vmul.f32 %v519, 0.5
    %v2455 = vmul.f32 %v688, 0.5
    %v2456 = vmul.f32 %v857, 0.5
    %v2457 = vmul.f32 %v1026, 0.5
    %v2458 = vmul.f32 %v1195, 0.5
    %v2459 = vmul.f32 %v1364, 0.5
    %v2460 = vmul.f32 %v1533, 0.5
    %v2461 = vmul.f32 %v1702, 0.5
    %v2462 = vmul.f32 %v1871, 0.5
    %v2463 = vmul.f32 %v2040, 0.5
    %v2464 = vmul.f32 %v521, 0.5
    %v2465 = vmul.f32 %v690, 0.5
    %v2466 = vmul.f32 %v859, 0.5
    %v2467 = vmul.f32 %v1028, 0.5
    %v2468 = vmul.f32 %v1197, 0.5
    %v2469 = vmul.f32 %v1366, 0.5
    %v2470 = vmul.f32 %v1535, 0.5
    %v2471 = vmul.f32 %v1704, 0.5
    %v2472 = vmul.f32 %v1873, 0.5
    %v2473 = vmul.f32 %v2042, 0.5
    %v2474 = vmul.f32 %v524, 0.5
    %v2475 = vmul.f32 %v693, 0.5
    %v2476 = vmul.f32 %v862, 0.5
    %v2477 = vmul.f32 %v1031, 0.5
    %v2478 = vmul.f32 %v1200, 0.5
    %v2479 = vmul.f32 %v1369, 0.5
    %v2480 = vmul.f32 %v1538, 0.5
    %v2481 = vmul.f32 %v1707, 0.5
    %v2482 = vmul.f32 %v1876, 0.5
    %v2483 = vmul.f32 %v2045, 0.5
    %v2484 = vmul.f32 %v526, 0.5
    %v2485 = vmul.f32 %v695, 0.5
    %v2486 = vmul.f32 %v864, 0.5
    %v2487 = vmul.f32 %v1033, 0.5
    %v2488 = vmul.f32 %v1202, 0.5
    %v2489 = vmul.f32 %v1371, 0.5
    %v2490 = vmul.f32 %v1540, 0.5
    %v2491 = vmul.f32 %v1709, 0.5
    %v2492 = vmul.f32 %v1878, 0.5
    %v2493 = vmul.f32 %v2047, 0.5
    %v2494 = vmul.f32 %v529, 0.5
    %v2495 = vmul.f32 %v698, 0.5
    %v2496 = vmul.f32 %v867, 0.5
    %v2497 = vmul.f32 %v1036, 0.5
    %v2498 = vmul.f32 %v1205, 0.5
    %v2499 = vmul.f32 %v1374, 0.5
    %v2500 = vmul.f32 %v1543, 0.5
    %v2501 = vmul.f32 %v1712, 0.5
    %v2502 = vmul.f32 %v1881, 0.5
    %v2503 = vmul.f32 %v2050, 0.5
    %v2504 = vmul.f32 %v531, 0.5
    %v2505 = vmul.f32 %v700, 0.5
    %v2506 = vmul.f32 %v869, 0.5
    %v2507 = vmul.f32 %v1038, 0.5
    %v2508 = vmul.f32 %v1207, 0.5
    %v2509 = vmul.f32 %v1376, 0.5
    %v2510 = vmul.f32 %v1545, 0.5
    %v2511 = vmul.f32 %v1714, 0.5
    %v2512 = vmul.f32 %v1883, 0.5
    %v2513 = vmul.f32 %v2052, 0.5
    %v2514 = vmul.f32 %v534, 0.5
    %v2515 = vmul.f32 %v703, 0.5
    %v2516 = vmul.f32 %v872, 0.5
    %v2517 = vmul.f32 %v1041, 0.5
    %v2518 = vmul.f32 %v1210, 0.5
    %v2519 = vmul.f32 %v1379, 0.5
    %v2520 = vmul.f32 %v1548, 0.5
    %v2521 = vmul.f32 %v1717, 0.5
    %v2522 = vmul.f32 %v1886, 0.5
    %v2523 = vmul.f32 %v2055, 0.5
    %v2524 = vmul.f32 %v536, 0.5
    %v2525 = vmul.f32 %v705, 0.5
    %v2526 = vmul.f32 %v874, 0.5
    %v2527 = vmul.f32 %v1043, 0.5
    %v2528 = vmul.f32 %v1212, 0.5
    %v2529 = vmul.f32 %v1381, 0.5
    %v2530 = vmul.f32 %v1550, 0.5
    %v2531 = vmul.f32 %v1719, 0.5
    %v2532 = vmul.f32 %v1888, 0.5
    %v2533 = vmul.f32 %v2057, 0.5
    %v2534 = vmul.f32 %v539, 0.5
    %v2535 = vmul.f32 %v708, 0.5
    %v2536 = vmul.f32 %v877, 0.5
    %v2537 = vmul.f32 %v1046, 0.5
    %v2538 = vmul.f32 %v1215, 0.5
    %v2539 = vmul.f32 %v1384, 0.5
    %v2540 = vmul.f32 %v1553, 0.5
    %v2541 = vmul.f32 %v1722, 0.5
    %v2542 = vmul.f32 %v1891, 0.5
    %v2543 = vmul.f32 %v2060, 0.5
    %v2544 = vmul.f32 %v541, 0.5
    %v2545 = vmul.f32 %v710, 0.5
    %v2546 = vmul.f32 %v879, 0.5
    %v2547 = vmul.f32 %v1048, 0.5
    %v2548 = vmul.f32 %v1217, 0.5
    %v2549 = vmul.f32 %v1386, 0.5
    %v2550 = vmul.f32 %v1555, 0.5
    %v2551 = vmul.f32 %v1724, 0.5
    %v2552 = vmul.f32 %v1893, 0.5
    %v2553 = vmul.f32 %v2062, 0.5
    %v2554 = vmul.f32 %v544, 0.5
    %v2555 = vmul.f32 %v713, 0.5
    %v2556 = vmul.f32 %v882, 0.5
    %v2557 = vmul.f32 %v1051, 0.5
    %v2558 = vmul.f32 %v1220, 0.5
    %v2559 = vmul.f32 %v1389, 0.5
    %v2560 = vmul.f32 %v1558, 0.5
    %v2561 = vmul.f32 %v1727, 0.5
    %v2562 = vmul.f32 %v1896, 0.5
    %v2563 = vmul.f32 %v2065, 0.5
    %v2564 = vmul.f32 %v546, 0.5
    %v2565 = vmul.f32 %v715, 0.5
    %v2566 = vmul.f32 %v884, 0.5
    %v2567 = vmul.f32 %v1053, 0.5
    %v2568 = vmul.f32 %v1222, 0.5
    %v2569 = vmul.f32 %v1391, 0.5
    %v2570 = vmul.f32 %v1560, 0.5
    %v2571 = vmul.f32 %v1729, 0.5
    %v2572 = vmul.f32 %v1898, 0.5
    %v2573 = vmul.f32 %v2067, 0.5
    %v2574 = vmul.f32 %v549, 0.5
    %v2575 = vmul.f32 %v718, 0.5
    %v2576 = vmul.f32 %v887, 0.5
    %v2577 = vmul.f32 %v1056, 0.5
    %v2578 = vmul.f32 %v1225, 0.5
    %v2579 = vmul.f32 %v1394, 0.5
    %v2580 = vmul.f32 %v1563, 0.5
    %v2581 = vmul.f32 %v1732, 0.5
    %v2582 = vmul.f32 %v1901, 0.5
    %v2583 = vmul.f32 %v2070, 0.5
    %v2584 = vmul.f32 %v551, 0.5
    %v2585 = vmul.f32 %v720, 0.5
    %v2586 = vmul.f32 %v889, 0.5
    %v2587 = vmul.f32 %v1058, 0.5
    %v2588 = vmul.f32 %v1227, 0.5
    %v2589 = vmul.f32 %v1396, 0.5
    %v2590 = vmul.f32 %v1565, 0.5
    %v2591 = vmul.f32 %v1734, 0.5
    %v2592 = vmul.f32 %v1903, 0.5
    %v2593 = vmul.f32 %v2072, 0.5
    %v2594 = vmul.f32 %v554, 0.5
    %v2595 = vmul.f32 %v723, 0.5
    %v2596 = vmul.f32 %v892, 0.5
    %v2597 = vmul.f32 %v1061, 0.5
    %v2598 = vmul.f32 %v1230, 0.5
    %v2599 = vmul.f32 %v1399, 0.5
    %v2600 = vmul.f32 %v1568, 0.5
    %v2601 = vmul.f32 %v1737, 0.5
    %v2602 = vmul.f32 %v1906, 0.5
    %v2603 = vmul.f32 %v2075, 0.5
    %v2604 = vmul.f32 %v556, 0.5
    %v2605 = vmul.f32 %v725, 0.5
    %v2606 = vmul.f32 %v894, 0.5
    %v2607 = vmul.f32 %v1063, 0.5
    %v2608 = vmul.f32 %v1232, 0.5
    %v2609 = vmul.f32 %v1401, 0.5
    %v2610 = vmul.f32 %v1570, 0.5
    %v2611 = vmul.f32 %v1739, 0.5
    %v2612 = vmul.f32 %v1908, 0.5
    %v2613 = vmul.f32 %v2077, 0.5
    %v2614 = vmul.f32 %v559, 0.5
    %v2615 = vmul.f32 %v728, 0.5
    %v2616 = vmul.f32 %v897, 0.5
    %v2617 = vmul.f32 %v1066, 0.5
    %v2618 = vmul.f32 %v1235, 0.5
    %v2619 = vmul.f32 %v1404, 0.5
    %v2620 = vmul.f32 %v1573, 0.5
    %v2621 = vmul.f32 %v1742, 0.5
    %v2622 = vmul.f32 %v1911, 0.5
    %v2623 = vmul.f32 %v2080, 0.5
    %v2624 = vmul.f32 %v561, 0.5
    %v2625 = vmul.f32 %v730, 0.5
    %v2626 = vmul.f32 %v899, 0.5
    %v2627 = vmul.f32 %v1068, 0.5
    %v2628 = vmul.f32 %v1237, 0.5
    %v2629 = vmul.f32 %v1406, 0.5
    %v2630 = vmul.f32 %v1575, 0.5
    %v2631 = vmul.f32 %v1744, 0.5
    %v2632 = vmul.f32 %v1913, 0.5
    %v2633 = vmul.f32 %v2082, 0.5
    %v2634 = vmul.f32 %v564, 0.5
    %v2635 = vmul.f32 %v733, 0.5
    %v2636 = vmul.f32 %v902, 0.5
    %v2637 = vmul.f32 %v1071, 0.5
    %v2638 = vmul.f32 %v1240, 0.5
    %v2639 = vmul.f32 %v1409, 0.5
    %v2640 = vmul.f32 %v1578, 0.5
    %v2641 = vmul.f32 %v1747, 0.5
    %v2642 = vmul.f32 %v1916, 0.5
    %v2643 = vmul.f32 %v2085, 0.5
    %v2644 = vmul.f32 %v566, 0.5
    %v2645 = vmul.f32 %v735, 0.5
    %v2646 = vmul.f32 %v904, 0.5
    %v2647 = vmul.f32 %v1073, 0.5
    %v2648 = vmul.f32 %v1242, 0.5
    %v2649 = vmul.f32 %v1411, 0.5
    %v2650 = vmul.f32 %v1580, 0.5
    %v2651 = vmul.f32 %v1749, 0.5
    %v2652 = vmul.f32 %v1918, 0.5
    %v2653 = vmul.f32 %v2087, 0.5
    %v2654 = vmul.f32 %v569, 0.5
    %v2655 = vmul.f32 %v738, 0.5
    %v2656 = vmul.f32 %v907, 0.5
    %v2657 = vmul.f32 %v1076, 0.5
    %v2658 = vmul.f32 %v1245, 0.5
    %v2659 = vmul.f32 %v1414, 0.5
    %v2660 = vmul.f32 %v1583, 0.5
    %v2661 = vmul.f32 %v1752, 0.5
    %v2662 = vmul.f32 %v1921, 0.5
    %v2663 = vmul.f32 %v2090, 0.5
    %v2664 = vmul.f32 %v571, 0.5
    %v2665 = vmul.f32 %v740, 0.5
    %v2666 = vmul.f32 %v909, 0.5
    %v2667 = vmul.f32 %v1078, 0.5
    %v2668 = vmul.f32 %v1247, 0.5
    %v2669 = vmul.f32 %v1416, 0.5
    %v2670 = vmul.f32 %v1585, 0.5
    %v2671 = vmul.f32 %v1754, 0.5
    %v2672 = vmul.f32 %v1923, 0.5
    %v2673 = vmul.f32 %v2092, 0.5
    %v2674 = vmul.f32 %v574, 0.5
    %v2675 = vmul.f32 %v743, 0.5
    %v2676 = vmul.f32 %v912, 0.5
    %v2677 = vmul.f32 %v1081, 0.5
    %v2678 = vmul.f32 %v1250, 0.5
    %v2679 = vmul.f32 %v1419, 0.5
    %v2680 = vmul.f32 %v1588, 0.5
    %v2681 = vmul.f32 %v1757, 0.5
    %v2682 = vmul.f32 %v1926, 0.5
    %v2683 = vmul.f32 %v2095, 0.5
    %v2684 = vmul.f32 %v576, 0.5
    %v2685 = vmul.f32 %v745, 0.5
    %v2686 = vmul.f32 %v914, 0.5
    %v2687 = vmul.f32 %v1083, 0.5
    %v2688 = vmul.f32 %v1252, 0.5
    %v2689 = vmul.f32 %v1421, 0.5
    %v2690 = vmul.f32 %v1590, 0.5
    %v2691 = vmul.f32 %v1759, 0.5
    %v2692 = vmul.f32 %v1928, 0.5
    %v2693 = vmul.f32 %v2097, 0.5
    %v2694 = vmul.f32 %v579, 0.5
    %v2695 = vmul.f32 %v748, 0.5
    %v2696 = vmul.f32 %v917, 0.5
    %v2697 = vmul.f32 %v1086, 0.5
    %v2698 = vmul.f32 %v1255, 0.5
    %v2699 = vmul.f32 %v1424, 0.5
    %v2700 = vmul.f32 %v1593, 0.5
    %v2701 = vmul.f32 %v1762, 0.5
    %v2702 = vmul.f32 %v1931, 0.5
    %v2703 = vmul.f32 %v2100, 0.5
    %v2704 = vmul.f32 %v581, 0.5
    %v2705 = vmul.f32 %v750, 0.5
    %v2706 = vmul.f32 %v919, 0.5
    %v2707 = vmul.f32 %v1088, 0.5
    %v2708 = vmul.f32 %v1257, 0.5
    %v2709 = vmul.f32 %v1426, 0.5
    %v2710 = vmul.f32 %v1595, 0.5
    %v2711 = vmul.f32 %v1764, 0.5
    %v2712 = vmul.f32 %v1933, 0.5
    %v2713 = vmul.f32 %v2102, 0.5
    %v2714 = vmul.f32 %v584, 0.5
    %v2715 = vmul.f32 %v753, 0.5
    %v2716 = vmul.f32 %v922, 0.5
    %v2717 = vmul.f32 %v1091, 0.5
    %v2718 = vmul.f32 %v1260, 0.5
    %v2719 = vmul.f32 %v1429, 0.5
    %v2720 = vmul.f32 %v1598, 0.5
    %v2721 = vmul.f32 %v1767, 0.5
    %v2722 = vmul.f32 %v1936, 0.5
    %v2723 = vmul.f32 %v2105, 0.5
    %v2724 = vmul.f32 %v586, 0.5
    %v2725 = vmul.f32 %v755, 0.5
    %v2726 = vmul.f32 %v924, 0.5
    %v2727 = vmul.f32 %v1093, 0.5
    %v2728 = vmul.f32 %v1262, 0.5
    %v2729 = vmul.f32 %v1431, 0.5
    %v2730 = vmul.f32 %v1600, 0.5
    %v2731 = vmul.f32 %v1769, 0.5
    %v2732 = vmul.f32 %v1938, 0.5
    %v2733 = vmul.f32 %v2107, 0.5
    %v2734 = vmul.f32 %v589, 0.5
    %v2735 = vmul.f32 %v758, 0.5
    %v2736 = vmul.f32 %v927, 0.5
    %v2737 = vmul.f32 %v1096, 0.5
    %v2738 = vmul.f32 %v1265, 0.5
    %v2739 = vmul.f32 %v1434, 0.5
    %v2740 = vmul.f32 %v1603, 0.5
    %v2741 = vmul.f32 %v1772, 0.5
    %v2742 = vmul.f32 %v1941, 0.5
    %v2743 = vmul.f32 %v2110, 0.5
    %v2744 = vmul.f32 %v591, 0.5
    %v2745 = vmul.f32 %v760, 0.5
    %v2746 = vmul.f32 %v929, 0.5
    %v2747 = vmul.f32 %v1098, 0.5
    %v2748 = vmul.f32 %v1267, 0.5
    %v2749 = vmul.f32 %v1436, 0.5
    %v2750 = vmul.f32 %v1605, 0.5
    %v2751 = vmul.f32 %v1774, 0.5
    %v2752 = vmul.f32 %v1943, 0.5
    %v2753 = vmul.f32 %v2112, 0.5
    %v2754 = vtanh.pop %v2114
    %v2755 = vtanh.pop %v2115
    %v2756 = vtanh.pop %v2116
    %v2757 = vtanh.pop %v2117
    %v2758 = vtanh.pop %v2118
    %v2759 = vtanh.pop %v2119
    %v2760 = vtanh.pop %v2120
    %v2761 = vtanh.pop %v2121
    %v2762 = vtanh.pop %v2122
    %v2763 = vtanh.pop %v2123
    %v2764 = vtanh.pop %v2124
    %v2765 = vtanh.pop %v2125
    %v2766 = vtanh.pop %v2126
    %v2767 = vtanh.pop %v2127
    %v2768 = vtanh.pop %v2128
    %v2769 = vtanh.pop %v2129
    %v2770 = vtanh.pop %v2130
    %v2771 = vtanh.pop %v2131
    %v2772 = vtanh.pop %v2132
    %v2773 = vtanh.pop %v2133
    %v2774 = vtanh.pop %v2134
    %v2775 = vtanh.pop %v2135
    %v2776 = vtanh.pop %v2136
    %v2777 = vtanh.pop %v2137
    %v2778 = vtanh.pop %v2138
    %v2779 = vtanh.pop %v2139
    %v2780 = vtanh.pop %v2140
    %v2781 = vtanh.pop %v2141
    %v2782 = vtanh.pop %v2142
    %v2783 = vtanh.pop %v2143
    %v2784 = vtanh.pop %v2144
    %v2785 = vtanh.pop %v2145
    %v2786 = vtanh.pop %v2146
    %v2787 = vtanh.pop %v2147
    %v2788 = vtanh.pop %v2148
    %v2789 = vtanh.pop %v2149
    %v2790 = vtanh.pop %v2150
    %v2791 = vtanh.pop %v2151
    %v2792 = vtanh.pop %v2152
    %v2793 = vtanh.pop %v2153
    %v2794 = vtanh.pop %v2154
    %v2795 = vtanh.pop %v2155
    %v2796 = vtanh.pop %v2156
    %v2797 = vtanh.pop %v2157
    %v2798 = vtanh.pop %v2158
    %v2799 = vtanh.pop %v2159
    %v2800 = vtanh.pop %v2160
    %v2801 = vtanh.pop %v2161
    %v2802 = vtanh.pop %v2162
    %v2803 = vtanh.pop %v2163
    %v2804 = vtanh.pop %v2164
    %v2805 = vtanh.pop %v2165
    %v2806 = vtanh.pop %v2166
    %v2807 = vtanh.pop %v2167
    %v2808 = vtanh.pop %v2168
    %v2809 = vtanh.pop %v2169
    %v2810 = vtanh.pop %v2170
    %v2811 = vtanh.pop %v2171
    %v2812 = vtanh.pop %v2172
    %v2813 = vtanh.pop %v2173
    %v2814 = vtanh.pop %v2174
    %v2815 = vtanh.pop %v2175
    %v2816 = vtanh.pop %v2176
    %v2817 = vtanh.pop %v2177
    %v2818 = vtanh.pop %v2178
    %v2819 = vtanh.pop %v2179
    %v2820 = vtanh.pop %v2180
    %v2821 = vtanh.pop %v2181
    %v2822 = vtanh.pop %v2182
    %v2823 = vtanh.pop %v2183
    %v2824 = vtanh.pop %v2184
    %v2825 = vtanh.pop %v2185
    %v2826 = vtanh.pop %v2186
    %v2827 = vtanh.pop %v2187
    %v2828 = vtanh.pop %v2188
    %v2829 = vtanh.pop %v2189
    %v2830 = vtanh.pop %v2190
    %v2831 = vtanh.pop %v2191
    %v2832 = vtanh.pop %v2192
    %v2833 = vtanh.pop %v2193
    %v2834 = vtanh.pop %v2194
    %v2835 = vtanh.pop %v2195
    %v2836 = vtanh.pop %v2196
    %v2837 = vtanh.pop %v2197
    %v2838 = vtanh.pop %v2198
    %v2839 = vtanh.pop %v2199
    %v2840 = vtanh.pop %v2200
    %v2841 = vtanh.pop %v2201
    %v2842 = vtanh.pop %v2202
    %v2843 = vtanh.pop %v2203
    %v2844 = vtanh.pop %v2204
    %v2845 = vtanh.pop %v2205
    %v2846 = vtanh.pop %v2206
    %v2847 = vtanh.pop %v2207
    %v2848 = vtanh.pop %v2208
    %v2849 = vtanh.pop %v2209
    %v2850 = vtanh.pop %v2210
    %v2851 = vtanh.pop %v2211
    %v2852 = vtanh.pop %v2212
    %v2853 = vtanh.pop %v2213
    %v2854 = vtanh.pop %v2214
    %v2855 = vtanh.pop %v2215
    %v2856 = vtanh.pop %v2216
    %v2857 = vtanh.pop %v2217
    %v2858 = vtanh.pop %v2218
    %v2859 = vtanh.pop %v2219
    %v2860 = vtanh.pop %v2220
    %v2861 = vtanh.pop %v2221
    %v2862 = vtanh.pop %v2222
    %v2863 = vtanh.pop %v2223
    %v2864 = vtanh.pop %v2224
    %v2865 = vtanh.pop %v2225
    %v2866 = vtanh.pop %v2226
    %v2867 = vtanh.pop %v2227
    %v2868 = vtanh.pop %v2228
    %v2869 = vtanh.pop %v2229
    %v2870 = vtanh.pop %v2230
    %v2871 = vtanh.pop %v2231
    %v2872 = vtanh.pop %v2232
    %v2873 = vtanh.pop %v2233
    %v2874 = vtanh.pop %v2234
    %v2875 = vtanh.pop %v2235
    %v2876 = vtanh.pop %v2236
    %v2877 = vtanh.pop %v2237
    %v2878 = vtanh.pop %v2238
    %v2879 = vtanh.pop %v2239
    %v2880 = vtanh.pop %v2240
    %v2881 = vtanh.pop %v2241
    %v2882 = vtanh.pop %v2242
    %v2883 = vtanh.pop %v2243
    %v2884 = vtanh.pop %v2244
    %v2885 = vtanh.pop %v2245
    %v2886 = vtanh.pop %v2246
    %v2887 = vtanh.pop %v2247
    %v2888 = vtanh.pop %v2248
    %v2889 = vtanh.pop %v2249
    %v2890 = vtanh.pop %v2250
    %v2891 = vtanh.pop %v2251
    %v2892 = vtanh.pop %v2252
    %v2893 = vtanh.pop %v2253
    %v2894 = vtanh.pop %v2254
    %v2895 = vtanh.pop %v2255
    %v2896 = vtanh.pop %v2256
    %v2897 = vtanh.pop %v2257
    %v2898 = vtanh.pop %v2258
    %v2899 = vtanh.pop %v2259
    %v2900 = vtanh.pop %v2260
    %v2901 = vtanh.pop %v2261
    %v2902 = vtanh.pop %v2262
    %v2903 = vtanh.pop %v2263
    %v2904 = vtanh.pop %v2264
    %v2905 = vtanh.pop %v2265
    %v2906 = vtanh.pop %v2266
    %v2907 = vtanh.pop %v2267
    %v2908 = vtanh.pop %v2268
    %v2909 = vtanh.pop %v2269
    %v2910 = vtanh.pop %v2270
    %v2911 = vtanh.pop %v2271
    %v2912 = vtanh.pop %v2272
    %v2913 = vtanh.pop %v2273
    %v2914 = vtanh.pop %v2274
    %v2915 = vtanh.pop %v2275
    %v2916 = vtanh.pop %v2276
    %v2917 = vtanh.pop %v2277
    %v2918 = vtanh.pop %v2278
    %v2919 = vtanh.pop %v2279
    %v2920 = vtanh.pop %v2280
    %v2921 = vtanh.pop %v2281
    %v2922 = vtanh.pop %v2282
    %v2923 = vtanh.pop %v2283
    %v2924 = vtanh.pop %v2284
    %v2925 = vtanh.pop %v2285
    %v2926 = vtanh.pop %v2286
    %v2927 = vtanh.pop %v2287
    %v2928 = vtanh.pop %v2288
    %v2929 = vtanh.pop %v2289
    %v2930 = vtanh.pop %v2290
    %v2931 = vtanh.pop %v2291
    %v2932 = vtanh.pop %v2292
    %v2933 = vtanh.pop %v2293
    %v2934 = vtanh.pop %v2294
    %v2935 = vtanh.pop %v2295
    %v2936 = vtanh.pop %v2296
    %v2937 = vtanh.pop %v2297
    %v2938 = vtanh.pop %v2298
    %v2939 = vtanh.pop %v2299
    %v2940 = vtanh.pop %v2300
    %v2941 = vtanh.pop %v2301
    %v2942 = vtanh.pop %v2302
    %v2943 = vtanh.pop %v2303
    %v2944 = vtanh.pop %v2304
    %v2945 = vtanh.pop %v2305
    %v2946 = vtanh.pop %v2306
    %v2947 = vtanh.pop %v2307
    %v2948 = vtanh.pop %v2308
    %v2949 = vtanh.pop %v2309
    %v2950 = vtanh.pop %v2310
    %v2951 = vtanh.pop %v2311
    %v2952 = vtanh.pop %v2312
    %v2953 = vtanh.pop %v2313
    %v2954 = vtanh.pop %v2314
    %v2955 = vtanh.pop %v2315
    %v2956 = vtanh.pop %v2316
    %v2957 = vtanh.pop %v2317
    %v2958 = vtanh.pop %v2318
    %v2959 = vtanh.pop %v2319
    %v2960 = vtanh.pop %v2320
    %v2961 = vtanh.pop %v2321
    %v2962 = vtanh.pop %v2322
    %v2963 = vtanh.pop %v2323
    %v2964 = vtanh.pop %v2324
    %v2965 = vtanh.pop %v2325
    %v2966 = vtanh.pop %v2326
    %v2967 = vtanh.pop %v2327
    %v2968 = vtanh.pop %v2328
    %v2969 = vtanh.pop %v2329
    %v2970 = vtanh.pop %v2330
    %v2971 = vtanh.pop %v2331
    %v2972 = vtanh.pop %v2332
    %v2973 = vtanh.pop %v2333
    %v2974 = vtanh.pop %v2334
    %v2975 = vtanh.pop %v2335
    %v2976 = vtanh.pop %v2336
    %v2977 = vtanh.pop %v2337
    %v2978 = vtanh.pop %v2338
    %v2979 = vtanh.pop %v2339
    %v2980 = vtanh.pop %v2340
    %v2981 = vtanh.pop %v2341
    %v2982 = vtanh.pop %v2342
    %v2983 = vtanh.pop %v2343
    %v2984 = vtanh.pop %v2344
    %v2985 = vtanh.pop %v2345
    %v2986 = vtanh.pop %v2346
    %v2987 = vtanh.pop %v2347
    %v2988 = vtanh.pop %v2348
    %v2989 = vtanh.pop %v2349
    %v2990 = vtanh.pop %v2350
    %v2991 = vtanh.pop %v2351
    %v2992 = vtanh.pop %v2352
    %v2993 = vtanh.pop %v2353
    %v2994 = vtanh.pop %v2354
    %v2995 = vtanh.pop %v2355
    %v2996 = vtanh.pop %v2356
    %v2997 = vtanh.pop %v2357
    %v2998 = vtanh.pop %v2358
    %v2999 = vtanh.pop %v2359
    %v3000 = vtanh.pop %v2360
    %v3001 = vtanh.pop %v2361
    %v3002 = vtanh.pop %v2362
    %v3003 = vtanh.pop %v2363
    %v3004 = vtanh.pop %v2364
    %v3005 = vtanh.pop %v2365
    %v3006 = vtanh.pop %v2366
    %v3007 = vtanh.pop %v2367
    %v3008 = vtanh.pop %v2368
    %v3009 = vtanh.pop %v2369
    %v3010 = vtanh.pop %v2370
    %v3011 = vtanh.pop %v2371
    %v3012 = vtanh.pop %v2372
    %v3013 = vtanh.pop %v2373
    %v3014 = vtanh.pop %v2374
    %v3015 = vtanh.pop %v2375
    %v3016 = vtanh.pop %v2376
    %v3017 = vtanh.pop %v2377
    %v3018 = vtanh.pop %v2378
    %v3019 = vtanh.pop %v2379
    %v3020 = vtanh.pop %v2380
    %v3021 = vtanh.pop %v2381
    %v3022 = vtanh.pop %v2382
    %v3023 = vtanh.pop %v2383
    %v3024 = vtanh.pop %v2384
    %v3025 = vtanh.pop %v2385
    %v3026 = vtanh.pop %v2386
    %v3027 = vtanh.pop %v2387
    %v3028 = vtanh.pop %v2388
    %v3029 = vtanh.pop %v2389
    %v3030 = vtanh.pop %v2390
    %v3031 = vtanh.pop %v2391
    %v3032 = vtanh.pop %v2392
    %v3033 = vtanh.pop %v2393
    %v3034 = vtanh.pop %v2394
    %v3035 = vtanh.pop %v2395
    %v3036 = vtanh.pop %v2396
    %v3037 = vtanh.pop %v2397
    %v3038 = vtanh.pop %v2398
    %v3039 = vtanh.pop %v2399
    %v3040 = vtanh.pop %v2400
    %v3041 = vtanh.pop %v2401
    %v3042 = vtanh.pop %v2402
    %v3043 = vtanh.pop %v2403
    %v3044 = vtanh.pop %v2404
    %v3045 = vtanh.pop %v2405
    %v3046 = vtanh.pop %v2406
    %v3047 = vtanh.pop %v2407
    %v3048 = vtanh.pop %v2408
    %v3049 = vtanh.pop %v2409
    %v3050 = vtanh.pop %v2410
    %v3051 = vtanh.pop %v2411
    %v3052 = vtanh.pop %v2412
    %v3053 = vtanh.pop %v2413
    %v3054 = vtanh.pop %v2414
    %v3055 = vtanh.pop %v2415
    %v3056 = vtanh.pop %v2416
    %v3057 = vtanh.pop %v2417
    %v3058 = vtanh.pop %v2418
    %v3059 = vtanh.pop %v2419
    %v3060 = vtanh.pop %v2420
    %v3061 = vtanh.pop %v2421
    %v3062 = vtanh.pop %v2422
    %v3063 = vtanh.pop %v2423
    %v3064 = vtanh.pop %v2424
    %v3065 = vtanh.pop %v2425
    %v3066 = vtanh.pop %v2426
    %v3067 = vtanh.pop %v2427
    %v3068 = vtanh.pop %v2428
    %v3069 = vtanh.pop %v2429
    %v3070 = vtanh.pop %v2430
    %v3071 = vtanh.pop %v2431
    %v3072 = vtanh.pop %v2432
    %v3073 = vtanh.pop %v2433
    %v3074 = vtanh.pop %v2434
    %v3075 = vtanh.pop %v2435
    %v3076 = vtanh.pop %v2436
    %v3077 = vtanh.pop %v2437
    %v3078 = vtanh.pop %v2438
    %v3079 = vtanh.pop %v2439
    %v3080 = vtanh.pop %v2440
    %v3081 = vtanh.pop %v2441
    %v3082 = vtanh.pop %v2442
    %v3083 = vtanh.pop %v2443
    %v3084 = vtanh.pop %v2444
    %v3085 = vtanh.pop %v2445
    %v3086 = vtanh.pop %v2446
    %v3087 = vtanh.pop %v2447
    %v3088 = vtanh.pop %v2448
    %v3089 = vtanh.pop %v2449
    %v3090 = vtanh.pop %v2450
    %v3091 = vtanh.pop %v2451
    %v3092 = vtanh.pop %v2452
    %v3093 = vtanh.pop %v2453
    %v3094 = vtanh.pop %v2454
    %v3095 = vtanh.pop %v2455
    %v3096 = vtanh.pop %v2456
    %v3097 = vtanh.pop %v2457
    %v3098 = vtanh.pop %v2458
    %v3099 = vtanh.pop %v2459
    %v3100 = vtanh.pop %v2460
    %v3101 = vtanh.pop %v2461
    %v3102 = vtanh.pop %v2462
    %v3103 = vtanh.pop %v2463
    %v3104 = vtanh.pop %v2464
    %v3105 = vtanh.pop %v2465
    %v3106 = vtanh.pop %v2466
    %v3107 = vtanh.pop %v2467
    %v3108 = vtanh.pop %v2468
    %v3109 = vtanh.pop %v2469
    %v3110 = vtanh.pop %v2470
    %v3111 = vtanh.pop %v2471
    %v3112 = vtanh.pop %v2472
    %v3113 = vtanh.pop %v2473
    %v3114 = vtanh.pop %v2474
    %v3115 = vtanh.pop %v2475
    %v3116 = vtanh.pop %v2476
    %v3117 = vtanh.pop %v2477
    %v3118 = vtanh.pop %v2478
    %v3119 = vtanh.pop %v2479
    %v3120 = vtanh.pop %v2480
    %v3121 = vtanh.pop %v2481
    %v3122 = vtanh.pop %v2482
    %v3123 = vtanh.pop %v2483
    %v3124 = vtanh.pop %v2484
    %v3125 = vtanh.pop %v2485
    %v3126 = vtanh.pop %v2486
    %v3127 = vtanh.pop %v2487
    %v3128 = vtanh.pop %v2488
    %v3129 = vtanh.pop %v2489
    %v3130 = vtanh.pop %v2490
    %v3131 = vtanh.pop %v2491
    %v3132 = vtanh.pop %v2492
    %v3133 = vtanh.pop %v2493
    %v3134 = vtanh.pop %v2494
    %v3135 = vtanh.pop %v2495
    %v3136 = vtanh.pop %v2496
    %v3137 = vtanh.pop %v2497
    %v3138 = vtanh.pop %v2498
    %v3139 = vtanh.pop %v2499
    %v3140 = vtanh.pop %v2500
    %v3141 = vtanh.pop %v2501
    %v3142 = vtanh.pop %v2502
    %v3143 = vtanh.pop %v2503
    %v3144 = vtanh.pop %v2504
    %v3145 = vtanh.pop %v2505
    %v3146 = vtanh.pop %v2506
    %v3147 = vtanh.pop %v2507
    %v3148 = vtanh.pop %v2508
    %v3149 = vtanh.pop %v2509
    %v3150 = vtanh.pop %v2510
    %v3151 = vtanh.pop %v2511
    %v3152 = vtanh.pop %v2512
    %v3153 = vtanh.pop %v2513
    %v3154 = vtanh.pop %v2514
    %v3155 = vtanh.pop %v2515
    %v3156 = vtanh.pop %v2516
    %v3157 = vtanh.pop %v2517
    %v3158 = vtanh.pop %v2518
    %v3159 = vtanh.pop %v2519
    %v3160 = vtanh.pop %v2520
    %v3161 = vtanh.pop %v2521
    %v3162 = vtanh.pop %v2522
    %v3163 = vtanh.pop %v2523
    %v3164 = vtanh.pop %v2524
    %v3165 = vtanh.pop %v2525
    %v3166 = vtanh.pop %v2526
    %v3167 = vtanh.pop %v2527
    %v3168 = vtanh.pop %v2528
    %v3169 = vtanh.pop %v2529
    %v3170 = vtanh.pop %v2530
    %v3171 = vtanh.pop %v2531
    %v3172 = vtanh.pop %v2532
    %v3173 = vtanh.pop %v2533
    %v3174 = vtanh.pop %v2534
    %v3175 = vtanh.pop %v2535
    %v3176 = vtanh.pop %v2536
    %v3177 = vtanh.pop %v2537
    %v3178 = vtanh.pop %v2538
    %v3179 = vtanh.pop %v2539
    %v3180 = vtanh.pop %v2540
    %v3181 = vtanh.pop %v2541
    %v3182 = vtanh.pop %v2542
    %v3183 = vtanh.pop %v2543
    %v3184 = vtanh.pop %v2544
    %v3185 = vtanh.pop %v2545
    %v3186 = vtanh.pop %v2546
    %v3187 = vtanh.pop %v2547
    %v3188 = vtanh.pop %v2548
    %v3189 = vtanh.pop %v2549
    %v3190 = vtanh.pop %v2550
    %v3191 = vtanh.pop %v2551
    %v3192 = vtanh.pop %v2552
    %v3193 = vtanh.pop %v2553
    %v3194 = vtanh.pop %v2554
    %v3195 = vtanh.pop %v2555
    %v3196 = vtanh.pop %v2556
    %v3197 = vtanh.pop %v2557
    %v3198 = vtanh.pop %v2558
    %v3199 = vtanh.pop %v2559
    %v3200 = vtanh.pop %v2560
    %v3201 = vtanh.pop %v2561
    %v3202 = vtanh.pop %v2562
    %v3203 = vtanh.pop %v2563
    %v3204 = vtanh.pop %v2564
    %v3205 = vtanh.pop %v2565
    %v3206 = vtanh.pop %v2566
    %v3207 = vtanh.pop %v2567
    %v3208 = vtanh.pop %v2568
    %v3209 = vtanh.pop %v2569
    %v3210 = vtanh.pop %v2570
    %v3211 = vtanh.pop %v2571
    %v3212 = vtanh.pop %v2572
    %v3213 = vtanh.pop %v2573
    %v3214 = vtanh.pop %v2574
    %v3215 = vtanh.pop %v2575
    %v3216 = vtanh.pop %v2576
    %v3217 = vtanh.pop %v2577
    %v3218 = vtanh.pop %v2578
    %v3219 = vtanh.pop %v2579
    %v3220 = vtanh.pop %v2580
    %v3221 = vtanh.pop %v2581
    %v3222 = vtanh.pop %v2582
    %v3223 = vtanh.pop %v2583
    %v3224 = vtanh.pop %v2584
    %v3225 = vtanh.pop %v2585
    %v3226 = vtanh.pop %v2586
    %v3227 = vtanh.pop %v2587
    %v3228 = vtanh.pop %v2588
    %v3229 = vtanh.pop %v2589
    %v3230 = vtanh.pop %v2590
    %v3231 = vtanh.pop %v2591
    %v3232 = vtanh.pop %v2592
    %v3233 = vtanh.pop %v2593
    %v3234 = vtanh.pop %v2594
    %v3235 = vtanh.pop %v2595
    %v3236 = vtanh.pop %v2596
    %v3237 = vtanh.pop %v2597
    %v3238 = vtanh.pop %v2598
    %v3239 = vtanh.pop %v2599
    %v3240 = vtanh.pop %v2600
    %v3241 = vtanh.pop %v2601
    %v3242 = vtanh.pop %v2602
    %v3243 = vtanh.pop %v2603
    %v3244 = vtanh.pop %v2604
    %v3245 = vtanh.pop %v2605
    %v3246 = vtanh.pop %v2606
    %v3247 = vtanh.pop %v2607
    %v3248 = vtanh.pop %v2608
    %v3249 = vtanh.pop %v2609
    %v3250 = vtanh.pop %v2610
    %v3251 = vtanh.pop %v2611
    %v3252 = vtanh.pop %v2612
    %v3253 = vtanh.pop %v2613
    %v3254 = vtanh.pop %v2614
    %v3255 = vtanh.pop %v2615
    %v3256 = vtanh.pop %v2616
    %v3257 = vtanh.pop %v2617
    %v3258 = vtanh.pop %v2618
    %v3259 = vtanh.pop %v2619
    %v3260 = vtanh.pop %v2620
    %v3261 = vtanh.pop %v2621
    %v3262 = vtanh.pop %v2622
    %v3263 = vtanh.pop %v2623
    %v3264 = vtanh.pop %v2624
    %v3265 = vtanh.pop %v2625
    %v3266 = vtanh.pop %v2626
    %v3267 = vtanh.pop %v2627
    %v3268 = vtanh.pop %v2628
    %v3269 = vtanh.pop %v2629
    %v3270 = vtanh.pop %v2630
    %v3271 = vtanh.pop %v2631
    %v3272 = vtanh.pop %v2632
    %v3273 = vtanh.pop %v2633
    %v3274 = vtanh.pop %v2634
    %v3275 = vtanh.pop %v2635
    %v3276 = vtanh.pop %v2636
    %v3277 = vtanh.pop %v2637
    %v3278 = vtanh.pop %v2638
    %v3279 = vtanh.pop %v2639
    %v3280 = vtanh.pop %v2640
    %v3281 = vtanh.pop %v2641
    %v3282 = vtanh.pop %v2642
    %v3283 = vtanh.pop %v2643
    %v3284 = vtanh.pop %v2644
    %v3285 = vtanh.pop %v2645
    %v3286 = vtanh.pop %v2646
    %v3287 = vtanh.pop %v2647
    %v3288 = vtanh.pop %v2648
    %v3289 = vtanh.pop %v2649
    %v3290 = vtanh.pop %v2650
    %v3291 = vtanh.pop %v2651
    %v3292 = vtanh.pop %v2652
    %v3293 = vtanh.pop %v2653
    %v3294 = vtanh.pop %v2654
    %v3295 = vtanh.pop %v2655
    %v3296 = vtanh.pop %v2656
    %v3297 = vtanh.pop %v2657
    %v3298 = vtanh.pop %v2658
    %v3299 = vtanh.pop %v2659
    %v3300 = vtanh.pop %v2660
    %v3301 = vtanh.pop %v2661
    %v3302 = vtanh.pop %v2662
    %v3303 = vtanh.pop %v2663
    %v3304 = vtanh.pop %v2664
    %v3305 = vtanh.pop %v2665
    %v3306 = vtanh.pop %v2666
    %v3307 = vtanh.pop %v2667
    %v3308 = vtanh.pop %v2668
    %v3309 = vtanh.pop %v2669
    %v3310 = vtanh.pop %v2670
    %v3311 = vtanh.pop %v2671
    %v3312 = vtanh.pop %v2672
    %v3313 = vtanh.pop %v2673
    %v3314 = vtanh.pop %v2674
    %v3315 = vtanh.pop %v2675
    %v3316 = vtanh.pop %v2676
    %v3317 = vtanh.pop %v2677
    %v3318 = vtanh.pop %v2678
    %v3319 = vtanh.pop %v2679
    %v3320 = vtanh.pop %v2680
    %v3321 = vtanh.pop %v2681
    %v3322 = vtanh.pop %v2682
    %v3323 = vtanh.pop %v2683
    %v3324 = vtanh.pop %v2684
    %v3325 = vtanh.pop %v2685
    %v3326 = vtanh.pop %v2686
    %v3327 = vtanh.pop %v2687
    %v3328 = vtanh.pop %v2688
    %v3329 = vtanh.pop %v2689
    %v3330 = vtanh.pop %v2690
    %v3331 = vtanh.pop %v2691
    %v3332 = vtanh.pop %v2692
    %v3333 = vtanh.pop %v2693
    %v3334 = vtanh.pop %v2694
    %v3335 = vtanh.pop %v2695
    %v3336 = vtanh.pop %v2696
    %v3337 = vtanh.pop %v2697
    %v3338 = vtanh.pop %v2698
    %v3339 = vtanh.pop %v2699
    %v3340 = vtanh.pop %v2700
    %v3341 = vtanh.pop %v2701
    %v3342 = vtanh.pop %v2702
    %v3343 = vtanh.pop %v2703
    %v3344 = vtanh.pop %v2704
    %v3345 = vtanh.pop %v2705
    %v3346 = vtanh.pop %v2706
    %v3347 = vtanh.pop %v2707
    %v3348 = vtanh.pop %v2708
    %v3349 = vtanh.pop %v2709
    %v3350 = vtanh.pop %v2710
    %v3351 = vtanh.pop %v2711
    %v3352 = vtanh.pop %v2712
    %v3353 = vtanh.pop %v2713
    %v3354 = vtanh.pop %v2714
    %v3355 = vtanh.pop %v2715
    %v3356 = vtanh.pop %v2716
    %v3357 = vtanh.pop %v2717
    %v3358 = vtanh.pop %v2718
    %v3359 = vtanh.pop %v2719
    %v3360 = vtanh.pop %v2720
    %v3361 = vtanh.pop %v2721
    %v3362 = vtanh.pop %v2722
    %v3363 = vtanh.pop %v2723
    %v3364 = vtanh.pop %v2724
    %v3365 = vtanh.pop %v2725
    %v3366 = vtanh.pop %v2726
    %v3367 = vtanh.pop %v2727
    %v3368 = vtanh.pop %v2728
    %v3369 = vtanh.pop %v2729
    %v3370 = vtanh.pop %v2730
    %v3371 = vtanh.pop %v2731
    %v3372 = vtanh.pop %v2732
    %v3373 = vtanh.pop %v2733
    %v3374 = vtanh.pop %v2734
    %v3375 = vtanh.pop %v2735
    %v3376 = vtanh.pop %v2736
    %v3377 = vtanh.pop %v2737
    %v3378 = vtanh.pop %v2738
    %v3379 = vtanh.pop %v2739
    %v3380 = vtanh.pop %v2740
    %v3381 = vtanh.pop %v2741
    %v3382 = vtanh.pop %v2742
    %v3383 = vtanh.pop %v2743
    %v3384 = vtanh.pop %v2744
    %v3385 = vtanh.pop %v2745
    %v3386 = vtanh.pop %v2746
    %v3387 = vtanh.pop %v2747
    %v3388 = vtanh.pop %v2748
    %v3389 = vtanh.pop %v2749
    %v3390 = vtanh.pop %v2750
    %v3391 = vtanh.pop %v2751
    %v3392 = vtanh.pop %v2752
    %v3393 = vtanh.pop %v2753
    %v3394 = vmul.f32 %v2114, %v2754
    %v3395 = vmul.f32 %v2115, %v2755
    %v3396 = vmul.f32 %v2116, %v2756
    %v3397 = vmul.f32 %v2117, %v2757
    %v3398 = vmul.f32 %v2118, %v2758
    %v3399 = vmul.f32 %v2119, %v2759
    %v3400 = vmul.f32 %v2120, %v2760
    %v3401 = vmul.f32 %v2121, %v2761
    %v3402 = vmul.f32 %v2122, %v2762
    %v3403 = vmul.f32 %v2123, %v2763
    %v3404 = vmul.f32 %v2124, %v2764
    %v3405 = vmul.f32 %v2125, %v2765
    %v3406 = vmul.f32 %v2126, %v2766
    %v3407 = vmul.f32 %v2127, %v2767
    %v3408 = vmul.f32 %v2128, %v2768
    %v3409 = vmul.f32 %v2129, %v2769
    %v3410 = vmul.f32 %v2130, %v2770
    %v3411 = vmul.f32 %v2131, %v2771
    %v3412 = vmul.f32 %v2132, %v2772
    %v3413 = vmul.f32 %v2133, %v2773
    %v3414 = vmul.f32 %v2134, %v2774
    %v3415 = vmul.f32 %v2135, %v2775
    %v3416 = vmul.f32 %v2136, %v2776
    %v3417 = vmul.f32 %v2137, %v2777
    %v3418 = vmul.f32 %v2138, %v2778
    %v3419 = vmul.f32 %v2139, %v2779
    %v3420 = vmul.f32 %v2140, %v2780
    %v3421 = vmul.f32 %v2141, %v2781
    %v3422 = vmul.f32 %v2142, %v2782
    %v3423 = vmul.f32 %v2143, %v2783
    %v3424 = vmul.f32 %v2144, %v2784
    %v3425 = vmul.f32 %v2145, %v2785
    %v3426 = vmul.f32 %v2146, %v2786
    %v3427 = vmul.f32 %v2147, %v2787
    %v3428 = vmul.f32 %v2148, %v2788
    %v3429 = vmul.f32 %v2149, %v2789
    %v3430 = vmul.f32 %v2150, %v2790
    %v3431 = vmul.f32 %v2151, %v2791
    %v3432 = vmul.f32 %v2152, %v2792
    %v3433 = vmul.f32 %v2153, %v2793
    %v3434 = vmul.f32 %v2154, %v2794
    %v3435 = vmul.f32 %v2155, %v2795
    %v3436 = vmul.f32 %v2156, %v2796
    %v3437 = vmul.f32 %v2157, %v2797
    %v3438 = vmul.f32 %v2158, %v2798
    %v3439 = vmul.f32 %v2159, %v2799
    %v3440 = vmul.f32 %v2160, %v2800
    %v3441 = vmul.f32 %v2161, %v2801
    %v3442 = vmul.f32 %v2162, %v2802
    %v3443 = vmul.f32 %v2163, %v2803
    %v3444 = vmul.f32 %v2164, %v2804
    %v3445 = vmul.f32 %v2165, %v2805
    %v3446 = vmul.f32 %v2166, %v2806
    %v3447 = vmul.f32 %v2167, %v2807
    %v3448 = vmul.f32 %v2168, %v2808
    %v3449 = vmul.f32 %v2169, %v2809
    %v3450 = vmul.f32 %v2170, %v2810
    %v3451 = vmul.f32 %v2171, %v2811
    %v3452 = vmul.f32 %v2172, %v2812
    %v3453 = vmul.f32 %v2173, %v2813
    %v3454 = vmul.f32 %v2174, %v2814
    %v3455 = vmul.f32 %v2175, %v2815
    %v3456 = vmul.f32 %v2176, %v2816
    %v3457 = vmul.f32 %v2177, %v2817
    %v3458 = vmul.f32 %v2178, %v2818
    %v3459 = vmul.f32 %v2179, %v2819
    %v3460 = vmul.f32 %v2180, %v2820
    %v3461 = vmul.f32 %v2181, %v2821
    %v3462 = vmul.f32 %v2182, %v2822
    %v3463 = vmul.f32 %v2183, %v2823
    %v3464 = vmul.f32 %v2184, %v2824
    %v3465 = vmul.f32 %v2185, %v2825
    %v3466 = vmul.f32 %v2186, %v2826
    %v3467 = vmul.f32 %v2187, %v2827
    %v3468 = vmul.f32 %v2188, %v2828
    %v3469 = vmul.f32 %v2189, %v2829
    %v3470 = vmul.f32 %v2190, %v2830
    %v3471 = vmul.f32 %v2191, %v2831
    %v3472 = vmul.f32 %v2192, %v2832
    %v3473 = vmul.f32 %v2193, %v2833
    %v3474 = vmul.f32 %v2194, %v2834
    %v3475 = vmul.f32 %v2195, %v2835
    %v3476 = vmul.f32 %v2196, %v2836
    %v3477 = vmul.f32 %v2197, %v2837
    %v3478 = vmul.f32 %v2198, %v2838
    %v3479 = vmul.f32 %v2199, %v2839
    %v3480 = vmul.f32 %v2200, %v2840
    %v3481 = vmul.f32 %v2201, %v2841
    %v3482 = vmul.f32 %v2202, %v2842
    %v3483 = vmul.f32 %v2203, %v2843
    %v3484 = vmul.f32 %v2204, %v2844
    %v3485 = vmul.f32 %v2205, %v2845
    %v3486 = vmul.f32 %v2206, %v2846
    %v3487 = vmul.f32 %v2207, %v2847
    %v3488 = vmul.f32 %v2208, %v2848
    %v3489 = vmul.f32 %v2209, %v2849
    %v3490 = vmul.f32 %v2210, %v2850
    %v3491 = vmul.f32 %v2211, %v2851
    %v3492 = vmul.f32 %v2212, %v2852
    %v3493 = vmul.f32 %v2213, %v2853
    %v3494 = vmul.f32 %v2214, %v2854
    %v3495 = vmul.f32 %v2215, %v2855
    %v3496 = vmul.f32 %v2216, %v2856
    %v3497 = vmul.f32 %v2217, %v2857
    %v3498 = vmul.f32 %v2218, %v2858
    %v3499 = vmul.f32 %v2219, %v2859
    %v3500 = vmul.f32 %v2220, %v2860
    %v3501 = vmul.f32 %v2221, %v2861
    %v3502 = vmul.f32 %v2222, %v2862
    %v3503 = vmul.f32 %v2223, %v2863
    %v3504 = vmul.f32 %v2224, %v2864
    %v3505 = vmul.f32 %v2225, %v2865
    %v3506 = vmul.f32 %v2226, %v2866
    %v3507 = vmul.f32 %v2227, %v2867
    %v3508 = vmul.f32 %v2228, %v2868
    %v3509 = vmul.f32 %v2229, %v2869
    %v3510 = vmul.f32 %v2230, %v2870
    %v3511 = vmul.f32 %v2231, %v2871
    %v3512 = vmul.f32 %v2232, %v2872
    %v3513 = vmul.f32 %v2233, %v2873
    %v3514 = vmul.f32 %v2234, %v2874
    %v3515 = vmul.f32 %v2235, %v2875
    %v3516 = vmul.f32 %v2236, %v2876
    %v3517 = vmul.f32 %v2237, %v2877
    %v3518 = vmul.f32 %v2238, %v2878
    %v3519 = vmul.f32 %v2239, %v2879
    %v3520 = vmul.f32 %v2240, %v2880
    %v3521 = vmul.f32 %v2241, %v2881
    %v3522 = vmul.f32 %v2242, %v2882
    %v3523 = vmul.f32 %v2243, %v2883
    %v3524 = vmul.f32 %v2244, %v2884
    %v3525 = vmul.f32 %v2245, %v2885
    %v3526 = vmul.f32 %v2246, %v2886
    %v3527 = vmul.f32 %v2247, %v2887
    %v3528 = vmul.f32 %v2248, %v2888
    %v3529 = vmul.f32 %v2249, %v2889
    %v3530 = vmul.f32 %v2250, %v2890
    %v3531 = vmul.f32 %v2251, %v2891
    %v3532 = vmul.f32 %v2252, %v2892
    %v3533 = vmul.f32 %v2253, %v2893
    %v3534 = vmul.f32 %v2254, %v2894
    %v3535 = vmul.f32 %v2255, %v2895
    %v3536 = vmul.f32 %v2256, %v2896
    %v3537 = vmul.f32 %v2257, %v2897
    %v3538 = vmul.f32 %v2258, %v2898
    %v3539 = vmul.f32 %v2259, %v2899
    %v3540 = vmul.f32 %v2260, %v2900
    %v3541 = vmul.f32 %v2261, %v2901
    %v3542 = vmul.f32 %v2262, %v2902
    %v3543 = vmul.f32 %v2263, %v2903
    %v3544 = vmul.f32 %v2264, %v2904
    %v3545 = vmul.f32 %v2265, %v2905
    %v3546 = vmul.f32 %v2266, %v2906
    %v3547 = vmul.f32 %v2267, %v2907
    %v3548 = vmul.f32 %v2268, %v2908
    %v3549 = vmul.f32 %v2269, %v2909
    %v3550 = vmul.f32 %v2270, %v2910
    %v3551 = vmul.f32 %v2271, %v2911
    %v3552 = vmul.f32 %v2272, %v2912
    %v3553 = vmul.f32 %v2273, %v2913
    %v3554 = vmul.f32 %v2274, %v2914
    %v3555 = vmul.f32 %v2275, %v2915
    %v3556 = vmul.f32 %v2276, %v2916
    %v3557 = vmul.f32 %v2277, %v2917
    %v3558 = vmul.f32 %v2278, %v2918
    %v3559 = vmul.f32 %v2279, %v2919
    %v3560 = vmul.f32 %v2280, %v2920
    %v3561 = vmul.f32 %v2281, %v2921
    %v3562 = vmul.f32 %v2282, %v2922
    %v3563 = vmul.f32 %v2283, %v2923
    %v3564 = vmul.f32 %v2284, %v2924
    %v3565 = vmul.f32 %v2285, %v2925
    %v3566 = vmul.f32 %v2286, %v2926
    %v3567 = vmul.f32 %v2287, %v2927
    %v3568 = vmul.f32 %v2288, %v2928
    %v3569 = vmul.f32 %v2289, %v2929
    %v3570 = vmul.f32 %v2290, %v2930
    %v3571 = vmul.f32 %v2291, %v2931
    %v3572 = vmul.f32 %v2292, %v2932
    %v3573 = vmul.f32 %v2293, %v2933
    %v3574 = vmul.f32 %v2294, %v2934
    %v3575 = vmul.f32 %v2295, %v2935
    %v3576 = vmul.f32 %v2296, %v2936
    %v3577 = vmul.f32 %v2297, %v2937
    %v3578 = vmul.f32 %v2298, %v2938
    %v3579 = vmul.f32 %v2299, %v2939
    %v3580 = vmul.f32 %v2300, %v2940
    %v3581 = vmul.f32 %v2301, %v2941
    %v3582 = vmul.f32 %v2302, %v2942
    %v3583 = vmul.f32 %v2303, %v2943
    %v3584 = vmul.f32 %v2304, %v2944
    %v3585 = vmul.f32 %v2305, %v2945
    %v3586 = vmul.f32 %v2306, %v2946
    %v3587 = vmul.f32 %v2307, %v2947
    %v3588 = vmul.f32 %v2308, %v2948
    %v3589 = vmul.f32 %v2309, %v2949
    %v3590 = vmul.f32 %v2310, %v2950
    %v3591 = vmul.f32 %v2311, %v2951
    %v3592 = vmul.f32 %v2312, %v2952
    %v3593 = vmul.f32 %v2313, %v2953
    %v3594 = vmul.f32 %v2314, %v2954
    %v3595 = vmul.f32 %v2315, %v2955
    %v3596 = vmul.f32 %v2316, %v2956
    %v3597 = vmul.f32 %v2317, %v2957
    %v3598 = vmul.f32 %v2318, %v2958
    %v3599 = vmul.f32 %v2319, %v2959
    %v3600 = vmul.f32 %v2320, %v2960
    %v3601 = vmul.f32 %v2321, %v2961
    %v3602 = vmul.f32 %v2322, %v2962
    %v3603 = vmul.f32 %v2323, %v2963
    %v3604 = vmul.f32 %v2324, %v2964
    %v3605 = vmul.f32 %v2325, %v2965
    %v3606 = vmul.f32 %v2326, %v2966
    %v3607 = vmul.f32 %v2327, %v2967
    %v3608 = vmul.f32 %v2328, %v2968
    %v3609 = vmul.f32 %v2329, %v2969
    %v3610 = vmul.f32 %v2330, %v2970
    %v3611 = vmul.f32 %v2331, %v2971
    %v3612 = vmul.f32 %v2332, %v2972
    %v3613 = vmul.f32 %v2333, %v2973
    %v3614 = vmul.f32 %v2334, %v2974
    %v3615 = vmul.f32 %v2335, %v2975
    %v3616 = vmul.f32 %v2336, %v2976
    %v3617 = vmul.f32 %v2337, %v2977
    %v3618 = vmul.f32 %v2338, %v2978
    %v3619 = vmul.f32 %v2339, %v2979
    %v3620 = vmul.f32 %v2340, %v2980
    %v3621 = vmul.f32 %v2341, %v2981
    %v3622 = vmul.f32 %v2342, %v2982
    %v3623 = vmul.f32 %v2343, %v2983
    %v3624 = vmul.f32 %v2344, %v2984
    %v3625 = vmul.f32 %v2345, %v2985
    %v3626 = vmul.f32 %v2346, %v2986
    %v3627 = vmul.f32 %v2347, %v2987
    %v3628 = vmul.f32 %v2348, %v2988
    %v3629 = vmul.f32 %v2349, %v2989
    %v3630 = vmul.f32 %v2350, %v2990
    %v3631 = vmul.f32 %v2351, %v2991
    %v3632 = vmul.f32 %v2352, %v2992
    %v3633 = vmul.f32 %v2353, %v2993
    %v3634 = vmul.f32 %v2354, %v2994
    %v3635 = vmul.f32 %v2355, %v2995
    %v3636 = vmul.f32 %v2356, %v2996
    %v3637 = vmul.f32 %v2357, %v2997
    %v3638 = vmul.f32 %v2358, %v2998
    %v3639 = vmul.f32 %v2359, %v2999
    %v3640 = vmul.f32 %v2360, %v3000
    %v3641 = vmul.f32 %v2361, %v3001
    %v3642 = vmul.f32 %v2362, %v3002
    %v3643 = vmul.f32 %v2363, %v3003
    %v3644 = vmul.f32 %v2364, %v3004
    %v3645 = vmul.f32 %v2365, %v3005
    %v3646 = vmul.f32 %v2366, %v3006
    %v3647 = vmul.f32 %v2367, %v3007
    %v3648 = vmul.f32 %v2368, %v3008
    %v3649 = vmul.f32 %v2369, %v3009
    %v3650 = vmul.f32 %v2370, %v3010
    %v3651 = vmul.f32 %v2371, %v3011
    %v3652 = vmul.f32 %v2372, %v3012
    %v3653 = vmul.f32 %v2373, %v3013
    %v3654 = vmul.f32 %v2374, %v3014
    %v3655 = vmul.f32 %v2375, %v3015
    %v3656 = vmul.f32 %v2376, %v3016
    %v3657 = vmul.f32 %v2377, %v3017
    %v3658 = vmul.f32 %v2378, %v3018
    %v3659 = vmul.f32 %v2379, %v3019
    %v3660 = vmul.f32 %v2380, %v3020
    %v3661 = vmul.f32 %v2381, %v3021
    %v3662 = vmul.f32 %v2382, %v3022
    %v3663 = vmul.f32 %v2383, %v3023
    %v3664 = vmul.f32 %v2384, %v3024
    %v3665 = vmul.f32 %v2385, %v3025
    %v3666 = vmul.f32 %v2386, %v3026
    %v3667 = vmul.f32 %v2387, %v3027
    %v3668 = vmul.f32 %v2388, %v3028
    %v3669 = vmul.f32 %v2389, %v3029
    %v3670 = vmul.f32 %v2390, %v3030
    %v3671 = vmul.f32 %v2391, %v3031
    %v3672 = vmul.f32 %v2392, %v3032
    %v3673 = vmul.f32 %v2393, %v3033
    %v3674 = vmul.f32 %v2394, %v3034
    %v3675 = vmul.f32 %v2395, %v3035
    %v3676 = vmul.f32 %v2396, %v3036
    %v3677 = vmul.f32 %v2397, %v3037
    %v3678 = vmul.f32 %v2398, %v3038
    %v3679 = vmul.f32 %v2399, %v3039
    %v3680 = vmul.f32 %v2400, %v3040
    %v3681 = vmul.f32 %v2401, %v3041
    %v3682 = vmul.f32 %v2402, %v3042
    %v3683 = vmul.f32 %v2403, %v3043
    %v3684 = vmul.f32 %v2404, %v3044
    %v3685 = vmul.f32 %v2405, %v3045
    %v3686 = vmul.f32 %v2406, %v3046
    %v3687 = vmul.f32 %v2407, %v3047
    %v3688 = vmul.f32 %v2408, %v3048
    %v3689 = vmul.f32 %v2409, %v3049
    %v3690 = vmul.f32 %v2410, %v3050
    %v3691 = vmul.f32 %v2411, %v3051
    %v3692 = vmul.f32 %v2412, %v3052
    %v3693 = vmul.f32 %v2413, %v3053
    %v3694 = vmul.f32 %v2414, %v3054
    %v3695 = vmul.f32 %v2415, %v3055
    %v3696 = vmul.f32 %v2416, %v3056
    %v3697 = vmul.f32 %v2417, %v3057
    %v3698 = vmul.f32 %v2418, %v3058
    %v3699 = vmul.f32 %v2419, %v3059
    %v3700 = vmul.f32 %v2420, %v3060
    %v3701 = vmul.f32 %v2421, %v3061
    %v3702 = vmul.f32 %v2422, %v3062
    %v3703 = vmul.f32 %v2423, %v3063
    %v3704 = vmul.f32 %v2424, %v3064
    %v3705 = vmul.f32 %v2425, %v3065
    %v3706 = vmul.f32 %v2426, %v3066
    %v3707 = vmul.f32 %v2427, %v3067
    %v3708 = vmul.f32 %v2428, %v3068
    %v3709 = vmul.f32 %v2429, %v3069
    %v3710 = vmul.f32 %v2430, %v3070
    %v3711 = vmul.f32 %v2431, %v3071
    %v3712 = vmul.f32 %v2432, %v3072
    %v3713 = vmul.f32 %v2433, %v3073
    %v3714 = vmul.f32 %v2434, %v3074
    %v3715 = vmul.f32 %v2435, %v3075
    %v3716 = vmul.f32 %v2436, %v3076
    %v3717 = vmul.f32 %v2437, %v3077
    %v3718 = vmul.f32 %v2438, %v3078
    %v3719 = vmul.f32 %v2439, %v3079
    %v3720 = vmul.f32 %v2440, %v3080
    %v3721 = vmul.f32 %v2441, %v3081
    %v3722 = vmul.f32 %v2442, %v3082
    %v3723 = vmul.f32 %v2443, %v3083
    %v3724 = vmul.f32 %v2444, %v3084
    %v3725 = vmul.f32 %v2445, %v3085
    %v3726 = vmul.f32 %v2446, %v3086
    %v3727 = vmul.f32 %v2447, %v3087
    %v3728 = vmul.f32 %v2448, %v3088
    %v3729 = vmul.f32 %v2449, %v3089
    %v3730 = vmul.f32 %v2450, %v3090
    %v3731 = vmul.f32 %v2451, %v3091
    %v3732 = vmul.f32 %v2452, %v3092
    %v3733 = vmul.f32 %v2453, %v3093
    %v3734 = vmul.f32 %v2454, %v3094
    %v3735 = vmul.f32 %v2455, %v3095
    %v3736 = vmul.f32 %v2456, %v3096
    %v3737 = vmul.f32 %v2457, %v3097
    %v3738 = vmul.f32 %v2458, %v3098
    %v3739 = vmul.f32 %v2459, %v3099
    %v3740 = vmul.f32 %v2460, %v3100
    %v3741 = vmul.f32 %v2461, %v3101
    %v3742 = vmul.f32 %v2462, %v3102
    %v3743 = vmul.f32 %v2463, %v3103
    %v3744 = vmul.f32 %v2464, %v3104
    %v3745 = vmul.f32 %v2465, %v3105
    %v3746 = vmul.f32 %v2466, %v3106
    %v3747 = vmul.f32 %v2467, %v3107
    %v3748 = vmul.f32 %v2468, %v3108
    %v3749 = vmul.f32 %v2469, %v3109
    %v3750 = vmul.f32 %v2470, %v3110
    %v3751 = vmul.f32 %v2471, %v3111
    %v3752 = vmul.f32 %v2472, %v3112
    %v3753 = vmul.f32 %v2473, %v3113
    %v3754 = vmul.f32 %v2474, %v3114
    %v3755 = vmul.f32 %v2475, %v3115
    %v3756 = vmul.f32 %v2476, %v3116
    %v3757 = vmul.f32 %v2477, %v3117
    %v3758 = vmul.f32 %v2478, %v3118
    %v3759 = vmul.f32 %v2479, %v3119
    %v3760 = vmul.f32 %v2480, %v3120
    %v3761 = vmul.f32 %v2481, %v3121
    %v3762 = vmul.f32 %v2482, %v3122
    %v3763 = vmul.f32 %v2483, %v3123
    %v3764 = vmul.f32 %v2484, %v3124
    %v3765 = vmul.f32 %v2485, %v3125
    %v3766 = vmul.f32 %v2486, %v3126
    %v3767 = vmul.f32 %v2487, %v3127
    %v3768 = vmul.f32 %v2488, %v3128
    %v3769 = vmul.f32 %v2489, %v3129
    %v3770 = vmul.f32 %v2490, %v3130
    %v3771 = vmul.f32 %v2491, %v3131
    %v3772 = vmul.f32 %v2492, %v3132
    %v3773 = vmul.f32 %v2493, %v3133
    %v3774 = vmul.f32 %v2494, %v3134
    %v3775 = vmul.f32 %v2495, %v3135
    %v3776 = vmul.f32 %v2496, %v3136
    %v3777 = vmul.f32 %v2497, %v3137
    %v3778 = vmul.f32 %v2498, %v3138
    %v3779 = vmul.f32 %v2499, %v3139
    %v3780 = vmul.f32 %v2500, %v3140
    %v3781 = vmul.f32 %v2501, %v3141
    %v3782 = vmul.f32 %v2502, %v3142
    %v3783 = vmul.f32 %v2503, %v3143
    %v3784 = vmul.f32 %v2504, %v3144
    %v3785 = vmul.f32 %v2505, %v3145
    %v3786 = vmul.f32 %v2506, %v3146
    %v3787 = vmul.f32 %v2507, %v3147
    %v3788 = vmul.f32 %v2508, %v3148
    %v3789 = vmul.f32 %v2509, %v3149
    %v3790 = vmul.f32 %v2510, %v3150
    %v3791 = vmul.f32 %v2511, %v3151
    %v3792 = vmul.f32 %v2512, %v3152
    %v3793 = vmul.f32 %v2513, %v3153
    %v3794 = vmul.f32 %v2514, %v3154
    %v3795 = vmul.f32 %v2515, %v3155
    %v3796 = vmul.f32 %v2516, %v3156
    %v3797 = vmul.f32 %v2517, %v3157
    %v3798 = vmul.f32 %v2518, %v3158
    %v3799 = vmul.f32 %v2519, %v3159
    %v3800 = vmul.f32 %v2520, %v3160
    %v3801 = vmul.f32 %v2521, %v3161
    %v3802 = vmul.f32 %v2522, %v3162
    %v3803 = vmul.f32 %v2523, %v3163
    %v3804 = vmul.f32 %v2524, %v3164
    %v3805 = vmul.f32 %v2525, %v3165
    %v3806 = vmul.f32 %v2526, %v3166
    %v3807 = vmul.f32 %v2527, %v3167
    %v3808 = vmul.f32 %v2528, %v3168
    %v3809 = vmul.f32 %v2529, %v3169
    %v3810 = vmul.f32 %v2530, %v3170
    %v3811 = vmul.f32 %v2531, %v3171
    %v3812 = vmul.f32 %v2532, %v3172
    %v3813 = vmul.f32 %v2533, %v3173
    %v3814 = vmul.f32 %v2534, %v3174
    %v3815 = vmul.f32 %v2535, %v3175
    %v3816 = vmul.f32 %v2536, %v3176
    %v3817 = vmul.f32 %v2537, %v3177
    %v3818 = vmul.f32 %v2538, %v3178
    %v3819 = vmul.f32 %v2539, %v3179
    %v3820 = vmul.f32 %v2540, %v3180
    %v3821 = vmul.f32 %v2541, %v3181
    %v3822 = vmul.f32 %v2542, %v3182
    %v3823 = vmul.f32 %v2543, %v3183
    %v3824 = vmul.f32 %v2544, %v3184
    %v3825 = vmul.f32 %v2545, %v3185
    %v3826 = vmul.f32 %v2546, %v3186
    %v3827 = vmul.f32 %v2547, %v3187
    %v3828 = vmul.f32 %v2548, %v3188
    %v3829 = vmul.f32 %v2549, %v3189
    %v3830 = vmul.f32 %v2550, %v3190
    %v3831 = vmul.f32 %v2551, %v3191
    %v3832 = vmul.f32 %v2552, %v3192
    %v3833 = vmul.f32 %v2553, %v3193
    %v3834 = vmul.f32 %v2554, %v3194
    %v3835 = vmul.f32 %v2555, %v3195
    %v3836 = vmul.f32 %v2556, %v3196
    %v3837 = vmul.f32 %v2557, %v3197
    %v3838 = vmul.f32 %v2558, %v3198
    %v3839 = vmul.f32 %v2559, %v3199
    %v3840 = vmul.f32 %v2560, %v3200
    %v3841 = vmul.f32 %v2561, %v3201
    %v3842 = vmul.f32 %v2562, %v3202
    %v3843 = vmul.f32 %v2563, %v3203
    %v3844 = vmul.f32 %v2564, %v3204
    %v3845 = vmul.f32 %v2565, %v3205
    %v3846 = vmul.f32 %v2566, %v3206
    %v3847 = vmul.f32 %v2567, %v3207
    %v3848 = vmul.f32 %v2568, %v3208
    %v3849 = vmul.f32 %v2569, %v3209
    %v3850 = vmul.f32 %v2570, %v3210
    %v3851 = vmul.f32 %v2571, %v3211
    %v3852 = vmul.f32 %v2572, %v3212
    %v3853 = vmul.f32 %v2573, %v3213
    %v3854 = vmul.f32 %v2574, %v3214
    %v3855 = vmul.f32 %v2575, %v3215
    %v3856 = vmul.f32 %v2576, %v3216
    %v3857 = vmul.f32 %v2577, %v3217
    %v3858 = vmul.f32 %v2578, %v3218
    %v3859 = vmul.f32 %v2579, %v3219
    %v3860 = vmul.f32 %v2580, %v3220
    %v3861 = vmul.f32 %v2581, %v3221
    %v3862 = vmul.f32 %v2582, %v3222
    %v3863 = vmul.f32 %v2583, %v3223
    %v3864 = vmul.f32 %v2584, %v3224
    %v3865 = vmul.f32 %v2585, %v3225
    %v3866 = vmul.f32 %v2586, %v3226
    %v3867 = vmul.f32 %v2587, %v3227
    %v3868 = vmul.f32 %v2588, %v3228
    %v3869 = vmul.f32 %v2589, %v3229
    %v3870 = vmul.f32 %v2590, %v3230
    %v3871 = vmul.f32 %v2591, %v3231
    %v3872 = vmul.f32 %v2592, %v3232
    %v3873 = vmul.f32 %v2593, %v3233
    %v3874 = vmul.f32 %v2594, %v3234
    %v3875 = vmul.f32 %v2595, %v3235
    %v3876 = vmul.f32 %v2596, %v3236
    %v3877 = vmul.f32 %v2597, %v3237
    %v3878 = vmul.f32 %v2598, %v3238
    %v3879 = vmul.f32 %v2599, %v3239
    %v3880 = vmul.f32 %v2600, %v3240
    %v3881 = vmul.f32 %v2601, %v3241
    %v3882 = vmul.f32 %v2602, %v3242
    %v3883 = vmul.f32 %v2603, %v3243
    %v3884 = vmul.f32 %v2604, %v3244
    %v3885 = vmul.f32 %v2605, %v3245
    %v3886 = vmul.f32 %v2606, %v3246
    %v3887 = vmul.f32 %v2607, %v3247
    %v3888 = vmul.f32 %v2608, %v3248
    %v3889 = vmul.f32 %v2609, %v3249
    %v3890 = vmul.f32 %v2610, %v3250
    %v3891 = vmul.f32 %v2611, %v3251
    %v3892 = vmul.f32 %v2612, %v3252
    %v3893 = vmul.f32 %v2613, %v3253
    %v3894 = vmul.f32 %v2614, %v3254
    %v3895 = vmul.f32 %v2615, %v3255
    %v3896 = vmul.f32 %v2616, %v3256
    %v3897 = vmul.f32 %v2617, %v3257
    %v3898 = vmul.f32 %v2618, %v3258
    %v3899 = vmul.f32 %v2619, %v3259
    %v3900 = vmul.f32 %v2620, %v3260
    %v3901 = vmul.f32 %v2621, %v3261
    %v3902 = vmul.f32 %v2622, %v3262
    %v3903 = vmul.f32 %v2623, %v3263
    %v3904 = vmul.f32 %v2624, %v3264
    %v3905 = vmul.f32 %v2625, %v3265
    %v3906 = vmul.f32 %v2626, %v3266
    %v3907 = vmul.f32 %v2627, %v3267
    %v3908 = vmul.f32 %v2628, %v3268
    %v3909 = vmul.f32 %v2629, %v3269
    %v3910 = vmul.f32 %v2630, %v3270
    %v3911 = vmul.f32 %v2631, %v3271
    %v3912 = vmul.f32 %v2632, %v3272
    %v3913 = vmul.f32 %v2633, %v3273
    %v3914 = vmul.f32 %v2634, %v3274
    %v3915 = vmul.f32 %v2635, %v3275
    %v3916 = vmul.f32 %v2636, %v3276
    %v3917 = vmul.f32 %v2637, %v3277
    %v3918 = vmul.f32 %v2638, %v3278
    %v3919 = vmul.f32 %v2639, %v3279
    %v3920 = vmul.f32 %v2640, %v3280
    %v3921 = vmul.f32 %v2641, %v3281
    %v3922 = vmul.f32 %v2642, %v3282
    %v3923 = vmul.f32 %v2643, %v3283
    %v3924 = vmul.f32 %v2644, %v3284
    %v3925 = vmul.f32 %v2645, %v3285
    %v3926 = vmul.f32 %v2646, %v3286
    %v3927 = vmul.f32 %v2647, %v3287
    %v3928 = vmul.f32 %v2648, %v3288
    %v3929 = vmul.f32 %v2649, %v3289
    %v3930 = vmul.f32 %v2650, %v3290
    %v3931 = vmul.f32 %v2651, %v3291
    %v3932 = vmul.f32 %v2652, %v3292
    %v3933 = vmul.f32 %v2653, %v3293
    %v3934 = vmul.f32 %v2654, %v3294
    %v3935 = vmul.f32 %v2655, %v3295
    %v3936 = vmul.f32 %v2656, %v3296
    %v3937 = vmul.f32 %v2657, %v3297
    %v3938 = vmul.f32 %v2658, %v3298
    %v3939 = vmul.f32 %v2659, %v3299
    %v3940 = vmul.f32 %v2660, %v3300
    %v3941 = vmul.f32 %v2661, %v3301
    %v3942 = vmul.f32 %v2662, %v3302
    %v3943 = vmul.f32 %v2663, %v3303
    %v3944 = vmul.f32 %v2664, %v3304
    %v3945 = vmul.f32 %v2665, %v3305
    %v3946 = vmul.f32 %v2666, %v3306
    %v3947 = vmul.f32 %v2667, %v3307
    %v3948 = vmul.f32 %v2668, %v3308
    %v3949 = vmul.f32 %v2669, %v3309
    %v3950 = vmul.f32 %v2670, %v3310
    %v3951 = vmul.f32 %v2671, %v3311
    %v3952 = vmul.f32 %v2672, %v3312
    %v3953 = vmul.f32 %v2673, %v3313
    %v3954 = vmul.f32 %v2674, %v3314
    %v3955 = vmul.f32 %v2675, %v3315
    %v3956 = vmul.f32 %v2676, %v3316
    %v3957 = vmul.f32 %v2677, %v3317
    %v3958 = vmul.f32 %v2678, %v3318
    %v3959 = vmul.f32 %v2679, %v3319
    %v3960 = vmul.f32 %v2680, %v3320
    %v3961 = vmul.f32 %v2681, %v3321
    %v3962 = vmul.f32 %v2682, %v3322
    %v3963 = vmul.f32 %v2683, %v3323
    %v3964 = vmul.f32 %v2684, %v3324
    %v3965 = vmul.f32 %v2685, %v3325
    %v3966 = vmul.f32 %v2686, %v3326
    %v3967 = vmul.f32 %v2687, %v3327
    %v3968 = vmul.f32 %v2688, %v3328
    %v3969 = vmul.f32 %v2689, %v3329
    %v3970 = vmul.f32 %v2690, %v3330
    %v3971 = vmul.f32 %v2691, %v3331
    %v3972 = vmul.f32 %v2692, %v3332
    %v3973 = vmul.f32 %v2693, %v3333
    %v3974 = vmul.f32 %v2694, %v3334
    %v3975 = vmul.f32 %v2695, %v3335
    %v3976 = vmul.f32 %v2696, %v3336
    %v3977 = vmul.f32 %v2697, %v3337
    %v3978 = vmul.f32 %v2698, %v3338
    %v3979 = vmul.f32 %v2699, %v3339
    %v3980 = vmul.f32 %v2700, %v3340
    %v3981 = vmul.f32 %v2701, %v3341
    %v3982 = vmul.f32 %v2702, %v3342
    %v3983 = vmul.f32 %v2703, %v3343
    %v3984 = vmul.f32 %v2704, %v3344
    %v3985 = vmul.f32 %v2705, %v3345
    %v3986 = vmul.f32 %v2706, %v3346
    %v3987 = vmul.f32 %v2707, %v3347
    %v3988 = vmul.f32 %v2708, %v3348
    %v3989 = vmul.f32 %v2709, %v3349
    %v3990 = vmul.f32 %v2710, %v3350
    %v3991 = vmul.f32 %v2711, %v3351
    %v3992 = vmul.f32 %v2712, %v3352
    %v3993 = vmul.f32 %v2713, %v3353
    %v3994 = vmul.f32 %v2714, %v3354
    %v3995 = vmul.f32 %v2715, %v3355
    %v3996 = vmul.f32 %v2716, %v3356
    %v3997 = vmul.f32 %v2717, %v3357
    %v3998 = vmul.f32 %v2718, %v3358
    %v3999 = vmul.f32 %v2719, %v3359
    %v4000 = vmul.f32 %v2720, %v3360
    %v4001 = vmul.f32 %v2721, %v3361
    %v4002 = vmul.f32 %v2722, %v3362
    %v4003 = vmul.f32 %v2723, %v3363
    %v4004 = vmul.f32 %v2724, %v3364
    %v4005 = vmul.f32 %v2725, %v3365
    %v4006 = vmul.f32 %v2726, %v3366
    %v4007 = vmul.f32 %v2727, %v3367
    %v4008 = vmul.f32 %v2728, %v3368
    %v4009 = vmul.f32 %v2729, %v3369
    %v4010 = vmul.f32 %v2730, %v3370
    %v4011 = vmul.f32 %v2731, %v3371
    %v4012 = vmul.f32 %v2732, %v3372
    %v4013 = vmul.f32 %v2733, %v3373
    %v4014 = vmul.f32 %v2734, %v3374
    %v4015 = vmul.f32 %v2735, %v3375
    %v4016 = vmul.f32 %v2736, %v3376
    %v4017 = vmul.f32 %v2737, %v3377
    %v4018 = vmul.f32 %v2738, %v3378
    %v4019 = vmul.f32 %v2739, %v3379
    %v4020 = vmul.f32 %v2740, %v3380
    %v4021 = vmul.f32 %v2741, %v3381
    %v4022 = vmul.f32 %v2742, %v3382
    %v4023 = vmul.f32 %v2743, %v3383
    %v4024 = vmul.f32 %v2744, %v3384
    %v4025 = vmul.f32 %v2745, %v3385
    %v4026 = vmul.f32 %v2746, %v3386
    %v4027 = vmul.f32 %v2747, %v3387
    %v4028 = vmul.f32 %v2748, %v3388
    %v4029 = vmul.f32 %v2749, %v3389
    %v4030 = vmul.f32 %v2750, %v3390
    %v4031 = vmul.f32 %v2751, %v3391
    %v4032 = vmul.f32 %v2752, %v3392
    %v4033 = vmul.f32 %v2753, %v3393
    %v4034 = vadd.f32 %v2114, %v3394
    %v4035 = vadd.f32 %v2115, %v3395
    %v4036 = vadd.f32 %v2116, %v3396
    %v4037 = vadd.f32 %v2117, %v3397
    %v4038 = vadd.f32 %v2118, %v3398
    %v4039 = vadd.f32 %v2119, %v3399
    %v4040 = vadd.f32 %v2120, %v3400
    %v4041 = vadd.f32 %v2121, %v3401
    %v4042 = vadd.f32 %v2122, %v3402
    %v4043 = vadd.f32 %v2123, %v3403
    %v4044 = vadd.f32 %v2124, %v3404
    %v4045 = vadd.f32 %v2125, %v3405
    %v4046 = vadd.f32 %v2126, %v3406
    %v4047 = vadd.f32 %v2127, %v3407
    %v4048 = vadd.f32 %v2128, %v3408
    %v4049 = vadd.f32 %v2129, %v3409
    %v4050 = vadd.f32 %v2130, %v3410
    %v4051 = vadd.f32 %v2131, %v3411
    %v4052 = vadd.f32 %v2132, %v3412
    %v4053 = vadd.f32 %v2133, %v3413
    %v4054 = vadd.f32 %v2134, %v3414
    %v4055 = vadd.f32 %v2135, %v3415
    %v4056 = vadd.f32 %v2136, %v3416
    %v4057 = vadd.f32 %v2137, %v3417
    %v4058 = vadd.f32 %v2138, %v3418
    %v4059 = vadd.f32 %v2139, %v3419
    %v4060 = vadd.f32 %v2140, %v3420
    %v4061 = vadd.f32 %v2141, %v3421
    %v4062 = vadd.f32 %v2142, %v3422
    %v4063 = vadd.f32 %v2143, %v3423
    %v4064 = vadd.f32 %v2144, %v3424
    %v4065 = vadd.f32 %v2145, %v3425
    %v4066 = vadd.f32 %v2146, %v3426
    %v4067 = vadd.f32 %v2147, %v3427
    %v4068 = vadd.f32 %v2148, %v3428
    %v4069 = vadd.f32 %v2149, %v3429
    %v4070 = vadd.f32 %v2150, %v3430
    %v4071 = vadd.f32 %v2151, %v3431
    %v4072 = vadd.f32 %v2152, %v3432
    %v4073 = vadd.f32 %v2153, %v3433
    %v4074 = vadd.f32 %v2154, %v3434
    %v4075 = vadd.f32 %v2155, %v3435
    %v4076 = vadd.f32 %v2156, %v3436
    %v4077 = vadd.f32 %v2157, %v3437
    %v4078 = vadd.f32 %v2158, %v3438
    %v4079 = vadd.f32 %v2159, %v3439
    %v4080 = vadd.f32 %v2160, %v3440
    %v4081 = vadd.f32 %v2161, %v3441
    %v4082 = vadd.f32 %v2162, %v3442
    %v4083 = vadd.f32 %v2163, %v3443
    %v4084 = vadd.f32 %v2164, %v3444
    %v4085 = vadd.f32 %v2165, %v3445
    %v4086 = vadd.f32 %v2166, %v3446
    %v4087 = vadd.f32 %v2167, %v3447
    %v4088 = vadd.f32 %v2168, %v3448
    %v4089 = vadd.f32 %v2169, %v3449
    %v4090 = vadd.f32 %v2170, %v3450
    %v4091 = vadd.f32 %v2171, %v3451
    %v4092 = vadd.f32 %v2172, %v3452
    %v4093 = vadd.f32 %v2173, %v3453
    %v4094 = vadd.f32 %v2174, %v3454
    %v4095 = vadd.f32 %v2175, %v3455
    %v4096 = vadd.f32 %v2176, %v3456
    %v4097 = vadd.f32 %v2177, %v3457
    %v4098 = vadd.f32 %v2178, %v3458
    %v4099 = vadd.f32 %v2179, %v3459
    %v4100 = vadd.f32 %v2180, %v3460
    %v4101 = vadd.f32 %v2181, %v3461
    %v4102 = vadd.f32 %v2182, %v3462
    %v4103 = vadd.f32 %v2183, %v3463
    %v4104 = vadd.f32 %v2184, %v3464
    %v4105 = vadd.f32 %v2185, %v3465
    %v4106 = vadd.f32 %v2186, %v3466
    %v4107 = vadd.f32 %v2187, %v3467
    %v4108 = vadd.f32 %v2188, %v3468
    %v4109 = vadd.f32 %v2189, %v3469
    %v4110 = vadd.f32 %v2190, %v3470
    %v4111 = vadd.f32 %v2191, %v3471
    %v4112 = vadd.f32 %v2192, %v3472
    %v4113 = vadd.f32 %v2193, %v3473
    %v4114 = vadd.f32 %v2194, %v3474
    %v4115 = vadd.f32 %v2195, %v3475
    %v4116 = vadd.f32 %v2196, %v3476
    %v4117 = vadd.f32 %v2197, %v3477
    %v4118 = vadd.f32 %v2198, %v3478
    %v4119 = vadd.f32 %v2199, %v3479
    %v4120 = vadd.f32 %v2200, %v3480
    %v4121 = vadd.f32 %v2201, %v3481
    %v4122 = vadd.f32 %v2202, %v3482
    %v4123 = vadd.f32 %v2203, %v3483
    %v4124 = vadd.f32 %v2204, %v3484
    %v4125 = vadd.f32 %v2205, %v3485
    %v4126 = vadd.f32 %v2206, %v3486
    %v4127 = vadd.f32 %v2207, %v3487
    %v4128 = vadd.f32 %v2208, %v3488
    %v4129 = vadd.f32 %v2209, %v3489
    %v4130 = vadd.f32 %v2210, %v3490
    %v4131 = vadd.f32 %v2211, %v3491
    %v4132 = vadd.f32 %v2212, %v3492
    %v4133 = vadd.f32 %v2213, %v3493
    %v4134 = vadd.f32 %v2214, %v3494
    %v4135 = vadd.f32 %v2215, %v3495
    %v4136 = vadd.f32 %v2216, %v3496
    %v4137 = vadd.f32 %v2217, %v3497
    %v4138 = vadd.f32 %v2218, %v3498
    %v4139 = vadd.f32 %v2219, %v3499
    %v4140 = vadd.f32 %v2220, %v3500
    %v4141 = vadd.f32 %v2221, %v3501
    %v4142 = vadd.f32 %v2222, %v3502
    %v4143 = vadd.f32 %v2223, %v3503
    %v4144 = vadd.f32 %v2224, %v3504
    %v4145 = vadd.f32 %v2225, %v3505
    %v4146 = vadd.f32 %v2226, %v3506
    %v4147 = vadd.f32 %v2227, %v3507
    %v4148 = vadd.f32 %v2228, %v3508
    %v4149 = vadd.f32 %v2229, %v3509
    %v4150 = vadd.f32 %v2230, %v3510
    %v4151 = vadd.f32 %v2231, %v3511
    %v4152 = vadd.f32 %v2232, %v3512
    %v4153 = vadd.f32 %v2233, %v3513
    %v4154 = vadd.f32 %v2234, %v3514
    %v4155 = vadd.f32 %v2235, %v3515
    %v4156 = vadd.f32 %v2236, %v3516
    %v4157 = vadd.f32 %v2237, %v3517
    %v4158 = vadd.f32 %v2238, %v3518
    %v4159 = vadd.f32 %v2239, %v3519
    %v4160 = vadd.f32 %v2240, %v3520
    %v4161 = vadd.f32 %v2241, %v3521
    %v4162 = vadd.f32 %v2242, %v3522
    %v4163 = vadd.f32 %v2243, %v3523
    %v4164 = vadd.f32 %v2244, %v3524
    %v4165 = vadd.f32 %v2245, %v3525
    %v4166 = vadd.f32 %v2246, %v3526
    %v4167 = vadd.f32 %v2247, %v3527
    %v4168 = vadd.f32 %v2248, %v3528
    %v4169 = vadd.f32 %v2249, %v3529
    %v4170 = vadd.f32 %v2250, %v3530
    %v4171 = vadd.f32 %v2251, %v3531
    %v4172 = vadd.f32 %v2252, %v3532
    %v4173 = vadd.f32 %v2253, %v3533
    %v4174 = vadd.f32 %v2254, %v3534
    %v4175 = vadd.f32 %v2255, %v3535
    %v4176 = vadd.f32 %v2256, %v3536
    %v4177 = vadd.f32 %v2257, %v3537
    %v4178 = vadd.f32 %v2258, %v3538
    %v4179 = vadd.f32 %v2259, %v3539
    %v4180 = vadd.f32 %v2260, %v3540
    %v4181 = vadd.f32 %v2261, %v3541
    %v4182 = vadd.f32 %v2262, %v3542
    %v4183 = vadd.f32 %v2263, %v3543
    %v4184 = vadd.f32 %v2264, %v3544
    %v4185 = vadd.f32 %v2265, %v3545
    %v4186 = vadd.f32 %v2266, %v3546
    %v4187 = vadd.f32 %v2267, %v3547
    %v4188 = vadd.f32 %v2268, %v3548
    %v4189 = vadd.f32 %v2269, %v3549
    %v4190 = vadd.f32 %v2270, %v3550
    %v4191 = vadd.f32 %v2271, %v3551
    %v4192 = vadd.f32 %v2272, %v3552
    %v4193 = vadd.f32 %v2273, %v3553
    %v4194 = vadd.f32 %v2274, %v3554
    %v4195 = vadd.f32 %v2275, %v3555
    %v4196 = vadd.f32 %v2276, %v3556
    %v4197 = vadd.f32 %v2277, %v3557
    %v4198 = vadd.f32 %v2278, %v3558
    %v4199 = vadd.f32 %v2279, %v3559
    %v4200 = vadd.f32 %v2280, %v3560
    %v4201 = vadd.f32 %v2281, %v3561
    %v4202 = vadd.f32 %v2282, %v3562
    %v4203 = vadd.f32 %v2283, %v3563
    %v4204 = vadd.f32 %v2284, %v3564
    %v4205 = vadd.f32 %v2285, %v3565
    %v4206 = vadd.f32 %v2286, %v3566
    %v4207 = vadd.f32 %v2287, %v3567
    %v4208 = vadd.f32 %v2288, %v3568
    %v4209 = vadd.f32 %v2289, %v3569
    %v4210 = vadd.f32 %v2290, %v3570
    %v4211 = vadd.f32 %v2291, %v3571
    %v4212 = vadd.f32 %v2292, %v3572
    %v4213 = vadd.f32 %v2293, %v3573
    %v4214 = vadd.f32 %v2294, %v3574
    %v4215 = vadd.f32 %v2295, %v3575
    %v4216 = vadd.f32 %v2296, %v3576
    %v4217 = vadd.f32 %v2297, %v3577
    %v4218 = vadd.f32 %v2298, %v3578
    %v4219 = vadd.f32 %v2299, %v3579
    %v4220 = vadd.f32 %v2300, %v3580
    %v4221 = vadd.f32 %v2301, %v3581
    %v4222 = vadd.f32 %v2302, %v3582
    %v4223 = vadd.f32 %v2303, %v3583
    %v4224 = vadd.f32 %v2304, %v3584
    %v4225 = vadd.f32 %v2305, %v3585
    %v4226 = vadd.f32 %v2306, %v3586
    %v4227 = vadd.f32 %v2307, %v3587
    %v4228 = vadd.f32 %v2308, %v3588
    %v4229 = vadd.f32 %v2309, %v3589
    %v4230 = vadd.f32 %v2310, %v3590
    %v4231 = vadd.f32 %v2311, %v3591
    %v4232 = vadd.f32 %v2312, %v3592
    %v4233 = vadd.f32 %v2313, %v3593
    %v4234 = vadd.f32 %v2314, %v3594
    %v4235 = vadd.f32 %v2315, %v3595
    %v4236 = vadd.f32 %v2316, %v3596
    %v4237 = vadd.f32 %v2317, %v3597
    %v4238 = vadd.f32 %v2318, %v3598
    %v4239 = vadd.f32 %v2319, %v3599
    %v4240 = vadd.f32 %v2320, %v3600
    %v4241 = vadd.f32 %v2321, %v3601
    %v4242 = vadd.f32 %v2322, %v3602
    %v4243 = vadd.f32 %v2323, %v3603
    %v4244 = vadd.f32 %v2324, %v3604
    %v4245 = vadd.f32 %v2325, %v3605
    %v4246 = vadd.f32 %v2326, %v3606
    %v4247 = vadd.f32 %v2327, %v3607
    %v4248 = vadd.f32 %v2328, %v3608
    %v4249 = vadd.f32 %v2329, %v3609
    %v4250 = vadd.f32 %v2330, %v3610
    %v4251 = vadd.f32 %v2331, %v3611
    %v4252 = vadd.f32 %v2332, %v3612
    %v4253 = vadd.f32 %v2333, %v3613
    %v4254 = vadd.f32 %v2334, %v3614
    %v4255 = vadd.f32 %v2335, %v3615
    %v4256 = vadd.f32 %v2336, %v3616
    %v4257 = vadd.f32 %v2337, %v3617
    %v4258 = vadd.f32 %v2338, %v3618
    %v4259 = vadd.f32 %v2339, %v3619
    %v4260 = vadd.f32 %v2340, %v3620
    %v4261 = vadd.f32 %v2341, %v3621
    %v4262 = vadd.f32 %v2342, %v3622
    %v4263 = vadd.f32 %v2343, %v3623
    %v4264 = vadd.f32 %v2344, %v3624
    %v4265 = vadd.f32 %v2345, %v3625
    %v4266 = vadd.f32 %v2346, %v3626
    %v4267 = vadd.f32 %v2347, %v3627
    %v4268 = vadd.f32 %v2348, %v3628
    %v4269 = vadd.f32 %v2349, %v3629
    %v4270 = vadd.f32 %v2350, %v3630
    %v4271 = vadd.f32 %v2351, %v3631
    %v4272 = vadd.f32 %v2352, %v3632
    %v4273 = vadd.f32 %v2353, %v3633
    %v4274 = vadd.f32 %v2354, %v3634
    %v4275 = vadd.f32 %v2355, %v3635
    %v4276 = vadd.f32 %v2356, %v3636
    %v4277 = vadd.f32 %v2357, %v3637
    %v4278 = vadd.f32 %v2358, %v3638
    %v4279 = vadd.f32 %v2359, %v3639
    %v4280 = vadd.f32 %v2360, %v3640
    %v4281 = vadd.f32 %v2361, %v3641
    %v4282 = vadd.f32 %v2362, %v3642
    %v4283 = vadd.f32 %v2363, %v3643
    %v4284 = vadd.f32 %v2364, %v3644
    %v4285 = vadd.f32 %v2365, %v3645
    %v4286 = vadd.f32 %v2366, %v3646
    %v4287 = vadd.f32 %v2367, %v3647
    %v4288 = vadd.f32 %v2368, %v3648
    %v4289 = vadd.f32 %v2369, %v3649
    %v4290 = vadd.f32 %v2370, %v3650
    %v4291 = vadd.f32 %v2371, %v3651
    %v4292 = vadd.f32 %v2372, %v3652
    %v4293 = vadd.f32 %v2373, %v3653
    %v4294 = vadd.f32 %v2374, %v3654
    %v4295 = vadd.f32 %v2375, %v3655
    %v4296 = vadd.f32 %v2376, %v3656
    %v4297 = vadd.f32 %v2377, %v3657
    %v4298 = vadd.f32 %v2378, %v3658
    %v4299 = vadd.f32 %v2379, %v3659
    %v4300 = vadd.f32 %v2380, %v3660
    %v4301 = vadd.f32 %v2381, %v3661
    %v4302 = vadd.f32 %v2382, %v3662
    %v4303 = vadd.f32 %v2383, %v3663
    %v4304 = vadd.f32 %v2384, %v3664
    %v4305 = vadd.f32 %v2385, %v3665
    %v4306 = vadd.f32 %v2386, %v3666
    %v4307 = vadd.f32 %v2387, %v3667
    %v4308 = vadd.f32 %v2388, %v3668
    %v4309 = vadd.f32 %v2389, %v3669
    %v4310 = vadd.f32 %v2390, %v3670
    %v4311 = vadd.f32 %v2391, %v3671
    %v4312 = vadd.f32 %v2392, %v3672
    %v4313 = vadd.f32 %v2393, %v3673
    %v4314 = vadd.f32 %v2394, %v3674
    %v4315 = vadd.f32 %v2395, %v3675
    %v4316 = vadd.f32 %v2396, %v3676
    %v4317 = vadd.f32 %v2397, %v3677
    %v4318 = vadd.f32 %v2398, %v3678
    %v4319 = vadd.f32 %v2399, %v3679
    %v4320 = vadd.f32 %v2400, %v3680
    %v4321 = vadd.f32 %v2401, %v3681
    %v4322 = vadd.f32 %v2402, %v3682
    %v4323 = vadd.f32 %v2403, %v3683
    %v4324 = vadd.f32 %v2404, %v3684
    %v4325 = vadd.f32 %v2405, %v3685
    %v4326 = vadd.f32 %v2406, %v3686
    %v4327 = vadd.f32 %v2407, %v3687
    %v4328 = vadd.f32 %v2408, %v3688
    %v4329 = vadd.f32 %v2409, %v3689
    %v4330 = vadd.f32 %v2410, %v3690
    %v4331 = vadd.f32 %v2411, %v3691
    %v4332 = vadd.f32 %v2412, %v3692
    %v4333 = vadd.f32 %v2413, %v3693
    %v4334 = vadd.f32 %v2414, %v3694
    %v4335 = vadd.f32 %v2415, %v3695
    %v4336 = vadd.f32 %v2416, %v3696
    %v4337 = vadd.f32 %v2417, %v3697
    %v4338 = vadd.f32 %v2418, %v3698
    %v4339 = vadd.f32 %v2419, %v3699
    %v4340 = vadd.f32 %v2420, %v3700
    %v4341 = vadd.f32 %v2421, %v3701
    %v4342 = vadd.f32 %v2422, %v3702
    %v4343 = vadd.f32 %v2423, %v3703
    %v4344 = vadd.f32 %v2424, %v3704
    %v4345 = vadd.f32 %v2425, %v3705
    %v4346 = vadd.f32 %v2426, %v3706
    %v4347 = vadd.f32 %v2427, %v3707
    %v4348 = vadd.f32 %v2428, %v3708
    %v4349 = vadd.f32 %v2429, %v3709
    %v4350 = vadd.f32 %v2430, %v3710
    %v4351 = vadd.f32 %v2431, %v3711
    %v4352 = vadd.f32 %v2432, %v3712
    %v4353 = vadd.f32 %v2433, %v3713
    %v4354 = vadd.f32 %v2434, %v3714
    %v4355 = vadd.f32 %v2435, %v3715
    %v4356 = vadd.f32 %v2436, %v3716
    %v4357 = vadd.f32 %v2437, %v3717
    %v4358 = vadd.f32 %v2438, %v3718
    %v4359 = vadd.f32 %v2439, %v3719
    %v4360 = vadd.f32 %v2440, %v3720
    %v4361 = vadd.f32 %v2441, %v3721
    %v4362 = vadd.f32 %v2442, %v3722
    %v4363 = vadd.f32 %v2443, %v3723
    %v4364 = vadd.f32 %v2444, %v3724
    %v4365 = vadd.f32 %v2445, %v3725
    %v4366 = vadd.f32 %v2446, %v3726
    %v4367 = vadd.f32 %v2447, %v3727
    %v4368 = vadd.f32 %v2448, %v3728
    %v4369 = vadd.f32 %v2449, %v3729
    %v4370 = vadd.f32 %v2450, %v3730
    %v4371 = vadd.f32 %v2451, %v3731
    %v4372 = vadd.f32 %v2452, %v3732
    %v4373 = vadd.f32 %v2453, %v3733
    %v4374 = vadd.f32 %v2454, %v3734
    %v4375 = vadd.f32 %v2455, %v3735
    %v4376 = vadd.f32 %v2456, %v3736
    %v4377 = vadd.f32 %v2457, %v3737
    %v4378 = vadd.f32 %v2458, %v3738
    %v4379 = vadd.f32 %v2459, %v3739
    %v4380 = vadd.f32 %v2460, %v3740
    %v4381 = vadd.f32 %v2461, %v3741
    %v4382 = vadd.f32 %v2462, %v3742
    %v4383 = vadd.f32 %v2463, %v3743
    %v4384 = vadd.f32 %v2464, %v3744
    %v4385 = vadd.f32 %v2465, %v3745
    %v4386 = vadd.f32 %v2466, %v3746
    %v4387 = vadd.f32 %v2467, %v3747
    %v4388 = vadd.f32 %v2468, %v3748
    %v4389 = vadd.f32 %v2469, %v3749
    %v4390 = vadd.f32 %v2470, %v3750
    %v4391 = vadd.f32 %v2471, %v3751
    %v4392 = vadd.f32 %v2472, %v3752
    %v4393 = vadd.f32 %v2473, %v3753
    %v4394 = vadd.f32 %v2474, %v3754
    %v4395 = vadd.f32 %v2475, %v3755
    %v4396 = vadd.f32 %v2476, %v3756
    %v4397 = vadd.f32 %v2477, %v3757
    %v4398 = vadd.f32 %v2478, %v3758
    %v4399 = vadd.f32 %v2479, %v3759
    %v4400 = vadd.f32 %v2480, %v3760
    %v4401 = vadd.f32 %v2481, %v3761
    %v4402 = vadd.f32 %v2482, %v3762
    %v4403 = vadd.f32 %v2483, %v3763
    %v4404 = vadd.f32 %v2484, %v3764
    %v4405 = vadd.f32 %v2485, %v3765
    %v4406 = vadd.f32 %v2486, %v3766
    %v4407 = vadd.f32 %v2487, %v3767
    %v4408 = vadd.f32 %v2488, %v3768
    %v4409 = vadd.f32 %v2489, %v3769
    %v4410 = vadd.f32 %v2490, %v3770
    %v4411 = vadd.f32 %v2491, %v3771
    %v4412 = vadd.f32 %v2492, %v3772
    %v4413 = vadd.f32 %v2493, %v3773
    %v4414 = vadd.f32 %v2494, %v3774
    %v4415 = vadd.f32 %v2495, %v3775
    %v4416 = vadd.f32 %v2496, %v3776
    %v4417 = vadd.f32 %v2497, %v3777
    %v4418 = vadd.f32 %v2498, %v3778
    %v4419 = vadd.f32 %v2499, %v3779
    %v4420 = vadd.f32 %v2500, %v3780
    %v4421 = vadd.f32 %v2501, %v3781
    %v4422 = vadd.f32 %v2502, %v3782
    %v4423 = vadd.f32 %v2503, %v3783
    %v4424 = vadd.f32 %v2504, %v3784
    %v4425 = vadd.f32 %v2505, %v3785
    %v4426 = vadd.f32 %v2506, %v3786
    %v4427 = vadd.f32 %v2507, %v3787
    %v4428 = vadd.f32 %v2508, %v3788
    %v4429 = vadd.f32 %v2509, %v3789
    %v4430 = vadd.f32 %v2510, %v3790
    %v4431 = vadd.f32 %v2511, %v3791
    %v4432 = vadd.f32 %v2512, %v3792
    %v4433 = vadd.f32 %v2513, %v3793
    %v4434 = vadd.f32 %v2514, %v3794
    %v4435 = vadd.f32 %v2515, %v3795
    %v4436 = vadd.f32 %v2516, %v3796
    %v4437 = vadd.f32 %v2517, %v3797
    %v4438 = vadd.f32 %v2518, %v3798
    %v4439 = vadd.f32 %v2519, %v3799
    %v4440 = vadd.f32 %v2520, %v3800
    %v4441 = vadd.f32 %v2521, %v3801
    %v4442 = vadd.f32 %v2522, %v3802
    %v4443 = vadd.f32 %v2523, %v3803
    %v4444 = vadd.f32 %v2524, %v3804
    %v4445 = vadd.f32 %v2525, %v3805
    %v4446 = vadd.f32 %v2526, %v3806
    %v4447 = vadd.f32 %v2527, %v3807
    %v4448 = vadd.f32 %v2528, %v3808
    %v4449 = vadd.f32 %v2529, %v3809
    %v4450 = vadd.f32 %v2530, %v3810
    %v4451 = vadd.f32 %v2531, %v3811
    %v4452 = vadd.f32 %v2532, %v3812
    %v4453 = vadd.f32 %v2533, %v3813
    %v4454 = vadd.f32 %v2534, %v3814
    %v4455 = vadd.f32 %v2535, %v3815
    %v4456 = vadd.f32 %v2536, %v3816
    %v4457 = vadd.f32 %v2537, %v3817
    %v4458 = vadd.f32 %v2538, %v3818
    %v4459 = vadd.f32 %v2539, %v3819
    %v4460 = vadd.f32 %v2540, %v3820
    %v4461 = vadd.f32 %v2541, %v3821
    %v4462 = vadd.f32 %v2542, %v3822
    %v4463 = vadd.f32 %v2543, %v3823
    %v4464 = vadd.f32 %v2544, %v3824
    %v4465 = vadd.f32 %v2545, %v3825
    %v4466 = vadd.f32 %v2546, %v3826
    %v4467 = vadd.f32 %v2547, %v3827
    %v4468 = vadd.f32 %v2548, %v3828
    %v4469 = vadd.f32 %v2549, %v3829
    %v4470 = vadd.f32 %v2550, %v3830
    %v4471 = vadd.f32 %v2551, %v3831
    %v4472 = vadd.f32 %v2552, %v3832
    %v4473 = vadd.f32 %v2553, %v3833
    %v4474 = vadd.f32 %v2554, %v3834
    %v4475 = vadd.f32 %v2555, %v3835
    %v4476 = vadd.f32 %v2556, %v3836
    %v4477 = vadd.f32 %v2557, %v3837
    %v4478 = vadd.f32 %v2558, %v3838
    %v4479 = vadd.f32 %v2559, %v3839
    %v4480 = vadd.f32 %v2560, %v3840
    %v4481 = vadd.f32 %v2561, %v3841
    %v4482 = vadd.f32 %v2562, %v3842
    %v4483 = vadd.f32 %v2563, %v3843
    %v4484 = vadd.f32 %v2564, %v3844
    %v4485 = vadd.f32 %v2565, %v3845
    %v4486 = vadd.f32 %v2566, %v3846
    %v4487 = vadd.f32 %v2567, %v3847
    %v4488 = vadd.f32 %v2568, %v3848
    %v4489 = vadd.f32 %v2569, %v3849
    %v4490 = vadd.f32 %v2570, %v3850
    %v4491 = vadd.f32 %v2571, %v3851
    %v4492 = vadd.f32 %v2572, %v3852
    %v4493 = vadd.f32 %v2573, %v3853
    %v4494 = vadd.f32 %v2574, %v3854
    %v4495 = vadd.f32 %v2575, %v3855
    %v4496 = vadd.f32 %v2576, %v3856
    %v4497 = vadd.f32 %v2577, %v3857
    %v4498 = vadd.f32 %v2578, %v3858
    %v4499 = vadd.f32 %v2579, %v3859
    %v4500 = vadd.f32 %v2580, %v3860
    %v4501 = vadd.f32 %v2581, %v3861
    %v4502 = vadd.f32 %v2582, %v3862
    %v4503 = vadd.f32 %v2583, %v3863
    %v4504 = vadd.f32 %v2584, %v3864
    %v4505 = vadd.f32 %v2585, %v3865
    %v4506 = vadd.f32 %v2586, %v3866
    %v4507 = vadd.f32 %v2587, %v3867
    %v4508 = vadd.f32 %v2588, %v3868
    %v4509 = vadd.f32 %v2589, %v3869
    %v4510 = vadd.f32 %v2590, %v3870
    %v4511 = vadd.f32 %v2591, %v3871
    %v4512 = vadd.f32 %v2592, %v3872
    %v4513 = vadd.f32 %v2593, %v3873
    %v4514 = vadd.f32 %v2594, %v3874
    %v4515 = vadd.f32 %v2595, %v3875
    %v4516 = vadd.f32 %v2596, %v3876
    %v4517 = vadd.f32 %v2597, %v3877
    %v4518 = vadd.f32 %v2598, %v3878
    %v4519 = vadd.f32 %v2599, %v3879
    %v4520 = vadd.f32 %v2600, %v3880
    %v4521 = vadd.f32 %v2601, %v3881
    %v4522 = vadd.f32 %v2602, %v3882
    %v4523 = vadd.f32 %v2603, %v3883
    %v4524 = vadd.f32 %v2604, %v3884
    %v4525 = vadd.f32 %v2605, %v3885
    %v4526 = vadd.f32 %v2606, %v3886
    %v4527 = vadd.f32 %v2607, %v3887
    %v4528 = vadd.f32 %v2608, %v3888
    %v4529 = vadd.f32 %v2609, %v3889
    %v4530 = vadd.f32 %v2610, %v3890
    %v4531 = vadd.f32 %v2611, %v3891
    %v4532 = vadd.f32 %v2612, %v3892
    %v4533 = vadd.f32 %v2613, %v3893
    %v4534 = vadd.f32 %v2614, %v3894
    %v4535 = vadd.f32 %v2615, %v3895
    %v4536 = vadd.f32 %v2616, %v3896
    %v4537 = vadd.f32 %v2617, %v3897
    %v4538 = vadd.f32 %v2618, %v3898
    %v4539 = vadd.f32 %v2619, %v3899
    %v4540 = vadd.f32 %v2620, %v3900
    %v4541 = vadd.f32 %v2621, %v3901
    %v4542 = vadd.f32 %v2622, %v3902
    %v4543 = vadd.f32 %v2623, %v3903
    %v4544 = vadd.f32 %v2624, %v3904
    %v4545 = vadd.f32 %v2625, %v3905
    %v4546 = vadd.f32 %v2626, %v3906
    %v4547 = vadd.f32 %v2627, %v3907
    %v4548 = vadd.f32 %v2628, %v3908
    %v4549 = vadd.f32 %v2629, %v3909
    %v4550 = vadd.f32 %v2630, %v3910
    %v4551 = vadd.f32 %v2631, %v3911
    %v4552 = vadd.f32 %v2632, %v3912
    %v4553 = vadd.f32 %v2633, %v3913
    %v4554 = vadd.f32 %v2634, %v3914
    %v4555 = vadd.f32 %v2635, %v3915
    %v4556 = vadd.f32 %v2636, %v3916
    %v4557 = vadd.f32 %v2637, %v3917
    %v4558 = vadd.f32 %v2638, %v3918
    %v4559 = vadd.f32 %v2639, %v3919
    %v4560 = vadd.f32 %v2640, %v3920
    %v4561 = vadd.f32 %v2641, %v3921
    %v4562 = vadd.f32 %v2642, %v3922
    %v4563 = vadd.f32 %v2643, %v3923
    %v4564 = vadd.f32 %v2644, %v3924
    %v4565 = vadd.f32 %v2645, %v3925
    %v4566 = vadd.f32 %v2646, %v3926
    %v4567 = vadd.f32 %v2647, %v3927
    %v4568 = vadd.f32 %v2648, %v3928
    %v4569 = vadd.f32 %v2649, %v3929
    %v4570 = vadd.f32 %v2650, %v3930
    %v4571 = vadd.f32 %v2651, %v3931
    %v4572 = vadd.f32 %v2652, %v3932
    %v4573 = vadd.f32 %v2653, %v3933
    %v4574 = vadd.f32 %v2654, %v3934
    %v4575 = vadd.f32 %v2655, %v3935
    %v4576 = vadd.f32 %v2656, %v3936
    %v4577 = vadd.f32 %v2657, %v3937
    %v4578 = vadd.f32 %v2658, %v3938
    %v4579 = vadd.f32 %v2659, %v3939
    %v4580 = vadd.f32 %v2660, %v3940
    %v4581 = vadd.f32 %v2661, %v3941
    %v4582 = vadd.f32 %v2662, %v3942
    %v4583 = vadd.f32 %v2663, %v3943
    %v4584 = vadd.f32 %v2664, %v3944
    %v4585 = vadd.f32 %v2665, %v3945
    %v4586 = vadd.f32 %v2666, %v3946
    %v4587 = vadd.f32 %v2667, %v3947
    %v4588 = vadd.f32 %v2668, %v3948
    %v4589 = vadd.f32 %v2669, %v3949
    %v4590 = vadd.f32 %v2670, %v3950
    %v4591 = vadd.f32 %v2671, %v3951
    %v4592 = vadd.f32 %v2672, %v3952
    %v4593 = vadd.f32 %v2673, %v3953
    %v4594 = vadd.f32 %v2674, %v3954
    %v4595 = vadd.f32 %v2675, %v3955
    %v4596 = vadd.f32 %v2676, %v3956
    %v4597 = vadd.f32 %v2677, %v3957
    %v4598 = vadd.f32 %v2678, %v3958
    %v4599 = vadd.f32 %v2679, %v3959
    %v4600 = vadd.f32 %v2680, %v3960
    %v4601 = vadd.f32 %v2681, %v3961
    %v4602 = vadd.f32 %v2682, %v3962
    %v4603 = vadd.f32 %v2683, %v3963
    %v4604 = vadd.f32 %v2684, %v3964
    %v4605 = vadd.f32 %v2685, %v3965
    %v4606 = vadd.f32 %v2686, %v3966
    %v4607 = vadd.f32 %v2687, %v3967
    %v4608 = vadd.f32 %v2688, %v3968
    %v4609 = vadd.f32 %v2689, %v3969
    %v4610 = vadd.f32 %v2690, %v3970
    %v4611 = vadd.f32 %v2691, %v3971
    %v4612 = vadd.f32 %v2692, %v3972
    %v4613 = vadd.f32 %v2693, %v3973
    %v4614 = vadd.f32 %v2694, %v3974
    %v4615 = vadd.f32 %v2695, %v3975
    %v4616 = vadd.f32 %v2696, %v3976
    %v4617 = vadd.f32 %v2697, %v3977
    %v4618 = vadd.f32 %v2698, %v3978
    %v4619 = vadd.f32 %v2699, %v3979
    %v4620 = vadd.f32 %v2700, %v3980
    %v4621 = vadd.f32 %v2701, %v3981
    %v4622 = vadd.f32 %v2702, %v3982
    %v4623 = vadd.f32 %v2703, %v3983
    %v4624 = vadd.f32 %v2704, %v3984
    %v4625 = vadd.f32 %v2705, %v3985
    %v4626 = vadd.f32 %v2706, %v3986
    %v4627 = vadd.f32 %v2707, %v3987
    %v4628 = vadd.f32 %v2708, %v3988
    %v4629 = vadd.f32 %v2709, %v3989
    %v4630 = vadd.f32 %v2710, %v3990
    %v4631 = vadd.f32 %v2711, %v3991
    %v4632 = vadd.f32 %v2712, %v3992
    %v4633 = vadd.f32 %v2713, %v3993
    %v4634 = vadd.f32 %v2714, %v3994
    %v4635 = vadd.f32 %v2715, %v3995
    %v4636 = vadd.f32 %v2716, %v3996
    %v4637 = vadd.f32 %v2717, %v3997
    %v4638 = vadd.f32 %v2718, %v3998
    %v4639 = vadd.f32 %v2719, %v3999
    %v4640 = vadd.f32 %v2720, %v4000
    %v4641 = vadd.f32 %v2721, %v4001
    %v4642 = vadd.f32 %v2722, %v4002
    %v4643 = vadd.f32 %v2723, %v4003
    %v4644 = vadd.f32 %v2724, %v4004
    %v4645 = vadd.f32 %v2725, %v4005
    %v4646 = vadd.f32 %v2726, %v4006
    %v4647 = vadd.f32 %v2727, %v4007
    %v4648 = vadd.f32 %v2728, %v4008
    %v4649 = vadd.f32 %v2729, %v4009
    %v4650 = vadd.f32 %v2730, %v4010
    %v4651 = vadd.f32 %v2731, %v4011
    %v4652 = vadd.f32 %v2732, %v4012
    %v4653 = vadd.f32 %v2733, %v4013
    %v4654 = vadd.f32 %v2734, %v4014
    %v4655 = vadd.f32 %v2735, %v4015
    %v4656 = vadd.f32 %v2736, %v4016
    %v4657 = vadd.f32 %v2737, %v4017
    %v4658 = vadd.f32 %v2738, %v4018
    %v4659 = vadd.f32 %v2739, %v4019
    %v4660 = vadd.f32 %v2740, %v4020
    %v4661 = vadd.f32 %v2741, %v4021
    %v4662 = vadd.f32 %v2742, %v4022
    %v4663 = vadd.f32 %v2743, %v4023
    %v4664 = vadd.f32 %v2744, %v4024
    %v4665 = vadd.f32 %v2745, %v4025
    %v4666 = vadd.f32 %v2746, %v4026
    %v4667 = vadd.f32 %v2747, %v4027
    %v4668 = vadd.f32 %v2748, %v4028
    %v4669 = vadd.f32 %v2749, %v4029
    %v4670 = vadd.f32 %v2750, %v4030
    %v4671 = vadd.f32 %v2751, %v4031
    %v4672 = vadd.f32 %v2752, %v4032
    %v4673 = vadd.f32 %v2753, %v4033
    %v4674 = vadd.f32 %v4034, %v4044
    %v4675 = vadd.f32 %v4674, %v4054
    %v4676 = vadd.f32 %v4675, %v4064
    %v4677 = vadd.f32 %v4676, %v4074
    %v4678 = vadd.f32 %v4677, %v4084
    %v4679 = vadd.f32 %v4678, %v4094
    %v4680 = vadd.f32 %v4679, %v4104
    %v4681 = vadd.f32 %v4680, %v4114
    %v4682 = vadd.f32 %v4681, %v4124
    %v4683 = vadd.f32 %v4682, %v4134
    %v4684 = vadd.f32 %v4683, %v4144
    %v4685 = vadd.f32 %v4684, %v4154
    %v4686 = vadd.f32 %v4685, %v4164
    %v4687 = vadd.f32 %v4686, %v4174
    %v4688 = vadd.f32 %v4687, %v4184
    %v4689 = vadd.f32 %v4688, %v4194
    %v4690 = vadd.f32 %v4689, %v4204
    %v4691 = vadd.f32 %v4690, %v4214
    %v4692 = vadd.f32 %v4691, %v4224
    %v4693 = vadd.f32 %v4692, %v4234
    %v4694 = vadd.f32 %v4693, %v4244
    %v4695 = vadd.f32 %v4694, %v4254
    %v4696 = vadd.f32 %v4695, %v4264
    %v4697 = vadd.f32 %v4696, %v4274
    %v4698 = vadd.f32 %v4697, %v4284
    %v4699 = vadd.f32 %v4698, %v4294
    %v4700 = vadd.f32 %v4699, %v4304
    %v4701 = vadd.f32 %v4700, %v4314
    %v4702 = vadd.f32 %v4701, %v4324
    %v4703 = vadd.f32 %v4702, %v4334
    %v4704 = vadd.f32 %v4703, %v4344
    %v4705 = vrot.slane %v4704, 4
    %v4706 = vadd.f32 %v4704, %v4705
    %v4707 = vrot.slane %v4706, 2
    %v4708 = vadd.f32 %v4706, %v4707
    %v4709 = vrot.slane %v4708, 1
    %v4710 = vadd.f32 %v4708, %v4709
    %v4711 = vadd.f32 %v4035, %v4045
    %v4712 = vadd.f32 %v4711, %v4055
    %v4713 = vadd.f32 %v4712, %v4065
    %v4714 = vadd.f32 %v4713, %v4075
    %v4715 = vadd.f32 %v4714, %v4085
    %v4716 = vadd.f32 %v4715, %v4095
    %v4717 = vadd.f32 %v4716, %v4105
    %v4718 = vadd.f32 %v4717, %v4115
    %v4719 = vadd.f32 %v4718, %v4125
    %v4720 = vadd.f32 %v4719, %v4135
    %v4721 = vadd.f32 %v4720, %v4145
    %v4722 = vadd.f32 %v4721, %v4155
    %v4723 = vadd.f32 %v4722, %v4165
    %v4724 = vadd.f32 %v4723, %v4175
    %v4725 = vadd.f32 %v4724, %v4185
    %v4726 = vadd.f32 %v4725, %v4195
    %v4727 = vadd.f32 %v4726, %v4205
    %v4728 = vadd.f32 %v4727, %v4215
    %v4729 = vadd.f32 %v4728, %v4225
    %v4730 = vadd.f32 %v4729, %v4235
    %v4731 = vadd.f32 %v4730, %v4245
    %v4732 = vadd.f32 %v4731, %v4255
    %v4733 = vadd.f32 %v4732, %v4265
    %v4734 = vadd.f32 %v4733, %v4275
    %v4735 = vadd.f32 %v4734, %v4285
    %v4736 = vadd.f32 %v4735, %v4295
    %v4737 = vadd.f32 %v4736, %v4305
    %v4738 = vadd.f32 %v4737, %v4315
    %v4739 = vadd.f32 %v4738, %v4325
    %v4740 = vadd.f32 %v4739, %v4335
    %v4741 = vadd.f32 %v4740, %v4345
    %v4742 = vrot.slane %v4741, 4
    %v4743 = vadd.f32 %v4741, %v4742
    %v4744 = vrot.slane %v4743, 2
    %v4745 = vadd.f32 %v4743, %v4744
    %v4746 = vrot.slane %v4745, 1
    %v4747 = vadd.f32 %v4745, %v4746
    %v4748 = vadd.f32 %v4036, %v4046
    %v4749 = vadd.f32 %v4748, %v4056
    %v4750 = vadd.f32 %v4749, %v4066
    %v4751 = vadd.f32 %v4750, %v4076
    %v4752 = vadd.f32 %v4751, %v4086
    %v4753 = vadd.f32 %v4752, %v4096
    %v4754 = vadd.f32 %v4753, %v4106
    %v4755 = vadd.f32 %v4754, %v4116
    %v4756 = vadd.f32 %v4755, %v4126
    %v4757 = vadd.f32 %v4756, %v4136
    %v4758 = vadd.f32 %v4757, %v4146
    %v4759 = vadd.f32 %v4758, %v4156
    %v4760 = vadd.f32 %v4759, %v4166
    %v4761 = vadd.f32 %v4760, %v4176
    %v4762 = vadd.f32 %v4761, %v4186
    %v4763 = vadd.f32 %v4762, %v4196
    %v4764 = vadd.f32 %v4763, %v4206
    %v4765 = vadd.f32 %v4764, %v4216
    %v4766 = vadd.f32 %v4765, %v4226
    %v4767 = vadd.f32 %v4766, %v4236
    %v4768 = vadd.f32 %v4767, %v4246
    %v4769 = vadd.f32 %v4768, %v4256
    %v4770 = vadd.f32 %v4769, %v4266
    %v4771 = vadd.f32 %v4770, %v4276
    %v4772 = vadd.f32 %v4771, %v4286
    %v4773 = vadd.f32 %v4772, %v4296
    %v4774 = vadd.f32 %v4773, %v4306
    %v4775 = vadd.f32 %v4774, %v4316
    %v4776 = vadd.f32 %v4775, %v4326
    %v4777 = vadd.f32 %v4776, %v4336
    %v4778 = vadd.f32 %v4777, %v4346
    %v4779 = vrot.slane %v4778, 4
    %v4780 = vadd.f32 %v4778, %v4779
    %v4781 = vrot.slane %v4780, 2
    %v4782 = vadd.f32 %v4780, %v4781
    %v4783 = vrot.slane %v4782, 1
    %v4784 = vadd.f32 %v4782, %v4783
    %v4785 = vadd.f32 %v4037, %v4047
    %v4786 = vadd.f32 %v4785, %v4057
    %v4787 = vadd.f32 %v4786, %v4067
    %v4788 = vadd.f32 %v4787, %v4077
    %v4789 = vadd.f32 %v4788, %v4087
    %v4790 = vadd.f32 %v4789, %v4097
    %v4791 = vadd.f32 %v4790, %v4107
    %v4792 = vadd.f32 %v4791, %v4117
    %v4793 = vadd.f32 %v4792, %v4127
    %v4794 = vadd.f32 %v4793, %v4137
    %v4795 = vadd.f32 %v4794, %v4147
    %v4796 = vadd.f32 %v4795, %v4157
    %v4797 = vadd.f32 %v4796, %v4167
    %v4798 = vadd.f32 %v4797, %v4177
    %v4799 = vadd.f32 %v4798, %v4187
    %v4800 = vadd.f32 %v4799, %v4197
    %v4801 = vadd.f32 %v4800, %v4207
    %v4802 = vadd.f32 %v4801, %v4217
    %v4803 = vadd.f32 %v4802, %v4227
    %v4804 = vadd.f32 %v4803, %v4237
    %v4805 = vadd.f32 %v4804, %v4247
    %v4806 = vadd.f32 %v4805, %v4257
    %v4807 = vadd.f32 %v4806, %v4267
    %v4808 = vadd.f32 %v4807, %v4277
    %v4809 = vadd.f32 %v4808, %v4287
    %v4810 = vadd.f32 %v4809, %v4297
    %v4811 = vadd.f32 %v4810, %v4307
    %v4812 = vadd.f32 %v4811, %v4317
    %v4813 = vadd.f32 %v4812, %v4327
    %v4814 = vadd.f32 %v4813, %v4337
    %v4815 = vadd.f32 %v4814, %v4347
    %v4816 = vrot.slane %v4815, 4
    %v4817 = vadd.f32 %v4815, %v4816
    %v4818 = vrot.slane %v4817, 2
    %v4819 = vadd.f32 %v4817, %v4818
    %v4820 = vrot.slane %v4819, 1
    %v4821 = vadd.f32 %v4819, %v4820
    %v4822 = vadd.f32 %v4038, %v4048
    %v4823 = vadd.f32 %v4822, %v4058
    %v4824 = vadd.f32 %v4823, %v4068
    %v4825 = vadd.f32 %v4824, %v4078
    %v4826 = vadd.f32 %v4825, %v4088
    %v4827 = vadd.f32 %v4826, %v4098
    %v4828 = vadd.f32 %v4827, %v4108
    %v4829 = vadd.f32 %v4828, %v4118
    %v4830 = vadd.f32 %v4829, %v4128
    %v4831 = vadd.f32 %v4830, %v4138
    %v4832 = vadd.f32 %v4831, %v4148
    %v4833 = vadd.f32 %v4832, %v4158
    %v4834 = vadd.f32 %v4833, %v4168
    %v4835 = vadd.f32 %v4834, %v4178
    %v4836 = vadd.f32 %v4835, %v4188
    %v4837 = vadd.f32 %v4836, %v4198
    %v4838 = vadd.f32 %v4837, %v4208
    %v4839 = vadd.f32 %v4838, %v4218
    %v4840 = vadd.f32 %v4839, %v4228
    %v4841 = vadd.f32 %v4840, %v4238
    %v4842 = vadd.f32 %v4841, %v4248
    %v4843 = vadd.f32 %v4842, %v4258
    %v4844 = vadd.f32 %v4843, %v4268
    %v4845 = vadd.f32 %v4844, %v4278
    %v4846 = vadd.f32 %v4845, %v4288
    %v4847 = vadd.f32 %v4846, %v4298
    %v4848 = vadd.f32 %v4847, %v4308
    %v4849 = vadd.f32 %v4848, %v4318
    %v4850 = vadd.f32 %v4849, %v4328
    %v4851 = vadd.f32 %v4850, %v4338
    %v4852 = vadd.f32 %v4851, %v4348
    %v4853 = vrot.slane %v4852, 4
    %v4854 = vadd.f32 %v4852, %v4853
    %v4855 = vrot.slane %v4854, 2
    %v4856 = vadd.f32 %v4854, %v4855
    %v4857 = vrot.slane %v4856, 1
    %v4858 = vadd.f32 %v4856, %v4857
    %v4859 = vadd.f32 %v4039, %v4049
    %v4860 = vadd.f32 %v4859, %v4059
    %v4861 = vadd.f32 %v4860, %v4069
    %v4862 = vadd.f32 %v4861, %v4079
    %v4863 = vadd.f32 %v4862, %v4089
    %v4864 = vadd.f32 %v4863, %v4099
    %v4865 = vadd.f32 %v4864, %v4109
    %v4866 = vadd.f32 %v4865, %v4119
    %v4867 = vadd.f32 %v4866, %v4129
    %v4868 = vadd.f32 %v4867, %v4139
    %v4869 = vadd.f32 %v4868, %v4149
    %v4870 = vadd.f32 %v4869, %v4159
    %v4871 = vadd.f32 %v4870, %v4169
    %v4872 = vadd.f32 %v4871, %v4179
    %v4873 = vadd.f32 %v4872, %v4189
    %v4874 = vadd.f32 %v4873, %v4199
    %v4875 = vadd.f32 %v4874, %v4209
    %v4876 = vadd.f32 %v4875, %v4219
    %v4877 = vadd.f32 %v4876, %v4229
    %v4878 = vadd.f32 %v4877, %v4239
    %v4879 = vadd.f32 %v4878, %v4249
    %v4880 = vadd.f32 %v4879, %v4259
    %v4881 = vadd.f32 %v4880, %v4269
    %v4882 = vadd.f32 %v4881, %v4279
    %v4883 = vadd.f32 %v4882, %v4289
    %v4884 = vadd.f32 %v4883, %v4299
    %v4885 = vadd.f32 %v4884, %v4309
    %v4886 = vadd.f32 %v4885, %v4319
    %v4887 = vadd.f32 %v4886, %v4329
    %v4888 = vadd.f32 %v4887, %v4339
    %v4889 = vadd.f32 %v4888, %v4349
    %v4890 = vrot.slane %v4889, 4
    %v4891 = vadd.f32 %v4889, %v4890
    %v4892 = vrot.slane %v4891, 2
    %v4893 = vadd.f32 %v4891, %v4892
    %v4894 = vrot.slane %v4893, 1
    %v4895 = vadd.f32 %v4893, %v4894
    %v4896 = vadd.f32 %v4040, %v4050
    %v4897 = vadd.f32 %v4896, %v4060
    %v4898 = vadd.f32 %v4897, %v4070
    %v4899 = vadd.f32 %v4898, %v4080
    %v4900 = vadd.f32 %v4899, %v4090
    %v4901 = vadd.f32 %v4900, %v4100
    %v4902 = vadd.f32 %v4901, %v4110
    %v4903 = vadd.f32 %v4902, %v4120
    %v4904 = vadd.f32 %v4903, %v4130
    %v4905 = vadd.f32 %v4904, %v4140
    %v4906 = vadd.f32 %v4905, %v4150
    %v4907 = vadd.f32 %v4906, %v4160
    %v4908 = vadd.f32 %v4907, %v4170
    %v4909 = vadd.f32 %v4908, %v4180
    %v4910 = vadd.f32 %v4909, %v4190
    %v4911 = vadd.f32 %v4910, %v4200
    %v4912 = vadd.f32 %v4911, %v4210
    %v4913 = vadd.f32 %v4912, %v4220
    %v4914 = vadd.f32 %v4913, %v4230
    %v4915 = vadd.f32 %v4914, %v4240
    %v4916 = vadd.f32 %v4915, %v4250
    %v4917 = vadd.f32 %v4916, %v4260
    %v4918 = vadd.f32 %v4917, %v4270
    %v4919 = vadd.f32 %v4918, %v4280
    %v4920 = vadd.f32 %v4919, %v4290
    %v4921 = vadd.f32 %v4920, %v4300
    %v4922 = vadd.f32 %v4921, %v4310
    %v4923 = vadd.f32 %v4922, %v4320
    %v4924 = vadd.f32 %v4923, %v4330
    %v4925 = vadd.f32 %v4924, %v4340
    %v4926 = vadd.f32 %v4925, %v4350
    %v4927 = vrot.slane %v4926, 4
    %v4928 = vadd.f32 %v4926, %v4927
    %v4929 = vrot.slane %v4928, 2
    %v4930 = vadd.f32 %v4928, %v4929
    %v4931 = vrot.slane %v4930, 1
    %v4932 = vadd.f32 %v4930, %v4931
    %v4933 = vadd.f32 %v4041, %v4051
    %v4934 = vadd.f32 %v4933, %v4061
    %v4935 = vadd.f32 %v4934, %v4071
    %v4936 = vadd.f32 %v4935, %v4081
    %v4937 = vadd.f32 %v4936, %v4091
    %v4938 = vadd.f32 %v4937, %v4101
    %v4939 = vadd.f32 %v4938, %v4111
    %v4940 = vadd.f32 %v4939, %v4121
    %v4941 = vadd.f32 %v4940, %v4131
    %v4942 = vadd.f32 %v4941, %v4141
    %v4943 = vadd.f32 %v4942, %v4151
    %v4944 = vadd.f32 %v4943, %v4161
    %v4945 = vadd.f32 %v4944, %v4171
    %v4946 = vadd.f32 %v4945, %v4181
    %v4947 = vadd.f32 %v4946, %v4191
    %v4948 = vadd.f32 %v4947, %v4201
    %v4949 = vadd.f32 %v4948, %v4211
    %v4950 = vadd.f32 %v4949, %v4221
    %v4951 = vadd.f32 %v4950, %v4231
    %v4952 = vadd.f32 %v4951, %v4241
    %v4953 = vadd.f32 %v4952, %v4251
    %v4954 = vadd.f32 %v4953, %v4261
    %v4955 = vadd.f32 %v4954, %v4271
    %v4956 = vadd.f32 %v4955, %v4281
    %v4957 = vadd.f32 %v4956, %v4291
    %v4958 = vadd.f32 %v4957, %v4301
    %v4959 = vadd.f32 %v4958, %v4311
    %v4960 = vadd.f32 %v4959, %v4321
    %v4961 = vadd.f32 %v4960, %v4331
    %v4962 = vadd.f32 %v4961, %v4341
    %v4963 = vadd.f32 %v4962, %v4351
    %v4964 = vrot.slane %v4963, 4
    %v4965 = vadd.f32 %v4963, %v4964
    %v4966 = vrot.slane %v4965, 2
    %v4967 = vadd.f32 %v4965, %v4966
    %v4968 = vrot.slane %v4967, 1
    %v4969 = vadd.f32 %v4967, %v4968
    %v4970 = vadd.f32 %v4042, %v4052
    %v4971 = vadd.f32 %v4970, %v4062
    %v4972 = vadd.f32 %v4971, %v4072
    %v4973 = vadd.f32 %v4972, %v4082
    %v4974 = vadd.f32 %v4973, %v4092
    %v4975 = vadd.f32 %v4974, %v4102
    %v4976 = vadd.f32 %v4975, %v4112
    %v4977 = vadd.f32 %v4976, %v4122
    %v4978 = vadd.f32 %v4977, %v4132
    %v4979 = vadd.f32 %v4978, %v4142
    %v4980 = vadd.f32 %v4979, %v4152
    %v4981 = vadd.f32 %v4980, %v4162
    %v4982 = vadd.f32 %v4981, %v4172
    %v4983 = vadd.f32 %v4982, %v4182
    %v4984 = vadd.f32 %v4983, %v4192
    %v4985 = vadd.f32 %v4984, %v4202
    %v4986 = vadd.f32 %v4985, %v4212
    %v4987 = vadd.f32 %v4986, %v4222
    %v4988 = vadd.f32 %v4987, %v4232
    %v4989 = vadd.f32 %v4988, %v4242
    %v4990 = vadd.f32 %v4989, %v4252
    %v4991 = vadd.f32 %v4990, %v4262
    %v4992 = vadd.f32 %v4991, %v4272
    %v4993 = vadd.f32 %v4992, %v4282
    %v4994 = vadd.f32 %v4993, %v4292
    %v4995 = vadd.f32 %v4994, %v4302
    %v4996 = vadd.f32 %v4995, %v4312
    %v4997 = vadd.f32 %v4996, %v4322
    %v4998 = vadd.f32 %v4997, %v4332
    %v4999 = vadd.f32 %v4998, %v4342
    %v5000 = vadd.f32 %v4999, %v4352
    %v5001 = vrot.slane %v5000, 4
    %v5002 = vadd.f32 %v5000, %v5001
    %v5003 = vrot.slane %v5002, 2
    %v5004 = vadd.f32 %v5002, %v5003
    %v5005 = vrot.slane %v5004, 1
    %v5006 = vadd.f32 %v5004, %v5005
    %v5007 = vadd.f32 %v4043, %v4053
    %v5008 = vadd.f32 %v5007, %v4063
    %v5009 = vadd.f32 %v5008, %v4073
    %v5010 = vadd.f32 %v5009, %v4083
    %v5011 = vadd.f32 %v5010, %v4093
    %v5012 = vadd.f32 %v5011, %v4103
    %v5013 = vadd.f32 %v5012, %v4113
    %v5014 = vadd.f32 %v5013, %v4123
    %v5015 = vadd.f32 %v5014, %v4133
    %v5016 = vadd.f32 %v5015, %v4143
    %v5017 = vadd.f32 %v5016, %v4153
    %v5018 = vadd.f32 %v5017, %v4163
    %v5019 = vadd.f32 %v5018, %v4173
    %v5020 = vadd.f32 %v5019, %v4183
    %v5021 = vadd.f32 %v5020, %v4193
    %v5022 = vadd.f32 %v5021, %v4203
    %v5023 = vadd.f32 %v5022, %v4213
    %v5024 = vadd.f32 %v5023, %v4223
    %v5025 = vadd.f32 %v5024, %v4233
    %v5026 = vadd.f32 %v5025, %v4243
    %v5027 = vadd.f32 %v5026, %v4253
    %v5028 = vadd.f32 %v5027, %v4263
    %v5029 = vadd.f32 %v5028, %v4273
    %v5030 = vadd.f32 %v5029, %v4283
    %v5031 = vadd.f32 %v5030, %v4293
    %v5032 = vadd.f32 %v5031, %v4303
    %v5033 = vadd.f32 %v5032, %v4313
    %v5034 = vadd.f32 %v5033, %v4323
    %v5035 = vadd.f32 %v5034, %v4333
    %v5036 = vadd.f32 %v5035, %v4343
    %v5037 = vadd.f32 %v5036, %v4353
    %v5038 = vrot.slane %v5037, 4
    %v5039 = vadd.f32 %v5037, %v5038
    %v5040 = vrot.slane %v5039, 2
    %v5041 = vadd.f32 %v5039, %v5040
    %v5042 = vrot.slane %v5041, 1
    %v5043 = vadd.f32 %v5041, %v5042
    %v5044 = vadd.f32 %v4354, %v4364
    %v5045 = vadd.f32 %v5044, %v4374
    %v5046 = vadd.f32 %v5045, %v4384
    %v5047 = vadd.f32 %v5046, %v4394
    %v5048 = vadd.f32 %v5047, %v4404
    %v5049 = vadd.f32 %v5048, %v4414
    %v5050 = vadd.f32 %v5049, %v4424
    %v5051 = vadd.f32 %v5050, %v4434
    %v5052 = vadd.f32 %v5051, %v4444
    %v5053 = vadd.f32 %v5052, %v4454
    %v5054 = vadd.f32 %v5053, %v4464
    %v5055 = vadd.f32 %v5054, %v4474
    %v5056 = vadd.f32 %v5055, %v4484
    %v5057 = vadd.f32 %v5056, %v4494
    %v5058 = vadd.f32 %v5057, %v4504
    %v5059 = vadd.f32 %v5058, %v4514
    %v5060 = vadd.f32 %v5059, %v4524
    %v5061 = vadd.f32 %v5060, %v4534
    %v5062 = vadd.f32 %v5061, %v4544
    %v5063 = vadd.f32 %v5062, %v4554
    %v5064 = vadd.f32 %v5063, %v4564
    %v5065 = vadd.f32 %v5064, %v4574
    %v5066 = vadd.f32 %v5065, %v4584
    %v5067 = vadd.f32 %v5066, %v4594
    %v5068 = vadd.f32 %v5067, %v4604
    %v5069 = vadd.f32 %v5068, %v4614
    %v5070 = vadd.f32 %v5069, %v4624
    %v5071 = vadd.f32 %v5070, %v4634
    %v5072 = vadd.f32 %v5071, %v4644
    %v5073 = vadd.f32 %v5072, %v4654
    %v5074 = vadd.f32 %v5073, %v4664
    %v5075 = vrot.slane %v5074, 4
    %v5076 = vadd.f32 %v5074, %v5075
    %v5077 = vrot.slane %v5076, 2
    %v5078 = vadd.f32 %v5076, %v5077
    %v5079 = vrot.slane %v5078, 1
    %v5080 = vadd.f32 %v5078, %v5079
    %v5081 = vadd.f32 %v4355, %v4365
    %v5082 = vadd.f32 %v5081, %v4375
    %v5083 = vadd.f32 %v5082, %v4385
    %v5084 = vadd.f32 %v5083, %v4395
    %v5085 = vadd.f32 %v5084, %v4405
    %v5086 = vadd.f32 %v5085, %v4415
    %v5087 = vadd.f32 %v5086, %v4425
    %v5088 = vadd.f32 %v5087, %v4435
    %v5089 = vadd.f32 %v5088, %v4445
    %v5090 = vadd.f32 %v5089, %v4455
    %v5091 = vadd.f32 %v5090, %v4465
    %v5092 = vadd.f32 %v5091, %v4475
    %v5093 = vadd.f32 %v5092, %v4485
    %v5094 = vadd.f32 %v5093, %v4495
    %v5095 = vadd.f32 %v5094, %v4505
    %v5096 = vadd.f32 %v5095, %v4515
    %v5097 = vadd.f32 %v5096, %v4525
    %v5098 = vadd.f32 %v5097, %v4535
    %v5099 = vadd.f32 %v5098, %v4545
    %v5100 = vadd.f32 %v5099, %v4555
    %v5101 = vadd.f32 %v5100, %v4565
    %v5102 = vadd.f32 %v5101, %v4575
    %v5103 = vadd.f32 %v5102, %v4585
    %v5104 = vadd.f32 %v5103, %v4595
    %v5105 = vadd.f32 %v5104, %v4605
    %v5106 = vadd.f32 %v5105, %v4615
    %v5107 = vadd.f32 %v5106, %v4625
    %v5108 = vadd.f32 %v5107, %v4635
    %v5109 = vadd.f32 %v5108, %v4645
    %v5110 = vadd.f32 %v5109, %v4655
    %v5111 = vadd.f32 %v5110, %v4665
    %v5112 = vrot.slane %v5111, 4
    %v5113 = vadd.f32 %v5111, %v5112
    %v5114 = vrot.slane %v5113, 2
    %v5115 = vadd.f32 %v5113, %v5114
    %v5116 = vrot.slane %v5115, 1
    %v5117 = vadd.f32 %v5115, %v5116
    %v5118 = vadd.f32 %v4356, %v4366
    %v5119 = vadd.f32 %v5118, %v4376
    %v5120 = vadd.f32 %v5119, %v4386
    %v5121 = vadd.f32 %v5120, %v4396
    %v5122 = vadd.f32 %v5121, %v4406
    %v5123 = vadd.f32 %v5122, %v4416
    %v5124 = vadd.f32 %v5123, %v4426
    %v5125 = vadd.f32 %v5124, %v4436
    %v5126 = vadd.f32 %v5125, %v4446
    %v5127 = vadd.f32 %v5126, %v4456
    %v5128 = vadd.f32 %v5127, %v4466
    %v5129 = vadd.f32 %v5128, %v4476
    %v5130 = vadd.f32 %v5129, %v4486
    %v5131 = vadd.f32 %v5130, %v4496
    %v5132 = vadd.f32 %v5131, %v4506
    %v5133 = vadd.f32 %v5132, %v4516
    %v5134 = vadd.f32 %v5133, %v4526
    %v5135 = vadd.f32 %v5134, %v4536
    %v5136 = vadd.f32 %v5135, %v4546
    %v5137 = vadd.f32 %v5136, %v4556
    %v5138 = vadd.f32 %v5137, %v4566
    %v5139 = vadd.f32 %v5138, %v4576
    %v5140 = vadd.f32 %v5139, %v4586
    %v5141 = vadd.f32 %v5140, %v4596
    %v5142 = vadd.f32 %v5141, %v4606
    %v5143 = vadd.f32 %v5142, %v4616
    %v5144 = vadd.f32 %v5143, %v4626
    %v5145 = vadd.f32 %v5144, %v4636
    %v5146 = vadd.f32 %v5145, %v4646
    %v5147 = vadd.f32 %v5146, %v4656
    %v5148 = vadd.f32 %v5147, %v4666
    %v5149 = vrot.slane %v5148, 4
    %v5150 = vadd.f32 %v5148, %v5149
    %v5151 = vrot.slane %v5150, 2
    %v5152 = vadd.f32 %v5150, %v5151
    %v5153 = vrot.slane %v5152, 1
    %v5154 = vadd.f32 %v5152, %v5153
    %v5155 = vadd.f32 %v4357, %v4367
    %v5156 = vadd.f32 %v5155, %v4377
    %v5157 = vadd.f32 %v5156, %v4387
    %v5158 = vadd.f32 %v5157, %v4397
    %v5159 = vadd.f32 %v5158, %v4407
    %v5160 = vadd.f32 %v5159, %v4417
    %v5161 = vadd.f32 %v5160, %v4427
    %v5162 = vadd.f32 %v5161, %v4437
    %v5163 = vadd.f32 %v5162, %v4447
    %v5164 = vadd.f32 %v5163, %v4457
    %v5165 = vadd.f32 %v5164, %v4467
    %v5166 = vadd.f32 %v5165, %v4477
    %v5167 = vadd.f32 %v5166, %v4487
    %v5168 = vadd.f32 %v5167, %v4497
    %v5169 = vadd.f32 %v5168, %v4507
    %v5170 = vadd.f32 %v5169, %v4517
    %v5171 = vadd.f32 %v5170, %v4527
    %v5172 = vadd.f32 %v5171, %v4537
    %v5173 = vadd.f32 %v5172, %v4547
    %v5174 = vadd.f32 %v5173, %v4557
    %v5175 = vadd.f32 %v5174, %v4567
    %v5176 = vadd.f32 %v5175, %v4577
    %v5177 = vadd.f32 %v5176, %v4587
    %v5178 = vadd.f32 %v5177, %v4597
    %v5179 = vadd.f32 %v5178, %v4607
    %v5180 = vadd.f32 %v5179, %v4617
    %v5181 = vadd.f32 %v5180, %v4627
    %v5182 = vadd.f32 %v5181, %v4637
    %v5183 = vadd.f32 %v5182, %v4647
    %v5184 = vadd.f32 %v5183, %v4657
    %v5185 = vadd.f32 %v5184, %v4667
    %v5186 = vrot.slane %v5185, 4
    %v5187 = vadd.f32 %v5185, %v5186
    %v5188 = vrot.slane %v5187, 2
    %v5189 = vadd.f32 %v5187, %v5188
    %v5190 = vrot.slane %v5189, 1
    %v5191 = vadd.f32 %v5189, %v5190
    %v5192 = vadd.f32 %v4358, %v4368
    %v5193 = vadd.f32 %v5192, %v4378
    %v5194 = vadd.f32 %v5193, %v4388
    %v5195 = vadd.f32 %v5194, %v4398
    %v5196 = vadd.f32 %v5195, %v4408
    %v5197 = vadd.f32 %v5196, %v4418
    %v5198 = vadd.f32 %v5197, %v4428
    %v5199 = vadd.f32 %v5198, %v4438
    %v5200 = vadd.f32 %v5199, %v4448
    %v5201 = vadd.f32 %v5200, %v4458
    %v5202 = vadd.f32 %v5201, %v4468
    %v5203 = vadd.f32 %v5202, %v4478
    %v5204 = vadd.f32 %v5203, %v4488
    %v5205 = vadd.f32 %v5204, %v4498
    %v5206 = vadd.f32 %v5205, %v4508
    %v5207 = vadd.f32 %v5206, %v4518
    %v5208 = vadd.f32 %v5207, %v4528
    %v5209 = vadd.f32 %v5208, %v4538
    %v5210 = vadd.f32 %v5209, %v4548
    %v5211 = vadd.f32 %v5210, %v4558
    %v5212 = vadd.f32 %v5211, %v4568
    %v5213 = vadd.f32 %v5212, %v4578
    %v5214 = vadd.f32 %v5213, %v4588
    %v5215 = vadd.f32 %v5214, %v4598
    %v5216 = vadd.f32 %v5215, %v4608
    %v5217 = vadd.f32 %v5216, %v4618
    %v5218 = vadd.f32 %v5217, %v4628
    %v5219 = vadd.f32 %v5218, %v4638
    %v5220 = vadd.f32 %v5219, %v4648
    %v5221 = vadd.f32 %v5220, %v4658
    %v5222 = vadd.f32 %v5221, %v4668
    %v5223 = vrot.slane %v5222, 4
    %v5224 = vadd.f32 %v5222, %v5223
    %v5225 = vrot.slane %v5224, 2
    %v5226 = vadd.f32 %v5224, %v5225
    %v5227 = vrot.slane %v5226, 1
    %v5228 = vadd.f32 %v5226, %v5227
    %v5229 = vadd.f32 %v4359, %v4369
    %v5230 = vadd.f32 %v5229, %v4379
    %v5231 = vadd.f32 %v5230, %v4389
    %v5232 = vadd.f32 %v5231, %v4399
    %v5233 = vadd.f32 %v5232, %v4409
    %v5234 = vadd.f32 %v5233, %v4419
    %v5235 = vadd.f32 %v5234, %v4429
    %v5236 = vadd.f32 %v5235, %v4439
    %v5237 = vadd.f32 %v5236, %v4449
    %v5238 = vadd.f32 %v5237, %v4459
    %v5239 = vadd.f32 %v5238, %v4469
    %v5240 = vadd.f32 %v5239, %v4479
    %v5241 = vadd.f32 %v5240, %v4489
    %v5242 = vadd.f32 %v5241, %v4499
    %v5243 = vadd.f32 %v5242, %v4509
    %v5244 = vadd.f32 %v5243, %v4519
    %v5245 = vadd.f32 %v5244, %v4529
    %v5246 = vadd.f32 %v5245, %v4539
    %v5247 = vadd.f32 %v5246, %v4549
    %v5248 = vadd.f32 %v5247, %v4559
    %v5249 = vadd.f32 %v5248, %v4569
    %v5250 = vadd.f32 %v5249, %v4579
    %v5251 = vadd.f32 %v5250, %v4589
    %v5252 = vadd.f32 %v5251, %v4599
    %v5253 = vadd.f32 %v5252, %v4609
    %v5254 = vadd.f32 %v5253, %v4619
    %v5255 = vadd.f32 %v5254, %v4629
    %v5256 = vadd.f32 %v5255, %v4639
    %v5257 = vadd.f32 %v5256, %v4649
    %v5258 = vadd.f32 %v5257, %v4659
    %v5259 = vadd.f32 %v5258, %v4669
    %v5260 = vrot.slane %v5259, 4
    %v5261 = vadd.f32 %v5259, %v5260
    %v5262 = vrot.slane %v5261, 2
    %v5263 = vadd.f32 %v5261, %v5262
    %v5264 = vrot.slane %v5263, 1
    %v5265 = vadd.f32 %v5263, %v5264
    %v5266 = vadd.f32 %v4360, %v4370
    %v5267 = vadd.f32 %v5266, %v4380
    %v5268 = vadd.f32 %v5267, %v4390
    %v5269 = vadd.f32 %v5268, %v4400
    %v5270 = vadd.f32 %v5269, %v4410
    %v5271 = vadd.f32 %v5270, %v4420
    %v5272 = vadd.f32 %v5271, %v4430
    %v5273 = vadd.f32 %v5272, %v4440
    %v5274 = vadd.f32 %v5273, %v4450
    %v5275 = vadd.f32 %v5274, %v4460
    %v5276 = vadd.f32 %v5275, %v4470
    %v5277 = vadd.f32 %v5276, %v4480
    %v5278 = vadd.f32 %v5277, %v4490
    %v5279 = vadd.f32 %v5278, %v4500
    %v5280 = vadd.f32 %v5279, %v4510
    %v5281 = vadd.f32 %v5280, %v4520
    %v5282 = vadd.f32 %v5281, %v4530
    %v5283 = vadd.f32 %v5282, %v4540
    %v5284 = vadd.f32 %v5283, %v4550
    %v5285 = vadd.f32 %v5284, %v4560
    %v5286 = vadd.f32 %v5285, %v4570
    %v5287 = vadd.f32 %v5286, %v4580
    %v5288 = vadd.f32 %v5287, %v4590
    %v5289 = vadd.f32 %v5288, %v4600
    %v5290 = vadd.f32 %v5289, %v4610
    %v5291 = vadd.f32 %v5290, %v4620
    %v5292 = vadd.f32 %v5291, %v4630
    %v5293 = vadd.f32 %v5292, %v4640
    %v5294 = vadd.f32 %v5293, %v4650
    %v5295 = vadd.f32 %v5294, %v4660
    %v5296 = vadd.f32 %v5295, %v4670
    %v5297 = vrot.slane %v5296, 4
    %v5298 = vadd.f32 %v5296, %v5297
    %v5299 = vrot.slane %v5298, 2
    %v5300 = vadd.f32 %v5298, %v5299
    %v5301 = vrot.slane %v5300, 1
    %v5302 = vadd.f32 %v5300, %v5301
    %v5303 = vadd.f32 %v4361, %v4371
    %v5304 = vadd.f32 %v5303, %v4381
    %v5305 = vadd.f32 %v5304, %v4391
    %v5306 = vadd.f32 %v5305, %v4401
    %v5307 = vadd.f32 %v5306, %v4411
    %v5308 = vadd.f32 %v5307, %v4421
    %v5309 = vadd.f32 %v5308, %v4431
    %v5310 = vadd.f32 %v5309, %v4441
    %v5311 = vadd.f32 %v5310, %v4451
    %v5312 = vadd.f32 %v5311, %v4461
    %v5313 = vadd.f32 %v5312, %v4471
    %v5314 = vadd.f32 %v5313, %v4481
    %v5315 = vadd.f32 %v5314, %v4491
    %v5316 = vadd.f32 %v5315, %v4501
    %v5317 = vadd.f32 %v5316, %v4511
    %v5318 = vadd.f32 %v5317, %v4521
    %v5319 = vadd.f32 %v5318, %v4531
    %v5320 = vadd.f32 %v5319, %v4541
    %v5321 = vadd.f32 %v5320, %v4551
    %v5322 = vadd.f32 %v5321, %v4561
    %v5323 = vadd.f32 %v5322, %v4571
    %v5324 = vadd.f32 %v5323, %v4581
    %v5325 = vadd.f32 %v5324, %v4591
    %v5326 = vadd.f32 %v5325, %v4601
    %v5327 = vadd.f32 %v5326, %v4611
    %v5328 = vadd.f32 %v5327, %v4621
    %v5329 = vadd.f32 %v5328, %v4631
    %v5330 = vadd.f32 %v5329, %v4641
    %v5331 = vadd.f32 %v5330, %v4651
    %v5332 = vadd.f32 %v5331, %v4661
    %v5333 = vadd.f32 %v5332, %v4671
    %v5334 = vrot.slane %v5333, 4
    %v5335 = vadd.f32 %v5333, %v5334
    %v5336 = vrot.slane %v5335, 2
    %v5337 = vadd.f32 %v5335, %v5336
    %v5338 = vrot.slane %v5337, 1
    %v5339 = vadd.f32 %v5337, %v5338
    %v5340 = vadd.f32 %v4362, %v4372
    %v5341 = vadd.f32 %v5340, %v4382
    %v5342 = vadd.f32 %v5341, %v4392
    %v5343 = vadd.f32 %v5342, %v4402
    %v5344 = vadd.f32 %v5343, %v4412
    %v5345 = vadd.f32 %v5344, %v4422
    %v5346 = vadd.f32 %v5345, %v4432
    %v5347 = vadd.f32 %v5346, %v4442
    %v5348 = vadd.f32 %v5347, %v4452
    %v5349 = vadd.f32 %v5348, %v4462
    %v5350 = vadd.f32 %v5349, %v4472
    %v5351 = vadd.f32 %v5350, %v4482
    %v5352 = vadd.f32 %v5351, %v4492
    %v5353 = vadd.f32 %v5352, %v4502
    %v5354 = vadd.f32 %v5353, %v4512
    %v5355 = vadd.f32 %v5354, %v4522
    %v5356 = vadd.f32 %v5355, %v4532
    %v5357 = vadd.f32 %v5356, %v4542
    %v5358 = vadd.f32 %v5357, %v4552
    %v5359 = vadd.f32 %v5358, %v4562
    %v5360 = vadd.f32 %v5359, %v4572
    %v5361 = vadd.f32 %v5360, %v4582
    %v5362 = vadd.f32 %v5361, %v4592
    %v5363 = vadd.f32 %v5362, %v4602
    %v5364 = vadd.f32 %v5363, %v4612
    %v5365 = vadd.f32 %v5364, %v4622
    %v5366 = vadd.f32 %v5365, %v4632
    %v5367 = vadd.f32 %v5366, %v4642
    %v5368 = vadd.f32 %v5367, %v4652
    %v5369 = vadd.f32 %v5368, %v4662
    %v5370 = vadd.f32 %v5369, %v4672
    %v5371 = vrot.slane %v5370, 4
    %v5372 = vadd.f32 %v5370, %v5371
    %v5373 = vrot.slane %v5372, 2
    %v5374 = vadd.f32 %v5372, %v5373
    %v5375 = vrot.slane %v5374, 1
    %v5376 = vadd.f32 %v5374, %v5375
    %v5377 = vadd.f32 %v4363, %v4373
    %v5378 = vadd.f32 %v5377, %v4383
    %v5379 = vadd.f32 %v5378, %v4393
    %v5380 = vadd.f32 %v5379, %v4403
    %v5381 = vadd.f32 %v5380, %v4413
    %v5382 = vadd.f32 %v5381, %v4423
    %v5383 = vadd.f32 %v5382, %v4433
    %v5384 = vadd.f32 %v5383, %v4443
    %v5385 = vadd.f32 %v5384, %v4453
    %v5386 = vadd.f32 %v5385, %v4463
    %v5387 = vadd.f32 %v5386, %v4473
    %v5388 = vadd.f32 %v5387, %v4483
    %v5389 = vadd.f32 %v5388, %v4493
    %v5390 = vadd.f32 %v5389, %v4503
    %v5391 = vadd.f32 %v5390, %v4513
    %v5392 = vadd.f32 %v5391, %v4523
    %v5393 = vadd.f32 %v5392, %v4533
    %v5394 = vadd.f32 %v5393, %v4543
    %v5395 = vadd.f32 %v5394, %v4553
    %v5396 = vadd.f32 %v5395, %v4563
    %v5397 = vadd.f32 %v5396, %v4573
    %v5398 = vadd.f32 %v5397, %v4583
    %v5399 = vadd.f32 %v5398, %v4593
    %v5400 = vadd.f32 %v5399, %v4603
    %v5401 = vadd.f32 %v5400, %v4613
    %v5402 = vadd.f32 %v5401, %v4623
    %v5403 = vadd.f32 %v5402, %v4633
    %v5404 = vadd.f32 %v5403, %v4643
    %v5405 = vadd.f32 %v5404, %v4653
    %v5406 = vadd.f32 %v5405, %v4663
    %v5407 = vadd.f32 %v5406, %v4673
    %v5408 = vrot.slane %v5407, 4
    %v5409 = vadd.f32 %v5407, %v5408
    %v5410 = vrot.slane %v5409, 2
    %v5411 = vadd.f32 %v5409, %v5410
    %v5412 = vrot.slane %v5411, 1
    %v5413 = vadd.f32 %v5411, %v5412
    %v5414 = vmul.f32 %v4710, 0.00390625
    %v5415 = vmul.f32 %v4747, 0.00390625
    %v5416 = vmul.f32 %v4784, 0.00390625
    %v5417 = vmul.f32 %v4821, 0.00390625
    %v5418 = vmul.f32 %v4858, 0.00390625
    %v5419 = vmul.f32 %v4895, 0.00390625
    %v5420 = vmul.f32 %v4932, 0.00390625
    %v5421 = vmul.f32 %v4969, 0.00390625
    %v5422 = vmul.f32 %v5006, 0.00390625
    %v5423 = vmul.f32 %v5043, 0.00390625
    %v5424 = vmul.f32 %v5080, 0.00390625
    %v5425 = vmul.f32 %v5117, 0.00390625
    %v5426 = vmul.f32 %v5154, 0.00390625
    %v5427 = vmul.f32 %v5191, 0.00390625
    %v5428 = vmul.f32 %v5228, 0.00390625
    %v5429 = vmul.f32 %v5265, 0.00390625
    %v5430 = vmul.f32 %v5302, 0.00390625
    %v5431 = vmul.f32 %v5339, 0.00390625
    %v5432 = vmul.f32 %v5376, 0.00390625
    %v5433 = vmul.f32 %v5413, 0.00390625
    %v5434 = vpack.c.bf16 %v5414, %v5414
    %v5435 = vpack.c.bf16 %v5415, %v5415
    %v5436 = vpack.c.bf16 %v5416, %v5416
    %v5437 = vpack.c.bf16 %v5417, %v5417
    %v5438 = vpack.c.bf16 %v5418, %v5418
    %v5439 = vpack.c.bf16 %v5419, %v5419
    %v5440 = vpack.c.bf16 %v5420, %v5420
    %v5441 = vpack.c.bf16 %v5421, %v5421
    %v5442 = vpack.c.bf16 %v5422, %v5422
    %v5443 = vpack.c.bf16 %v5423, %v5423
    %v5444 = vpack.c.bf16 %v5424, %v5424
    %v5445 = vpack.c.bf16 %v5425, %v5425
    %v5446 = vpack.c.bf16 %v5426, %v5426
    %v5447 = vpack.c.bf16 %v5427, %v5427
    %v5448 = vpack.c.bf16 %v5428, %v5428
    %v5449 = vpack.c.bf16 %v5429, %v5429
    %v5450 = vpack.c.bf16 %v5430, %v5430
    %v5451 = vpack.c.bf16 %v5431, %v5431
    %v5452 = vpack.c.bf16 %v5432, %v5432
    %v5453 = vpack.c.bf16 %v5433, %v5433
    %v5454 = vld [vmem:[#allocation2] sm:$0xf]
    %v5455 = vld [vmem:[#allocation2 + $0x4] sm:$0xf]
    %v5456 = vld [vmem:[#allocation2 + $0x8] sm:$0xf]
    %v5457 = vld [vmem:[#allocation2 + $0xc] sm:$0xf]
    %v5458 = vld [vmem:[#allocation2 + $0x10] sm:$0xf]
    %v5459 = vld [vmem:[#allocation2 + $0x14] sm:$0xf]
    %v5460 = vld [vmem:[#allocation2 + $0x18] sm:$0xf]
    %v5461 = vld [vmem:[#allocation2 + $0x1c] sm:$0xf]
    %v5462 = vld [vmem:[#allocation2 + $0x20] sm:$0xf]
    %v5463 = vld [vmem:[#allocation2 + $0x24] sm:$0xf]
    %v5464 = vld [vmem:[#allocation2 + $0x28] sm:$0xf]
    %v5465 = vld [vmem:[#allocation2 + $0x2c] sm:$0xf]
    %v5466 = vld [vmem:[#allocation2 + $0x30] sm:$0xf]
    %v5467 = vld [vmem:[#allocation2 + $0x34] sm:$0xf]
    %v5468 = vld [vmem:[#allocation2 + $0x38] sm:$0xf]
    %v5469 = vld [vmem:[#allocation2 + $0x3c] sm:$0xf]
    %v5470 = vld [vmem:[#allocation2 + $0x40] sm:$0xf]
    %v5471 = vld [vmem:[#allocation2 + $0x44] sm:$0xf]
    %v5472 = vld [vmem:[#allocation2 + $0x48] sm:$0xf]
    %v5473 = vld [vmem:[#allocation2 + $0x4c] sm:$0xf]
    %v5474 = vld [vmem:[#allocation2 + $0x50] sm:$0xf]
    %v5475 = vld [vmem:[#allocation2 + $0x54] sm:$0xf]
    %v5476 = vld [vmem:[#allocation2 + $0x58] sm:$0xf]
    %v5477 = vld [vmem:[#allocation2 + $0x5c] sm:$0xf]
    %v5478 = vld [vmem:[#allocation2 + $0x60] sm:$0xf]
    %v5479 = vld [vmem:[#allocation2 + $0x64] sm:$0xf]
    %v5480 = vld [vmem:[#allocation2 + $0x68] sm:$0xf]
    %v5481 = vld [vmem:[#allocation2 + $0x6c] sm:$0xf]
    %v5482 = vld [vmem:[#allocation2 + $0x70] sm:$0xf]
    %v5483 = vld [vmem:[#allocation2 + $0x74] sm:$0xf]
    %v5484 = vld [vmem:[#allocation2 + $0x78] sm:$0xf]
    %v5485 = vld [vmem:[#allocation2 + $0x7c] sm:$0xf]
    %v5486 = vld [vmem:[#allocation2 + $0x80] sm:$0xf]
    %v5487 = vld [vmem:[#allocation2 + $0x84] sm:$0xf]
    %v5488 = vld [vmem:[#allocation2 + $0x88] sm:$0xf]
    %v5489 = vld [vmem:[#allocation2 + $0x8c] sm:$0xf]
    %v5490 = vld [vmem:[#allocation2 + $0x90] sm:$0xf]
    %v5491 = vld [vmem:[#allocation2 + $0x94] sm:$0xf]
    %v5492 = vld [vmem:[#allocation2 + $0x98] sm:$0xf]
    %v5493 = vld [vmem:[#allocation2 + $0x9c] sm:$0xf]
    %v5494 = vld [vmem:[#allocation2 + $0xa0] sm:$0xf]
    %v5495 = vld [vmem:[#allocation2 + $0xa4] sm:$0xf]
    %v5496 = vld [vmem:[#allocation2 + $0xa8] sm:$0xf]
    %v5497 = vld [vmem:[#allocation2 + $0xac] sm:$0xf]
    %v5498 = vld [vmem:[#allocation2 + $0xb0] sm:$0xf]
    %v5499 = vld [vmem:[#allocation2 + $0xb4] sm:$0xf]
    %v5500 = vld [vmem:[#allocation2 + $0xb8] sm:$0xf]
    %v5501 = vld [vmem:[#allocation2 + $0xbc] sm:$0xf]
    %v5502 = vld [vmem:[#allocation2 + $0xc0] sm:$0xf]
    %v5503 = vld [vmem:[#allocation2 + $0xc4] sm:$0xf]
    %v5504 = vld [vmem:[#allocation2 + $0xc8] sm:$0xf]
    %v5505 = vld [vmem:[#allocation2 + $0xcc] sm:$0xf]
    %v5506 = vld [vmem:[#allocation2 + $0xd0] sm:$0xf]
    %v5507 = vld [vmem:[#allocation2 + $0xd4] sm:$0xf]
    %v5508 = vld [vmem:[#allocation2 + $0xd8] sm:$0xf]
    %v5509 = vld [vmem:[#allocation2 + $0xdc] sm:$0xf]
    %v5510 = vld [vmem:[#allocation2 + $0xe0] sm:$0xf]
    %v5511 = vld [vmem:[#allocation2 + $0xe4] sm:$0xf]
    %v5512 = vld [vmem:[#allocation2 + $0xe8] sm:$0xf]
    %v5513 = vld [vmem:[#allocation2 + $0xec] sm:$0xf]
    %v5514 = vld [vmem:[#allocation2 + $0xf0] sm:$0xf]
    %v5515 = vld [vmem:[#allocation2 + $0xf4] sm:$0xf]
    %v5516 = vld [vmem:[#allocation2 + $0xf8] sm:$0xf]
    %v5517 = vld [vmem:[#allocation2 + $0xfc] sm:$0xf]
    %v5518 = vld [vmem:[#allocation2 + $0x100] sm:$0xf]
    %v5519 = vld [vmem:[#allocation2 + $0x104] sm:$0xf]
    %v5520 = vld [vmem:[#allocation2 + $0x108] sm:$0xf]
    %v5521 = vld [vmem:[#allocation2 + $0x10c] sm:$0xf]
    %v5522 = vld [vmem:[#allocation2 + $0x110] sm:$0xf]
    %v5523 = vld [vmem:[#allocation2 + $0x114] sm:$0xf]
    %v5524 = vld [vmem:[#allocation2 + $0x118] sm:$0xf]
    %v5525 = vld [vmem:[#allocation2 + $0x11c] sm:$0xf]
    %v5526 = vld [vmem:[#allocation2 + $0x120] sm:$0xf]
    %v5527 = vld [vmem:[#allocation2 + $0x124] sm:$0xf]
    %v5528 = vld [vmem:[#allocation2 + $0x128] sm:$0xf]
    %v5529 = vld [vmem:[#allocation2 + $0x12c] sm:$0xf]
    %v5530 = vld [vmem:[#allocation2 + $0x130] sm:$0xf]
    %v5531 = vld [vmem:[#allocation2 + $0x134] sm:$0xf]
    %v5532 = vld [vmem:[#allocation2 + $0x138] sm:$0xf]
    %v5533 = vld [vmem:[#allocation2 + $0x13c] sm:$0xf]
    %v5534 = vld [vmem:[#allocation2 + $0x140] sm:$0xf]
    %v5535 = vld [vmem:[#allocation2 + $0x144] sm:$0xf]
    %v5536 = vld [vmem:[#allocation2 + $0x148] sm:$0xf]
    %v5537 = vld [vmem:[#allocation2 + $0x14c] sm:$0xf]
    %v5538 = vld [vmem:[#allocation2 + $0x150] sm:$0xf]
    %v5539 = vld [vmem:[#allocation2 + $0x154] sm:$0xf]
    %v5540 = vld [vmem:[#allocation2 + $0x158] sm:$0xf]
    %v5541 = vld [vmem:[#allocation2 + $0x15c] sm:$0xf]
    %v5542 = vld [vmem:[#allocation2 + $0x160] sm:$0xf]
    %v5543 = vld [vmem:[#allocation2 + $0x164] sm:$0xf]
    %v5544 = vld [vmem:[#allocation2 + $0x168] sm:$0xf]
    %v5545 = vld [vmem:[#allocation2 + $0x16c] sm:$0xf]
    %v5546 = vld [vmem:[#allocation2 + $0x170] sm:$0xf]
    %v5547 = vld [vmem:[#allocation2 + $0x174] sm:$0xf]
    %v5548 = vld [vmem:[#allocation2 + $0x178] sm:$0xf]
    %v5549 = vld [vmem:[#allocation2 + $0x17c] sm:$0xf]
    %v5550 = vld [vmem:[#allocation2 + $0x180] sm:$0xf]
    %v5551 = vld [vmem:[#allocation2 + $0x184] sm:$0xf]
    %v5552 = vld [vmem:[#allocation2 + $0x188] sm:$0xf]
    %v5553 = vld [vmem:[#allocation2 + $0x18c] sm:$0xf]
    %v5554 = vld [vmem:[#allocation2 + $0x190] sm:$0xf]
    %v5555 = vld [vmem:[#allocation2 + $0x194] sm:$0xf]
    %v5556 = vld [vmem:[#allocation2 + $0x198] sm:$0xf]
    %v5557 = vld [vmem:[#allocation2 + $0x19c] sm:$0xf]
    %v5558 = vld [vmem:[#allocation2 + $0x1a0] sm:$0xf]
    %v5559 = vld [vmem:[#allocation2 + $0x1a4] sm:$0xf]
    %v5560 = vld [vmem:[#allocation2 + $0x1a8] sm:$0xf]
    %v5561 = vld [vmem:[#allocation2 + $0x1ac] sm:$0xf]
    %v5562 = vld [vmem:[#allocation2 + $0x1b0] sm:$0xf]
    %v5563 = vld [vmem:[#allocation2 + $0x1b4] sm:$0xf]
    %v5564 = vld [vmem:[#allocation2 + $0x1b8] sm:$0xf]
    %v5565 = vld [vmem:[#allocation2 + $0x1bc] sm:$0xf]
    %v5566 = vld [vmem:[#allocation2 + $0x1c0] sm:$0xf]
    %v5567 = vld [vmem:[#allocation2 + $0x1c4] sm:$0xf]
    %v5568 = vld [vmem:[#allocation2 + $0x1c8] sm:$0xf]
    %v5569 = vld [vmem:[#allocation2 + $0x1cc] sm:$0xf]
    %v5570 = vld [vmem:[#allocation2 + $0x1d0] sm:$0xf]
    %v5571 = vld [vmem:[#allocation2 + $0x1d4] sm:$0xf]
    %v5572 = vld [vmem:[#allocation2 + $0x1d8] sm:$0xf]
    %v5573 = vld [vmem:[#allocation2 + $0x1dc] sm:$0xf]
    %v5574 = vld [vmem:[#allocation2 + $0x1e0] sm:$0xf]
    %v5575 = vld [vmem:[#allocation2 + $0x1e4] sm:$0xf]
    %v5576 = vld [vmem:[#allocation2 + $0x1e8] sm:$0xf]
    %v5577 = vld [vmem:[#allocation2 + $0x1ec] sm:$0xf]
    %v5578 = vld [vmem:[#allocation2 + $0x1f0] sm:$0xf]
    %v5579 = vld [vmem:[#allocation2 + $0x1f4] sm:$0xf]
    %v5580 = vld [vmem:[#allocation2 + $0x1f8] sm:$0xf]
    %v5581 = vld [vmem:[#allocation2 + $0x1fc] sm:$0xf]
    %v5582 = vld [vmem:[#allocation2 + $0x200] sm:$0xf]
    %v5583 = vld [vmem:[#allocation2 + $0x204] sm:$0xf]
    %v5584 = vld [vmem:[#allocation2 + $0x208] sm:$0xf]
    %v5585 = vld [vmem:[#allocation2 + $0x20c] sm:$0xf]
    %v5586 = vld [vmem:[#allocation2 + $0x210] sm:$0xf]
    %v5587 = vld [vmem:[#allocation2 + $0x214] sm:$0xf]
    %v5588 = vld [vmem:[#allocation2 + $0x218] sm:$0xf]
    %v5589 = vld [vmem:[#allocation2 + $0x21c] sm:$0xf]
    %v5590 = vld [vmem:[#allocation2 + $0x220] sm:$0xf]
    %v5591 = vld [vmem:[#allocation2 + $0x224] sm:$0xf]
    %v5592 = vld [vmem:[#allocation2 + $0x228] sm:$0xf]
    %v5593 = vld [vmem:[#allocation2 + $0x22c] sm:$0xf]
    %v5594 = vld [vmem:[#allocation2 + $0x230] sm:$0xf]
    %v5595 = vld [vmem:[#allocation2 + $0x234] sm:$0xf]
    %v5596 = vld [vmem:[#allocation2 + $0x238] sm:$0xf]
    %v5597 = vld [vmem:[#allocation2 + $0x23c] sm:$0xf]
    %v5598 = vld [vmem:[#allocation2 + $0x240] sm:$0xf]
    %v5599 = vld [vmem:[#allocation2 + $0x244] sm:$0xf]
    %v5600 = vld [vmem:[#allocation2 + $0x248] sm:$0xf]
    %v5601 = vld [vmem:[#allocation2 + $0x24c] sm:$0xf]
    %v5602 = vld [vmem:[#allocation2 + $0x250] sm:$0xf]
    %v5603 = vld [vmem:[#allocation2 + $0x254] sm:$0xf]
    %v5604 = vld [vmem:[#allocation2 + $0x258] sm:$0xf]
    %v5605 = vld [vmem:[#allocation2 + $0x25c] sm:$0xf]
    %v5606 = vld [vmem:[#allocation2 + $0x260] sm:$0xf]
    %v5607 = vld [vmem:[#allocation2 + $0x264] sm:$0xf]
    %v5608 = vld [vmem:[#allocation2 + $0x268] sm:$0xf]
    %v5609 = vld [vmem:[#allocation2 + $0x26c] sm:$0xf]
    %v5610 = vld [vmem:[#allocation2 + $0x270] sm:$0xf]
    %v5611 = vld [vmem:[#allocation2 + $0x274] sm:$0xf]
    %v5612 = vld [vmem:[#allocation2 + $0x278] sm:$0xf]
    %v5613 = vld [vmem:[#allocation2 + $0x27c] sm:$0xf]
    %v5614 = vld [vmem:[%s4] sm:$0x1]
    %v5616 = vperm.slane %v5614, 0
    %v5638 = vunpack.c.l.b16 %v5434
    %v5639 = vunpack.c.l.b16 %v5435
    %v5640 = vunpack.c.l.b16 %v5436
    %v5641 = vunpack.c.l.b16 %v5437
    %v5642 = vunpack.c.l.b16 %v5438
    %v5643 = vunpack.c.l.b16 %v5439
    %v5644 = vunpack.c.l.b16 %v5440
    %v5645 = vunpack.c.l.b16 %v5441
    %v5646 = vunpack.c.l.b16 %v5442
    %v5647 = vunpack.c.l.b16 %v5443
    %v5648 = vunpack.c.l.b16 %v5444
    %v5649 = vunpack.c.l.b16 %v5445
    %v5650 = vunpack.c.l.b16 %v5446
    %v5651 = vunpack.c.l.b16 %v5447
    %v5652 = vunpack.c.l.b16 %v5448
    %v5653 = vunpack.c.l.b16 %v5449
    %v5654 = vunpack.c.l.b16 %v5450
    %v5655 = vunpack.c.l.b16 %v5451
    %v5656 = vunpack.c.l.b16 %v5452
    %v5657 = vunpack.c.l.b16 %v5453
    %vm5658 = vcmask 1041409
    %v5659 = vsel %vm5658, %v5648, %v5638
    %v5660 = vsel %vm5658, %v5649, %v5639
    %v5661 = vsel %vm5658, %v5650, %v5640
    %v5662 = vsel %vm5658, %v5651, %v5641
    %v5663 = vsel %vm5658, %v5652, %v5642
    %v5664 = vsel %vm5658, %v5653, %v5643
    %v5665 = vsel %vm5658, %v5654, %v5644
    %v5666 = vsel %vm5658, %v5655, %v5645
    %v5667 = vsel %vm5658, %v5656, %v5646
    %v5668 = vsel %vm5658, %v5657, %v5647
    %v5669 = vpack.c.b16 %v5659, %v5659
    %v5670 = vpack.c.b16 %v5660, %v5660
    %v5671 = vpack.c.b16 %v5661, %v5661
    %v5672 = vpack.c.b16 %v5662, %v5662
    %v5673 = vpack.c.b16 %v5663, %v5663
    %v5674 = vpack.c.b16 %v5664, %v5664
    %v5675 = vpack.c.b16 %v5665, %v5665
    %v5676 = vpack.c.b16 %v5666, %v5666
    %v5677 = vpack.c.b16 %v5667, %v5667
    %v5678 = vpack.c.b16 %v5668, %v5668
    %v5849 = vunpack.c.l.b16 %v5454
    %v5850 = vunpack.c.l.b16 %v5455
    %v5851 = vunpack.c.l.b16 %v5456
    %v5852 = vunpack.c.l.b16 %v5457
    %v5853 = vunpack.c.l.b16 %v5458
    %v5854 = vunpack.c.l.b16 %v5459
    %v5855 = vunpack.c.l.b16 %v5460
    %v5856 = vunpack.c.l.b16 %v5461
    %v5857 = vunpack.c.l.b16 %v5462
    %v5858 = vunpack.c.l.b16 %v5463
    %v5859 = vunpack.c.l.b16 %v5464
    %v5860 = vunpack.c.l.b16 %v5465
    %v5861 = vunpack.c.l.b16 %v5466
    %v5862 = vunpack.c.l.b16 %v5467
    %v5863 = vunpack.c.l.b16 %v5468
    %v5864 = vunpack.c.l.b16 %v5469
    %v5865 = vunpack.c.l.b16 %v5470
    %v5866 = vunpack.c.l.b16 %v5471
    %v5867 = vunpack.c.l.b16 %v5472
    %v5868 = vunpack.c.l.b16 %v5473
    %v5869 = vunpack.c.l.b16 %v5474
    %v5870 = vunpack.c.l.b16 %v5475
    %v5871 = vunpack.c.l.b16 %v5476
    %v5872 = vunpack.c.l.b16 %v5477
    %v5873 = vunpack.c.l.b16 %v5478
    %v5874 = vunpack.c.l.b16 %v5479
    %v5875 = vunpack.c.l.b16 %v5480
    %v5876 = vunpack.c.l.b16 %v5481
    %v5877 = vunpack.c.l.b16 %v5482
    %v5878 = vunpack.c.l.b16 %v5483
    %v5879 = vunpack.c.l.b16 %v5484
    %v5880 = vunpack.c.l.b16 %v5485
    %v5881 = vunpack.c.l.b16 %v5486
    %v5882 = vunpack.c.l.b16 %v5487
    %v5883 = vunpack.c.l.b16 %v5488
    %v5884 = vunpack.c.l.b16 %v5489
    %v5885 = vunpack.c.l.b16 %v5490
    %v5886 = vunpack.c.l.b16 %v5491
    %v5887 = vunpack.c.l.b16 %v5492
    %v5888 = vunpack.c.l.b16 %v5493
    %v5889 = vunpack.c.l.b16 %v5494
    %v5890 = vunpack.c.l.b16 %v5495
    %v5891 = vunpack.c.l.b16 %v5496
    %v5892 = vunpack.c.l.b16 %v5497
    %v5893 = vunpack.c.l.b16 %v5498
    %v5894 = vunpack.c.l.b16 %v5499
    %v5895 = vunpack.c.l.b16 %v5500
    %v5896 = vunpack.c.l.b16 %v5501
    %v5897 = vunpack.c.l.b16 %v5502
    %v5898 = vunpack.c.l.b16 %v5503
    %v5899 = vunpack.c.l.b16 %v5504
    %v5900 = vunpack.c.l.b16 %v5505
    %v5901 = vunpack.c.l.b16 %v5506
    %v5902 = vunpack.c.l.b16 %v5507
    %v5903 = vunpack.c.l.b16 %v5508
    %v5904 = vunpack.c.l.b16 %v5509
    %v5905 = vunpack.c.l.b16 %v5510
    %v5906 = vunpack.c.l.b16 %v5511
    %v5907 = vunpack.c.l.b16 %v5512
    %v5908 = vunpack.c.l.b16 %v5513
    %v5909 = vunpack.c.l.b16 %v5514
    %v5910 = vunpack.c.l.b16 %v5515
    %v5911 = vunpack.c.l.b16 %v5516
    %v5912 = vunpack.c.l.b16 %v5517
    %v5913 = vunpack.c.l.b16 %v5518
    %v5914 = vunpack.c.l.b16 %v5519
    %v5915 = vunpack.c.l.b16 %v5520
    %v5916 = vunpack.c.l.b16 %v5521
    %v5917 = vunpack.c.l.b16 %v5522
    %v5918 = vunpack.c.l.b16 %v5523
    %v5919 = vunpack.c.l.b16 %v5524
    %v5920 = vunpack.c.l.b16 %v5525
    %v5921 = vunpack.c.l.b16 %v5526
    %v5922 = vunpack.c.l.b16 %v5527
    %v5923 = vunpack.c.l.b16 %v5528
    %v5924 = vunpack.c.l.b16 %v5529
    %v5925 = vunpack.c.l.b16 %v5530
    %v5926 = vunpack.c.l.b16 %v5531
    %v5927 = vunpack.c.l.b16 %v5532
    %v5928 = vunpack.c.l.b16 %v5533
    %v5929 = vunpack.c.l.b16 %v5534
    %v5930 = vunpack.c.l.b16 %v5535
    %v5931 = vunpack.c.l.b16 %v5536
    %v5932 = vunpack.c.l.b16 %v5537
    %v5933 = vunpack.c.l.b16 %v5538
    %v5934 = vunpack.c.l.b16 %v5539
    %v5935 = vunpack.c.l.b16 %v5540
    %v5936 = vunpack.c.l.b16 %v5541
    %v5937 = vunpack.c.l.b16 %v5542
    %v5938 = vunpack.c.l.b16 %v5543
    %v5939 = vunpack.c.l.b16 %v5544
    %v5940 = vunpack.c.l.b16 %v5545
    %v5941 = vunpack.c.l.b16 %v5546
    %v5942 = vunpack.c.l.b16 %v5547
    %v5943 = vunpack.c.l.b16 %v5548
    %v5944 = vunpack.c.l.b16 %v5549
    %v5945 = vunpack.c.l.b16 %v5550
    %v5946 = vunpack.c.l.b16 %v5551
    %v5947 = vunpack.c.l.b16 %v5552
    %v5948 = vunpack.c.l.b16 %v5553
    %v5949 = vunpack.c.l.b16 %v5554
    %v5950 = vunpack.c.l.b16 %v5555
    %v5951 = vunpack.c.l.b16 %v5556
    %v5952 = vunpack.c.l.b16 %v5557
    %v5953 = vunpack.c.l.b16 %v5558
    %v5954 = vunpack.c.l.b16 %v5559
    %v5955 = vunpack.c.l.b16 %v5560
    %v5956 = vunpack.c.l.b16 %v5561
    %v5957 = vunpack.c.l.b16 %v5562
    %v5958 = vunpack.c.l.b16 %v5563
    %v5959 = vunpack.c.l.b16 %v5564
    %v5960 = vunpack.c.l.b16 %v5565
    %v5961 = vunpack.c.l.b16 %v5566
    %v5962 = vunpack.c.l.b16 %v5567
    %v5963 = vunpack.c.l.b16 %v5568
    %v5964 = vunpack.c.l.b16 %v5569
    %v5965 = vunpack.c.l.b16 %v5570
    %v5966 = vunpack.c.l.b16 %v5571
    %v5967 = vunpack.c.l.b16 %v5572
    %v5968 = vunpack.c.l.b16 %v5573
    %v5969 = vunpack.c.l.b16 %v5574
    %v5970 = vunpack.c.l.b16 %v5575
    %v5971 = vunpack.c.l.b16 %v5576
    %v5972 = vunpack.c.l.b16 %v5577
    %v5973 = vunpack.c.l.b16 %v5578
    %v5974 = vunpack.c.l.b16 %v5579
    %v5975 = vunpack.c.l.b16 %v5580
    %v5976 = vunpack.c.l.b16 %v5581
    %v5977 = vunpack.c.l.b16 %v5582
    %v5978 = vunpack.c.l.b16 %v5583
    %v5979 = vunpack.c.l.b16 %v5584
    %v5980 = vunpack.c.l.b16 %v5585
    %v5981 = vunpack.c.l.b16 %v5586
    %v5982 = vunpack.c.l.b16 %v5587
    %v5983 = vunpack.c.l.b16 %v5588
    %v5984 = vunpack.c.l.b16 %v5589
    %v5985 = vunpack.c.l.b16 %v5590
    %v5986 = vunpack.c.l.b16 %v5591
    %v5987 = vunpack.c.l.b16 %v5592
    %v5988 = vunpack.c.l.b16 %v5593
    %v5989 = vunpack.c.l.b16 %v5594
    %v5990 = vunpack.c.l.b16 %v5595
    %v5991 = vunpack.c.l.b16 %v5596
    %v5992 = vunpack.c.l.b16 %v5597
    %v5993 = vunpack.c.l.b16 %v5598
    %v5994 = vunpack.c.l.b16 %v5599
    %v5995 = vunpack.c.l.b16 %v5600
    %v5996 = vunpack.c.l.b16 %v5601
    %v5997 = vunpack.c.l.b16 %v5602
    %v5998 = vunpack.c.l.b16 %v5603
    %v5999 = vunpack.c.l.b16 %v5604
    %v6000 = vunpack.c.l.b16 %v5605
    %v6001 = vunpack.c.l.b16 %v5606
    %v6002 = vunpack.c.l.b16 %v5607
    %v6003 = vunpack.c.l.b16 %v5608
    %v6004 = vunpack.c.l.b16 %v5609
    %v6005 = vunpack.c.l.b16 %v5610
    %v6006 = vunpack.c.l.b16 %v5611
    %v6007 = vunpack.c.l.b16 %v5612
    %v6008 = vunpack.c.l.b16 %v5613
    %v6009 = vpack.c.b16 %v5850, %v5849
    %v6010 = vpack.c.b16 %v5852, %v5851
    %v6011 = vpack.c.b16 %v5854, %v5853
    %v6012 = vpack.c.b16 %v5856, %v5855
    %v6013 = vpack.c.b16 %v5858, %v5857
    %v6014 = vpack.c.b16 %v5860, %v5859
    %v6015 = vpack.c.b16 %v5862, %v5861
    %v6016 = vpack.c.b16 %v5864, %v5863
    %v6017 = vpack.c.b16 %v5866, %v5865
    %v6018 = vpack.c.b16 %v5868, %v5867
    %v6019 = vpack.c.b16 %v5870, %v5869
    %v6020 = vpack.c.b16 %v5872, %v5871
    %v6021 = vpack.c.b16 %v5874, %v5873
    %v6022 = vpack.c.b16 %v5876, %v5875
    %v6023 = vpack.c.b16 %v5878, %v5877
    %v6024 = vpack.c.b16 %v5880, %v5879
    %v6025 = vpack.c.b16 %v5882, %v5881
    %v6026 = vpack.c.b16 %v5884, %v5883
    %v6027 = vpack.c.b16 %v5886, %v5885
    %v6028 = vpack.c.b16 %v5888, %v5887
    %v6029 = vpack.c.b16 %v5890, %v5889
    %v6030 = vpack.c.b16 %v5892, %v5891
    %v6031 = vpack.c.b16 %v5894, %v5893
    %v6032 = vpack.c.b16 %v5896, %v5895
    %v6033 = vpack.c.b16 %v5898, %v5897
    %v6034 = vpack.c.b16 %v5900, %v5899
    %v6035 = vpack.c.b16 %v5902, %v5901
    %v6036 = vpack.c.b16 %v5904, %v5903
    %v6037 = vpack.c.b16 %v5906, %v5905
    %v6038 = vpack.c.b16 %v5908, %v5907
    %v6039 = vpack.c.b16 %v5910, %v5909
    %v6040 = vpack.c.b16 %v5912, %v5911
    %v6041 = vpack.c.b16 %v5914, %v5913
    %v6042 = vpack.c.b16 %v5916, %v5915
    %v6043 = vpack.c.b16 %v5918, %v5917
    %v6044 = vpack.c.b16 %v5920, %v5919
    %v6045 = vpack.c.b16 %v5922, %v5921
    %v6046 = vpack.c.b16 %v5924, %v5923
    %v6047 = vpack.c.b16 %v5926, %v5925
    %v6048 = vpack.c.b16 %v5928, %v5927
    %v6049 = vpack.c.b16 %v5930, %v5929
    %v6050 = vpack.c.b16 %v5932, %v5931
    %v6051 = vpack.c.b16 %v5934, %v5933
    %v6052 = vpack.c.b16 %v5936, %v5935
    %v6053 = vpack.c.b16 %v5938, %v5937
    %v6054 = vpack.c.b16 %v5940, %v5939
    %v6055 = vpack.c.b16 %v5942, %v5941
    %v6056 = vpack.c.b16 %v5944, %v5943
    %v6057 = vpack.c.b16 %v5946, %v5945
    %v6058 = vpack.c.b16 %v5948, %v5947
    %v6059 = vpack.c.b16 %v5950, %v5949
    %v6060 = vpack.c.b16 %v5952, %v5951
    %v6061 = vpack.c.b16 %v5954, %v5953
    %v6062 = vpack.c.b16 %v5956, %v5955
    %v6063 = vpack.c.b16 %v5958, %v5957
    %v6064 = vpack.c.b16 %v5960, %v5959
    %v6065 = vpack.c.b16 %v5962, %v5961
    %v6066 = vpack.c.b16 %v5964, %v5963
    %v6067 = vpack.c.b16 %v5966, %v5965
    %v6068 = vpack.c.b16 %v5968, %v5967
    %v6069 = vpack.c.b16 %v5970, %v5969
    %v6070 = vpack.c.b16 %v5972, %v5971
    %v6071 = vpack.c.b16 %v5974, %v5973
    %v6072 = vpack.c.b16 %v5976, %v5975
    %v6073 = vpack.c.b16 %v5978, %v5977
    %v6074 = vpack.c.b16 %v5980, %v5979
    %v6075 = vpack.c.b16 %v5982, %v5981
    %v6076 = vpack.c.b16 %v5984, %v5983
    %v6077 = vpack.c.b16 %v5986, %v5985
    %v6078 = vpack.c.b16 %v5988, %v5987
    %v6079 = vpack.c.b16 %v5990, %v5989
    %v6080 = vpack.c.b16 %v5992, %v5991
    %v6081 = vpack.c.b16 %v5994, %v5993
    %v6082 = vpack.c.b16 %v5996, %v5995
    %v6083 = vpack.c.b16 %v5998, %v5997
    %v6084 = vpack.c.b16 %v6000, %v5999
    %v6085 = vpack.c.b16 %v6002, %v6001
    %v6086 = vpack.c.b16 %v6004, %v6003
    %v6087 = vpack.c.b16 %v6006, %v6005
    %v6088 = vpack.c.b16 %v6008, %v6007
    %6169 = vmatpush.bf16.msra.mxu0 %v6016
    %6170 = vmatpush.bf16.msra.mxu0 %v6015
    %6171 = vmatpush.bf16.msra.mxu0 %v6014
    %6172 = vmatpush.bf16.msra.mxu0 %v6013
    %6173 = vmatpush.bf16.msra.mxu0 %v6012
    %6174 = vmatpush.bf16.msra.mxu0 %v6011
    %6175 = vmatpush.bf16.msra.mxu0 %v6010
    %6176 = vmatpush.bf16.msra.mxu0 %v6009
    %6177 = vmatmul.bf16.gmra.mxu0 %v5669
    %v6178 = vpop.f32.mrf.mxu0
    %v6179 = vadd.f32 %v5616, %v6178
    %v6180 = vpop.f32.mrf.mxu0
    %6181 = vdwg.mxu0
    %6182 = vmatpush.bf16.msra.mxu0 %v6024
    %6183 = vmatpush.bf16.msra.mxu0 %v6023
    %6184 = vmatpush.bf16.msra.mxu0 %v6022
    %6185 = vmatpush.bf16.msra.mxu0 %v6021
    %6186 = vmatpush.bf16.msra.mxu0 %v6020
    %6187 = vmatpush.bf16.msra.mxu0 %v6019
    %6188 = vmatpush.bf16.msra.mxu0 %v6018
    %6189 = vmatpush.bf16.msra.mxu0 %v6017
    %6190 = vmatmul.bf16.gmra.mxu0 %v5670
    %v6191 = vpop.f32.mrf.mxu0
    %v6192 = vadd.f32 %v6179, %v6191
    %v6193 = vpop.f32.mrf.mxu0
    %6194 = vdwg.mxu0
    %6195 = vmatpush.bf16.msra.mxu0 %v6032
    %6196 = vmatpush.bf16.msra.mxu0 %v6031
    %6197 = vmatpush.bf16.msra.mxu0 %v6030
    %6198 = vmatpush.bf16.msra.mxu0 %v6029
    %6199 = vmatpush.bf16.msra.mxu0 %v6028
    %6200 = vmatpush.bf16.msra.mxu0 %v6027
    %6201 = vmatpush.bf16.msra.mxu0 %v6026
    %6202 = vmatpush.bf16.msra.mxu0 %v6025
    %6203 = vmatmul.bf16.gmra.mxu0 %v5671
    %v6204 = vpop.f32.mrf.mxu0
    %v6205 = vadd.f32 %v6192, %v6204
    %v6206 = vpop.f32.mrf.mxu0
    %6207 = vdwg.mxu0
    %6208 = vmatpush.bf16.msra.mxu0 %v6040
    %6209 = vmatpush.bf16.msra.mxu0 %v6039
    %6210 = vmatpush.bf16.msra.mxu0 %v6038
    %6211 = vmatpush.bf16.msra.mxu0 %v6037
    %6212 = vmatpush.bf16.msra.mxu0 %v6036
    %6213 = vmatpush.bf16.msra.mxu0 %v6035
    %6214 = vmatpush.bf16.msra.mxu0 %v6034
    %6215 = vmatpush.bf16.msra.mxu0 %v6033
    %6216 = vmatmul.bf16.gmra.mxu0 %v5672
    %v6217 = vpop.f32.mrf.mxu0
    %v6218 = vadd.f32 %v6205, %v6217
    %v6219 = vpop.f32.mrf.mxu0
    %6220 = vdwg.mxu0
    %6221 = vmatpush.bf16.msra.mxu0 %v6048
    %6222 = vmatpush.bf16.msra.mxu0 %v6047
    %6223 = vmatpush.bf16.msra.mxu0 %v6046
    %6224 = vmatpush.bf16.msra.mxu0 %v6045
    %6225 = vmatpush.bf16.msra.mxu0 %v6044
    %6226 = vmatpush.bf16.msra.mxu0 %v6043
    %6227 = vmatpush.bf16.msra.mxu0 %v6042
    %6228 = vmatpush.bf16.msra.mxu0 %v6041
    %6229 = vmatmul.bf16.gmra.mxu0 %v5673
    %v6230 = vpop.f32.mrf.mxu0
    %v6231 = vadd.f32 %v6218, %v6230
    %v6232 = vpop.f32.mrf.mxu0
    %6233 = vdwg.mxu0
    %6234 = vmatpush.bf16.msra.mxu0 %v6056
    %6235 = vmatpush.bf16.msra.mxu0 %v6055
    %6236 = vmatpush.bf16.msra.mxu0 %v6054
    %6237 = vmatpush.bf16.msra.mxu0 %v6053
    %6238 = vmatpush.bf16.msra.mxu0 %v6052
    %6239 = vmatpush.bf16.msra.mxu0 %v6051
    %6240 = vmatpush.bf16.msra.mxu0 %v6050
    %6241 = vmatpush.bf16.msra.mxu0 %v6049
    %6242 = vmatmul.bf16.gmra.mxu0 %v5674
    %v6243 = vpop.f32.mrf.mxu0
    %v6244 = vadd.f32 %v6231, %v6243
    %v6245 = vpop.f32.mrf.mxu0
    %6246 = vdwg.mxu0
    %6247 = vmatpush.bf16.msra.mxu0 %v6064
    %6248 = vmatpush.bf16.msra.mxu0 %v6063
    %6249 = vmatpush.bf16.msra.mxu0 %v6062
    %6250 = vmatpush.bf16.msra.mxu0 %v6061
    %6251 = vmatpush.bf16.msra.mxu0 %v6060
    %6252 = vmatpush.bf16.msra.mxu0 %v6059
    %6253 = vmatpush.bf16.msra.mxu0 %v6058
    %6254 = vmatpush.bf16.msra.mxu0 %v6057
    %6255 = vmatmul.bf16.gmra.mxu0 %v5675
    %v6256 = vpop.f32.mrf.mxu0
    %v6257 = vadd.f32 %v6244, %v6256
    %v6258 = vpop.f32.mrf.mxu0
    %6259 = vdwg.mxu0
    %6260 = vmatpush.bf16.msra.mxu0 %v6072
    %6261 = vmatpush.bf16.msra.mxu0 %v6071
    %6262 = vmatpush.bf16.msra.mxu0 %v6070
    %6263 = vmatpush.bf16.msra.mxu0 %v6069
    %6264 = vmatpush.bf16.msra.mxu0 %v6068
    %6265 = vmatpush.bf16.msra.mxu0 %v6067
    %6266 = vmatpush.bf16.msra.mxu0 %v6066
    %6267 = vmatpush.bf16.msra.mxu0 %v6065
    %6268 = vmatmul.bf16.gmra.mxu0 %v5676
    %v6269 = vpop.f32.mrf.mxu0
    %v6270 = vadd.f32 %v6257, %v6269
    %v6271 = vpop.f32.mrf.mxu0
    %6272 = vdwg.mxu0
    %6273 = vmatpush.bf16.msra.mxu0 %v6080
    %6274 = vmatpush.bf16.msra.mxu0 %v6079
    %6275 = vmatpush.bf16.msra.mxu0 %v6078
    %6276 = vmatpush.bf16.msra.mxu0 %v6077
    %6277 = vmatpush.bf16.msra.mxu0 %v6076
    %6278 = vmatpush.bf16.msra.mxu0 %v6075
    %6279 = vmatpush.bf16.msra.mxu0 %v6074
    %6280 = vmatpush.bf16.msra.mxu0 %v6073
    %6281 = vmatmul.bf16.gmra.mxu0 %v5677
    %v6282 = vpop.f32.mrf.mxu0
    %v6283 = vadd.f32 %v6270, %v6282
    %v6284 = vpop.f32.mrf.mxu0
    %6285 = vdwg.mxu0
    %6286 = vmatpush.bf16.msra.mxu0 %v6088
    %6287 = vmatpush.bf16.msra.mxu0 %v6087
    %6288 = vmatpush.bf16.msra.mxu0 %v6086
    %6289 = vmatpush.bf16.msra.mxu0 %v6085
    %6290 = vmatpush.bf16.msra.mxu0 %v6084
    %6291 = vmatpush.bf16.msra.mxu0 %v6083
    %6292 = vmatpush.bf16.msra.mxu0 %v6082
    %6293 = vmatpush.bf16.msra.mxu0 %v6081
    %6294 = vmatmul.bf16.gmra.mxu0 %v5678
    %v6295 = vpop.f32.mrf.mxu0
    %v6296 = vadd.f32 %v6283, %v6295
    %v6297 = vpop.f32.mrf.mxu0
    %6298 = vdwg.mxu0
    %v6299 = vsel %vm403, %v6296, -inf
    %6300 = vmax.xlane.f32.xlu0 %v6299
    %v6301 = vpop.xlane.xlu0 %6300
    %v6302 = vsub.f32 %v6296, %v6301
    %v6303 = vmul.f32 %v6302, 1.442695
    %v6304 = vpow.pop %v6303
    %v6305 = vsel %vm403, %v6304, 0.0
    %6306 = vadd.xlane.f32.xlu0 %v6305
    %v6307 = vpop.xlane.xlu0 %6306
    %v6308 = vrcp.pop %v6307
    %v6309 = vmul.f32 %v6307, %v6308
    %v6310 = vsub.f32 2.0, %v6309
    %v6311 = vmul.f32 %v6308, %v6310
    %v6312 = vmul.f32 %v6304, %v6311
    %6313 = vst [vmem:[#allocation5] sm:$0x3] %v6312
    // Predicated region
    $region26: #{tpu_custom_call.1} parent=1 // pred_check
      _
    $region27: #{tpu_custom_call.1} parent=1 // pred_check_branch
      %6315 = sbr.rel (0) target = $region29
    $region28: #{tpu_custom_call.1} parent=1 // pred_region
      %6317 = vsyncadd [#allocation4], 0
      %s6319 = sshll.u32 [#allocation5], 4
      %s6320 = int_to_ptr.vmem [resolvable:$true] %s6319
      %s6321 = sshll.u32 %s5, 4
      %s6322 = int_to_ptr.hbm [resolvable:$true] %s6321
      %6324 = dma.vmem_to_hbm [thread:$0]  %s6320, 32, %s6322, [#allocation4]
    $region29: #{tpu_custom_call.1} parent=1 // pred_fallthru
      _
    // Predicated region
    $region30: #{tpu_custom_call.1} parent=1 // pred_check
      _
    $region31: #{tpu_custom_call.1} parent=1 // pred_check_branch
      %6326 = sbr.rel (0) target = $region33
    $region32: #{tpu_custom_call.1} parent=1 // pred_region
      %6328 = dma.done [#allocation4], 32
    $region33: #{tpu_custom_call.1} parent=1 // pred_fallthru
      _
    %6329 = vsyncpa [#allocation3], 1
    %6330 = vsyncpa [#allocation4], 1

</llo_original>
